<compile_context>
chip_gen: v7x
topology: tpu7x:2x2x1
jax: 0.10.0
libtpu: 0.0.40
codegen_flags: <defaults>
</compile_context>

<pallas_src>
import functools

import jax
import jax.numpy as jnp
from jax.experimental import pallas as pl
from jax.experimental.pallas import tpu as pltpu


_EPS = 1e-5
_VMEM = pl.BlockSpec(memory_space=pltpu.MemorySpace.VMEM)
_VMEM_LIMIT = 32 * 1024 * 1024          # safe on v5e/v6e/v7x scoped limits


def _round_up(x, m):
    return (x + m - 1) // m * m


# ----------------------------- Pallas kernels ------------------------------

def _conv_gemm_stats_kernel(a_ref, b_ref, o_ref, stats_ref):
    """One M-tile of the im2col GEMM (bf16 in, f32 MXU accumulation), fused
    with per-tile partial BatchNorm statistics (sum / sum-of-squares)."""
    acc = jnp.dot(a_ref[...], b_ref[...], preferred_element_type=jnp.float32)
    o_ref[...] = acc                                       # (tm, Cout) f32
    s = jnp.sum(acc, axis=0, keepdims=True)                # (1, Cout)
    ss = jnp.sum(acc * acc, axis=0, keepdims=True)         # (1, Cout)
    row = jax.lax.broadcasted_iota(jnp.int32, (8, acc.shape[1]), 0)
    stats_ref[...] = (jnp.where(row == 0, s, 0.0) +
                      jnp.where(row == 1, ss, 0.0))        # row0=sum, row1=sumsq


def _bn_relu_kernel(x_ref, scale_ref, shift_ref, o_ref):
    """y = relu(x * scale + shift): BatchNorm folded to a per-channel affine."""
    y = x_ref[...].astype(jnp.float32) * scale_ref[...] + shift_ref[...]
    o_ref[...] = jnp.maximum(y, 0.0).astype(o_ref.dtype)


def _bn_res_relu_kernel(x_ref, res_ref, scale_ref, shift_ref, o_ref):
    """Tail of a BasicBlock: relu(BN(conv2) + shortcut)."""
    y = x_ref[...].astype(jnp.float32) * scale_ref[...] + shift_ref[...]
    y = y + res_ref[...].astype(jnp.float32)
    o_ref[...] = jnp.maximum(y, 0.0).astype(o_ref.dtype)


def _head_kernel(f_ref, w_ref, b_ref, o_ref):
    """Global average pool over H*W followed by the final Linear layer."""
    pooled = jnp.mean(f_ref[...].astype(jnp.float32), axis=1)     # (N, C)
    o_ref[...] = jnp.dot(pooled, w_ref[...],
                         preferred_element_type=jnp.float32) + b_ref[...]


# ------------------------------ op wrappers --------------------------------

def conv3x3(x_nhwc, w_oihw, stride, *, tm_target=512):
    """3x3 conv (padding=1, no bias) as im2col + row-tiled Pallas GEMM with
    fused per-channel batch statistics for the following BatchNorm.

    Returns: raw conv output (Mp, Cout) f32 (rows = N*Ho*Wo, zero-padded to a
    multiple of the row tile), tiling meta, NHWC shape, batch mean and biased
    variance (training-mode BatchNorm statistics)."""
    n, h, w, c = x_nhwc.shape
    cout = w_oihw.shape[0]
    ho = (h + 2 - 3) // stride + 1
    wo = (w + 2 - 3) // stride + 1

    xp = jnp.pad(x_nhwc, ((0, 0), (1, 1), (1, 1), (0, 0)))
    cols = []
    for kh in range(3):
        for kw in range(3):
            cols.append(xp[:,
                           kh:kh + (ho - 1) * stride + 1:stride,
                           kw:kw + (wo - 1) * stride + 1:stride,
                           :])
    # TODO(synk): build the (tm, 9*Cin) patch tile inside the kernel (shifted
    # windows of the padded NHWC input) instead of materializing im2col in HBM.
    patches = jnp.concatenate(cols, axis=-1)               # (N, Ho, Wo, 9*Cin)

    m = n * ho * wo
    k9 = 9 * c
    a = patches.reshape(m, k9).astype(jnp.bfloat16)        # MXU operand: bf16
    b = jnp.transpose(w_oihw, (2, 3, 1, 0)).reshape(k9, cout).astype(jnp.bfloat16)

    tm = min(tm_target, _round_up(m, 8))
    mp = _round_up(m, tm)
    if mp != m:
        a = jnp.pad(a, ((0, mp - m), (0, 0)))              # zero rows: inert for stats
    nt = mp // tm

    out, stats = pl.pallas_call(
        _conv_gemm_stats_kernel,
        grid=(nt,),
        in_specs=[pl.BlockSpec((tm, k9), lambda i: (i, 0)),
                  pl.BlockSpec((k9, cout), lambda i: (0, 0))],
        out_specs=(pl.BlockSpec((tm, cout), lambda i: (i, 0)),
                   pl.BlockSpec((8, cout), lambda i: (i, 0))),
        out_shape=(jax.ShapeDtypeStruct((mp, cout), jnp.float32),
                   jax.ShapeDtypeStruct((8 * nt, cout), jnp.float32)),
        compiler_params=pltpu.CompilerParams(
            dimension_semantics=("parallel",),
            vmem_limit_bytes=_VMEM_LIMIT),
    )(a, b)

    # Finalize BatchNorm batch statistics (tiny (nt, C) reduction, XLA glue).
    ps = stats.reshape(nt, 8, cout)
    total = jnp.sum(ps[:, 0, :], axis=0)
    total_sq = jnp.sum(ps[:, 1, :], axis=0)
    mean = total / m
    var = jnp.maximum(total_sq / m - mean * mean, 0.0)     # biased (training mode)
    meta = (m, mp, tm, nt)
    return out, meta, (n, ho, wo, cout), mean, var


def _fold_bn(gamma, beta, mean, var):
    scale = gamma * jax.lax.rsqrt(var + _EPS)
    shift = beta - mean * scale
    return scale, shift


def bn_relu(raw, meta, shape_nhwc, mean, var, gamma, beta):
    m, mp, tm, nt = meta
    n, ho, wo, cout = shape_nhwc
    scale, shift = _fold_bn(gamma, beta, mean, var)
    y = pl.pallas_call(
        _bn_relu_kernel,
        grid=(nt,),
        in_specs=[pl.BlockSpec((tm, cout), lambda i: (i, 0)),
                  pl.BlockSpec((1, cout), lambda i: (0, 0)),
                  pl.BlockSpec((1, cout), lambda i: (0, 0))],
        out_specs=pl.BlockSpec((tm, cout), lambda i: (i, 0)),
        out_shape=jax.ShapeDtypeStruct((mp, cout), jnp.bfloat16),
        compiler_params=pltpu.CompilerParams(
            dimension_semantics=("parallel",),
            vmem_limit_bytes=_VMEM_LIMIT),
    )(raw, scale.reshape(1, cout), shift.reshape(1, cout))
    return y[:m].reshape(n, ho, wo, cout)


def bn_res_relu(raw, meta, shape_nhwc, mean, var, gamma, beta, res_nhwc):
    m, mp, tm, nt = meta
    n, ho, wo, cout = shape_nhwc
    res2 = res_nhwc.reshape(m, cout).astype(jnp.bfloat16)
    if mp != m:
        res2 = jnp.pad(res2, ((0, mp - m), (0, 0)))
    scale, shift = _fold_bn(gamma, beta, mean, var)
    y = pl.pallas_call(
        _bn_res_relu_kernel,
        grid=(nt,),
        in_specs=[pl.BlockSpec((tm, cout), lambda i: (i, 0)),
                  pl.BlockSpec((tm, cout), lambda i: (i, 0)),
                  pl.BlockSpec((1, cout), lambda i: (0, 0)),
                  pl.BlockSpec((1, cout), lambda i: (0, 0))],
        out_specs=pl.BlockSpec((tm, cout), lambda i: (i, 0)),
        out_shape=jax.ShapeDtypeStruct((mp, cout), jnp.bfloat16),
        compiler_params=pltpu.CompilerParams(
            dimension_semantics=("parallel",),
            vmem_limit_bytes=_VMEM_LIMIT),
    )(raw, res2, scale.reshape(1, cout), shift.reshape(1, cout))
    return y[:m].reshape(n, ho, wo, cout)


def basic_block(x, blk):
    stride, in_planes, planes = blk['stride'], blk['in_planes'], blk['planes']
    raw1, meta1, shp1, mu1, var1 = conv3x3(x, blk['conv1'], stride)
    act1 = bn_relu(raw1, meta1, shp1, mu1, var1, blk['g1'], blk['b1'])
    raw2, meta2, shp2, mu2, var2 = conv3x3(act1, blk['conv2'], 1)
    if stride != 1 or in_planes != planes:
        # option-'A' shortcut: stride-2 spatial subsample + zero channel pad
        sc = x[:, ::2, ::2, :]
        pad = planes // 4
        # TODO(synk): fold the zero channel pad into _bn_res_relu_kernel (add
        # residual only into the middle channel slice) to skip this HBM copy.
        sc = jnp.pad(sc, ((0, 0), (0, 0), (0, 0), (pad, pad)))
    else:
        sc = x
    return bn_res_relu(raw2, meta2, shp2, mu2, var2, blk['g2'], blk['b2'], sc)


def resnet_forward(params, x_nchw):
    x = jnp.transpose(x_nchw, (0, 2, 3, 1)).astype(jnp.bfloat16)  # NCHW -> NHWC
    raw0, meta0, shp0, mu0, var0 = conv3x3(x, params['conv1'], 1)
    out = bn_relu(raw0, meta0, shp0, mu0, var0, params['bn1_g'], params['bn1_b'])
    for layer in params['layers']:
        for blk in layer:
            out = basic_block(out, blk)
    n, h, w, c = out.shape
    feat = out.reshape(n, h * w, c)
    logits = pl.pallas_call(
        _head_kernel,
        out_shape=jax.ShapeDtypeStruct((n, params['fc_w'].shape[1]), jnp.float32),
        in_specs=[_VMEM, _VMEM, _VMEM],
        out_specs=_VMEM,
        compiler_params=pltpu.CompilerParams(vmem_limit_bytes=_VMEM_LIMIT),
    )(feat, params['fc_w'], params['fc_b'])
    return logits


# --------------------------- parameter init --------------------------------

def _kaiming_conv(key, cout, cin):
    fan_in = cin * 9
    return jax.random.normal(key, (cout, cin, 3, 3), jnp.float32) * jnp.sqrt(2.0 / fan_in)


def init_params(key, num_classes=10, num_blocks=(3, 3, 3)):
    keys = iter(jax.random.split(key, 64))
    params = {
        'conv1': _kaiming_conv(next(keys), 16, 3),
        'bn1_g': jnp.ones((16,), jnp.float32),
        'bn1_b': jnp.zeros((16,), jnp.float32),
    }
    in_planes = 16
    layers = []
    for planes, nb, stride in zip((16, 32, 64), num_blocks, (1, 2, 2)):
        blocks = []
        for s in [stride] + [1] * (nb - 1):
            blocks.append({
                'conv1': _kaiming_conv(next(keys), planes, in_planes),
                'g1': jnp.ones((planes,), jnp.float32),
                'b1': jnp.zeros((planes,), jnp.float32),
                'conv2': _kaiming_conv(next(keys), planes, planes),
                'g2': jnp.ones((planes,), jnp.float32),
                'b2': jnp.zeros((planes,), jnp.float32),
                'stride': s, 'in_planes': in_planes, 'planes': planes,
            })
            in_planes = planes
        layers.append(blocks)
    params['layers'] = layers
    # Linear(64, num_classes): kaiming-normal weight (fan_in=64), default uniform bias
    w = jax.random.normal(next(keys), (num_classes, 64), jnp.float32) * jnp.sqrt(2.0 / 64)
    bound = 1.0 / jnp.sqrt(64.0)
    b = jax.random.uniform(next(keys), (num_classes,), jnp.float32, -bound, bound)
    params['fc_w'] = jnp.transpose(w)            # stored as (64, num_classes)
    params['fc_b'] = b.reshape(1, num_classes)
    return params


# --------------------------------- main -------------------------------------

if __name__ == "__main__":
    key = jax.random.PRNGKey(0)
    k_x, k_p = jax.random.split(key)
    # small CIFAR-like input: batch=2, channels=3 (required by conv1), spatial=16
    x = jax.random.normal(k_x, (2, 3, 16, 16), jnp.float32)   # NCHW, like PyTorch
    params = init_params(k_p)
    fwd = jax.jit(functools.partial(resnet_forward, params))
    logits = fwd(x)                                           # (2, 10)
    jax.block_until_ready(logits)
    assert logits.shape == (2, 10) and logits.dtype == jnp.float32
    print("KERNEL_OK")
</pallas_src>

<mosaic_0001>
module attributes {stable_mosaic.version = 11 : i64} {
  func.func @_conv_gemm_stats_kernel(%arg0: i32, %arg1: memref<512x27xbf16, #tpu.memory_space<vmem>>, %arg2: memref<27x16xbf16, #tpu.memory_space<vmem>>, %arg3: memref<512x16xf32, #tpu.memory_space<vmem>>, %arg4: memref<8x16xf32, #tpu.memory_space<vmem>>) attributes {dimension_semantics = [#tpu.dimension_semantics<parallel>], iteration_bounds = array<i64: 1>, scalar_prefetch = 0 : i64, scratch_operands = 0 : i64, tpu.core_type = #tpu.core_type<tc>, window_params = [{transform_indices = @transform_0, window_bounds = array<i64: 512, 27>}, {pipeline_mode = #tpu.pipeline_mode<synchronous>, transform_indices = @transform_1, window_bounds = array<i64: 27, 16>}, {transform_indices = @transform_2, window_bounds = array<i64: 512, 16>}, {transform_indices = @transform_3, window_bounds = array<i64: 8, 16>}]} {
    %c0 = arith.constant 0 : index
    %c0_0 = arith.constant 0 : index
    %0 = vector.load %arg1[%c0, %c0_0] : memref<512x27xbf16, #tpu.memory_space<vmem>>, vector<512x27xbf16>
    %c0_1 = arith.constant 0 : index
    %c0_2 = arith.constant 0 : index
    %1 = vector.load %arg2[%c0_1, %c0_2] : memref<27x16xbf16, #tpu.memory_space<vmem>>, vector<27x16xbf16>
    %cst = arith.constant dense<0.000000e+00> : vector<512x16xf32>
    %2 = tpu.matmul %0, %1, %cst {dimension_numbers = #tpu.dot_dimension_numbers<[1], [0], [0], [1], [0, 0, 1, 1], [], []>} : vector<512x27xbf16>, vector<27x16xbf16>, vector<512x16xf32> -> vector<512x16xf32>
    %c0_3 = arith.constant 0 : index
    %c0_4 = arith.constant 0 : index
    %3 = vector.load %arg3[%c0_3, %c0_4] : memref<512x16xf32, #tpu.memory_space<vmem>>, vector<512x16xf32>
    tpu.vector_store %arg3[%c0_3, %c0_4], %2 {strides = array<i32>} : memref<512x16xf32, #tpu.memory_space<vmem>>, vector<512x16xf32>,
    %cst_5 = arith.constant dense<0.000000e+00> : vector<16xf32>
    %4 = vector.multi_reduction <add>, %2, %cst_5 [0] : vector<512x16xf32> to vector<16xf32>
    %5 = vector.shape_cast %4 : vector<16xf32> to vector<1x16xf32>
    %6 = arith.mulf %2, %2 : vector<512x16xf32>
    %cst_6 = arith.constant dense<0.000000e+00> : vector<16xf32>
    %7 = vector.multi_reduction <add>, %6, %cst_6 [0] : vector<512x16xf32> to vector<16xf32>
    %8 = vector.shape_cast %7 : vector<16xf32> to vector<1x16xf32>
    %9 = tpu.iota {dimensions = array<i32: 0>} : vector<8x16xi32>
    %c0_i32 = arith.constant 0 : i32
    %10 = vector.broadcast %c0_i32 : i32 to vector<8x16xi32>
    %11 = arith.cmpi eq, %9, %10 : vector<8x16xi32>
    %cst_7 = arith.constant 0.000000e+00 : f32
    %12 = vector.shape_cast %5 : vector<1x16xf32> to vector<1x16xf32>
    %13 = vector.broadcast %12 : vector<1x16xf32> to vector<8x16xf32>
    %14 = vector.broadcast %cst_7 : f32 to vector<8x16xf32>
    %15 = arith.select %11, %13, %14 : vector<8x16xi1>, vector<8x16xf32>
    %c1_i32 = arith.constant 1 : i32
    %16 = vector.broadcast %c1_i32 : i32 to vector<8x16xi32>
    %17 = arith.cmpi eq, %9, %16 : vector<8x16xi32>
    %cst_8 = arith.constant 0.000000e+00 : f32
    %18 = vector.shape_cast %8 : vector<1x16xf32> to vector<1x16xf32>
    %19 = vector.broadcast %18 : vector<1x16xf32> to vector<8x16xf32>
    %20 = vector.broadcast %cst_8 : f32 to vector<8x16xf32>
    %21 = arith.select %17, %19, %20 : vector<8x16xi1>, vector<8x16xf32>
    %22 = arith.addf %15, %21 : vector<8x16xf32>
    %c0_9 = arith.constant 0 : index
    %c0_10 = arith.constant 0 : index
    %23 = vector.load %arg4[%c0_9, %c0_10] : memref<8x16xf32, #tpu.memory_space<vmem>>, vector<8x16xf32>
    tpu.vector_store %arg4[%c0_9, %c0_10], %22 {strides = array<i32>} : memref<8x16xf32, #tpu.memory_space<vmem>>, vector<8x16xf32>,
    return
  }
  func.func @transform_0(%arg0: i32) -> (i32, i32) {
    %c0_i32 = arith.constant 0 : i32
    %c0_i32_0 = arith.constant 0 : i32
    return %arg0, %c0_i32 : i32, i32
  }
  func.func @transform_1(%arg0: i32) -> (i32, i32) {
    %c0_i32 = arith.constant 0 : i32
    %c0_i32_0 = arith.constant 0 : i32
    %c0_i32_1 = arith.constant 0 : i32
    return %c0_i32, %c0_i32_0 : i32, i32
  }
  func.func @transform_2(%arg0: i32) -> (i32, i32) {
    %c0_i32 = arith.constant 0 : i32
    %c0_i32_0 = arith.constant 0 : i32
    return %arg0, %c0_i32 : i32, i32
  }
  func.func @transform_3(%arg0: i32) -> (i32, i32) {
    %c0_i32 = arith.constant 0 : i32
    %c0_i32_0 = arith.constant 0 : i32
    return %arg0, %c0_i32 : i32, i32
  }
}

module attributes {stable_mosaic.version = 11 : i64} {
  func.func @_bn_relu_kernel(%arg0: i32, %arg1: memref<512x16xf32, #tpu.memory_space<vmem>>, %arg2: memref<1x16xf32, #tpu.memory_space<vmem>>, %arg3: memref<1x16xf32, #tpu.memory_space<vmem>>, %arg4: memref<512x16xbf16, #tpu.memory_space<vmem>>) attributes {dimension_semantics = [#tpu.dimension_semantics<parallel>], iteration_bounds = array<i64: 1>, scalar_prefetch = 0 : i64, scratch_operands = 0 : i64, tpu.core_type = #tpu.core_type<tc>, window_params = [{transform_indices = @transform_0, window_bounds = array<i64: 512, 16>}, {pipeline_mode = #tpu.pipeline_mode<synchronous>, transform_indices = @transform_1, window_bounds = array<i64: 1, 16>}, {pipeline_mode = #tpu.pipeline_mode<synchronous>, transform_indices = @transform_2, window_bounds = array<i64: 1, 16>}, {transform_indices = @transform_3, window_bounds = array<i64: 512, 16>}]} {
    %c0 = arith.constant 0 : index
    %c0_0 = arith.constant 0 : index
    %0 = vector.load %arg1[%c0, %c0_0] : memref<512x16xf32, #tpu.memory_space<vmem>>, vector<512x16xf32>
    %c0_1 = arith.constant 0 : index
    %c0_2 = arith.constant 0 : index
    %1 = vector.load %arg2[%c0_1, %c0_2] : memref<1x16xf32, #tpu.memory_space<vmem>>, vector<1x16xf32>
    %2 = vector.broadcast %1 : vector<1x16xf32> to vector<512x16xf32>
    %3 = arith.mulf %0, %2 : vector<512x16xf32>
    %c0_3 = arith.constant 0 : index
    %c0_4 = arith.constant 0 : index
    %4 = vector.load %arg3[%c0_3, %c0_4] : memref<1x16xf32, #tpu.memory_space<vmem>>, vector<1x16xf32>
    %5 = vector.broadcast %4 : vector<1x16xf32> to vector<512x16xf32>
    %6 = arith.addf %3, %5 : vector<512x16xf32>
    %cst = arith.constant 0.000000e+00 : f32
    %7 = vector.broadcast %cst : f32 to vector<512x16xf32>
    %8 = arith.maximumf %6, %7 : vector<512x16xf32>
    %9 = arith.truncf %8 : vector<512x16xf32> to vector<512x16xbf16>
    %c0_5 = arith.constant 0 : index
    %c0_6 = arith.constant 0 : index
    %10 = vector.load %arg4[%c0_5, %c0_6] : memref<512x16xbf16, #tpu.memory_space<vmem>>, vector<512x16xbf16>
    tpu.vector_store %arg4[%c0_5, %c0_6], %9 {strides = array<i32>} : memref<512x16xbf16, #tpu.memory_space<vmem>>, vector<512x16xbf16>,
    return
  }
  func.func @transform_0(%arg0: i32) -> (i32, i32) {
    %c0_i32 = arith.constant 0 : i32
    %c0_i32_0 = arith.constant 0 : i32
    return %arg0, %c0_i32 : i32, i32
  }
  func.func @transform_1(%arg0: i32) -> (i32, i32) {
    %c0_i32 = arith.constant 0 : i32
    %c0_i32_0 = arith.constant 0 : i32
    %c0_i32_1 = arith.constant 0 : i32
    return %c0_i32, %c0_i32_0 : i32, i32
  }
  func.func @transform_2(%arg0: i32) -> (i32, i32) {
    %c0_i32 = arith.constant 0 : i32
    %c0_i32_0 = arith.constant 0 : i32
    %c0_i32_1 = arith.constant 0 : i32
    return %c0_i32, %c0_i32_0 : i32, i32
  }
  func.func @transform_3(%arg0: i32) -> (i32, i32) {
    %c0_i32 = arith.constant 0 : i32
    %c0_i32_0 = arith.constant 0 : i32
    return %arg0, %c0_i32 : i32, i32
  }
}

module attributes {stable_mosaic.version = 11 : i64} {
  func.func @_conv_gemm_stats_kernel(%arg0: i32, %arg1: memref<512x144xbf16, #tpu.memory_space<vmem>>, %arg2: memref<144x16xbf16, #tpu.memory_space<vmem>>, %arg3: memref<512x16xf32, #tpu.memory_space<vmem>>, %arg4: memref<8x16xf32, #tpu.memory_space<vmem>>) attributes {dimension_semantics = [#tpu.dimension_semantics<parallel>], iteration_bounds = array<i64: 1>, scalar_prefetch = 0 : i64, scratch_operands = 0 : i64, tpu.core_type = #tpu.core_type<tc>, window_params = [{transform_indices = @transform_0, window_bounds = array<i64: 512, 144>}, {pipeline_mode = #tpu.pipeline_mode<synchronous>, transform_indices = @transform_1, window_bounds = array<i64: 144, 16>}, {transform_indices = @transform_2, window_bounds = array<i64: 512, 16>}, {transform_indices = @transform_3, window_bounds = array<i64: 8, 16>}]} {
    %c0 = arith.constant 0 : index
    %c0_0 = arith.constant 0 : index
    %0 = vector.load %arg1[%c0, %c0_0] : memref<512x144xbf16, #tpu.memory_space<vmem>>, vector<512x144xbf16>
    %c0_1 = arith.constant 0 : index
    %c0_2 = arith.constant 0 : index
    %1 = vector.load %arg2[%c0_1, %c0_2] : memref<144x16xbf16, #tpu.memory_space<vmem>>, vector<144x16xbf16>
    %cst = arith.constant dense<0.000000e+00> : vector<512x16xf32>
    %2 = tpu.matmul %0, %1, %cst {dimension_numbers = #tpu.dot_dimension_numbers<[1], [0], [0], [1], [0, 0, 1, 1], [], []>} : vector<512x144xbf16>, vector<144x16xbf16>, vector<512x16xf32> -> vector<512x16xf32>
    %c0_3 = arith.constant 0 : index
    %c0_4 = arith.constant 0 : index
    %3 = vector.load %arg3[%c0_3, %c0_4] : memref<512x16xf32, #tpu.memory_space<vmem>>, vector<512x16xf32>
    tpu.vector_store %arg3[%c0_3, %c0_4], %2 {strides = array<i32>} : memref<512x16xf32, #tpu.memory_space<vmem>>, vector<512x16xf32>,
    %cst_5 = arith.constant dense<0.000000e+00> : vector<16xf32>
    %4 = vector.multi_reduction <add>, %2, %cst_5 [0] : vector<512x16xf32> to vector<16xf32>
    %5 = vector.shape_cast %4 : vector<16xf32> to vector<1x16xf32>
    %6 = arith.mulf %2, %2 : vector<512x16xf32>
    %cst_6 = arith.constant dense<0.000000e+00> : vector<16xf32>
    %7 = vector.multi_reduction <add>, %6, %cst_6 [0] : vector<512x16xf32> to vector<16xf32>
    %8 = vector.shape_cast %7 : vector<16xf32> to vector<1x16xf32>
    %9 = tpu.iota {dimensions = array<i32: 0>} : vector<8x16xi32>
    %c0_i32 = arith.constant 0 : i32
    %10 = vector.broadcast %c0_i32 : i32 to vector<8x16xi32>
    %11 = arith.cmpi eq, %9, %10 : vector<8x16xi32>
    %cst_7 = arith.constant 0.000000e+00 : f32
    %12 = vector.shape_cast %5 : vector<1x16xf32> to vector<1x16xf32>
    %13 = vector.broadcast %12 : vector<1x16xf32> to vector<8x16xf32>
    %14 = vector.broadcast %cst_7 : f32 to vector<8x16xf32>
    %15 = arith.select %11, %13, %14 : vector<8x16xi1>, vector<8x16xf32>
    %c1_i32 = arith.constant 1 : i32
    %16 = vector.broadcast %c1_i32 : i32 to vector<8x16xi32>
    %17 = arith.cmpi eq, %9, %16 : vector<8x16xi32>
    %cst_8 = arith.constant 0.000000e+00 : f32
    %18 = vector.shape_cast %8 : vector<1x16xf32> to vector<1x16xf32>
    %19 = vector.broadcast %18 : vector<1x16xf32> to vector<8x16xf32>
    %20 = vector.broadcast %cst_8 : f32 to vector<8x16xf32>
    %21 = arith.select %17, %19, %20 : vector<8x16xi1>, vector<8x16xf32>
    %22 = arith.addf %15, %21 : vector<8x16xf32>
    %c0_9 = arith.constant 0 : index
    %c0_10 = arith.constant 0 : index
    %23 = vector.load %arg4[%c0_9, %c0_10] : memref<8x16xf32, #tpu.memory_space<vmem>>, vector<8x16xf32>
    tpu.vector_store %arg4[%c0_9, %c0_10], %22 {strides = array<i32>} : memref<8x16xf32, #tpu.memory_space<vmem>>, vector<8x16xf32>,
    return
  }
  func.func @transform_0(%arg0: i32) -> (i32, i32) {
    %c0_i32 = arith.constant 0 : i32
    %c0_i32_0 = arith.constant 0 : i32
    return %arg0, %c0_i32 : i32, i32
  }
  func.func @transform_1(%arg0: i32) -> (i32, i32) {
    %c0_i32 = arith.constant 0 : i32
    %c0_i32_0 = arith.constant 0 : i32
    %c0_i32_1 = arith.constant 0 : i32
    return %c0_i32, %c0_i32_0 : i32, i32
  }
  func.func @transform_2(%arg0: i32) -> (i32, i32) {
    %c0_i32 = arith.constant 0 : i32
    %c0_i32_0 = arith.constant 0 : i32
    return %arg0, %c0_i32 : i32, i32
  }
  func.func @transform_3(%arg0: i32) -> (i32, i32) {
    %c0_i32 = arith.constant 0 : i32
    %c0_i32_0 = arith.constant 0 : i32
    return %arg0, %c0_i32 : i32, i32
  }
}

module attributes {stable_mosaic.version = 11 : i64} {
  func.func @_bn_res_relu_kernel(%arg0: i32, %arg1: memref<512x16xf32, #tpu.memory_space<vmem>>, %arg2: memref<512x16xbf16, #tpu.memory_space<vmem>>, %arg3: memref<1x16xf32, #tpu.memory_space<vmem>>, %arg4: memref<1x16xf32, #tpu.memory_space<vmem>>, %arg5: memref<512x16xbf16, #tpu.memory_space<vmem>>) attributes {dimension_semantics = [#tpu.dimension_semantics<parallel>], iteration_bounds = array<i64: 1>, scalar_prefetch = 0 : i64, scratch_operands = 0 : i64, tpu.core_type = #tpu.core_type<tc>, window_params = [{transform_indices = @transform_0, window_bounds = array<i64: 512, 16>}, {transform_indices = @transform_1, window_bounds = array<i64: 512, 16>}, {pipeline_mode = #tpu.pipeline_mode<synchronous>, transform_indices = @transform_2, window_bounds = array<i64: 1, 16>}, {pipeline_mode = #tpu.pipeline_mode<synchronous>, transform_indices = @transform_3, window_bounds = array<i64: 1, 16>}, {transform_indices = @transform_4, window_bounds = array<i64: 512, 16>}]} {
    %c0 = arith.constant 0 : index
    %c0_0 = arith.constant 0 : index
    %0 = vector.load %arg1[%c0, %c0_0] : memref<512x16xf32, #tpu.memory_space<vmem>>, vector<512x16xf32>
    %c0_1 = arith.constant 0 : index
    %c0_2 = arith.constant 0 : index
    %1 = vector.load %arg3[%c0_1, %c0_2] : memref<1x16xf32, #tpu.memory_space<vmem>>, vector<1x16xf32>
    %2 = vector.broadcast %1 : vector<1x16xf32> to vector<512x16xf32>
    %3 = arith.mulf %0, %2 : vector<512x16xf32>
    %c0_3 = arith.constant 0 : index
    %c0_4 = arith.constant 0 : index
    %4 = vector.load %arg4[%c0_3, %c0_4] : memref<1x16xf32, #tpu.memory_space<vmem>>, vector<1x16xf32>
    %5 = vector.broadcast %4 : vector<1x16xf32> to vector<512x16xf32>
    %6 = arith.addf %3, %5 : vector<512x16xf32>
    %c0_5 = arith.constant 0 : index
    %c0_6 = arith.constant 0 : index
    %7 = vector.load %arg2[%c0_5, %c0_6] : memref<512x16xbf16, #tpu.memory_space<vmem>>, vector<512x16xbf16>
    %8 = arith.extf %7 : vector<512x16xbf16> to vector<512x16xf32>
    %9 = arith.addf %6, %8 : vector<512x16xf32>
    %cst = arith.constant 0.000000e+00 : f32
    %10 = vector.broadcast %cst : f32 to vector<512x16xf32>
    %11 = arith.maximumf %9, %10 : vector<512x16xf32>
    %12 = arith.truncf %11 : vector<512x16xf32> to vector<512x16xbf16>
    %c0_7 = arith.constant 0 : index
    %c0_8 = arith.constant 0 : index
    %13 = vector.load %arg5[%c0_7, %c0_8] : memref<512x16xbf16, #tpu.memory_space<vmem>>, vector<512x16xbf16>
    tpu.vector_store %arg5[%c0_7, %c0_8], %12 {strides = array<i32>} : memref<512x16xbf16, #tpu.memory_space<vmem>>, vector<512x16xbf16>,
    return
  }
  func.func @transform_0(%arg0: i32) -> (i32, i32) {
    %c0_i32 = arith.constant 0 : i32
    %c0_i32_0 = arith.constant 0 : i32
    return %arg0, %c0_i32 : i32, i32
  }
  func.func @transform_1(%arg0: i32) -> (i32, i32) {
    %c0_i32 = arith.constant 0 : i32
    %c0_i32_0 = arith.constant 0 : i32
    return %arg0, %c0_i32 : i32, i32
  }
  func.func @transform_2(%arg0: i32) -> (i32, i32) {
    %c0_i32 = arith.constant 0 : i32
    %c0_i32_0 = arith.constant 0 : i32
    %c0_i32_1 = arith.constant 0 : i32
    return %c0_i32, %c0_i32_0 : i32, i32
  }
  func.func @transform_3(%arg0: i32) -> (i32, i32) {
    %c0_i32 = arith.constant 0 : i32
    %c0_i32_0 = arith.constant 0 : i32
    %c0_i32_1 = arith.constant 0 : i32
    return %c0_i32, %c0_i32_0 : i32, i32
  }
  func.func @transform_4(%arg0: i32) -> (i32, i32) {
    %c0_i32 = arith.constant 0 : i32
    %c0_i32_0 = arith.constant 0 : i32
    return %arg0, %c0_i32 : i32, i32
  }
}

module attributes {stable_mosaic.version = 11 : i64} {
  func.func @_conv_gemm_stats_kernel(%arg0: i32, %arg1: memref<128x144xbf16, #tpu.memory_space<vmem>>, %arg2: memref<144x32xbf16, #tpu.memory_space<vmem>>, %arg3: memref<128x32xf32, #tpu.memory_space<vmem>>, %arg4: memref<8x32xf32, #tpu.memory_space<vmem>>) attributes {dimension_semantics = [#tpu.dimension_semantics<parallel>], iteration_bounds = array<i64: 1>, scalar_prefetch = 0 : i64, scratch_operands = 0 : i64, tpu.core_type = #tpu.core_type<tc>, window_params = [{transform_indices = @transform_0, window_bounds = array<i64: 128, 144>}, {pipeline_mode = #tpu.pipeline_mode<synchronous>, transform_indices = @transform_1, window_bounds = array<i64: 144, 32>}, {transform_indices = @transform_2, window_bounds = array<i64: 128, 32>}, {transform_indices = @transform_3, window_bounds = array<i64: 8, 32>}]} {
    %c0 = arith.constant 0 : index
    %c0_0 = arith.constant 0 : index
    %0 = vector.load %arg1[%c0, %c0_0] : memref<128x144xbf16, #tpu.memory_space<vmem>>, vector<128x144xbf16>
    %c0_1 = arith.constant 0 : index
    %c0_2 = arith.constant 0 : index
    %1 = vector.load %arg2[%c0_1, %c0_2] : memref<144x32xbf16, #tpu.memory_space<vmem>>, vector<144x32xbf16>
    %cst = arith.constant dense<0.000000e+00> : vector<128x32xf32>
    %2 = tpu.matmul %0, %1, %cst {dimension_numbers = #tpu.dot_dimension_numbers<[1], [0], [0], [1], [0, 0, 1, 1], [], []>} : vector<128x144xbf16>, vector<144x32xbf16>, vector<128x32xf32> -> vector<128x32xf32>
    %c0_3 = arith.constant 0 : index
    %c0_4 = arith.constant 0 : index
    %3 = vector.load %arg3[%c0_3, %c0_4] : memref<128x32xf32, #tpu.memory_space<vmem>>, vector<128x32xf32>
    tpu.vector_store %arg3[%c0_3, %c0_4], %2 {strides = array<i32>} : memref<128x32xf32, #tpu.memory_space<vmem>>, vector<128x32xf32>,
    %cst_5 = arith.constant dense<0.000000e+00> : vector<32xf32>
    %4 = vector.multi_reduction <add>, %2, %cst_5 [0] : vector<128x32xf32> to vector<32xf32>
    %5 = vector.shape_cast %4 : vector<32xf32> to vector<1x32xf32>
    %6 = arith.mulf %2, %2 : vector<128x32xf32>
    %cst_6 = arith.constant dense<0.000000e+00> : vector<32xf32>
    %7 = vector.multi_reduction <add>, %6, %cst_6 [0] : vector<128x32xf32> to vector<32xf32>
    %8 = vector.shape_cast %7 : vector<32xf32> to vector<1x32xf32>
    %9 = tpu.iota {dimensions = array<i32: 0>} : vector<8x32xi32>
    %c0_i32 = arith.constant 0 : i32
    %10 = vector.broadcast %c0_i32 : i32 to vector<8x32xi32>
    %11 = arith.cmpi eq, %9, %10 : vector<8x32xi32>
    %cst_7 = arith.constant 0.000000e+00 : f32
    %12 = vector.shape_cast %5 : vector<1x32xf32> to vector<1x32xf32>
    %13 = vector.broadcast %12 : vector<1x32xf32> to vector<8x32xf32>
    %14 = vector.broadcast %cst_7 : f32 to vector<8x32xf32>
    %15 = arith.select %11, %13, %14 : vector<8x32xi1>, vector<8x32xf32>
    %c1_i32 = arith.constant 1 : i32
    %16 = vector.broadcast %c1_i32 : i32 to vector<8x32xi32>
    %17 = arith.cmpi eq, %9, %16 : vector<8x32xi32>
    %cst_8 = arith.constant 0.000000e+00 : f32
    %18 = vector.shape_cast %8 : vector<1x32xf32> to vector<1x32xf32>
    %19 = vector.broadcast %18 : vector<1x32xf32> to vector<8x32xf32>
    %20 = vector.broadcast %cst_8 : f32 to vector<8x32xf32>
    %21 = arith.select %17, %19, %20 : vector<8x32xi1>, vector<8x32xf32>
    %22 = arith.addf %15, %21 : vector<8x32xf32>
    %c0_9 = arith.constant 0 : index
    %c0_10 = arith.constant 0 : index
    %23 = vector.load %arg4[%c0_9, %c0_10] : memref<8x32xf32, #tpu.memory_space<vmem>>, vector<8x32xf32>
    tpu.vector_store %arg4[%c0_9, %c0_10], %22 {strides = array<i32>} : memref<8x32xf32, #tpu.memory_space<vmem>>, vector<8x32xf32>,
    return
  }
  func.func @transform_0(%arg0: i32) -> (i32, i32) {
    %c0_i32 = arith.constant 0 : i32
    %c0_i32_0 = arith.constant 0 : i32
    return %arg0, %c0_i32 : i32, i32
  }
  func.func @transform_1(%arg0: i32) -> (i32, i32) {
    %c0_i32 = arith.constant 0 : i32
    %c0_i32_0 = arith.constant 0 : i32
    %c0_i32_1 = arith.constant 0 : i32
    return %c0_i32, %c0_i32_0 : i32, i32
  }
  func.func @transform_2(%arg0: i32) -> (i32, i32) {
    %c0_i32 = arith.constant 0 : i32
    %c0_i32_0 = arith.constant 0 : i32
    return %arg0, %c0_i32 : i32, i32
  }
  func.func @transform_3(%arg0: i32) -> (i32, i32) {
    %c0_i32 = arith.constant 0 : i32
    %c0_i32_0 = arith.constant 0 : i32
    return %arg0, %c0_i32 : i32, i32
  }
}

module attributes {stable_mosaic.version = 11 : i64} {
  func.func @_bn_relu_kernel(%arg0: i32, %arg1: memref<128x32xf32, #tpu.memory_space<vmem>>, %arg2: memref<1x32xf32, #tpu.memory_space<vmem>>, %arg3: memref<1x32xf32, #tpu.memory_space<vmem>>, %arg4: memref<128x32xbf16, #tpu.memory_space<vmem>>) attributes {dimension_semantics = [#tpu.dimension_semantics<parallel>], iteration_bounds = array<i64: 1>, scalar_prefetch = 0 : i64, scratch_operands = 0 : i64, tpu.core_type = #tpu.core_type<tc>, window_params = [{transform_indices = @transform_0, window_bounds = array<i64: 128, 32>}, {pipeline_mode = #tpu.pipeline_mode<synchronous>, transform_indices = @transform_1, window_bounds = array<i64: 1, 32>}, {pipeline_mode = #tpu.pipeline_mode<synchronous>, transform_indices = @transform_2, window_bounds = array<i64: 1, 32>}, {transform_indices = @transform_3, window_bounds = array<i64: 128, 32>}]} {
    %c0 = arith.constant 0 : index
    %c0_0 = arith.constant 0 : index
    %0 = vector.load %arg1[%c0, %c0_0] : memref<128x32xf32, #tpu.memory_space<vmem>>, vector<128x32xf32>
    %c0_1 = arith.constant 0 : index
    %c0_2 = arith.constant 0 : index
    %1 = vector.load %arg2[%c0_1, %c0_2] : memref<1x32xf32, #tpu.memory_space<vmem>>, vector<1x32xf32>
    %2 = vector.broadcast %1 : vector<1x32xf32> to vector<128x32xf32>
    %3 = arith.mulf %0, %2 : vector<128x32xf32>
    %c0_3 = arith.constant 0 : index
    %c0_4 = arith.constant 0 : index
    %4 = vector.load %arg3[%c0_3, %c0_4] : memref<1x32xf32, #tpu.memory_space<vmem>>, vector<1x32xf32>
    %5 = vector.broadcast %4 : vector<1x32xf32> to vector<128x32xf32>
    %6 = arith.addf %3, %5 : vector<128x32xf32>
    %cst = arith.constant 0.000000e+00 : f32
    %7 = vector.broadcast %cst : f32 to vector<128x32xf32>
    %8 = arith.maximumf %6, %7 : vector<128x32xf32>
    %9 = arith.truncf %8 : vector<128x32xf32> to vector<128x32xbf16>
    %c0_5 = arith.constant 0 : index
    %c0_6 = arith.constant 0 : index
    %10 = vector.load %arg4[%c0_5, %c0_6] : memref<128x32xbf16, #tpu.memory_space<vmem>>, vector<128x32xbf16>
    tpu.vector_store %arg4[%c0_5, %c0_6], %9 {strides = array<i32>} : memref<128x32xbf16, #tpu.memory_space<vmem>>, vector<128x32xbf16>,
    return
  }
  func.func @transform_0(%arg0: i32) -> (i32, i32) {
    %c0_i32 = arith.constant 0 : i32
    %c0_i32_0 = arith.constant 0 : i32
    return %arg0, %c0_i32 : i32, i32
  }
  func.func @transform_1(%arg0: i32) -> (i32, i32) {
    %c0_i32 = arith.constant 0 : i32
    %c0_i32_0 = arith.constant 0 : i32
    %c0_i32_1 = arith.constant 0 : i32
    return %c0_i32, %c0_i32_0 : i32, i32
  }
  func.func @transform_2(%arg0: i32) -> (i32, i32) {
    %c0_i32 = arith.constant 0 : i32
    %c0_i32_0 = arith.constant 0 : i32
    %c0_i32_1 = arith.constant 0 : i32
    return %c0_i32, %c0_i32_0 : i32, i32
  }
  func.func @transform_3(%arg0: i32) -> (i32, i32) {
    %c0_i32 = arith.constant 0 : i32
    %c0_i32_0 = arith.constant 0 : i32
    return %arg0, %c0_i32 : i32, i32
  }
}

module attributes {stable_mosaic.version = 11 : i64} {
  func.func @_conv_gemm_stats_kernel(%arg0: i32, %arg1: memref<128x288xbf16, #tpu.memory_space<vmem>>, %arg2: memref<288x32xbf16, #tpu.memory_space<vmem>>, %arg3: memref<128x32xf32, #tpu.memory_space<vmem>>, %arg4: memref<8x32xf32, #tpu.memory_space<vmem>>) attributes {dimension_semantics = [#tpu.dimension_semantics<parallel>], iteration_bounds = array<i64: 1>, scalar_prefetch = 0 : i64, scratch_operands = 0 : i64, tpu.core_type = #tpu.core_type<tc>, window_params = [{transform_indices = @transform_0, window_bounds = array<i64: 128, 288>}, {pipeline_mode = #tpu.pipeline_mode<synchronous>, transform_indices = @transform_1, window_bounds = array<i64: 288, 32>}, {transform_indices = @transform_2, window_bounds = array<i64: 128, 32>}, {transform_indices = @transform_3, window_bounds = array<i64: 8, 32>}]} {
    %c0 = arith.constant 0 : index
    %c0_0 = arith.constant 0 : index
    %0 = vector.load %arg1[%c0, %c0_0] : memref<128x288xbf16, #tpu.memory_space<vmem>>, vector<128x288xbf16>
    %c0_1 = arith.constant 0 : index
    %c0_2 = arith.constant 0 : index
    %1 = vector.load %arg2[%c0_1, %c0_2] : memref<288x32xbf16, #tpu.memory_space<vmem>>, vector<288x32xbf16>
    %cst = arith.constant dense<0.000000e+00> : vector<128x32xf32>
    %2 = tpu.matmul %0, %1, %cst {dimension_numbers = #tpu.dot_dimension_numbers<[1], [0], [0], [1], [0, 0, 1, 1], [], []>} : vector<128x288xbf16>, vector<288x32xbf16>, vector<128x32xf32> -> vector<128x32xf32>
    %c0_3 = arith.constant 0 : index
    %c0_4 = arith.constant 0 : index
    %3 = vector.load %arg3[%c0_3, %c0_4] : memref<128x32xf32, #tpu.memory_space<vmem>>, vector<128x32xf32>
    tpu.vector_store %arg3[%c0_3, %c0_4], %2 {strides = array<i32>} : memref<128x32xf32, #tpu.memory_space<vmem>>, vector<128x32xf32>,
    %cst_5 = arith.constant dense<0.000000e+00> : vector<32xf32>
    %4 = vector.multi_reduction <add>, %2, %cst_5 [0] : vector<128x32xf32> to vector<32xf32>
    %5 = vector.shape_cast %4 : vector<32xf32> to vector<1x32xf32>
    %6 = arith.mulf %2, %2 : vector<128x32xf32>
    %cst_6 = arith.constant dense<0.000000e+00> : vector<32xf32>
    %7 = vector.multi_reduction <add>, %6, %cst_6 [0] : vector<128x32xf32> to vector<32xf32>
    %8 = vector.shape_cast %7 : vector<32xf32> to vector<1x32xf32>
    %9 = tpu.iota {dimensions = array<i32: 0>} : vector<8x32xi32>
    %c0_i32 = arith.constant 0 : i32
    %10 = vector.broadcast %c0_i32 : i32 to vector<8x32xi32>
    %11 = arith.cmpi eq, %9, %10 : vector<8x32xi32>
    %cst_7 = arith.constant 0.000000e+00 : f32
    %12 = vector.shape_cast %5 : vector<1x32xf32> to vector<1x32xf32>
    %13 = vector.broadcast %12 : vector<1x32xf32> to vector<8x32xf32>
    %14 = vector.broadcast %cst_7 : f32 to vector<8x32xf32>
    %15 = arith.select %11, %13, %14 : vector<8x32xi1>, vector<8x32xf32>
    %c1_i32 = arith.constant 1 : i32
    %16 = vector.broadcast %c1_i32 : i32 to vector<8x32xi32>
    %17 = arith.cmpi eq, %9, %16 : vector<8x32xi32>
    %cst_8 = arith.constant 0.000000e+00 : f32
    %18 = vector.shape_cast %8 : vector<1x32xf32> to vector<1x32xf32>
    %19 = vector.broadcast %18 : vector<1x32xf32> to vector<8x32xf32>
    %20 = vector.broadcast %cst_8 : f32 to vector<8x32xf32>
    %21 = arith.select %17, %19, %20 : vector<8x32xi1>, vector<8x32xf32>
    %22 = arith.addf %15, %21 : vector<8x32xf32>
    %c0_9 = arith.constant 0 : index
    %c0_10 = arith.constant 0 : index
    %23 = vector.load %arg4[%c0_9, %c0_10] : memref<8x32xf32, #tpu.memory_space<vmem>>, vector<8x32xf32>
    tpu.vector_store %arg4[%c0_9, %c0_10], %22 {strides = array<i32>} : memref<8x32xf32, #tpu.memory_space<vmem>>, vector<8x32xf32>,
    return
  }
  func.func @transform_0(%arg0: i32) -> (i32, i32) {
    %c0_i32 = arith.constant 0 : i32
    %c0_i32_0 = arith.constant 0 : i32
    return %arg0, %c0_i32 : i32, i32
  }
  func.func @transform_1(%arg0: i32) -> (i32, i32) {
    %c0_i32 = arith.constant 0 : i32
    %c0_i32_0 = arith.constant 0 : i32
    %c0_i32_1 = arith.constant 0 : i32
    return %c0_i32, %c0_i32_0 : i32, i32
  }
  func.func @transform_2(%arg0: i32) -> (i32, i32) {
    %c0_i32 = arith.constant 0 : i32
    %c0_i32_0 = arith.constant 0 : i32
    return %arg0, %c0_i32 : i32, i32
  }
  func.func @transform_3(%arg0: i32) -> (i32, i32) {
    %c0_i32 = arith.constant 0 : i32
    %c0_i32_0 = arith.constant 0 : i32
    return %arg0, %c0_i32 : i32, i32
  }
}

module attributes {stable_mosaic.version = 11 : i64} {
  func.func @_bn_res_relu_kernel(%arg0: i32, %arg1: memref<128x32xf32, #tpu.memory_space<vmem>>, %arg2: memref<128x32xbf16, #tpu.memory_space<vmem>>, %arg3: memref<1x32xf32, #tpu.memory_space<vmem>>, %arg4: memref<1x32xf32, #tpu.memory_space<vmem>>, %arg5: memref<128x32xbf16, #tpu.memory_space<vmem>>) attributes {dimension_semantics = [#tpu.dimension_semantics<parallel>], iteration_bounds = array<i64: 1>, scalar_prefetch = 0 : i64, scratch_operands = 0 : i64, tpu.core_type = #tpu.core_type<tc>, window_params = [{transform_indices = @transform_0, window_bounds = array<i64: 128, 32>}, {transform_indices = @transform_1, window_bounds = array<i64: 128, 32>}, {pipeline_mode = #tpu.pipeline_mode<synchronous>, transform_indices = @transform_2, window_bounds = array<i64: 1, 32>}, {pipeline_mode = #tpu.pipeline_mode<synchronous>, transform_indices = @transform_3, window_bounds = array<i64: 1, 32>}, {transform_indices = @transform_4, window_bounds = array<i64: 128, 32>}]} {
    %c0 = arith.constant 0 : index
    %c0_0 = arith.constant 0 : index
    %0 = vector.load %arg1[%c0, %c0_0] : memref<128x32xf32, #tpu.memory_space<vmem>>, vector<128x32xf32>
    %c0_1 = arith.constant 0 : index
    %c0_2 = arith.constant 0 : index
    %1 = vector.load %arg3[%c0_1, %c0_2] : memref<1x32xf32, #tpu.memory_space<vmem>>, vector<1x32xf32>
    %2 = vector.broadcast %1 : vector<1x32xf32> to vector<128x32xf32>
    %3 = arith.mulf %0, %2 : vector<128x32xf32>
    %c0_3 = arith.constant 0 : index
    %c0_4 = arith.constant 0 : index
    %4 = vector.load %arg4[%c0_3, %c0_4] : memref<1x32xf32, #tpu.memory_space<vmem>>, vector<1x32xf32>
    %5 = vector.broadcast %4 : vector<1x32xf32> to vector<128x32xf32>
    %6 = arith.addf %3, %5 : vector<128x32xf32>
    %c0_5 = arith.constant 0 : index
    %c0_6 = arith.constant 0 : index
    %7 = vector.load %arg2[%c0_5, %c0_6] : memref<128x32xbf16, #tpu.memory_space<vmem>>, vector<128x32xbf16>
    %8 = arith.extf %7 : vector<128x32xbf16> to vector<128x32xf32>
    %9 = arith.addf %6, %8 : vector<128x32xf32>
    %cst = arith.constant 0.000000e+00 : f32
    %10 = vector.broadcast %cst : f32 to vector<128x32xf32>
    %11 = arith.maximumf %9, %10 : vector<128x32xf32>
    %12 = arith.truncf %11 : vector<128x32xf32> to vector<128x32xbf16>
    %c0_7 = arith.constant 0 : index
    %c0_8 = arith.constant 0 : index
    %13 = vector.load %arg5[%c0_7, %c0_8] : memref<128x32xbf16, #tpu.memory_space<vmem>>, vector<128x32xbf16>
    tpu.vector_store %arg5[%c0_7, %c0_8], %12 {strides = array<i32>} : memref<128x32xbf16, #tpu.memory_space<vmem>>, vector<128x32xbf16>,
    return
  }
  func.func @transform_0(%arg0: i32) -> (i32, i32) {
    %c0_i32 = arith.constant 0 : i32
    %c0_i32_0 = arith.constant 0 : i32
    return %arg0, %c0_i32 : i32, i32
  }
  func.func @transform_1(%arg0: i32) -> (i32, i32) {
    %c0_i32 = arith.constant 0 : i32
    %c0_i32_0 = arith.constant 0 : i32
    return %arg0, %c0_i32 : i32, i32
  }
  func.func @transform_2(%arg0: i32) -> (i32, i32) {
    %c0_i32 = arith.constant 0 : i32
    %c0_i32_0 = arith.constant 0 : i32
    %c0_i32_1 = arith.constant 0 : i32
    return %c0_i32, %c0_i32_0 : i32, i32
  }
  func.func @transform_3(%arg0: i32) -> (i32, i32) {
    %c0_i32 = arith.constant 0 : i32
    %c0_i32_0 = arith.constant 0 : i32
    %c0_i32_1 = arith.constant 0 : i32
    return %c0_i32, %c0_i32_0 : i32, i32
  }
  func.func @transform_4(%arg0: i32) -> (i32, i32) {
    %c0_i32 = arith.constant 0 : i32
    %c0_i32_0 = arith.constant 0 : i32
    return %arg0, %c0_i32 : i32, i32
  }
}

module attributes {stable_mosaic.version = 11 : i64} {
  func.func @_bn_relu_kernel(%arg0: i32, %arg1: memref<32x64xf32, #tpu.memory_space<vmem>>, %arg2: memref<1x64xf32, #tpu.memory_space<vmem>>, %arg3: memref<1x64xf32, #tpu.memory_space<vmem>>, %arg4: memref<32x64xbf16, #tpu.memory_space<vmem>>) attributes {dimension_semantics = [#tpu.dimension_semantics<parallel>], iteration_bounds = array<i64: 1>, scalar_prefetch = 0 : i64, scratch_operands = 0 : i64, tpu.core_type = #tpu.core_type<tc>, window_params = [{transform_indices = @transform_0, window_bounds = array<i64: 32, 64>}, {pipeline_mode = #tpu.pipeline_mode<synchronous>, transform_indices = @transform_1, window_bounds = array<i64: 1, 64>}, {pipeline_mode = #tpu.pipeline_mode<synchronous>, transform_indices = @transform_2, window_bounds = array<i64: 1, 64>}, {transform_indices = @transform_3, window_bounds = array<i64: 32, 64>}]} {
    %c0 = arith.constant 0 : index
    %c0_0 = arith.constant 0 : index
    %0 = vector.load %arg1[%c0, %c0_0] : memref<32x64xf32, #tpu.memory_space<vmem>>, vector<32x64xf32>
    %c0_1 = arith.constant 0 : index
    %c0_2 = arith.constant 0 : index
    %1 = vector.load %arg2[%c0_1, %c0_2] : memref<1x64xf32, #tpu.memory_space<vmem>>, vector<1x64xf32>
    %2 = vector.broadcast %1 : vector<1x64xf32> to vector<32x64xf32>
    %3 = arith.mulf %0, %2 : vector<32x64xf32>
    %c0_3 = arith.constant 0 : index
    %c0_4 = arith.constant 0 : index
    %4 = vector.load %arg3[%c0_3, %c0_4] : memref<1x64xf32, #tpu.memory_space<vmem>>, vector<1x64xf32>
    %5 = vector.broadcast %4 : vector<1x64xf32> to vector<32x64xf32>
    %6 = arith.addf %3, %5 : vector<32x64xf32>
    %cst = arith.constant 0.000000e+00 : f32
    %7 = vector.broadcast %cst : f32 to vector<32x64xf32>
    %8 = arith.maximumf %6, %7 : vector<32x64xf32>
    %9 = arith.truncf %8 : vector<32x64xf32> to vector<32x64xbf16>
    %c0_5 = arith.constant 0 : index
    %c0_6 = arith.constant 0 : index
    %10 = vector.load %arg4[%c0_5, %c0_6] : memref<32x64xbf16, #tpu.memory_space<vmem>>, vector<32x64xbf16>
    tpu.vector_store %arg4[%c0_5, %c0_6], %9 {strides = array<i32>} : memref<32x64xbf16, #tpu.memory_space<vmem>>, vector<32x64xbf16>,
    return
  }
  func.func @transform_0(%arg0: i32) -> (i32, i32) {
    %c0_i32 = arith.constant 0 : i32
    %c0_i32_0 = arith.constant 0 : i32
    return %arg0, %c0_i32 : i32, i32
  }
  func.func @transform_1(%arg0: i32) -> (i32, i32) {
    %c0_i32 = arith.constant 0 : i32
    %c0_i32_0 = arith.constant 0 : i32
    %c0_i32_1 = arith.constant 0 : i32
    return %c0_i32, %c0_i32_0 : i32, i32
  }
  func.func @transform_2(%arg0: i32) -> (i32, i32) {
    %c0_i32 = arith.constant 0 : i32
    %c0_i32_0 = arith.constant 0 : i32
    %c0_i32_1 = arith.constant 0 : i32
    return %c0_i32, %c0_i32_0 : i32, i32
  }
  func.func @transform_3(%arg0: i32) -> (i32, i32) {
    %c0_i32 = arith.constant 0 : i32
    %c0_i32_0 = arith.constant 0 : i32
    return %arg0, %c0_i32 : i32, i32
  }
}

module attributes {stable_mosaic.version = 11 : i64} {
  func.func @_conv_gemm_stats_kernel(%arg0: i32, %arg1: memref<32x288xbf16, #tpu.memory_space<vmem>>, %arg2: memref<288x64xbf16, #tpu.memory_space<vmem>>, %arg3: memref<32x64xf32, #tpu.memory_space<vmem>>, %arg4: memref<8x64xf32, #tpu.memory_space<vmem>>) attributes {dimension_semantics = [#tpu.dimension_semantics<parallel>], iteration_bounds = array<i64: 1>, scalar_prefetch = 0 : i64, scratch_operands = 0 : i64, tpu.core_type = #tpu.core_type<tc>, window_params = [{transform_indices = @transform_0, window_bounds = array<i64: 32, 288>}, {pipeline_mode = #tpu.pipeline_mode<synchronous>, transform_indices = @transform_1, window_bounds = array<i64: 288, 64>}, {transform_indices = @transform_2, window_bounds = array<i64: 32, 64>}, {transform_indices = @transform_3, window_bounds = array<i64: 8, 64>}]} {
    %c0 = arith.constant 0 : index
    %c0_0 = arith.constant 0 : index
    %0 = vector.load %arg1[%c0, %c0_0] : memref<32x288xbf16, #tpu.memory_space<vmem>>, vector<32x288xbf16>
    %c0_1 = arith.constant 0 : index
    %c0_2 = arith.constant 0 : index
    %1 = vector.load %arg2[%c0_1, %c0_2] : memref<288x64xbf16, #tpu.memory_space<vmem>>, vector<288x64xbf16>
    %cst = arith.constant dense<0.000000e+00> : vector<32x64xf32>
    %2 = tpu.matmul %0, %1, %cst {dimension_numbers = #tpu.dot_dimension_numbers<[1], [0], [0], [1], [0, 0, 1, 1], [], []>} : vector<32x288xbf16>, vector<288x64xbf16>, vector<32x64xf32> -> vector<32x64xf32>
    %c0_3 = arith.constant 0 : index
    %c0_4 = arith.constant 0 : index
    %3 = vector.load %arg3[%c0_3, %c0_4] : memref<32x64xf32, #tpu.memory_space<vmem>>, vector<32x64xf32>
    tpu.vector_store %arg3[%c0_3, %c0_4], %2 {strides = array<i32>} : memref<32x64xf32, #tpu.memory_space<vmem>>, vector<32x64xf32>,
    %cst_5 = arith.constant dense<0.000000e+00> : vector<64xf32>
    %4 = vector.multi_reduction <add>, %2, %cst_5 [0] : vector<32x64xf32> to vector<64xf32>
    %5 = vector.shape_cast %4 : vector<64xf32> to vector<1x64xf32>
    %6 = arith.mulf %2, %2 : vector<32x64xf32>
    %cst_6 = arith.constant dense<0.000000e+00> : vector<64xf32>
    %7 = vector.multi_reduction <add>, %6, %cst_6 [0] : vector<32x64xf32> to vector<64xf32>
    %8 = vector.shape_cast %7 : vector<64xf32> to vector<1x64xf32>
    %9 = tpu.iota {dimensions = array<i32: 0>} : vector<8x64xi32>
    %c0_i32 = arith.constant 0 : i32
    %10 = vector.broadcast %c0_i32 : i32 to vector<8x64xi32>
    %11 = arith.cmpi eq, %9, %10 : vector<8x64xi32>
    %cst_7 = arith.constant 0.000000e+00 : f32
    %12 = vector.shape_cast %5 : vector<1x64xf32> to vector<1x64xf32>
    %13 = vector.broadcast %12 : vector<1x64xf32> to vector<8x64xf32>
    %14 = vector.broadcast %cst_7 : f32 to vector<8x64xf32>
    %15 = arith.select %11, %13, %14 : vector<8x64xi1>, vector<8x64xf32>
    %c1_i32 = arith.constant 1 : i32
    %16 = vector.broadcast %c1_i32 : i32 to vector<8x64xi32>
    %17 = arith.cmpi eq, %9, %16 : vector<8x64xi32>
    %cst_8 = arith.constant 0.000000e+00 : f32
    %18 = vector.shape_cast %8 : vector<1x64xf32> to vector<1x64xf32>
    %19 = vector.broadcast %18 : vector<1x64xf32> to vector<8x64xf32>
    %20 = vector.broadcast %cst_8 : f32 to vector<8x64xf32>
    %21 = arith.select %17, %19, %20 : vector<8x64xi1>, vector<8x64xf32>
    %22 = arith.addf %15, %21 : vector<8x64xf32>
    %c0_9 = arith.constant 0 : index
    %c0_10 = arith.constant 0 : index
    %23 = vector.load %arg4[%c0_9, %c0_10] : memref<8x64xf32, #tpu.memory_space<vmem>>, vector<8x64xf32>
    tpu.vector_store %arg4[%c0_9, %c0_10], %22 {strides = array<i32>} : memref<8x64xf32, #tpu.memory_space<vmem>>, vector<8x64xf32>,
    return
  }
  func.func @transform_0(%arg0: i32) -> (i32, i32) {
    %c0_i32 = arith.constant 0 : i32
    %c0_i32_0 = arith.constant 0 : i32
    return %arg0, %c0_i32 : i32, i32
  }
  func.func @transform_1(%arg0: i32) -> (i32, i32) {
    %c0_i32 = arith.constant 0 : i32
    %c0_i32_0 = arith.constant 0 : i32
    %c0_i32_1 = arith.constant 0 : i32
    return %c0_i32, %c0_i32_0 : i32, i32
  }
  func.func @transform_2(%arg0: i32) -> (i32, i32) {
    %c0_i32 = arith.constant 0 : i32
    %c0_i32_0 = arith.constant 0 : i32
    return %arg0, %c0_i32 : i32, i32
  }
  func.func @transform_3(%arg0: i32) -> (i32, i32) {
    %c0_i32 = arith.constant 0 : i32
    %c0_i32_0 = arith.constant 0 : i32
    return %arg0, %c0_i32 : i32, i32
  }
}

module attributes {stable_mosaic.version = 11 : i64} {
  func.func @_conv_gemm_stats_kernel(%arg0: i32, %arg1: memref<32x576xbf16, #tpu.memory_space<vmem>>, %arg2: memref<576x64xbf16, #tpu.memory_space<vmem>>, %arg3: memref<32x64xf32, #tpu.memory_space<vmem>>, %arg4: memref<8x64xf32, #tpu.memory_space<vmem>>) attributes {dimension_semantics = [#tpu.dimension_semantics<parallel>], iteration_bounds = array<i64: 1>, scalar_prefetch = 0 : i64, scratch_operands = 0 : i64, tpu.core_type = #tpu.core_type<tc>, window_params = [{transform_indices = @transform_0, window_bounds = array<i64: 32, 576>}, {pipeline_mode = #tpu.pipeline_mode<synchronous>, transform_indices = @transform_1, window_bounds = array<i64: 576, 64>}, {transform_indices = @transform_2, window_bounds = array<i64: 32, 64>}, {transform_indices = @transform_3, window_bounds = array<i64: 8, 64>}]} {
    %c0 = arith.constant 0 : index
    %c0_0 = arith.constant 0 : index
    %0 = vector.load %arg1[%c0, %c0_0] : memref<32x576xbf16, #tpu.memory_space<vmem>>, vector<32x576xbf16>
    %c0_1 = arith.constant 0 : index
    %c0_2 = arith.constant 0 : index
    %1 = vector.load %arg2[%c0_1, %c0_2] : memref<576x64xbf16, #tpu.memory_space<vmem>>, vector<576x64xbf16>
    %cst = arith.constant dense<0.000000e+00> : vector<32x64xf32>
    %2 = tpu.matmul %0, %1, %cst {dimension_numbers = #tpu.dot_dimension_numbers<[1], [0], [0], [1], [0, 0, 1, 1], [], []>} : vector<32x576xbf16>, vector<576x64xbf16>, vector<32x64xf32> -> vector<32x64xf32>
    %c0_3 = arith.constant 0 : index
    %c0_4 = arith.constant 0 : index
    %3 = vector.load %arg3[%c0_3, %c0_4] : memref<32x64xf32, #tpu.memory_space<vmem>>, vector<32x64xf32>
    tpu.vector_store %arg3[%c0_3, %c0_4], %2 {strides = array<i32>} : memref<32x64xf32, #tpu.memory_space<vmem>>, vector<32x64xf32>,
    %cst_5 = arith.constant dense<0.000000e+00> : vector<64xf32>
    %4 = vector.multi_reduction <add>, %2, %cst_5 [0] : vector<32x64xf32> to vector<64xf32>
    %5 = vector.shape_cast %4 : vector<64xf32> to vector<1x64xf32>
    %6 = arith.mulf %2, %2 : vector<32x64xf32>
    %cst_6 = arith.constant dense<0.000000e+00> : vector<64xf32>
    %7 = vector.multi_reduction <add>, %6, %cst_6 [0] : vector<32x64xf32> to vector<64xf32>
    %8 = vector.shape_cast %7 : vector<64xf32> to vector<1x64xf32>
    %9 = tpu.iota {dimensions = array<i32: 0>} : vector<8x64xi32>
    %c0_i32 = arith.constant 0 : i32
    %10 = vector.broadcast %c0_i32 : i32 to vector<8x64xi32>
    %11 = arith.cmpi eq, %9, %10 : vector<8x64xi32>
    %cst_7 = arith.constant 0.000000e+00 : f32
    %12 = vector.shape_cast %5 : vector<1x64xf32> to vector<1x64xf32>
    %13 = vector.broadcast %12 : vector<1x64xf32> to vector<8x64xf32>
    %14 = vector.broadcast %cst_7 : f32 to vector<8x64xf32>
    %15 = arith.select %11, %13, %14 : vector<8x64xi1>, vector<8x64xf32>
    %c1_i32 = arith.constant 1 : i32
    %16 = vector.broadcast %c1_i32 : i32 to vector<8x64xi32>
    %17 = arith.cmpi eq, %9, %16 : vector<8x64xi32>
    %cst_8 = arith.constant 0.000000e+00 : f32
    %18 = vector.shape_cast %8 : vector<1x64xf32> to vector<1x64xf32>
    %19 = vector.broadcast %18 : vector<1x64xf32> to vector<8x64xf32>
    %20 = vector.broadcast %cst_8 : f32 to vector<8x64xf32>
    %21 = arith.select %17, %19, %20 : vector<8x64xi1>, vector<8x64xf32>
    %22 = arith.addf %15, %21 : vector<8x64xf32>
    %c0_9 = arith.constant 0 : index
    %c0_10 = arith.constant 0 : index
    %23 = vector.load %arg4[%c0_9, %c0_10] : memref<8x64xf32, #tpu.memory_space<vmem>>, vector<8x64xf32>
    tpu.vector_store %arg4[%c0_9, %c0_10], %22 {strides = array<i32>} : memref<8x64xf32, #tpu.memory_space<vmem>>, vector<8x64xf32>,
    return
  }
  func.func @transform_0(%arg0: i32) -> (i32, i32) {
    %c0_i32 = arith.constant 0 : i32
    %c0_i32_0 = arith.constant 0 : i32
    return %arg0, %c0_i32 : i32, i32
  }
  func.func @transform_1(%arg0: i32) -> (i32, i32) {
    %c0_i32 = arith.constant 0 : i32
    %c0_i32_0 = arith.constant 0 : i32
    %c0_i32_1 = arith.constant 0 : i32
    return %c0_i32, %c0_i32_0 : i32, i32
  }
  func.func @transform_2(%arg0: i32) -> (i32, i32) {
    %c0_i32 = arith.constant 0 : i32
    %c0_i32_0 = arith.constant 0 : i32
    return %arg0, %c0_i32 : i32, i32
  }
  func.func @transform_3(%arg0: i32) -> (i32, i32) {
    %c0_i32 = arith.constant 0 : i32
    %c0_i32_0 = arith.constant 0 : i32
    return %arg0, %c0_i32 : i32, i32
  }
}

module attributes {stable_mosaic.version = 11 : i64} {
  func.func @_bn_res_relu_kernel(%arg0: i32, %arg1: memref<32x64xf32, #tpu.memory_space<vmem>>, %arg2: memref<32x64xbf16, #tpu.memory_space<vmem>>, %arg3: memref<1x64xf32, #tpu.memory_space<vmem>>, %arg4: memref<1x64xf32, #tpu.memory_space<vmem>>, %arg5: memref<32x64xbf16, #tpu.memory_space<vmem>>) attributes {dimension_semantics = [#tpu.dimension_semantics<parallel>], iteration_bounds = array<i64: 1>, scalar_prefetch = 0 : i64, scratch_operands = 0 : i64, tpu.core_type = #tpu.core_type<tc>, window_params = [{transform_indices = @transform_0, window_bounds = array<i64: 32, 64>}, {transform_indices = @transform_1, window_bounds = array<i64: 32, 64>}, {pipeline_mode = #tpu.pipeline_mode<synchronous>, transform_indices = @transform_2, window_bounds = array<i64: 1, 64>}, {pipeline_mode = #tpu.pipeline_mode<synchronous>, transform_indices = @transform_3, window_bounds = array<i64: 1, 64>}, {transform_indices = @transform_4, window_bounds = array<i64: 32, 64>}]} {
    %c0 = arith.constant 0 : index
    %c0_0 = arith.constant 0 : index
    %0 = vector.load %arg1[%c0, %c0_0] : memref<32x64xf32, #tpu.memory_space<vmem>>, vector<32x64xf32>
    %c0_1 = arith.constant 0 : index
    %c0_2 = arith.constant 0 : index
    %1 = vector.load %arg3[%c0_1, %c0_2] : memref<1x64xf32, #tpu.memory_space<vmem>>, vector<1x64xf32>
    %2 = vector.broadcast %1 : vector<1x64xf32> to vector<32x64xf32>
    %3 = arith.mulf %0, %2 : vector<32x64xf32>
    %c0_3 = arith.constant 0 : index
    %c0_4 = arith.constant 0 : index
    %4 = vector.load %arg4[%c0_3, %c0_4] : memref<1x64xf32, #tpu.memory_space<vmem>>, vector<1x64xf32>
    %5 = vector.broadcast %4 : vector<1x64xf32> to vector<32x64xf32>
    %6 = arith.addf %3, %5 : vector<32x64xf32>
    %c0_5 = arith.constant 0 : index
    %c0_6 = arith.constant 0 : index
    %7 = vector.load %arg2[%c0_5, %c0_6] : memref<32x64xbf16, #tpu.memory_space<vmem>>, vector<32x64xbf16>
    %8 = arith.extf %7 : vector<32x64xbf16> to vector<32x64xf32>
    %9 = arith.addf %6, %8 : vector<32x64xf32>
    %cst = arith.constant 0.000000e+00 : f32
    %10 = vector.broadcast %cst : f32 to vector<32x64xf32>
    %11 = arith.maximumf %9, %10 : vector<32x64xf32>
    %12 = arith.truncf %11 : vector<32x64xf32> to vector<32x64xbf16>
    %c0_7 = arith.constant 0 : index
    %c0_8 = arith.constant 0 : index
    %13 = vector.load %arg5[%c0_7, %c0_8] : memref<32x64xbf16, #tpu.memory_space<vmem>>, vector<32x64xbf16>
    tpu.vector_store %arg5[%c0_7, %c0_8], %12 {strides = array<i32>} : memref<32x64xbf16, #tpu.memory_space<vmem>>, vector<32x64xbf16>,
    return
  }
  func.func @transform_0(%arg0: i32) -> (i32, i32) {
    %c0_i32 = arith.constant 0 : i32
    %c0_i32_0 = arith.constant 0 : i32
    return %arg0, %c0_i32 : i32, i32
  }
  func.func @transform_1(%arg0: i32) -> (i32, i32) {
    %c0_i32 = arith.constant 0 : i32
    %c0_i32_0 = arith.constant 0 : i32
    return %arg0, %c0_i32 : i32, i32
  }
  func.func @transform_2(%arg0: i32) -> (i32, i32) {
    %c0_i32 = arith.constant 0 : i32
    %c0_i32_0 = arith.constant 0 : i32
    %c0_i32_1 = arith.constant 0 : i32
    return %c0_i32, %c0_i32_0 : i32, i32
  }
  func.func @transform_3(%arg0: i32) -> (i32, i32) {
    %c0_i32 = arith.constant 0 : i32
    %c0_i32_0 = arith.constant 0 : i32
    %c0_i32_1 = arith.constant 0 : i32
    return %c0_i32, %c0_i32_0 : i32, i32
  }
  func.func @transform_4(%arg0: i32) -> (i32, i32) {
    %c0_i32 = arith.constant 0 : i32
    %c0_i32_0 = arith.constant 0 : i32
    return %arg0, %c0_i32 : i32, i32
  }
}

module attributes {stable_mosaic.version = 11 : i64} {
  func.func @_head_kernel(%arg0: memref<2x16x64xbf16, #tpu.memory_space<vmem>>, %arg1: memref<64x10xf32, #tpu.memory_space<vmem>>, %arg2: memref<1x10xf32, #tpu.memory_space<vmem>>, %arg3: memref<2x10xf32, #tpu.memory_space<vmem>>) attributes {dimension_semantics = [], scalar_prefetch = 0 : i64, scratch_operands = 0 : i64, tpu.core_type = #tpu.core_type<tc>} {
    %c0 = arith.constant 0 : index
    %c0_0 = arith.constant 0 : index
    %c0_1 = arith.constant 0 : index
    %0 = vector.load %arg0[%c0, %c0_0, %c0_1] : memref<2x16x64xbf16, #tpu.memory_space<vmem>>, vector<2x16x64xbf16>
    %1 = arith.extf %0 : vector<2x16x64xbf16> to vector<2x16x64xf32>
    %cst = arith.constant dense<0.000000e+00> : vector<2x64xf32>
    %2 = vector.multi_reduction <add>, %1, %cst [1] : vector<2x16x64xf32> to vector<2x64xf32>
    %cst_2 = arith.constant 1.600000e+01 : f32
    %3 = vector.broadcast %cst_2 : f32 to vector<2x64xf32>
    %4 = arith.divf %2, %3 : vector<2x64xf32>
    %c0_3 = arith.constant 0 : index
    %c0_4 = arith.constant 0 : index
    %5 = vector.load %arg1[%c0_3, %c0_4] : memref<64x10xf32, #tpu.memory_space<vmem>>, vector<64x10xf32>
    %cst_5 = arith.constant dense<0.000000e+00> : vector<2x10xf32>
    %6 = tpu.matmul %4, %5, %cst_5 {dimension_numbers = #tpu.dot_dimension_numbers<[1], [0], [0], [1], [0, 0, 1, 1], [], []>} : vector<2x64xf32>, vector<64x10xf32>, vector<2x10xf32> -> vector<2x10xf32>
    %c0_6 = arith.constant 0 : index
    %c0_7 = arith.constant 0 : index
    %7 = vector.load %arg2[%c0_6, %c0_7] : memref<1x10xf32, #tpu.memory_space<vmem>>, vector<1x10xf32>
    %8 = vector.broadcast %7 : vector<1x10xf32> to vector<2x10xf32>
    %9 = arith.addf %6, %8 : vector<2x10xf32>
    %c0_8 = arith.constant 0 : index
    %c0_9 = arith.constant 0 : index
    %10 = vector.load %arg3[%c0_8, %c0_9] : memref<2x10xf32, #tpu.memory_space<vmem>>, vector<2x10xf32>
    tpu.vector_store %arg3[%c0_8, %c0_9], %9 {strides = array<i32>} : memref<2x10xf32, #tpu.memory_space<vmem>>, vector<2x10xf32>,
    return
  }
}

</mosaic_0001>

<llo_original>
// kernel: resnet_forward.40
$region0: #{resnet_forward.40}
  #allocation0 [shape = 'u32[]', space=smem, size = 0x4, offset = 0x4, fixed_abs, tag = 'smem constant byte address 0x4 - core index']
  #allocation1 [shape = 'u32[144,128]{1,0:T(1,128)}', space=vmem, size = 0x12000, scoped, tag = 'internal scratch']
  %s0 = inlined_call_operand.vmem [shape: f32[512,16], index: 0, kind: input, shape index: {}]
  %s1 = inlined_call_operand.vmem [shape: f32[1,16], index: 1, kind: input, shape index: {}]
  %s2 = inlined_call_operand.vmem [shape: f32[1,16], index: 2, kind: input, shape index: {}]
  %s3 = inlined_call_operand.vmem [shape: bf16[512,16], index: 3, kind: output, shape index: {}]
  %s4 = sld [smem:[#allocation0]]
  $region22: #{resnet_forward.40} parent=0
    _
  %s6 = ssub.s32 1, %s4
  %s7 = scalar_select 0, %s6, %s4
  // Predicated region
  $region2: #{resnet_forward.40} parent=0 // pred_check
    _
  $region3: #{resnet_forward.40} parent=0 // pred_check_branch
    %9 = sbr.rel (0) target = $region5
  $region4: #{resnet_forward.40} parent=0 // pred_region
    _
  $region5: #{resnet_forward.40} parent=0 // pred_fallthru
    _
  // Predicated region
  $region6: #{resnet_forward.40} parent=0 // pred_check
    _
  $region7: #{resnet_forward.40} parent=0 // pred_check_branch
    %11 = sbr.rel (0) target = $region9
  $region8: #{resnet_forward.40} parent=0 // pred_region
    _
  $region9: #{resnet_forward.40} parent=0 // pred_fallthru
    _
  // Predicated region
  $region10: #{resnet_forward.40} parent=0 // pred_check
    _
  $region11: #{resnet_forward.40} parent=0 // pred_check_branch
    %13 = sbr.rel (0) target = $region13
  $region12: #{resnet_forward.40} parent=0 // pred_region
    _
  $region13: #{resnet_forward.40} parent=0 // pred_fallthru
    _
  %v14 = vld [vmem:[%s0] sm:$0xff]
  %v15 = vld [vmem:[%s0 + $0x8] sm:$0xff]
  %v16 = vld [vmem:[%s0 + $0x10] sm:$0xff]
  %v17 = vld [vmem:[%s0 + $0x18] sm:$0xff]
  %v18 = vld [vmem:[%s0 + $0x20] sm:$0xff]
  %v19 = vld [vmem:[%s0 + $0x28] sm:$0xff]
  %v20 = vld [vmem:[%s0 + $0x30] sm:$0xff]
  %v21 = vld [vmem:[%s0 + $0x38] sm:$0xff]
  %v22 = vld [vmem:[%s0 + $0x40] sm:$0xff]
  %v23 = vld [vmem:[%s0 + $0x48] sm:$0xff]
  %v24 = vld [vmem:[%s0 + $0x50] sm:$0xff]
  %v25 = vld [vmem:[%s0 + $0x58] sm:$0xff]
  %v26 = vld [vmem:[%s0 + $0x60] sm:$0xff]
  %v27 = vld [vmem:[%s0 + $0x68] sm:$0xff]
  %v28 = vld [vmem:[%s0 + $0x70] sm:$0xff]
  %v29 = vld [vmem:[%s0 + $0x78] sm:$0xff]
  %v30 = vld [vmem:[%s0 + $0x80] sm:$0xff]
  %v31 = vld [vmem:[%s0 + $0x88] sm:$0xff]
  %v32 = vld [vmem:[%s0 + $0x90] sm:$0xff]
  %v33 = vld [vmem:[%s0 + $0x98] sm:$0xff]
  %v34 = vld [vmem:[%s0 + $0xa0] sm:$0xff]
  %v35 = vld [vmem:[%s0 + $0xa8] sm:$0xff]
  %v36 = vld [vmem:[%s0 + $0xb0] sm:$0xff]
  %v37 = vld [vmem:[%s0 + $0xb8] sm:$0xff]
  %v38 = vld [vmem:[%s0 + $0xc0] sm:$0xff]
  %v39 = vld [vmem:[%s0 + $0xc8] sm:$0xff]
  %v40 = vld [vmem:[%s0 + $0xd0] sm:$0xff]
  %v41 = vld [vmem:[%s0 + $0xd8] sm:$0xff]
  %v42 = vld [vmem:[%s0 + $0xe0] sm:$0xff]
  %v43 = vld [vmem:[%s0 + $0xe8] sm:$0xff]
  %v44 = vld [vmem:[%s0 + $0xf0] sm:$0xff]
  %v45 = vld [vmem:[%s0 + $0xf8] sm:$0xff]
  %v46 = vld [vmem:[%s0 + $0x100] sm:$0xff]
  %v47 = vld [vmem:[%s0 + $0x108] sm:$0xff]
  %v48 = vld [vmem:[%s0 + $0x110] sm:$0xff]
  %v49 = vld [vmem:[%s0 + $0x118] sm:$0xff]
  %v50 = vld [vmem:[%s0 + $0x120] sm:$0xff]
  %v51 = vld [vmem:[%s0 + $0x128] sm:$0xff]
  %v52 = vld [vmem:[%s0 + $0x130] sm:$0xff]
  %v53 = vld [vmem:[%s0 + $0x138] sm:$0xff]
  %v54 = vld [vmem:[%s0 + $0x140] sm:$0xff]
  %v55 = vld [vmem:[%s0 + $0x148] sm:$0xff]
  %v56 = vld [vmem:[%s0 + $0x150] sm:$0xff]
  %v57 = vld [vmem:[%s0 + $0x158] sm:$0xff]
  %v58 = vld [vmem:[%s0 + $0x160] sm:$0xff]
  %v59 = vld [vmem:[%s0 + $0x168] sm:$0xff]
  %v60 = vld [vmem:[%s0 + $0x170] sm:$0xff]
  %v61 = vld [vmem:[%s0 + $0x178] sm:$0xff]
  %v62 = vld [vmem:[%s0 + $0x180] sm:$0xff]
  %v63 = vld [vmem:[%s0 + $0x188] sm:$0xff]
  %v64 = vld [vmem:[%s0 + $0x190] sm:$0xff]
  %v65 = vld [vmem:[%s0 + $0x198] sm:$0xff]
  %v66 = vld [vmem:[%s0 + $0x1a0] sm:$0xff]
  %v67 = vld [vmem:[%s0 + $0x1a8] sm:$0xff]
  %v68 = vld [vmem:[%s0 + $0x1b0] sm:$0xff]
  %v69 = vld [vmem:[%s0 + $0x1b8] sm:$0xff]
  %v70 = vld [vmem:[%s0 + $0x1c0] sm:$0xff]
  %v71 = vld [vmem:[%s0 + $0x1c8] sm:$0xff]
  %v72 = vld [vmem:[%s0 + $0x1d0] sm:$0xff]
  %v73 = vld [vmem:[%s0 + $0x1d8] sm:$0xff]
  %v74 = vld [vmem:[%s0 + $0x1e0] sm:$0xff]
  %v75 = vld [vmem:[%s0 + $0x1e8] sm:$0xff]
  %v76 = vld [vmem:[%s0 + $0x1f0] sm:$0xff]
  %v77 = vld [vmem:[%s0 + $0x1f8] sm:$0xff]
  %v78 = vld [vmem:[%s1] sm:$0x1]
  %v80 = vlaneseq
  %v81 = vshrl.u32 %v80, 7
  %v82 = vsub.s32 0, %v81
  %v83 = vrot.slane %v78, %v82
  %v85 = vmul.f32 %v14, %v83
  %v86 = vmul.f32 %v15, %v83
  %v87 = vmul.f32 %v16, %v83
  %v88 = vmul.f32 %v17, %v83
  %v89 = vmul.f32 %v18, %v83
  %v90 = vmul.f32 %v19, %v83
  %v91 = vmul.f32 %v20, %v83
  %v92 = vmul.f32 %v21, %v83
  %v93 = vmul.f32 %v22, %v83
  %v94 = vmul.f32 %v23, %v83
  %v95 = vmul.f32 %v24, %v83
  %v96 = vmul.f32 %v25, %v83
  %v97 = vmul.f32 %v26, %v83
  %v98 = vmul.f32 %v27, %v83
  %v99 = vmul.f32 %v28, %v83
  %v100 = vmul.f32 %v29, %v83
  %v101 = vmul.f32 %v30, %v83
  %v102 = vmul.f32 %v31, %v83
  %v103 = vmul.f32 %v32, %v83
  %v104 = vmul.f32 %v33, %v83
  %v105 = vmul.f32 %v34, %v83
  %v106 = vmul.f32 %v35, %v83
  %v107 = vmul.f32 %v36, %v83
  %v108 = vmul.f32 %v37, %v83
  %v109 = vmul.f32 %v38, %v83
  %v110 = vmul.f32 %v39, %v83
  %v111 = vmul.f32 %v40, %v83
  %v112 = vmul.f32 %v41, %v83
  %v113 = vmul.f32 %v42, %v83
  %v114 = vmul.f32 %v43, %v83
  %v115 = vmul.f32 %v44, %v83
  %v116 = vmul.f32 %v45, %v83
  %v117 = vmul.f32 %v46, %v83
  %v118 = vmul.f32 %v47, %v83
  %v119 = vmul.f32 %v48, %v83
  %v120 = vmul.f32 %v49, %v83
  %v121 = vmul.f32 %v50, %v83
  %v122 = vmul.f32 %v51, %v83
  %v123 = vmul.f32 %v52, %v83
  %v124 = vmul.f32 %v53, %v83
  %v125 = vmul.f32 %v54, %v83
  %v126 = vmul.f32 %v55, %v83
  %v127 = vmul.f32 %v56, %v83
  %v128 = vmul.f32 %v57, %v83
  %v129 = vmul.f32 %v58, %v83
  %v130 = vmul.f32 %v59, %v83
  %v131 = vmul.f32 %v60, %v83
  %v132 = vmul.f32 %v61, %v83
  %v133 = vmul.f32 %v62, %v83
  %v134 = vmul.f32 %v63, %v83
  %v135 = vmul.f32 %v64, %v83
  %v136 = vmul.f32 %v65, %v83
  %v137 = vmul.f32 %v66, %v83
  %v138 = vmul.f32 %v67, %v83
  %v139 = vmul.f32 %v68, %v83
  %v140 = vmul.f32 %v69, %v83
  %v141 = vmul.f32 %v70, %v83
  %v142 = vmul.f32 %v71, %v83
  %v143 = vmul.f32 %v72, %v83
  %v144 = vmul.f32 %v73, %v83
  %v145 = vmul.f32 %v74, %v83
  %v146 = vmul.f32 %v75, %v83
  %v147 = vmul.f32 %v76, %v83
  %v148 = vmul.f32 %v77, %v83
  %v149 = vld [vmem:[%s2] sm:$0x1]
  %v151 = vlaneseq
  %v152 = vshrl.u32 %v151, 7
  %v153 = vsub.s32 0, %v152
  %v154 = vrot.slane %v149, %v153
  %v156 = vadd.f32 %v85, %v154
  %v157 = vadd.f32 %v86, %v154
  %v158 = vadd.f32 %v87, %v154
  %v159 = vadd.f32 %v88, %v154
  %v160 = vadd.f32 %v89, %v154
  %v161 = vadd.f32 %v90, %v154
  %v162 = vadd.f32 %v91, %v154
  %v163 = vadd.f32 %v92, %v154
  %v164 = vadd.f32 %v93, %v154
  %v165 = vadd.f32 %v94, %v154
  %v166 = vadd.f32 %v95, %v154
  %v167 = vadd.f32 %v96, %v154
  %v168 = vadd.f32 %v97, %v154
  %v169 = vadd.f32 %v98, %v154
  %v170 = vadd.f32 %v99, %v154
  %v171 = vadd.f32 %v100, %v154
  %v172 = vadd.f32 %v101, %v154
  %v173 = vadd.f32 %v102, %v154
  %v174 = vadd.f32 %v103, %v154
  %v175 = vadd.f32 %v104, %v154
  %v176 = vadd.f32 %v105, %v154
  %v177 = vadd.f32 %v106, %v154
  %v178 = vadd.f32 %v107, %v154
  %v179 = vadd.f32 %v108, %v154
  %v180 = vadd.f32 %v109, %v154
  %v181 = vadd.f32 %v110, %v154
  %v182 = vadd.f32 %v111, %v154
  %v183 = vadd.f32 %v112, %v154
  %v184 = vadd.f32 %v113, %v154
  %v185 = vadd.f32 %v114, %v154
  %v186 = vadd.f32 %v115, %v154
  %v187 = vadd.f32 %v116, %v154
  %v188 = vadd.f32 %v117, %v154
  %v189 = vadd.f32 %v118, %v154
  %v190 = vadd.f32 %v119, %v154
  %v191 = vadd.f32 %v120, %v154
  %v192 = vadd.f32 %v121, %v154
  %v193 = vadd.f32 %v122, %v154
  %v194 = vadd.f32 %v123, %v154
  %v195 = vadd.f32 %v124, %v154
  %v196 = vadd.f32 %v125, %v154
  %v197 = vadd.f32 %v126, %v154
  %v198 = vadd.f32 %v127, %v154
  %v199 = vadd.f32 %v128, %v154
  %v200 = vadd.f32 %v129, %v154
  %v201 = vadd.f32 %v130, %v154
  %v202 = vadd.f32 %v131, %v154
  %v203 = vadd.f32 %v132, %v154
  %v204 = vadd.f32 %v133, %v154
  %v205 = vadd.f32 %v134, %v154
  %v206 = vadd.f32 %v135, %v154
  %v207 = vadd.f32 %v136, %v154
  %v208 = vadd.f32 %v137, %v154
  %v209 = vadd.f32 %v138, %v154
  %v210 = vadd.f32 %v139, %v154
  %v211 = vadd.f32 %v140, %v154
  %v212 = vadd.f32 %v141, %v154
  %v213 = vadd.f32 %v142, %v154
  %v214 = vadd.f32 %v143, %v154
  %v215 = vadd.f32 %v144, %v154
  %v216 = vadd.f32 %v145, %v154
  %v217 = vadd.f32 %v146, %v154
  %v218 = vadd.f32 %v147, %v154
  %v219 = vadd.f32 %v148, %v154
  %v220 = vmax.f32 %v156, 0.0
  %v221 = vmax.f32 %v157, 0.0
  %v222 = vmax.f32 %v158, 0.0
  %v223 = vmax.f32 %v159, 0.0
  %v224 = vmax.f32 %v160, 0.0
  %v225 = vmax.f32 %v161, 0.0
  %v226 = vmax.f32 %v162, 0.0
  %v227 = vmax.f32 %v163, 0.0
  %v228 = vmax.f32 %v164, 0.0
  %v229 = vmax.f32 %v165, 0.0
  %v230 = vmax.f32 %v166, 0.0
  %v231 = vmax.f32 %v167, 0.0
  %v232 = vmax.f32 %v168, 0.0
  %v233 = vmax.f32 %v169, 0.0
  %v234 = vmax.f32 %v170, 0.0
  %v235 = vmax.f32 %v171, 0.0
  %v236 = vmax.f32 %v172, 0.0
  %v237 = vmax.f32 %v173, 0.0
  %v238 = vmax.f32 %v174, 0.0
  %v239 = vmax.f32 %v175, 0.0
  %v240 = vmax.f32 %v176, 0.0
  %v241 = vmax.f32 %v177, 0.0
  %v242 = vmax.f32 %v178, 0.0
  %v243 = vmax.f32 %v179, 0.0
  %v244 = vmax.f32 %v180, 0.0
  %v245 = vmax.f32 %v181, 0.0
  %v246 = vmax.f32 %v182, 0.0
  %v247 = vmax.f32 %v183, 0.0
  %v248 = vmax.f32 %v184, 0.0
  %v249 = vmax.f32 %v185, 0.0
  %v250 = vmax.f32 %v186, 0.0
  %v251 = vmax.f32 %v187, 0.0
  %v252 = vmax.f32 %v188, 0.0
  %v253 = vmax.f32 %v189, 0.0
  %v254 = vmax.f32 %v190, 0.0
  %v255 = vmax.f32 %v191, 0.0
  %v256 = vmax.f32 %v192, 0.0
  %v257 = vmax.f32 %v193, 0.0
  %v258 = vmax.f32 %v194, 0.0
  %v259 = vmax.f32 %v195, 0.0
  %v260 = vmax.f32 %v196, 0.0
  %v261 = vmax.f32 %v197, 0.0
  %v262 = vmax.f32 %v198, 0.0
  %v263 = vmax.f32 %v199, 0.0
  %v264 = vmax.f32 %v200, 0.0
  %v265 = vmax.f32 %v201, 0.0
  %v266 = vmax.f32 %v202, 0.0
  %v267 = vmax.f32 %v203, 0.0
  %v268 = vmax.f32 %v204, 0.0
  %v269 = vmax.f32 %v205, 0.0
  %v270 = vmax.f32 %v206, 0.0
  %v271 = vmax.f32 %v207, 0.0
  %v272 = vmax.f32 %v208, 0.0
  %v273 = vmax.f32 %v209, 0.0
  %v274 = vmax.f32 %v210, 0.0
  %v275 = vmax.f32 %v211, 0.0
  %v276 = vmax.f32 %v212, 0.0
  %v277 = vmax.f32 %v213, 0.0
  %v278 = vmax.f32 %v214, 0.0
  %v279 = vmax.f32 %v215, 0.0
  %v280 = vmax.f32 %v216, 0.0
  %v281 = vmax.f32 %v217, 0.0
  %v282 = vmax.f32 %v218, 0.0
  %v283 = vmax.f32 %v219, 0.0
  %v284 = vpack.c.bf16 %v221, %v220
  %v285 = vpack.c.bf16 %v223, %v222
  %v286 = vpack.c.bf16 %v225, %v224
  %v287 = vpack.c.bf16 %v227, %v226
  %v288 = vpack.c.bf16 %v229, %v228
  %v289 = vpack.c.bf16 %v231, %v230
  %v290 = vpack.c.bf16 %v233, %v232
  %v291 = vpack.c.bf16 %v235, %v234
  %v292 = vpack.c.bf16 %v237, %v236
  %v293 = vpack.c.bf16 %v239, %v238
  %v294 = vpack.c.bf16 %v241, %v240
  %v295 = vpack.c.bf16 %v243, %v242
  %v296 = vpack.c.bf16 %v245, %v244
  %v297 = vpack.c.bf16 %v247, %v246
  %v298 = vpack.c.bf16 %v249, %v248
  %v299 = vpack.c.bf16 %v251, %v250
  %v300 = vpack.c.bf16 %v253, %v252
  %v301 = vpack.c.bf16 %v255, %v254
  %v302 = vpack.c.bf16 %v257, %v256
  %v303 = vpack.c.bf16 %v259, %v258
  %v304 = vpack.c.bf16 %v261, %v260
  %v305 = vpack.c.bf16 %v263, %v262
  %v306 = vpack.c.bf16 %v265, %v264
  %v307 = vpack.c.bf16 %v267, %v266
  %v308 = vpack.c.bf16 %v269, %v268
  %v309 = vpack.c.bf16 %v271, %v270
  %v310 = vpack.c.bf16 %v273, %v272
  %v311 = vpack.c.bf16 %v275, %v274
  %v312 = vpack.c.bf16 %v277, %v276
  %v313 = vpack.c.bf16 %v279, %v278
  %v314 = vpack.c.bf16 %v281, %v280
  %v315 = vpack.c.bf16 %v283, %v282
  %v348 = vunpack.c.l.b16 %v284
  %v349 = vunpack.c.h.b16 %v284
  %v350 = vunpack.c.l.b16 %v285
  %v351 = vunpack.c.h.b16 %v285
  %v352 = vunpack.c.l.b16 %v286
  %v353 = vunpack.c.h.b16 %v286
  %v354 = vunpack.c.l.b16 %v287
  %v355 = vunpack.c.h.b16 %v287
  %v356 = vunpack.c.l.b16 %v288
  %v357 = vunpack.c.h.b16 %v288
  %v358 = vunpack.c.l.b16 %v289
  %v359 = vunpack.c.h.b16 %v289
  %v360 = vunpack.c.l.b16 %v290
  %v361 = vunpack.c.h.b16 %v290
  %v362 = vunpack.c.l.b16 %v291
  %v363 = vunpack.c.h.b16 %v291
  %v364 = vunpack.c.l.b16 %v292
  %v365 = vunpack.c.h.b16 %v292
  %v366 = vunpack.c.l.b16 %v293
  %v367 = vunpack.c.h.b16 %v293
  %v368 = vunpack.c.l.b16 %v294
  %v369 = vunpack.c.h.b16 %v294
  %v370 = vunpack.c.l.b16 %v295
  %v371 = vunpack.c.h.b16 %v295
  %v372 = vunpack.c.l.b16 %v296
  %v373 = vunpack.c.h.b16 %v296
  %v374 = vunpack.c.l.b16 %v297
  %v375 = vunpack.c.h.b16 %v297
  %v376 = vunpack.c.l.b16 %v298
  %v377 = vunpack.c.h.b16 %v298
  %v378 = vunpack.c.l.b16 %v299
  %v379 = vunpack.c.h.b16 %v299
  %v380 = vunpack.c.l.b16 %v300
  %v381 = vunpack.c.h.b16 %v300
  %v382 = vunpack.c.l.b16 %v301
  %v383 = vunpack.c.h.b16 %v301
  %v384 = vunpack.c.l.b16 %v302
  %v385 = vunpack.c.h.b16 %v302
  %v386 = vunpack.c.l.b16 %v303
  %v387 = vunpack.c.h.b16 %v303
  %v388 = vunpack.c.l.b16 %v304
  %v389 = vunpack.c.h.b16 %v304
  %v390 = vunpack.c.l.b16 %v305
  %v391 = vunpack.c.h.b16 %v305
  %v392 = vunpack.c.l.b16 %v306
  %v393 = vunpack.c.h.b16 %v306
  %v394 = vunpack.c.l.b16 %v307
  %v395 = vunpack.c.h.b16 %v307
  %v396 = vunpack.c.l.b16 %v308
  %v397 = vunpack.c.h.b16 %v308
  %v398 = vunpack.c.l.b16 %v309
  %v399 = vunpack.c.h.b16 %v309
  %v400 = vunpack.c.l.b16 %v310
  %v401 = vunpack.c.h.b16 %v310
  %v402 = vunpack.c.l.b16 %v311
  %v403 = vunpack.c.h.b16 %v311
  %v404 = vunpack.c.l.b16 %v312
  %v405 = vunpack.c.h.b16 %v312
  %v406 = vunpack.c.l.b16 %v313
  %v407 = vunpack.c.h.b16 %v313
  %v408 = vunpack.c.l.b16 %v314
  %v409 = vunpack.c.h.b16 %v314
  %v410 = vunpack.c.l.b16 %v315
  %v411 = vunpack.c.h.b16 %v315
  %v412 = vpack.c.b16 %v348, %v348
  %v413 = vpack.c.b16 %v349, %v349
  %v414 = vpack.c.b16 %v350, %v350
  %v415 = vpack.c.b16 %v351, %v351
  %v416 = vpack.c.b16 %v352, %v352
  %v417 = vpack.c.b16 %v353, %v353
  %v418 = vpack.c.b16 %v354, %v354
  %v419 = vpack.c.b16 %v355, %v355
  %v420 = vpack.c.b16 %v356, %v356
  %v421 = vpack.c.b16 %v357, %v357
  %v422 = vpack.c.b16 %v358, %v358
  %v423 = vpack.c.b16 %v359, %v359
  %v424 = vpack.c.b16 %v360, %v360
  %v425 = vpack.c.b16 %v361, %v361
  %v426 = vpack.c.b16 %v362, %v362
  %v427 = vpack.c.b16 %v363, %v363
  %v428 = vpack.c.b16 %v364, %v364
  %v429 = vpack.c.b16 %v365, %v365
  %v430 = vpack.c.b16 %v366, %v366
  %v431 = vpack.c.b16 %v367, %v367
  %v432 = vpack.c.b16 %v368, %v368
  %v433 = vpack.c.b16 %v369, %v369
  %v434 = vpack.c.b16 %v370, %v370
  %v435 = vpack.c.b16 %v371, %v371
  %v436 = vpack.c.b16 %v372, %v372
  %v437 = vpack.c.b16 %v373, %v373
  %v438 = vpack.c.b16 %v374, %v374
  %v439 = vpack.c.b16 %v375, %v375
  %v440 = vpack.c.b16 %v376, %v376
  %v441 = vpack.c.b16 %v377, %v377
  %v442 = vpack.c.b16 %v378, %v378
  %v443 = vpack.c.b16 %v379, %v379
  %v444 = vpack.c.b16 %v380, %v380
  %v445 = vpack.c.b16 %v381, %v381
  %v446 = vpack.c.b16 %v382, %v382
  %v447 = vpack.c.b16 %v383, %v383
  %v448 = vpack.c.b16 %v384, %v384
  %v449 = vpack.c.b16 %v385, %v385
  %v450 = vpack.c.b16 %v386, %v386
  %v451 = vpack.c.b16 %v387, %v387
  %v452 = vpack.c.b16 %v388, %v388
  %v453 = vpack.c.b16 %v389, %v389
  %v454 = vpack.c.b16 %v390, %v390
  %v455 = vpack.c.b16 %v391, %v391
  %v456 = vpack.c.b16 %v392, %v392
  %v457 = vpack.c.b16 %v393, %v393
  %v458 = vpack.c.b16 %v394, %v394
  %v459 = vpack.c.b16 %v395, %v395
  %v460 = vpack.c.b16 %v396, %v396
  %v461 = vpack.c.b16 %v397, %v397
  %v462 = vpack.c.b16 %v398, %v398
  %v463 = vpack.c.b16 %v399, %v399
  %v464 = vpack.c.b16 %v400, %v400
  %v465 = vpack.c.b16 %v401, %v401
  %v466 = vpack.c.b16 %v402, %v402
  %v467 = vpack.c.b16 %v403, %v403
  %v468 = vpack.c.b16 %v404, %v404
  %v469 = vpack.c.b16 %v405, %v405
  %v470 = vpack.c.b16 %v406, %v406
  %v471 = vpack.c.b16 %v407, %v407
  %v472 = vpack.c.b16 %v408, %v408
  %v473 = vpack.c.b16 %v409, %v409
  %v474 = vpack.c.b16 %v410, %v410
  %v475 = vpack.c.b16 %v411, %v411
  %vm540 = vcmask 125952
  %541 = vst.msk [vmem:[%s3] sm:$0xf] %vm540, %v412
  %542 = vst.msk [vmem:[%s3 + $0x4] sm:$0xf] %vm540, %v413
  %543 = vst.msk [vmem:[%s3 + $0x8] sm:$0xf] %vm540, %v414
  %544 = vst.msk [vmem:[%s3 + $0xc] sm:$0xf] %vm540, %v415
  %545 = vst.msk [vmem:[%s3 + $0x10] sm:$0xf] %vm540, %v416
  %546 = vst.msk [vmem:[%s3 + $0x14] sm:$0xf] %vm540, %v417
  %547 = vst.msk [vmem:[%s3 + $0x18] sm:$0xf] %vm540, %v418
  %548 = vst.msk [vmem:[%s3 + $0x1c] sm:$0xf] %vm540, %v419
  %549 = vst.msk [vmem:[%s3 + $0x20] sm:$0xf] %vm540, %v420
  %550 = vst.msk [vmem:[%s3 + $0x24] sm:$0xf] %vm540, %v421
  %551 = vst.msk [vmem:[%s3 + $0x28] sm:$0xf] %vm540, %v422
  %552 = vst.msk [vmem:[%s3 + $0x2c] sm:$0xf] %vm540, %v423
  %553 = vst.msk [vmem:[%s3 + $0x30] sm:$0xf] %vm540, %v424
  %554 = vst.msk [vmem:[%s3 + $0x34] sm:$0xf] %vm540, %v425
  %555 = vst.msk [vmem:[%s3 + $0x38] sm:$0xf] %vm540, %v426
  %556 = vst.msk [vmem:[%s3 + $0x3c] sm:$0xf] %vm540, %v427
  %557 = vst.msk [vmem:[%s3 + $0x40] sm:$0xf] %vm540, %v428
  %558 = vst.msk [vmem:[%s3 + $0x44] sm:$0xf] %vm540, %v429
  %559 = vst.msk [vmem:[%s3 + $0x48] sm:$0xf] %vm540, %v430
  %560 = vst.msk [vmem:[%s3 + $0x4c] sm:$0xf] %vm540, %v431
  %561 = vst.msk [vmem:[%s3 + $0x50] sm:$0xf] %vm540, %v432
  %562 = vst.msk [vmem:[%s3 + $0x54] sm:$0xf] %vm540, %v433
  %563 = vst.msk [vmem:[%s3 + $0x58] sm:$0xf] %vm540, %v434
  %564 = vst.msk [vmem:[%s3 + $0x5c] sm:$0xf] %vm540, %v435
  %565 = vst.msk [vmem:[%s3 + $0x60] sm:$0xf] %vm540, %v436
  %566 = vst.msk [vmem:[%s3 + $0x64] sm:$0xf] %vm540, %v437
  %567 = vst.msk [vmem:[%s3 + $0x68] sm:$0xf] %vm540, %v438
  %568 = vst.msk [vmem:[%s3 + $0x6c] sm:$0xf] %vm540, %v439
  %569 = vst.msk [vmem:[%s3 + $0x70] sm:$0xf] %vm540, %v440
  %570 = vst.msk [vmem:[%s3 + $0x74] sm:$0xf] %vm540, %v441
  %571 = vst.msk [vmem:[%s3 + $0x78] sm:$0xf] %vm540, %v442
  %572 = vst.msk [vmem:[%s3 + $0x7c] sm:$0xf] %vm540, %v443
  %573 = vst.msk [vmem:[%s3 + $0x80] sm:$0xf] %vm540, %v444
  %574 = vst.msk [vmem:[%s3 + $0x84] sm:$0xf] %vm540, %v445
  %575 = vst.msk [vmem:[%s3 + $0x88] sm:$0xf] %vm540, %v446
  %576 = vst.msk [vmem:[%s3 + $0x8c] sm:$0xf] %vm540, %v447
  %577 = vst.msk [vmem:[%s3 + $0x90] sm:$0xf] %vm540, %v448
  %578 = vst.msk [vmem:[%s3 + $0x94] sm:$0xf] %vm540, %v449
  %579 = vst.msk [vmem:[%s3 + $0x98] sm:$0xf] %vm540, %v450
  %580 = vst.msk [vmem:[%s3 + $0x9c] sm:$0xf] %vm540, %v451
  %581 = vst.msk [vmem:[%s3 + $0xa0] sm:$0xf] %vm540, %v452
  %582 = vst.msk [vmem:[%s3 + $0xa4] sm:$0xf] %vm540, %v453
  %583 = vst.msk [vmem:[%s3 + $0xa8] sm:$0xf] %vm540, %v454
  %584 = vst.msk [vmem:[%s3 + $0xac] sm:$0xf] %vm540, %v455
  %585 = vst.msk [vmem:[%s3 + $0xb0] sm:$0xf] %vm540, %v456
  %586 = vst.msk [vmem:[%s3 + $0xb4] sm:$0xf] %vm540, %v457
  %587 = vst.msk [vmem:[%s3 + $0xb8] sm:$0xf] %vm540, %v458
  %588 = vst.msk [vmem:[%s3 + $0xbc] sm:$0xf] %vm540, %v459
  %589 = vst.msk [vmem:[%s3 + $0xc0] sm:$0xf] %vm540, %v460
  %590 = vst.msk [vmem:[%s3 + $0xc4] sm:$0xf] %vm540, %v461
  %591 = vst.msk [vmem:[%s3 + $0xc8] sm:$0xf] %vm540, %v462
  %592 = vst.msk [vmem:[%s3 + $0xcc] sm:$0xf] %vm540, %v463
  %593 = vst.msk [vmem:[%s3 + $0xd0] sm:$0xf] %vm540, %v464
  %594 = vst.msk [vmem:[%s3 + $0xd4] sm:$0xf] %vm540, %v465
  %595 = vst.msk [vmem:[%s3 + $0xd8] sm:$0xf] %vm540, %v466
  %596 = vst.msk [vmem:[%s3 + $0xdc] sm:$0xf] %vm540, %v467
  %597 = vst.msk [vmem:[%s3 + $0xe0] sm:$0xf] %vm540, %v468
  %598 = vst.msk [vmem:[%s3 + $0xe4] sm:$0xf] %vm540, %v469
  %599 = vst.msk [vmem:[%s3 + $0xe8] sm:$0xf] %vm540, %v470
  %600 = vst.msk [vmem:[%s3 + $0xec] sm:$0xf] %vm540, %v471
  %601 = vst.msk [vmem:[%s3 + $0xf0] sm:$0xf] %vm540, %v472
  %602 = vst.msk [vmem:[%s3 + $0xf4] sm:$0xf] %vm540, %v473
  %603 = vst.msk [vmem:[%s3 + $0xf8] sm:$0xf] %vm540, %v474
  %604 = vst.msk [vmem:[%s3 + $0xfc] sm:$0xf] %vm540, %v475
  // Predicated region
  $region14: #{resnet_forward.40} parent=0 // pred_check
    _
  $region15: #{resnet_forward.40} parent=0 // pred_check_branch
    %606 = sbr.rel (0) target = $region17
  $region16: #{resnet_forward.40} parent=0 // pred_region
    _
  $region17: #{resnet_forward.40} parent=0 // pred_fallthru
    _
  // Predicated region
  $region18: #{resnet_forward.40} parent=0 // pred_check
    _
  $region19: #{resnet_forward.40} parent=0 // pred_check_branch
    %608 = sbr.rel (0) target = $region21
  $region20: #{resnet_forward.40} parent=0 // pred_region
    _
  $region21: #{resnet_forward.40} parent=0 // pred_fallthru
    _

// kernel: resnet_forward.39
$region0: #{resnet_forward.39}
  #allocation0 [shape = 'u32[]', space=smem, size = 0x4, offset = 0x4, fixed_abs, tag = 'smem constant byte address 0x4 - core index']
  #allocation1 [shape = 'u32[144,128]{1,0:T(1,128)}', space=vmem, size = 0x12000, scoped, tag = 'internal scratch']
  %s0 = inlined_call_operand.vmem [shape: bf16[512,27], index: 0, kind: input, shape index: {}]
  %s1 = inlined_call_operand.vmem [shape: bf16[27,16], index: 1, kind: input, shape index: {}]
  %s2 = inlined_call_operand.vmem [shape: f32[512,16], index: 2, kind: output, shape index: {0}]
  %s3 = inlined_call_operand.vmem [shape: f32[8,16], index: 3, kind: output, shape index: {1}]
  %4 = xla_tuple %s2, %s3
  %s5 = sld [smem:[#allocation0]]
  $region26: #{resnet_forward.39} parent=0
    _
  %s7 = ssub.s32 1, %s5
  %s8 = scalar_select 0, %s7, %s5
  // Predicated region
  $region2: #{resnet_forward.39} parent=0 // pred_check
    _
  $region3: #{resnet_forward.39} parent=0 // pred_check_branch
    %10 = sbr.rel (0) target = $region5
  $region4: #{resnet_forward.39} parent=0 // pred_region
    _
  $region5: #{resnet_forward.39} parent=0 // pred_fallthru
    _
  // Predicated region
  $region6: #{resnet_forward.39} parent=0 // pred_check
    _
  $region7: #{resnet_forward.39} parent=0 // pred_check_branch
    %12 = sbr.rel (0) target = $region9
  $region8: #{resnet_forward.39} parent=0 // pred_region
    _
  $region9: #{resnet_forward.39} parent=0 // pred_fallthru
    _
  %v14 = vld [vmem:[%s0] sm:$0xf]
  %v15 = vld [vmem:[%s0 + $0x4] sm:$0xf]
  %v16 = vld [vmem:[%s0 + $0x8] sm:$0xf]
  %v17 = vld [vmem:[%s0 + $0xc] sm:$0xf]
  %v18 = vld [vmem:[%s0 + $0x10] sm:$0xf]
  %v19 = vld [vmem:[%s0 + $0x14] sm:$0xf]
  %v20 = vld [vmem:[%s0 + $0x18] sm:$0xf]
  %v21 = vld [vmem:[%s0 + $0x1c] sm:$0xf]
  %v22 = vld [vmem:[%s0 + $0x20] sm:$0xf]
  %v23 = vld [vmem:[%s0 + $0x24] sm:$0xf]
  %v24 = vld [vmem:[%s0 + $0x28] sm:$0xf]
  %v25 = vld [vmem:[%s0 + $0x2c] sm:$0xf]
  %v26 = vld [vmem:[%s0 + $0x30] sm:$0xf]
  %v27 = vld [vmem:[%s0 + $0x34] sm:$0xf]
  %v28 = vld [vmem:[%s0 + $0x38] sm:$0xf]
  %v29 = vld [vmem:[%s0 + $0x3c] sm:$0xf]
  %v30 = vld [vmem:[%s0 + $0x40] sm:$0xf]
  %v31 = vld [vmem:[%s0 + $0x44] sm:$0xf]
  %v32 = vld [vmem:[%s0 + $0x48] sm:$0xf]
  %v33 = vld [vmem:[%s0 + $0x4c] sm:$0xf]
  %v34 = vld [vmem:[%s0 + $0x50] sm:$0xf]
  %v35 = vld [vmem:[%s0 + $0x54] sm:$0xf]
  %v36 = vld [vmem:[%s0 + $0x58] sm:$0xf]
  %v37 = vld [vmem:[%s0 + $0x5c] sm:$0xf]
  %v38 = vld [vmem:[%s0 + $0x60] sm:$0xf]
  %v39 = vld [vmem:[%s0 + $0x64] sm:$0xf]
  %v40 = vld [vmem:[%s0 + $0x68] sm:$0xf]
  %v41 = vld [vmem:[%s0 + $0x6c] sm:$0xf]
  %v42 = vld [vmem:[%s0 + $0x70] sm:$0xf]
  %v43 = vld [vmem:[%s0 + $0x74] sm:$0xf]
  %v44 = vld [vmem:[%s0 + $0x78] sm:$0xf]
  %v45 = vld [vmem:[%s0 + $0x7c] sm:$0xf]
  %v46 = vld [vmem:[%s0 + $0x80] sm:$0xf]
  %v47 = vld [vmem:[%s0 + $0x84] sm:$0xf]
  %v48 = vld [vmem:[%s0 + $0x88] sm:$0xf]
  %v49 = vld [vmem:[%s0 + $0x8c] sm:$0xf]
  %v50 = vld [vmem:[%s0 + $0x90] sm:$0xf]
  %v51 = vld [vmem:[%s0 + $0x94] sm:$0xf]
  %v52 = vld [vmem:[%s0 + $0x98] sm:$0xf]
  %v53 = vld [vmem:[%s0 + $0x9c] sm:$0xf]
  %v54 = vld [vmem:[%s0 + $0xa0] sm:$0xf]
  %v55 = vld [vmem:[%s0 + $0xa4] sm:$0xf]
  %v56 = vld [vmem:[%s0 + $0xa8] sm:$0xf]
  %v57 = vld [vmem:[%s0 + $0xac] sm:$0xf]
  %v58 = vld [vmem:[%s0 + $0xb0] sm:$0xf]
  %v59 = vld [vmem:[%s0 + $0xb4] sm:$0xf]
  %v60 = vld [vmem:[%s0 + $0xb8] sm:$0xf]
  %v61 = vld [vmem:[%s0 + $0xbc] sm:$0xf]
  %v62 = vld [vmem:[%s0 + $0xc0] sm:$0xf]
  %v63 = vld [vmem:[%s0 + $0xc4] sm:$0xf]
  %v64 = vld [vmem:[%s0 + $0xc8] sm:$0xf]
  %v65 = vld [vmem:[%s0 + $0xcc] sm:$0xf]
  %v66 = vld [vmem:[%s0 + $0xd0] sm:$0xf]
  %v67 = vld [vmem:[%s0 + $0xd4] sm:$0xf]
  %v68 = vld [vmem:[%s0 + $0xd8] sm:$0xf]
  %v69 = vld [vmem:[%s0 + $0xdc] sm:$0xf]
  %v70 = vld [vmem:[%s0 + $0xe0] sm:$0xf]
  %v71 = vld [vmem:[%s0 + $0xe4] sm:$0xf]
  %v72 = vld [vmem:[%s0 + $0xe8] sm:$0xf]
  %v73 = vld [vmem:[%s0 + $0xec] sm:$0xf]
  %v74 = vld [vmem:[%s0 + $0xf0] sm:$0xf]
  %v75 = vld [vmem:[%s0 + $0xf4] sm:$0xf]
  %v76 = vld [vmem:[%s0 + $0xf8] sm:$0xf]
  %v77 = vld [vmem:[%s0 + $0xfc] sm:$0xf]
  %v78 = vld [vmem:[%s1] sm:$0xf]
  %v79 = vld [vmem:[%s1 + $0x4] sm:$0xf]
  %v80 = vld [vmem:[%s1 + $0x8] sm:$0xf]
  %v81 = vld [vmem:[%s1 + $0xc] sm:$0x3]
  %v146 = vunpack.c.l.b16 %v14
  %v147 = vunpack.c.l.b16 %v15
  %v148 = vunpack.c.l.b16 %v16
  %v149 = vunpack.c.l.b16 %v17
  %v150 = vunpack.c.l.b16 %v18
  %v151 = vunpack.c.l.b16 %v19
  %v152 = vunpack.c.l.b16 %v20
  %v153 = vunpack.c.l.b16 %v21
  %v154 = vunpack.c.l.b16 %v22
  %v155 = vunpack.c.l.b16 %v23
  %v156 = vunpack.c.l.b16 %v24
  %v157 = vunpack.c.l.b16 %v25
  %v158 = vunpack.c.l.b16 %v26
  %v159 = vunpack.c.l.b16 %v27
  %v160 = vunpack.c.l.b16 %v28
  %v161 = vunpack.c.l.b16 %v29
  %v162 = vunpack.c.l.b16 %v30
  %v163 = vunpack.c.l.b16 %v31
  %v164 = vunpack.c.l.b16 %v32
  %v165 = vunpack.c.l.b16 %v33
  %v166 = vunpack.c.l.b16 %v34
  %v167 = vunpack.c.l.b16 %v35
  %v168 = vunpack.c.l.b16 %v36
  %v169 = vunpack.c.l.b16 %v37
  %v170 = vunpack.c.l.b16 %v38
  %v171 = vunpack.c.l.b16 %v39
  %v172 = vunpack.c.l.b16 %v40
  %v173 = vunpack.c.l.b16 %v41
  %v174 = vunpack.c.l.b16 %v42
  %v175 = vunpack.c.l.b16 %v43
  %v176 = vunpack.c.l.b16 %v44
  %v177 = vunpack.c.l.b16 %v45
  %v178 = vunpack.c.l.b16 %v46
  %v179 = vunpack.c.l.b16 %v47
  %v180 = vunpack.c.l.b16 %v48
  %v181 = vunpack.c.l.b16 %v49
  %v182 = vunpack.c.l.b16 %v50
  %v183 = vunpack.c.l.b16 %v51
  %v184 = vunpack.c.l.b16 %v52
  %v185 = vunpack.c.l.b16 %v53
  %v186 = vunpack.c.l.b16 %v54
  %v187 = vunpack.c.l.b16 %v55
  %v188 = vunpack.c.l.b16 %v56
  %v189 = vunpack.c.l.b16 %v57
  %v190 = vunpack.c.l.b16 %v58
  %v191 = vunpack.c.l.b16 %v59
  %v192 = vunpack.c.l.b16 %v60
  %v193 = vunpack.c.l.b16 %v61
  %v194 = vunpack.c.l.b16 %v62
  %v195 = vunpack.c.l.b16 %v63
  %v196 = vunpack.c.l.b16 %v64
  %v197 = vunpack.c.l.b16 %v65
  %v198 = vunpack.c.l.b16 %v66
  %v199 = vunpack.c.l.b16 %v67
  %v200 = vunpack.c.l.b16 %v68
  %v201 = vunpack.c.l.b16 %v69
  %v202 = vunpack.c.l.b16 %v70
  %v203 = vunpack.c.l.b16 %v71
  %v204 = vunpack.c.l.b16 %v72
  %v205 = vunpack.c.l.b16 %v73
  %v206 = vunpack.c.l.b16 %v74
  %v207 = vunpack.c.l.b16 %v75
  %v208 = vunpack.c.l.b16 %v76
  %v209 = vunpack.c.l.b16 %v77
  %v210 = vpack.c.b16 %v147, %v146
  %v211 = vpack.c.b16 %v149, %v148
  %v212 = vpack.c.b16 %v151, %v150
  %v213 = vpack.c.b16 %v153, %v152
  %v214 = vpack.c.b16 %v155, %v154
  %v215 = vpack.c.b16 %v157, %v156
  %v216 = vpack.c.b16 %v159, %v158
  %v217 = vpack.c.b16 %v161, %v160
  %v218 = vpack.c.b16 %v163, %v162
  %v219 = vpack.c.b16 %v165, %v164
  %v220 = vpack.c.b16 %v167, %v166
  %v221 = vpack.c.b16 %v169, %v168
  %v222 = vpack.c.b16 %v171, %v170
  %v223 = vpack.c.b16 %v173, %v172
  %v224 = vpack.c.b16 %v175, %v174
  %v225 = vpack.c.b16 %v177, %v176
  %v226 = vpack.c.b16 %v179, %v178
  %v227 = vpack.c.b16 %v181, %v180
  %v228 = vpack.c.b16 %v183, %v182
  %v229 = vpack.c.b16 %v185, %v184
  %v230 = vpack.c.b16 %v187, %v186
  %v231 = vpack.c.b16 %v189, %v188
  %v232 = vpack.c.b16 %v191, %v190
  %v233 = vpack.c.b16 %v193, %v192
  %v234 = vpack.c.b16 %v195, %v194
  %v235 = vpack.c.b16 %v197, %v196
  %v236 = vpack.c.b16 %v199, %v198
  %v237 = vpack.c.b16 %v201, %v200
  %v238 = vpack.c.b16 %v203, %v202
  %v239 = vpack.c.b16 %v205, %v204
  %v240 = vpack.c.b16 %v207, %v206
  %v241 = vpack.c.b16 %v209, %v208
  %v246 = vunpack.c.l.b16 %v78
  %v247 = vunpack.c.l.b16 %v79
  %v248 = vunpack.c.l.b16 %v80
  %v249 = vunpack.c.l.b16 %v81
  %v250 = vpack.c.b16 %v247, %v246
  %v251 = vpack.c.b16 %v249, %v248
  %vm253 = vcmask 220160
  %v255 = vsel %vm253, %v210, 0
  %v258 = vsel %vm253, %v211, 0
  %v261 = vsel %vm253, %v212, 0
  %v264 = vsel %vm253, %v213, 0
  %v267 = vsel %vm253, %v214, 0
  %v270 = vsel %vm253, %v215, 0
  %v273 = vsel %vm253, %v216, 0
  %v276 = vsel %vm253, %v217, 0
  %v279 = vsel %vm253, %v218, 0
  %v282 = vsel %vm253, %v219, 0
  %v285 = vsel %vm253, %v220, 0
  %v288 = vsel %vm253, %v221, 0
  %v291 = vsel %vm253, %v222, 0
  %v294 = vsel %vm253, %v223, 0
  %v297 = vsel %vm253, %v224, 0
  %v300 = vsel %vm253, %v225, 0
  %v303 = vsel %vm253, %v226, 0
  %v306 = vsel %vm253, %v227, 0
  %v309 = vsel %vm253, %v228, 0
  %v312 = vsel %vm253, %v229, 0
  %v315 = vsel %vm253, %v230, 0
  %v318 = vsel %vm253, %v231, 0
  %v321 = vsel %vm253, %v232, 0
  %v324 = vsel %vm253, %v233, 0
  %v327 = vsel %vm253, %v234, 0
  %v330 = vsel %vm253, %v235, 0
  %v333 = vsel %vm253, %v236, 0
  %v336 = vsel %vm253, %v237, 0
  %v339 = vsel %vm253, %v238, 0
  %v342 = vsel %vm253, %v239, 0
  %v345 = vsel %vm253, %v240, 0
  %v348 = vsel %vm253, %v241, 0
  %vm350 = vcmask 1044480
  %vm351 = vcmask 1045504
  %v352 = vsel %vm350, 4294967295, 65535
  %v353 = vsel %vm351, %v352, 0
  %v355 = vand.u32 %v251, %v353
  %357 = vmatprep.subr.bf16.mxu0 0
  %358 = vmatpush1.bf16.msra.mxu0 %v250
  %359 = vmatprep.subr.bf16.mxu0 0
  %360 = vmatpush1.bf16.msra.mxu0 %v355
  %361 = vmatprep.subr.bf16.mxu0 0
  %362 = vmatpush1.bf16.msra.mxu0 0
  %363 = vmatprep.subr.bf16.mxu0 0
  %364 = vmatpush1.bf16.msra.mxu0 0
  %365 = vmatprep.subr.bf16.mxu0 0
  %366 = vmatpush1.bf16.msra.mxu0 0
  %367 = vmatprep.subr.bf16.mxu0 0
  %368 = vmatpush1.bf16.msra.mxu0 0
  %369 = vmatprep.subr.bf16.mxu0 0
  %370 = vmatpush1.bf16.msra.mxu0 0
  %371 = vmatprep.subr.bf16.mxu0 0
  %372 = vmatpush1.bf16.msra.mxu0 0
  %373 = vmatprep.subr.bf16.mxu0 0
  %374 = vmatpush1.bf16.msra.mxu0 0
  %375 = vmatprep.subr.bf16.mxu0 0
  %376 = vmatpush1.bf16.msra.mxu0 0
  %377 = vmatprep.subr.bf16.mxu0 0
  %378 = vmatpush1.bf16.msra.mxu0 0
  %379 = vmatprep.subr.bf16.mxu0 0
  %380 = vmatpush1.bf16.msra.mxu0 0
  %381 = vmatprep.subr.bf16.mxu0 0
  %382 = vmatpush1.bf16.msra.mxu0 0
  %383 = vmatprep.subr.bf16.mxu0 0
  %384 = vmatpush1.bf16.msra.mxu0 0
  %385 = vmatprep.subr.bf16.mxu0 0
  %386 = vmatpush1.bf16.msra.mxu0 0
  %387 = vmatprep.subr.bf16.mxu0 0
  %388 = vmatpush1.bf16.msra.mxu0 0
  %389 = vmatprep.mubr.bf16.mxu0 0
  %390 = vmatmul.mubr.bf16.gmra.mrb[0].mxu0 %v255
  %v391 = vpop.f32.mrb[0].mxu0
  %v392 = vadd.f32 0.0, %v391
  %v393 = vpop.f32.mrb[0].mxu0
  %v394 = vpop.f32.mrb[0].mxu0
  %v395 = vadd.f32 0.0, %v394
  %v396 = vpop.f32.mrb[0].mxu0
  %397 = vmatprep.mubr.bf16.mxu0 0
  %398 = vmatmul.mubr.bf16.gmra.mrb[0].mxu0 %v258
  %v399 = vpop.f32.mrb[0].mxu0
  %v400 = vadd.f32 0.0, %v399
  %v401 = vpop.f32.mrb[0].mxu0
  %v402 = vpop.f32.mrb[0].mxu0
  %v403 = vadd.f32 0.0, %v402
  %v404 = vpop.f32.mrb[0].mxu0
  %405 = vmatprep.mubr.bf16.mxu0 0
  %406 = vmatmul.mubr.bf16.gmra.mrb[0].mxu0 %v261
  %v407 = vpop.f32.mrb[0].mxu0
  %v408 = vadd.f32 0.0, %v407
  %v409 = vpop.f32.mrb[0].mxu0
  %v410 = vpop.f32.mrb[0].mxu0
  %v411 = vadd.f32 0.0, %v410
  %v412 = vpop.f32.mrb[0].mxu0
  %413 = vmatprep.mubr.bf16.mxu0 0
  %414 = vmatmul.mubr.bf16.gmra.mrb[0].mxu0 %v264
  %v415 = vpop.f32.mrb[0].mxu0
  %v416 = vadd.f32 0.0, %v415
  %v417 = vpop.f32.mrb[0].mxu0
  %v418 = vpop.f32.mrb[0].mxu0
  %v419 = vadd.f32 0.0, %v418
  %v420 = vpop.f32.mrb[0].mxu0
  %421 = vmatprep.mubr.bf16.mxu0 0
  %422 = vmatmul.mubr.bf16.gmra.mrb[0].mxu0 %v267
  %v423 = vpop.f32.mrb[0].mxu0
  %v424 = vadd.f32 0.0, %v423
  %v425 = vpop.f32.mrb[0].mxu0
  %v426 = vpop.f32.mrb[0].mxu0
  %v427 = vadd.f32 0.0, %v426
  %v428 = vpop.f32.mrb[0].mxu0
  %429 = vmatprep.mubr.bf16.mxu0 0
  %430 = vmatmul.mubr.bf16.gmra.mrb[0].mxu0 %v270
  %v431 = vpop.f32.mrb[0].mxu0
  %v432 = vadd.f32 0.0, %v431
  %v433 = vpop.f32.mrb[0].mxu0
  %v434 = vpop.f32.mrb[0].mxu0
  %v435 = vadd.f32 0.0, %v434
  %v436 = vpop.f32.mrb[0].mxu0
  %437 = vmatprep.mubr.bf16.mxu0 0
  %438 = vmatmul.mubr.bf16.gmra.mrb[0].mxu0 %v273
  %v439 = vpop.f32.mrb[0].mxu0
  %v440 = vadd.f32 0.0, %v439
  %v441 = vpop.f32.mrb[0].mxu0
  %v442 = vpop.f32.mrb[0].mxu0
  %v443 = vadd.f32 0.0, %v442
  %v444 = vpop.f32.mrb[0].mxu0
  %445 = vmatprep.mubr.bf16.mxu0 0
  %446 = vmatmul.mubr.bf16.gmra.mrb[0].mxu0 %v276
  %v447 = vpop.f32.mrb[0].mxu0
  %v448 = vadd.f32 0.0, %v447
  %v449 = vpop.f32.mrb[0].mxu0
  %v450 = vpop.f32.mrb[0].mxu0
  %v451 = vadd.f32 0.0, %v450
  %v452 = vpop.f32.mrb[0].mxu0
  %453 = vmatprep.mubr.bf16.mxu0 0
  %454 = vmatmul.mubr.bf16.gmra.mrb[0].mxu0 %v279
  %v455 = vpop.f32.mrb[0].mxu0
  %v456 = vadd.f32 0.0, %v455
  %v457 = vpop.f32.mrb[0].mxu0
  %v458 = vpop.f32.mrb[0].mxu0
  %v459 = vadd.f32 0.0, %v458
  %v460 = vpop.f32.mrb[0].mxu0
  %461 = vmatprep.mubr.bf16.mxu0 0
  %462 = vmatmul.mubr.bf16.gmra.mrb[0].mxu0 %v282
  %v463 = vpop.f32.mrb[0].mxu0
  %v464 = vadd.f32 0.0, %v463
  %v465 = vpop.f32.mrb[0].mxu0
  %v466 = vpop.f32.mrb[0].mxu0
  %v467 = vadd.f32 0.0, %v466
  %v468 = vpop.f32.mrb[0].mxu0
  %469 = vmatprep.mubr.bf16.mxu0 0
  %470 = vmatmul.mubr.bf16.gmra.mrb[0].mxu0 %v285
  %v471 = vpop.f32.mrb[0].mxu0
  %v472 = vadd.f32 0.0, %v471
  %v473 = vpop.f32.mrb[0].mxu0
  %v474 = vpop.f32.mrb[0].mxu0
  %v475 = vadd.f32 0.0, %v474
  %v476 = vpop.f32.mrb[0].mxu0
  %477 = vmatprep.mubr.bf16.mxu0 0
  %478 = vmatmul.mubr.bf16.gmra.mrb[0].mxu0 %v288
  %v479 = vpop.f32.mrb[0].mxu0
  %v480 = vadd.f32 0.0, %v479
  %v481 = vpop.f32.mrb[0].mxu0
  %v482 = vpop.f32.mrb[0].mxu0
  %v483 = vadd.f32 0.0, %v482
  %v484 = vpop.f32.mrb[0].mxu0
  %485 = vmatprep.mubr.bf16.mxu0 0
  %486 = vmatmul.mubr.bf16.gmra.mrb[0].mxu0 %v291
  %v487 = vpop.f32.mrb[0].mxu0
  %v488 = vadd.f32 0.0, %v487
  %v489 = vpop.f32.mrb[0].mxu0
  %v490 = vpop.f32.mrb[0].mxu0
  %v491 = vadd.f32 0.0, %v490
  %v492 = vpop.f32.mrb[0].mxu0
  %493 = vmatprep.mubr.bf16.mxu0 0
  %494 = vmatmul.mubr.bf16.gmra.mrb[0].mxu0 %v294
  %v495 = vpop.f32.mrb[0].mxu0
  %v496 = vadd.f32 0.0, %v495
  %v497 = vpop.f32.mrb[0].mxu0
  %v498 = vpop.f32.mrb[0].mxu0
  %v499 = vadd.f32 0.0, %v498
  %v500 = vpop.f32.mrb[0].mxu0
  %501 = vmatprep.mubr.bf16.mxu0 0
  %502 = vmatmul.mubr.bf16.gmra.mrb[0].mxu0 %v297
  %v503 = vpop.f32.mrb[0].mxu0
  %v504 = vadd.f32 0.0, %v503
  %v505 = vpop.f32.mrb[0].mxu0
  %v506 = vpop.f32.mrb[0].mxu0
  %v507 = vadd.f32 0.0, %v506
  %v508 = vpop.f32.mrb[0].mxu0
  %509 = vmatprep.mubr.bf16.mxu0 0
  %510 = vmatmul.mubr.bf16.gmra.mrb[0].mxu0 %v300
  %v511 = vpop.f32.mrb[0].mxu0
  %v512 = vadd.f32 0.0, %v511
  %v513 = vpop.f32.mrb[0].mxu0
  %v514 = vpop.f32.mrb[0].mxu0
  %v515 = vadd.f32 0.0, %v514
  %v516 = vpop.f32.mrb[0].mxu0
  %517 = vmatprep.mubr.bf16.mxu0 0
  %518 = vmatmul.mubr.bf16.gmra.mrb[0].mxu0 %v303
  %v519 = vpop.f32.mrb[0].mxu0
  %v520 = vadd.f32 0.0, %v519
  %v521 = vpop.f32.mrb[0].mxu0
  %v522 = vpop.f32.mrb[0].mxu0
  %v523 = vadd.f32 0.0, %v522
  %v524 = vpop.f32.mrb[0].mxu0
  %525 = vmatprep.mubr.bf16.mxu0 0
  %526 = vmatmul.mubr.bf16.gmra.mrb[0].mxu0 %v306
  %v527 = vpop.f32.mrb[0].mxu0
  %v528 = vadd.f32 0.0, %v527
  %v529 = vpop.f32.mrb[0].mxu0
  %v530 = vpop.f32.mrb[0].mxu0
  %v531 = vadd.f32 0.0, %v530
  %v532 = vpop.f32.mrb[0].mxu0
  %533 = vmatprep.mubr.bf16.mxu0 0
  %534 = vmatmul.mubr.bf16.gmra.mrb[0].mxu0 %v309
  %v535 = vpop.f32.mrb[0].mxu0
  %v536 = vadd.f32 0.0, %v535
  %v537 = vpop.f32.mrb[0].mxu0
  %v538 = vpop.f32.mrb[0].mxu0
  %v539 = vadd.f32 0.0, %v538
  %v540 = vpop.f32.mrb[0].mxu0
  %541 = vmatprep.mubr.bf16.mxu0 0
  %542 = vmatmul.mubr.bf16.gmra.mrb[0].mxu0 %v312
  %v543 = vpop.f32.mrb[0].mxu0
  %v544 = vadd.f32 0.0, %v543
  %v545 = vpop.f32.mrb[0].mxu0
  %v546 = vpop.f32.mrb[0].mxu0
  %v547 = vadd.f32 0.0, %v546
  %v548 = vpop.f32.mrb[0].mxu0
  %549 = vmatprep.mubr.bf16.mxu0 0
  %550 = vmatmul.mubr.bf16.gmra.mrb[0].mxu0 %v315
  %v551 = vpop.f32.mrb[0].mxu0
  %v552 = vadd.f32 0.0, %v551
  %v553 = vpop.f32.mrb[0].mxu0
  %v554 = vpop.f32.mrb[0].mxu0
  %v555 = vadd.f32 0.0, %v554
  %v556 = vpop.f32.mrb[0].mxu0
  %557 = vmatprep.mubr.bf16.mxu0 0
  %558 = vmatmul.mubr.bf16.gmra.mrb[0].mxu0 %v318
  %v559 = vpop.f32.mrb[0].mxu0
  %v560 = vadd.f32 0.0, %v559
  %v561 = vpop.f32.mrb[0].mxu0
  %v562 = vpop.f32.mrb[0].mxu0
  %v563 = vadd.f32 0.0, %v562
  %v564 = vpop.f32.mrb[0].mxu0
  %565 = vmatprep.mubr.bf16.mxu0 0
  %566 = vmatmul.mubr.bf16.gmra.mrb[0].mxu0 %v321
  %v567 = vpop.f32.mrb[0].mxu0
  %v568 = vadd.f32 0.0, %v567
  %v569 = vpop.f32.mrb[0].mxu0
  %v570 = vpop.f32.mrb[0].mxu0
  %v571 = vadd.f32 0.0, %v570
  %v572 = vpop.f32.mrb[0].mxu0
  %573 = vmatprep.mubr.bf16.mxu0 0
  %574 = vmatmul.mubr.bf16.gmra.mrb[0].mxu0 %v324
  %v575 = vpop.f32.mrb[0].mxu0
  %v576 = vadd.f32 0.0, %v575
  %v577 = vpop.f32.mrb[0].mxu0
  %v578 = vpop.f32.mrb[0].mxu0
  %v579 = vadd.f32 0.0, %v578
  %v580 = vpop.f32.mrb[0].mxu0
  %581 = vmatprep.mubr.bf16.mxu0 0
  %582 = vmatmul.mubr.bf16.gmra.mrb[0].mxu0 %v327
  %v583 = vpop.f32.mrb[0].mxu0
  %v584 = vadd.f32 0.0, %v583
  %v585 = vpop.f32.mrb[0].mxu0
  %v586 = vpop.f32.mrb[0].mxu0
  %v587 = vadd.f32 0.0, %v586
  %v588 = vpop.f32.mrb[0].mxu0
  %589 = vmatprep.mubr.bf16.mxu0 0
  %590 = vmatmul.mubr.bf16.gmra.mrb[0].mxu0 %v330
  %v591 = vpop.f32.mrb[0].mxu0
  %v592 = vadd.f32 0.0, %v591
  %v593 = vpop.f32.mrb[0].mxu0
  %v594 = vpop.f32.mrb[0].mxu0
  %v595 = vadd.f32 0.0, %v594
  %v596 = vpop.f32.mrb[0].mxu0
  %597 = vmatprep.mubr.bf16.mxu0 0
  %598 = vmatmul.mubr.bf16.gmra.mrb[0].mxu0 %v333
  %v599 = vpop.f32.mrb[0].mxu0
  %v600 = vadd.f32 0.0, %v599
  %v601 = vpop.f32.mrb[0].mxu0
  %v602 = vpop.f32.mrb[0].mxu0
  %v603 = vadd.f32 0.0, %v602
  %v604 = vpop.f32.mrb[0].mxu0
  %605 = vmatprep.mubr.bf16.mxu0 0
  %606 = vmatmul.mubr.bf16.gmra.mrb[0].mxu0 %v336
  %v607 = vpop.f32.mrb[0].mxu0
  %v608 = vadd.f32 0.0, %v607
  %v609 = vpop.f32.mrb[0].mxu0
  %v610 = vpop.f32.mrb[0].mxu0
  %v611 = vadd.f32 0.0, %v610
  %v612 = vpop.f32.mrb[0].mxu0
  %613 = vmatprep.mubr.bf16.mxu0 0
  %614 = vmatmul.mubr.bf16.gmra.mrb[0].mxu0 %v339
  %v615 = vpop.f32.mrb[0].mxu0
  %v616 = vadd.f32 0.0, %v615
  %v617 = vpop.f32.mrb[0].mxu0
  %v618 = vpop.f32.mrb[0].mxu0
  %v619 = vadd.f32 0.0, %v618
  %v620 = vpop.f32.mrb[0].mxu0
  %621 = vmatprep.mubr.bf16.mxu0 0
  %622 = vmatmul.mubr.bf16.gmra.mrb[0].mxu0 %v342
  %v623 = vpop.f32.mrb[0].mxu0
  %v624 = vadd.f32 0.0, %v623
  %v625 = vpop.f32.mrb[0].mxu0
  %v626 = vpop.f32.mrb[0].mxu0
  %v627 = vadd.f32 0.0, %v626
  %v628 = vpop.f32.mrb[0].mxu0
  %629 = vmatprep.mubr.bf16.mxu0 0
  %630 = vmatmul.mubr.bf16.gmra.mrb[0].mxu0 %v345
  %v631 = vpop.f32.mrb[0].mxu0
  %v632 = vadd.f32 0.0, %v631
  %v633 = vpop.f32.mrb[0].mxu0
  %v634 = vpop.f32.mrb[0].mxu0
  %v635 = vadd.f32 0.0, %v634
  %v636 = vpop.f32.mrb[0].mxu0
  %637 = vmatprep.mubr.bf16.mxu0 0
  %638 = vmatmul.mubr.bf16.gmra.mrb[0].mxu0 %v348
  %v639 = vpop.f32.mrb[0].mxu0
  %v640 = vadd.f32 0.0, %v639
  %v641 = vpop.f32.mrb[0].mxu0
  %v642 = vpop.f32.mrb[0].mxu0
  %v643 = vadd.f32 0.0, %v642
  %v644 = vpop.f32.mrb[0].mxu0
  %645 = vdwg.mxu0
  %vm646 = vcmask 130048
  %647 = vst.msk [vmem:[%s2] sm:$0xff] %vm646, %v392
  %648 = vst.msk [vmem:[%s2 + $0x8] sm:$0xff] %vm646, %v395
  %649 = vst.msk [vmem:[%s2 + $0x10] sm:$0xff] %vm646, %v400
  %650 = vst.msk [vmem:[%s2 + $0x18] sm:$0xff] %vm646, %v403
  %651 = vst.msk [vmem:[%s2 + $0x20] sm:$0xff] %vm646, %v408
  %652 = vst.msk [vmem:[%s2 + $0x28] sm:$0xff] %vm646, %v411
  %653 = vst.msk [vmem:[%s2 + $0x30] sm:$0xff] %vm646, %v416
  %654 = vst.msk [vmem:[%s2 + $0x38] sm:$0xff] %vm646, %v419
  %655 = vst.msk [vmem:[%s2 + $0x40] sm:$0xff] %vm646, %v424
  %656 = vst.msk [vmem:[%s2 + $0x48] sm:$0xff] %vm646, %v427
  %657 = vst.msk [vmem:[%s2 + $0x50] sm:$0xff] %vm646, %v432
  %658 = vst.msk [vmem:[%s2 + $0x58] sm:$0xff] %vm646, %v435
  %659 = vst.msk [vmem:[%s2 + $0x60] sm:$0xff] %vm646, %v440
  %660 = vst.msk [vmem:[%s2 + $0x68] sm:$0xff] %vm646, %v443
  %661 = vst.msk [vmem:[%s2 + $0x70] sm:$0xff] %vm646, %v448
  %662 = vst.msk [vmem:[%s2 + $0x78] sm:$0xff] %vm646, %v451
  %663 = vst.msk [vmem:[%s2 + $0x80] sm:$0xff] %vm646, %v456
  %664 = vst.msk [vmem:[%s2 + $0x88] sm:$0xff] %vm646, %v459
  %665 = vst.msk [vmem:[%s2 + $0x90] sm:$0xff] %vm646, %v464
  %666 = vst.msk [vmem:[%s2 + $0x98] sm:$0xff] %vm646, %v467
  %667 = vst.msk [vmem:[%s2 + $0xa0] sm:$0xff] %vm646, %v472
  %668 = vst.msk [vmem:[%s2 + $0xa8] sm:$0xff] %vm646, %v475
  %669 = vst.msk [vmem:[%s2 + $0xb0] sm:$0xff] %vm646, %v480
  %670 = vst.msk [vmem:[%s2 + $0xb8] sm:$0xff] %vm646, %v483
  %671 = vst.msk [vmem:[%s2 + $0xc0] sm:$0xff] %vm646, %v488
  %672 = vst.msk [vmem:[%s2 + $0xc8] sm:$0xff] %vm646, %v491
  %673 = vst.msk [vmem:[%s2 + $0xd0] sm:$0xff] %vm646, %v496
  %674 = vst.msk [vmem:[%s2 + $0xd8] sm:$0xff] %vm646, %v499
  %675 = vst.msk [vmem:[%s2 + $0xe0] sm:$0xff] %vm646, %v504
  %676 = vst.msk [vmem:[%s2 + $0xe8] sm:$0xff] %vm646, %v507
  %677 = vst.msk [vmem:[%s2 + $0xf0] sm:$0xff] %vm646, %v512
  %678 = vst.msk [vmem:[%s2 + $0xf8] sm:$0xff] %vm646, %v515
  %679 = vst.msk [vmem:[%s2 + $0x100] sm:$0xff] %vm646, %v520
  %680 = vst.msk [vmem:[%s2 + $0x108] sm:$0xff] %vm646, %v523
  %681 = vst.msk [vmem:[%s2 + $0x110] sm:$0xff] %vm646, %v528
  %682 = vst.msk [vmem:[%s2 + $0x118] sm:$0xff] %vm646, %v531
  %683 = vst.msk [vmem:[%s2 + $0x120] sm:$0xff] %vm646, %v536
  %684 = vst.msk [vmem:[%s2 + $0x128] sm:$0xff] %vm646, %v539
  %685 = vst.msk [vmem:[%s2 + $0x130] sm:$0xff] %vm646, %v544
  %686 = vst.msk [vmem:[%s2 + $0x138] sm:$0xff] %vm646, %v547
  %687 = vst.msk [vmem:[%s2 + $0x140] sm:$0xff] %vm646, %v552
  %688 = vst.msk [vmem:[%s2 + $0x148] sm:$0xff] %vm646, %v555
  %689 = vst.msk [vmem:[%s2 + $0x150] sm:$0xff] %vm646, %v560
  %690 = vst.msk [vmem:[%s2 + $0x158] sm:$0xff] %vm646, %v563
  %691 = vst.msk [vmem:[%s2 + $0x160] sm:$0xff] %vm646, %v568
  %692 = vst.msk [vmem:[%s2 + $0x168] sm:$0xff] %vm646, %v571
  %693 = vst.msk [vmem:[%s2 + $0x170] sm:$0xff] %vm646, %v576
  %694 = vst.msk [vmem:[%s2 + $0x178] sm:$0xff] %vm646, %v579
  %695 = vst.msk [vmem:[%s2 + $0x180] sm:$0xff] %vm646, %v584
  %696 = vst.msk [vmem:[%s2 + $0x188] sm:$0xff] %vm646, %v587
  %697 = vst.msk [vmem:[%s2 + $0x190] sm:$0xff] %vm646, %v592
  %698 = vst.msk [vmem:[%s2 + $0x198] sm:$0xff] %vm646, %v595
  %699 = vst.msk [vmem:[%s2 + $0x1a0] sm:$0xff] %vm646, %v600
  %700 = vst.msk [vmem:[%s2 + $0x1a8] sm:$0xff] %vm646, %v603
  %701 = vst.msk [vmem:[%s2 + $0x1b0] sm:$0xff] %vm646, %v608
  %702 = vst.msk [vmem:[%s2 + $0x1b8] sm:$0xff] %vm646, %v611
  %703 = vst.msk [vmem:[%s2 + $0x1c0] sm:$0xff] %vm646, %v616
  %704 = vst.msk [vmem:[%s2 + $0x1c8] sm:$0xff] %vm646, %v619
  %705 = vst.msk [vmem:[%s2 + $0x1d0] sm:$0xff] %vm646, %v624
  %706 = vst.msk [vmem:[%s2 + $0x1d8] sm:$0xff] %vm646, %v627
  %707 = vst.msk [vmem:[%s2 + $0x1e0] sm:$0xff] %vm646, %v632
  %708 = vst.msk [vmem:[%s2 + $0x1e8] sm:$0xff] %vm646, %v635
  %709 = vst.msk [vmem:[%s2 + $0x1f0] sm:$0xff] %vm646, %v640
  %710 = vst.msk [vmem:[%s2 + $0x1f8] sm:$0xff] %vm646, %v643
  %v711 = vsel %vm646, %v392, 0.0
  %v712 = vsel %vm646, %v395, 0.0
  %v713 = vadd.f32 %v711, %v712
  %v714 = vsel %vm646, %v400, 0.0
  %v715 = vadd.f32 %v713, %v714
  %v716 = vsel %vm646, %v403, 0.0
  %v717 = vadd.f32 %v715, %v716
  %v718 = vsel %vm646, %v408, 0.0
  %v719 = vadd.f32 %v717, %v718
  %v720 = vsel %vm646, %v411, 0.0
  %v721 = vadd.f32 %v719, %v720
  %v722 = vsel %vm646, %v416, 0.0
  %v723 = vadd.f32 %v721, %v722
  %v724 = vsel %vm646, %v419, 0.0
  %v725 = vadd.f32 %v723, %v724
  %v726 = vsel %vm646, %v424, 0.0
  %v727 = vadd.f32 %v725, %v726
  %v728 = vsel %vm646, %v427, 0.0
  %v729 = vadd.f32 %v727, %v728
  %v730 = vsel %vm646, %v432, 0.0
  %v731 = vadd.f32 %v729, %v730
  %v732 = vsel %vm646, %v435, 0.0
  %v733 = vadd.f32 %v731, %v732
  %v734 = vsel %vm646, %v440, 0.0
  %v735 = vadd.f32 %v733, %v734
  %v736 = vsel %vm646, %v443, 0.0
  %v737 = vadd.f32 %v735, %v736
  %v738 = vsel %vm646, %v448, 0.0
  %v739 = vadd.f32 %v737, %v738
  %v740 = vsel %vm646, %v451, 0.0
  %v741 = vadd.f32 %v739, %v740
  %v742 = vsel %vm646, %v456, 0.0
  %v743 = vadd.f32 %v741, %v742
  %v744 = vsel %vm646, %v459, 0.0
  %v745 = vadd.f32 %v743, %v744
  %v746 = vsel %vm646, %v464, 0.0
  %v747 = vadd.f32 %v745, %v746
  %v748 = vsel %vm646, %v467, 0.0
  %v749 = vadd.f32 %v747, %v748
  %v750 = vsel %vm646, %v472, 0.0
  %v751 = vadd.f32 %v749, %v750
  %v752 = vsel %vm646, %v475, 0.0
  %v753 = vadd.f32 %v751, %v752
  %v754 = vsel %vm646, %v480, 0.0
  %v755 = vadd.f32 %v753, %v754
  %v756 = vsel %vm646, %v483, 0.0
  %v757 = vadd.f32 %v755, %v756
  %v758 = vsel %vm646, %v488, 0.0
  %v759 = vadd.f32 %v757, %v758
  %v760 = vsel %vm646, %v491, 0.0
  %v761 = vadd.f32 %v759, %v760
  %v762 = vsel %vm646, %v496, 0.0
  %v763 = vadd.f32 %v761, %v762
  %v764 = vsel %vm646, %v499, 0.0
  %v765 = vadd.f32 %v763, %v764
  %v766 = vsel %vm646, %v504, 0.0
  %v767 = vadd.f32 %v765, %v766
  %v768 = vsel %vm646, %v507, 0.0
  %v769 = vadd.f32 %v767, %v768
  %v770 = vsel %vm646, %v512, 0.0
  %v771 = vadd.f32 %v769, %v770
  %v772 = vsel %vm646, %v515, 0.0
  %v773 = vadd.f32 %v771, %v772
  %v774 = vsel %vm646, %v520, 0.0
  %v775 = vadd.f32 %v773, %v774
  %v776 = vsel %vm646, %v523, 0.0
  %v777 = vadd.f32 %v775, %v776
  %v778 = vsel %vm646, %v528, 0.0
  %v779 = vadd.f32 %v777, %v778
  %v780 = vsel %vm646, %v531, 0.0
  %v781 = vadd.f32 %v779, %v780
  %v782 = vsel %vm646, %v536, 0.0
  %v783 = vadd.f32 %v781, %v782
  %v784 = vsel %vm646, %v539, 0.0
  %v785 = vadd.f32 %v783, %v784
  %v786 = vsel %vm646, %v544, 0.0
  %v787 = vadd.f32 %v785, %v786
  %v788 = vsel %vm646, %v547, 0.0
  %v789 = vadd.f32 %v787, %v788
  %v790 = vsel %vm646, %v552, 0.0
  %v791 = vadd.f32 %v789, %v790
  %v792 = vsel %vm646, %v555, 0.0
  %v793 = vadd.f32 %v791, %v792
  %v794 = vsel %vm646, %v560, 0.0
  %v795 = vadd.f32 %v793, %v794
  %v796 = vsel %vm646, %v563, 0.0
  %v797 = vadd.f32 %v795, %v796
  %v798 = vsel %vm646, %v568, 0.0
  %v799 = vadd.f32 %v797, %v798
  %v800 = vsel %vm646, %v571, 0.0
  %v801 = vadd.f32 %v799, %v800
  %v802 = vsel %vm646, %v576, 0.0
  %v803 = vadd.f32 %v801, %v802
  %v804 = vsel %vm646, %v579, 0.0
  %v805 = vadd.f32 %v803, %v804
  %v806 = vsel %vm646, %v584, 0.0
  %v807 = vadd.f32 %v805, %v806
  %v808 = vsel %vm646, %v587, 0.0
  %v809 = vadd.f32 %v807, %v808
  %v810 = vsel %vm646, %v592, 0.0
  %v811 = vadd.f32 %v809, %v810
  %v812 = vsel %vm646, %v595, 0.0
  %v813 = vadd.f32 %v811, %v812
  %v814 = vsel %vm646, %v600, 0.0
  %v815 = vadd.f32 %v813, %v814
  %v816 = vsel %vm646, %v603, 0.0
  %v817 = vadd.f32 %v815, %v816
  %v818 = vsel %vm646, %v608, 0.0
  %v819 = vadd.f32 %v817, %v818
  %v820 = vsel %vm646, %v611, 0.0
  %v821 = vadd.f32 %v819, %v820
  %v822 = vsel %vm646, %v616, 0.0
  %v823 = vadd.f32 %v821, %v822
  %v824 = vsel %vm646, %v619, 0.0
  %v825 = vadd.f32 %v823, %v824
  %v826 = vsel %vm646, %v624, 0.0
  %v827 = vadd.f32 %v825, %v826
  %v828 = vsel %vm646, %v627, 0.0
  %v829 = vadd.f32 %v827, %v828
  %v830 = vsel %vm646, %v632, 0.0
  %v831 = vadd.f32 %v829, %v830
  %v832 = vsel %vm646, %v635, 0.0
  %v833 = vadd.f32 %v831, %v832
  %v834 = vsel %vm646, %v640, 0.0
  %v835 = vadd.f32 %v833, %v834
  %v836 = vsel %vm646, %v643, 0.0
  %v837 = vadd.f32 %v835, %v836
  %v838 = vrot.slane %v837, 4
  %v839 = vadd.f32 %v837, %v838
  %v840 = vrot.slane %v839, 2
  %v841 = vadd.f32 %v839, %v840
  %v842 = vrot.slane %v841, 1
  %v843 = vadd.f32 %v841, %v842
  %v844 = vmul.f32 %v392, %v392
  %v845 = vmul.f32 %v395, %v395
  %v846 = vmul.f32 %v400, %v400
  %v847 = vmul.f32 %v403, %v403
  %v848 = vmul.f32 %v408, %v408
  %v849 = vmul.f32 %v411, %v411
  %v850 = vmul.f32 %v416, %v416
  %v851 = vmul.f32 %v419, %v419
  %v852 = vmul.f32 %v424, %v424
  %v853 = vmul.f32 %v427, %v427
  %v854 = vmul.f32 %v432, %v432
  %v855 = vmul.f32 %v435, %v435
  %v856 = vmul.f32 %v440, %v440
  %v857 = vmul.f32 %v443, %v443
  %v858 = vmul.f32 %v448, %v448
  %v859 = vmul.f32 %v451, %v451
  %v860 = vmul.f32 %v456, %v456
  %v861 = vmul.f32 %v459, %v459
  %v862 = vmul.f32 %v464, %v464
  %v863 = vmul.f32 %v467, %v467
  %v864 = vmul.f32 %v472, %v472
  %v865 = vmul.f32 %v475, %v475
  %v866 = vmul.f32 %v480, %v480
  %v867 = vmul.f32 %v483, %v483
  %v868 = vmul.f32 %v488, %v488
  %v869 = vmul.f32 %v491, %v491
  %v870 = vmul.f32 %v496, %v496
  %v871 = vmul.f32 %v499, %v499
  %v872 = vmul.f32 %v504, %v504
  %v873 = vmul.f32 %v507, %v507
  %v874 = vmul.f32 %v512, %v512
  %v875 = vmul.f32 %v515, %v515
  %v876 = vmul.f32 %v520, %v520
  %v877 = vmul.f32 %v523, %v523
  %v878 = vmul.f32 %v528, %v528
  %v879 = vmul.f32 %v531, %v531
  %v880 = vmul.f32 %v536, %v536
  %v881 = vmul.f32 %v539, %v539
  %v882 = vmul.f32 %v544, %v544
  %v883 = vmul.f32 %v547, %v547
  %v884 = vmul.f32 %v552, %v552
  %v885 = vmul.f32 %v555, %v555
  %v886 = vmul.f32 %v560, %v560
  %v887 = vmul.f32 %v563, %v563
  %v888 = vmul.f32 %v568, %v568
  %v889 = vmul.f32 %v571, %v571
  %v890 = vmul.f32 %v576, %v576
  %v891 = vmul.f32 %v579, %v579
  %v892 = vmul.f32 %v584, %v584
  %v893 = vmul.f32 %v587, %v587
  %v894 = vmul.f32 %v592, %v592
  %v895 = vmul.f32 %v595, %v595
  %v896 = vmul.f32 %v600, %v600
  %v897 = vmul.f32 %v603, %v603
  %v898 = vmul.f32 %v608, %v608
  %v899 = vmul.f32 %v611, %v611
  %v900 = vmul.f32 %v616, %v616
  %v901 = vmul.f32 %v619, %v619
  %v902 = vmul.f32 %v624, %v624
  %v903 = vmul.f32 %v627, %v627
  %v904 = vmul.f32 %v632, %v632
  %v905 = vmul.f32 %v635, %v635
  %v906 = vmul.f32 %v640, %v640
  %v907 = vmul.f32 %v643, %v643
  %v908 = vsel %vm646, %v844, 0.0
  %v909 = vsel %vm646, %v845, 0.0
  %v910 = vadd.f32 %v908, %v909
  %v911 = vsel %vm646, %v846, 0.0
  %v912 = vadd.f32 %v910, %v911
  %v913 = vsel %vm646, %v847, 0.0
  %v914 = vadd.f32 %v912, %v913
  %v915 = vsel %vm646, %v848, 0.0
  %v916 = vadd.f32 %v914, %v915
  %v917 = vsel %vm646, %v849, 0.0
  %v918 = vadd.f32 %v916, %v917
  %v919 = vsel %vm646, %v850, 0.0
  %v920 = vadd.f32 %v918, %v919
  %v921 = vsel %vm646, %v851, 0.0
  %v922 = vadd.f32 %v920, %v921
  %v923 = vsel %vm646, %v852, 0.0
  %v924 = vadd.f32 %v922, %v923
  %v925 = vsel %vm646, %v853, 0.0
  %v926 = vadd.f32 %v924, %v925
  %v927 = vsel %vm646, %v854, 0.0
  %v928 = vadd.f32 %v926, %v927
  %v929 = vsel %vm646, %v855, 0.0
  %v930 = vadd.f32 %v928, %v929
  %v931 = vsel %vm646, %v856, 0.0
  %v932 = vadd.f32 %v930, %v931
  %v933 = vsel %vm646, %v857, 0.0
  %v934 = vadd.f32 %v932, %v933
  %v935 = vsel %vm646, %v858, 0.0
  %v936 = vadd.f32 %v934, %v935
  %v937 = vsel %vm646, %v859, 0.0
  %v938 = vadd.f32 %v936, %v937
  %v939 = vsel %vm646, %v860, 0.0
  %v940 = vadd.f32 %v938, %v939
  %v941 = vsel %vm646, %v861, 0.0
  %v942 = vadd.f32 %v940, %v941
  %v943 = vsel %vm646, %v862, 0.0
  %v944 = vadd.f32 %v942, %v943
  %v945 = vsel %vm646, %v863, 0.0
  %v946 = vadd.f32 %v944, %v945
  %v947 = vsel %vm646, %v864, 0.0
  %v948 = vadd.f32 %v946, %v947
  %v949 = vsel %vm646, %v865, 0.0
  %v950 = vadd.f32 %v948, %v949
  %v951 = vsel %vm646, %v866, 0.0
  %v952 = vadd.f32 %v950, %v951
  %v953 = vsel %vm646, %v867, 0.0
  %v954 = vadd.f32 %v952, %v953
  %v955 = vsel %vm646, %v868, 0.0
  %v956 = vadd.f32 %v954, %v955
  %v957 = vsel %vm646, %v869, 0.0
  %v958 = vadd.f32 %v956, %v957
  %v959 = vsel %vm646, %v870, 0.0
  %v960 = vadd.f32 %v958, %v959
  %v961 = vsel %vm646, %v871, 0.0
  %v962 = vadd.f32 %v960, %v961
  %v963 = vsel %vm646, %v872, 0.0
  %v964 = vadd.f32 %v962, %v963
  %v965 = vsel %vm646, %v873, 0.0
  %v966 = vadd.f32 %v964, %v965
  %v967 = vsel %vm646, %v874, 0.0
  %v968 = vadd.f32 %v966, %v967
  %v969 = vsel %vm646, %v875, 0.0
  %v970 = vadd.f32 %v968, %v969
  %v971 = vsel %vm646, %v876, 0.0
  %v972 = vadd.f32 %v970, %v971
  %v973 = vsel %vm646, %v877, 0.0
  %v974 = vadd.f32 %v972, %v973
  %v975 = vsel %vm646, %v878, 0.0
  %v976 = vadd.f32 %v974, %v975
  %v977 = vsel %vm646, %v879, 0.0
  %v978 = vadd.f32 %v976, %v977
  %v979 = vsel %vm646, %v880, 0.0
  %v980 = vadd.f32 %v978, %v979
  %v981 = vsel %vm646, %v881, 0.0
  %v982 = vadd.f32 %v980, %v981
  %v983 = vsel %vm646, %v882, 0.0
  %v984 = vadd.f32 %v982, %v983
  %v985 = vsel %vm646, %v883, 0.0
  %v986 = vadd.f32 %v984, %v985
  %v987 = vsel %vm646, %v884, 0.0
  %v988 = vadd.f32 %v986, %v987
  %v989 = vsel %vm646, %v885, 0.0
  %v990 = vadd.f32 %v988, %v989
  %v991 = vsel %vm646, %v886, 0.0
  %v992 = vadd.f32 %v990, %v991
  %v993 = vsel %vm646, %v887, 0.0
  %v994 = vadd.f32 %v992, %v993
  %v995 = vsel %vm646, %v888, 0.0
  %v996 = vadd.f32 %v994, %v995
  %v997 = vsel %vm646, %v889, 0.0
  %v998 = vadd.f32 %v996, %v997
  %v999 = vsel %vm646, %v890, 0.0
  %v1000 = vadd.f32 %v998, %v999
  %v1001 = vsel %vm646, %v891, 0.0
  %v1002 = vadd.f32 %v1000, %v1001
  %v1003 = vsel %vm646, %v892, 0.0
  %v1004 = vadd.f32 %v1002, %v1003
  %v1005 = vsel %vm646, %v893, 0.0
  %v1006 = vadd.f32 %v1004, %v1005
  %v1007 = vsel %vm646, %v894, 0.0
  %v1008 = vadd.f32 %v1006, %v1007
  %v1009 = vsel %vm646, %v895, 0.0
  %v1010 = vadd.f32 %v1008, %v1009
  %v1011 = vsel %vm646, %v896, 0.0
  %v1012 = vadd.f32 %v1010, %v1011
  %v1013 = vsel %vm646, %v897, 0.0
  %v1014 = vadd.f32 %v1012, %v1013
  %v1015 = vsel %vm646, %v898, 0.0
  %v1016 = vadd.f32 %v1014, %v1015
  %v1017 = vsel %vm646, %v899, 0.0
  %v1018 = vadd.f32 %v1016, %v1017
  %v1019 = vsel %vm646, %v900, 0.0
  %v1020 = vadd.f32 %v1018, %v1019
  %v1021 = vsel %vm646, %v901, 0.0
  %v1022 = vadd.f32 %v1020, %v1021
  %v1023 = vsel %vm646, %v902, 0.0
  %v1024 = vadd.f32 %v1022, %v1023
  %v1025 = vsel %vm646, %v903, 0.0
  %v1026 = vadd.f32 %v1024, %v1025
  %v1027 = vsel %vm646, %v904, 0.0
  %v1028 = vadd.f32 %v1026, %v1027
  %v1029 = vsel %vm646, %v905, 0.0
  %v1030 = vadd.f32 %v1028, %v1029
  %v1031 = vsel %vm646, %v906, 0.0
  %v1032 = vadd.f32 %v1030, %v1031
  %v1033 = vsel %vm646, %v907, 0.0
  %v1034 = vadd.f32 %v1032, %v1033
  %v1035 = vrot.slane %v1034, 4
  %v1036 = vadd.f32 %v1034, %v1035
  %v1037 = vrot.slane %v1036, 2
  %v1038 = vadd.f32 %v1036, %v1037
  %v1039 = vrot.slane %v1038, 1
  %v1040 = vadd.f32 %v1038, %v1039
  %v1041 = vlaneseq
  %v1042 = vshrl.u32 %v1041, 7
  %vm1043 = vcmp.eq.s32.totalorder %v1042, 0
  %v1044 = vsel %vm1043, %v843, 0.0
  %vm1045 = vcmp.eq.s32.totalorder %v1042, 1
  %v1046 = vsel %vm1045, %v1040, 0.0
  %v1047 = vadd.f32 %v1044, %v1046
  %1048 = vst.msk [vmem:[%s3] sm:$0xff] %vm646, %v1047
  // Predicated region
  $region10: #{resnet_forward.39} parent=0 // pred_check
    _
  $region11: #{resnet_forward.39} parent=0 // pred_check_branch
    %1050 = sbr.rel (0) target = $region13
  $region12: #{resnet_forward.39} parent=0 // pred_region
    _
  $region13: #{resnet_forward.39} parent=0 // pred_fallthru
    _
  // Predicated region
  $region14: #{resnet_forward.39} parent=0 // pred_check
    _
  $region15: #{resnet_forward.39} parent=0 // pred_check_branch
    %1052 = sbr.rel (0) target = $region17
  $region16: #{resnet_forward.39} parent=0 // pred_region
    _
  $region17: #{resnet_forward.39} parent=0 // pred_fallthru
    _
  // Predicated region
  $region18: #{resnet_forward.39} parent=0 // pred_check
    _
  $region19: #{resnet_forward.39} parent=0 // pred_check_branch
    %1054 = sbr.rel (0) target = $region21
  $region20: #{resnet_forward.39} parent=0 // pred_region
    _
  $region21: #{resnet_forward.39} parent=0 // pred_fallthru
    _
  // Predicated region
  $region22: #{resnet_forward.39} parent=0 // pred_check
    _
  $region23: #{resnet_forward.39} parent=0 // pred_check_branch
    %1056 = sbr.rel (0) target = $region25
  $region24: #{resnet_forward.39} parent=0 // pred_region
    _
  $region25: #{resnet_forward.39} parent=0 // pred_fallthru
    _

// kernel: resnet_forward.44
$region0: #{resnet_forward.44}
  #allocation0 [shape = 'u32[]', space=smem, size = 0x4, offset = 0x4, fixed_abs, tag = 'smem constant byte address 0x4 - core index']
  #allocation1 [shape = 'u32[144,128]{1,0:T(1,128)}', space=vmem, size = 0x12000, scoped, tag = 'internal scratch']
  %s0 = inlined_call_operand.vmem [shape: f32[512,16], index: 0, kind: input, shape index: {}]
  %s1 = inlined_call_operand.vmem [shape: bf16[512,16], index: 1, kind: input, shape index: {}]
  %s2 = inlined_call_operand.vmem [shape: f32[1,16], index: 2, kind: input, shape index: {}]
  %s3 = inlined_call_operand.vmem [shape: f32[1,16], index: 3, kind: input, shape index: {}]
  %s4 = inlined_call_operand.vmem [shape: bf16[512,16], index: 4, kind: output, shape index: {}]
  %s5 = sld [smem:[#allocation0]]
  $region26: #{resnet_forward.44} parent=0
    _
  %s7 = ssub.s32 1, %s5
  %s8 = scalar_select 0, %s7, %s5
  // Predicated region
  $region2: #{resnet_forward.44} parent=0 // pred_check
    _
  $region3: #{resnet_forward.44} parent=0 // pred_check_branch
    %10 = sbr.rel (0) target = $region5
  $region4: #{resnet_forward.44} parent=0 // pred_region
    _
  $region5: #{resnet_forward.44} parent=0 // pred_fallthru
    _
  // Predicated region
  $region6: #{resnet_forward.44} parent=0 // pred_check
    _
  $region7: #{resnet_forward.44} parent=0 // pred_check_branch
    %12 = sbr.rel (0) target = $region9
  $region8: #{resnet_forward.44} parent=0 // pred_region
    _
  $region9: #{resnet_forward.44} parent=0 // pred_fallthru
    _
  // Predicated region
  $region10: #{resnet_forward.44} parent=0 // pred_check
    _
  $region11: #{resnet_forward.44} parent=0 // pred_check_branch
    %14 = sbr.rel (0) target = $region13
  $region12: #{resnet_forward.44} parent=0 // pred_region
    _
  $region13: #{resnet_forward.44} parent=0 // pred_fallthru
    _
  // Predicated region
  $region14: #{resnet_forward.44} parent=0 // pred_check
    _
  $region15: #{resnet_forward.44} parent=0 // pred_check_branch
    %16 = sbr.rel (0) target = $region17
  $region16: #{resnet_forward.44} parent=0 // pred_region
    _
  $region17: #{resnet_forward.44} parent=0 // pred_fallthru
    _
  %v17 = vld [vmem:[%s0] sm:$0xff]
  %v18 = vld [vmem:[%s0 + $0x8] sm:$0xff]
  %v19 = vld [vmem:[%s0 + $0x10] sm:$0xff]
  %v20 = vld [vmem:[%s0 + $0x18] sm:$0xff]
  %v21 = vld [vmem:[%s0 + $0x20] sm:$0xff]
  %v22 = vld [vmem:[%s0 + $0x28] sm:$0xff]
  %v23 = vld [vmem:[%s0 + $0x30] sm:$0xff]
  %v24 = vld [vmem:[%s0 + $0x38] sm:$0xff]
  %v25 = vld [vmem:[%s0 + $0x40] sm:$0xff]
  %v26 = vld [vmem:[%s0 + $0x48] sm:$0xff]
  %v27 = vld [vmem:[%s0 + $0x50] sm:$0xff]
  %v28 = vld [vmem:[%s0 + $0x58] sm:$0xff]
  %v29 = vld [vmem:[%s0 + $0x60] sm:$0xff]
  %v30 = vld [vmem:[%s0 + $0x68] sm:$0xff]
  %v31 = vld [vmem:[%s0 + $0x70] sm:$0xff]
  %v32 = vld [vmem:[%s0 + $0x78] sm:$0xff]
  %v33 = vld [vmem:[%s0 + $0x80] sm:$0xff]
  %v34 = vld [vmem:[%s0 + $0x88] sm:$0xff]
  %v35 = vld [vmem:[%s0 + $0x90] sm:$0xff]
  %v36 = vld [vmem:[%s0 + $0x98] sm:$0xff]
  %v37 = vld [vmem:[%s0 + $0xa0] sm:$0xff]
  %v38 = vld [vmem:[%s0 + $0xa8] sm:$0xff]
  %v39 = vld [vmem:[%s0 + $0xb0] sm:$0xff]
  %v40 = vld [vmem:[%s0 + $0xb8] sm:$0xff]
  %v41 = vld [vmem:[%s0 + $0xc0] sm:$0xff]
  %v42 = vld [vmem:[%s0 + $0xc8] sm:$0xff]
  %v43 = vld [vmem:[%s0 + $0xd0] sm:$0xff]
  %v44 = vld [vmem:[%s0 + $0xd8] sm:$0xff]
  %v45 = vld [vmem:[%s0 + $0xe0] sm:$0xff]
  %v46 = vld [vmem:[%s0 + $0xe8] sm:$0xff]
  %v47 = vld [vmem:[%s0 + $0xf0] sm:$0xff]
  %v48 = vld [vmem:[%s0 + $0xf8] sm:$0xff]
  %v49 = vld [vmem:[%s0 + $0x100] sm:$0xff]
  %v50 = vld [vmem:[%s0 + $0x108] sm:$0xff]
  %v51 = vld [vmem:[%s0 + $0x110] sm:$0xff]
  %v52 = vld [vmem:[%s0 + $0x118] sm:$0xff]
  %v53 = vld [vmem:[%s0 + $0x120] sm:$0xff]
  %v54 = vld [vmem:[%s0 + $0x128] sm:$0xff]
  %v55 = vld [vmem:[%s0 + $0x130] sm:$0xff]
  %v56 = vld [vmem:[%s0 + $0x138] sm:$0xff]
  %v57 = vld [vmem:[%s0 + $0x140] sm:$0xff]
  %v58 = vld [vmem:[%s0 + $0x148] sm:$0xff]
  %v59 = vld [vmem:[%s0 + $0x150] sm:$0xff]
  %v60 = vld [vmem:[%s0 + $0x158] sm:$0xff]
  %v61 = vld [vmem:[%s0 + $0x160] sm:$0xff]
  %v62 = vld [vmem:[%s0 + $0x168] sm:$0xff]
  %v63 = vld [vmem:[%s0 + $0x170] sm:$0xff]
  %v64 = vld [vmem:[%s0 + $0x178] sm:$0xff]
  %v65 = vld [vmem:[%s0 + $0x180] sm:$0xff]
  %v66 = vld [vmem:[%s0 + $0x188] sm:$0xff]
  %v67 = vld [vmem:[%s0 + $0x190] sm:$0xff]
  %v68 = vld [vmem:[%s0 + $0x198] sm:$0xff]
  %v69 = vld [vmem:[%s0 + $0x1a0] sm:$0xff]
  %v70 = vld [vmem:[%s0 + $0x1a8] sm:$0xff]
  %v71 = vld [vmem:[%s0 + $0x1b0] sm:$0xff]
  %v72 = vld [vmem:[%s0 + $0x1b8] sm:$0xff]
  %v73 = vld [vmem:[%s0 + $0x1c0] sm:$0xff]
  %v74 = vld [vmem:[%s0 + $0x1c8] sm:$0xff]
  %v75 = vld [vmem:[%s0 + $0x1d0] sm:$0xff]
  %v76 = vld [vmem:[%s0 + $0x1d8] sm:$0xff]
  %v77 = vld [vmem:[%s0 + $0x1e0] sm:$0xff]
  %v78 = vld [vmem:[%s0 + $0x1e8] sm:$0xff]
  %v79 = vld [vmem:[%s0 + $0x1f0] sm:$0xff]
  %v80 = vld [vmem:[%s0 + $0x1f8] sm:$0xff]
  %v81 = vld [vmem:[%s2] sm:$0x1]
  %v83 = vlaneseq
  %v84 = vshrl.u32 %v83, 7
  %v85 = vsub.s32 0, %v84
  %v86 = vrot.slane %v81, %v85
  %v88 = vmul.f32 %v17, %v86
  %v89 = vmul.f32 %v18, %v86
  %v90 = vmul.f32 %v19, %v86
  %v91 = vmul.f32 %v20, %v86
  %v92 = vmul.f32 %v21, %v86
  %v93 = vmul.f32 %v22, %v86
  %v94 = vmul.f32 %v23, %v86
  %v95 = vmul.f32 %v24, %v86
  %v96 = vmul.f32 %v25, %v86
  %v97 = vmul.f32 %v26, %v86
  %v98 = vmul.f32 %v27, %v86
  %v99 = vmul.f32 %v28, %v86
  %v100 = vmul.f32 %v29, %v86
  %v101 = vmul.f32 %v30, %v86
  %v102 = vmul.f32 %v31, %v86
  %v103 = vmul.f32 %v32, %v86
  %v104 = vmul.f32 %v33, %v86
  %v105 = vmul.f32 %v34, %v86
  %v106 = vmul.f32 %v35, %v86
  %v107 = vmul.f32 %v36, %v86
  %v108 = vmul.f32 %v37, %v86
  %v109 = vmul.f32 %v38, %v86
  %v110 = vmul.f32 %v39, %v86
  %v111 = vmul.f32 %v40, %v86
  %v112 = vmul.f32 %v41, %v86
  %v113 = vmul.f32 %v42, %v86
  %v114 = vmul.f32 %v43, %v86
  %v115 = vmul.f32 %v44, %v86
  %v116 = vmul.f32 %v45, %v86
  %v117 = vmul.f32 %v46, %v86
  %v118 = vmul.f32 %v47, %v86
  %v119 = vmul.f32 %v48, %v86
  %v120 = vmul.f32 %v49, %v86
  %v121 = vmul.f32 %v50, %v86
  %v122 = vmul.f32 %v51, %v86
  %v123 = vmul.f32 %v52, %v86
  %v124 = vmul.f32 %v53, %v86
  %v125 = vmul.f32 %v54, %v86
  %v126 = vmul.f32 %v55, %v86
  %v127 = vmul.f32 %v56, %v86
  %v128 = vmul.f32 %v57, %v86
  %v129 = vmul.f32 %v58, %v86
  %v130 = vmul.f32 %v59, %v86
  %v131 = vmul.f32 %v60, %v86
  %v132 = vmul.f32 %v61, %v86
  %v133 = vmul.f32 %v62, %v86
  %v134 = vmul.f32 %v63, %v86
  %v135 = vmul.f32 %v64, %v86
  %v136 = vmul.f32 %v65, %v86
  %v137 = vmul.f32 %v66, %v86
  %v138 = vmul.f32 %v67, %v86
  %v139 = vmul.f32 %v68, %v86
  %v140 = vmul.f32 %v69, %v86
  %v141 = vmul.f32 %v70, %v86
  %v142 = vmul.f32 %v71, %v86
  %v143 = vmul.f32 %v72, %v86
  %v144 = vmul.f32 %v73, %v86
  %v145 = vmul.f32 %v74, %v86
  %v146 = vmul.f32 %v75, %v86
  %v147 = vmul.f32 %v76, %v86
  %v148 = vmul.f32 %v77, %v86
  %v149 = vmul.f32 %v78, %v86
  %v150 = vmul.f32 %v79, %v86
  %v151 = vmul.f32 %v80, %v86
  %v152 = vld [vmem:[%s3] sm:$0x1]
  %v154 = vlaneseq
  %v155 = vshrl.u32 %v154, 7
  %v156 = vsub.s32 0, %v155
  %v157 = vrot.slane %v152, %v156
  %v159 = vadd.f32 %v88, %v157
  %v160 = vadd.f32 %v89, %v157
  %v161 = vadd.f32 %v90, %v157
  %v162 = vadd.f32 %v91, %v157
  %v163 = vadd.f32 %v92, %v157
  %v164 = vadd.f32 %v93, %v157
  %v165 = vadd.f32 %v94, %v157
  %v166 = vadd.f32 %v95, %v157
  %v167 = vadd.f32 %v96, %v157
  %v168 = vadd.f32 %v97, %v157
  %v169 = vadd.f32 %v98, %v157
  %v170 = vadd.f32 %v99, %v157
  %v171 = vadd.f32 %v100, %v157
  %v172 = vadd.f32 %v101, %v157
  %v173 = vadd.f32 %v102, %v157
  %v174 = vadd.f32 %v103, %v157
  %v175 = vadd.f32 %v104, %v157
  %v176 = vadd.f32 %v105, %v157
  %v177 = vadd.f32 %v106, %v157
  %v178 = vadd.f32 %v107, %v157
  %v179 = vadd.f32 %v108, %v157
  %v180 = vadd.f32 %v109, %v157
  %v181 = vadd.f32 %v110, %v157
  %v182 = vadd.f32 %v111, %v157
  %v183 = vadd.f32 %v112, %v157
  %v184 = vadd.f32 %v113, %v157
  %v185 = vadd.f32 %v114, %v157
  %v186 = vadd.f32 %v115, %v157
  %v187 = vadd.f32 %v116, %v157
  %v188 = vadd.f32 %v117, %v157
  %v189 = vadd.f32 %v118, %v157
  %v190 = vadd.f32 %v119, %v157
  %v191 = vadd.f32 %v120, %v157
  %v192 = vadd.f32 %v121, %v157
  %v193 = vadd.f32 %v122, %v157
  %v194 = vadd.f32 %v123, %v157
  %v195 = vadd.f32 %v124, %v157
  %v196 = vadd.f32 %v125, %v157
  %v197 = vadd.f32 %v126, %v157
  %v198 = vadd.f32 %v127, %v157
  %v199 = vadd.f32 %v128, %v157
  %v200 = vadd.f32 %v129, %v157
  %v201 = vadd.f32 %v130, %v157
  %v202 = vadd.f32 %v131, %v157
  %v203 = vadd.f32 %v132, %v157
  %v204 = vadd.f32 %v133, %v157
  %v205 = vadd.f32 %v134, %v157
  %v206 = vadd.f32 %v135, %v157
  %v207 = vadd.f32 %v136, %v157
  %v208 = vadd.f32 %v137, %v157
  %v209 = vadd.f32 %v138, %v157
  %v210 = vadd.f32 %v139, %v157
  %v211 = vadd.f32 %v140, %v157
  %v212 = vadd.f32 %v141, %v157
  %v213 = vadd.f32 %v142, %v157
  %v214 = vadd.f32 %v143, %v157
  %v215 = vadd.f32 %v144, %v157
  %v216 = vadd.f32 %v145, %v157
  %v217 = vadd.f32 %v146, %v157
  %v218 = vadd.f32 %v147, %v157
  %v219 = vadd.f32 %v148, %v157
  %v220 = vadd.f32 %v149, %v157
  %v221 = vadd.f32 %v150, %v157
  %v222 = vadd.f32 %v151, %v157
  %v223 = vld [vmem:[%s1] sm:$0xf]
  %v224 = vld [vmem:[%s1 + $0x4] sm:$0xf]
  %v225 = vld [vmem:[%s1 + $0x8] sm:$0xf]
  %v226 = vld [vmem:[%s1 + $0xc] sm:$0xf]
  %v227 = vld [vmem:[%s1 + $0x10] sm:$0xf]
  %v228 = vld [vmem:[%s1 + $0x14] sm:$0xf]
  %v229 = vld [vmem:[%s1 + $0x18] sm:$0xf]
  %v230 = vld [vmem:[%s1 + $0x1c] sm:$0xf]
  %v231 = vld [vmem:[%s1 + $0x20] sm:$0xf]
  %v232 = vld [vmem:[%s1 + $0x24] sm:$0xf]
  %v233 = vld [vmem:[%s1 + $0x28] sm:$0xf]
  %v234 = vld [vmem:[%s1 + $0x2c] sm:$0xf]
  %v235 = vld [vmem:[%s1 + $0x30] sm:$0xf]
  %v236 = vld [vmem:[%s1 + $0x34] sm:$0xf]
  %v237 = vld [vmem:[%s1 + $0x38] sm:$0xf]
  %v238 = vld [vmem:[%s1 + $0x3c] sm:$0xf]
  %v239 = vld [vmem:[%s1 + $0x40] sm:$0xf]
  %v240 = vld [vmem:[%s1 + $0x44] sm:$0xf]
  %v241 = vld [vmem:[%s1 + $0x48] sm:$0xf]
  %v242 = vld [vmem:[%s1 + $0x4c] sm:$0xf]
  %v243 = vld [vmem:[%s1 + $0x50] sm:$0xf]
  %v244 = vld [vmem:[%s1 + $0x54] sm:$0xf]
  %v245 = vld [vmem:[%s1 + $0x58] sm:$0xf]
  %v246 = vld [vmem:[%s1 + $0x5c] sm:$0xf]
  %v247 = vld [vmem:[%s1 + $0x60] sm:$0xf]
  %v248 = vld [vmem:[%s1 + $0x64] sm:$0xf]
  %v249 = vld [vmem:[%s1 + $0x68] sm:$0xf]
  %v250 = vld [vmem:[%s1 + $0x6c] sm:$0xf]
  %v251 = vld [vmem:[%s1 + $0x70] sm:$0xf]
  %v252 = vld [vmem:[%s1 + $0x74] sm:$0xf]
  %v253 = vld [vmem:[%s1 + $0x78] sm:$0xf]
  %v254 = vld [vmem:[%s1 + $0x7c] sm:$0xf]
  %v255 = vld [vmem:[%s1 + $0x80] sm:$0xf]
  %v256 = vld [vmem:[%s1 + $0x84] sm:$0xf]
  %v257 = vld [vmem:[%s1 + $0x88] sm:$0xf]
  %v258 = vld [vmem:[%s1 + $0x8c] sm:$0xf]
  %v259 = vld [vmem:[%s1 + $0x90] sm:$0xf]
  %v260 = vld [vmem:[%s1 + $0x94] sm:$0xf]
  %v261 = vld [vmem:[%s1 + $0x98] sm:$0xf]
  %v262 = vld [vmem:[%s1 + $0x9c] sm:$0xf]
  %v263 = vld [vmem:[%s1 + $0xa0] sm:$0xf]
  %v264 = vld [vmem:[%s1 + $0xa4] sm:$0xf]
  %v265 = vld [vmem:[%s1 + $0xa8] sm:$0xf]
  %v266 = vld [vmem:[%s1 + $0xac] sm:$0xf]
  %v267 = vld [vmem:[%s1 + $0xb0] sm:$0xf]
  %v268 = vld [vmem:[%s1 + $0xb4] sm:$0xf]
  %v269 = vld [vmem:[%s1 + $0xb8] sm:$0xf]
  %v270 = vld [vmem:[%s1 + $0xbc] sm:$0xf]
  %v271 = vld [vmem:[%s1 + $0xc0] sm:$0xf]
  %v272 = vld [vmem:[%s1 + $0xc4] sm:$0xf]
  %v273 = vld [vmem:[%s1 + $0xc8] sm:$0xf]
  %v274 = vld [vmem:[%s1 + $0xcc] sm:$0xf]
  %v275 = vld [vmem:[%s1 + $0xd0] sm:$0xf]
  %v276 = vld [vmem:[%s1 + $0xd4] sm:$0xf]
  %v277 = vld [vmem:[%s1 + $0xd8] sm:$0xf]
  %v278 = vld [vmem:[%s1 + $0xdc] sm:$0xf]
  %v279 = vld [vmem:[%s1 + $0xe0] sm:$0xf]
  %v280 = vld [vmem:[%s1 + $0xe4] sm:$0xf]
  %v281 = vld [vmem:[%s1 + $0xe8] sm:$0xf]
  %v282 = vld [vmem:[%s1 + $0xec] sm:$0xf]
  %v283 = vld [vmem:[%s1 + $0xf0] sm:$0xf]
  %v284 = vld [vmem:[%s1 + $0xf4] sm:$0xf]
  %v285 = vld [vmem:[%s1 + $0xf8] sm:$0xf]
  %v286 = vld [vmem:[%s1 + $0xfc] sm:$0xf]
  %v287 = vunpack.c.l.bf16 %v223
  %v288 = vunpack.c.l.bf16 %v224
  %v289 = vunpack.c.l.bf16 %v225
  %v290 = vunpack.c.l.bf16 %v226
  %v291 = vunpack.c.l.bf16 %v227
  %v292 = vunpack.c.l.bf16 %v228
  %v293 = vunpack.c.l.bf16 %v229
  %v294 = vunpack.c.l.bf16 %v230
  %v295 = vunpack.c.l.bf16 %v231
  %v296 = vunpack.c.l.bf16 %v232
  %v297 = vunpack.c.l.bf16 %v233
  %v298 = vunpack.c.l.bf16 %v234
  %v299 = vunpack.c.l.bf16 %v235
  %v300 = vunpack.c.l.bf16 %v236
  %v301 = vunpack.c.l.bf16 %v237
  %v302 = vunpack.c.l.bf16 %v238
  %v303 = vunpack.c.l.bf16 %v239
  %v304 = vunpack.c.l.bf16 %v240
  %v305 = vunpack.c.l.bf16 %v241
  %v306 = vunpack.c.l.bf16 %v242
  %v307 = vunpack.c.l.bf16 %v243
  %v308 = vunpack.c.l.bf16 %v244
  %v309 = vunpack.c.l.bf16 %v245
  %v310 = vunpack.c.l.bf16 %v246
  %v311 = vunpack.c.l.bf16 %v247
  %v312 = vunpack.c.l.bf16 %v248
  %v313 = vunpack.c.l.bf16 %v249
  %v314 = vunpack.c.l.bf16 %v250
  %v315 = vunpack.c.l.bf16 %v251
  %v316 = vunpack.c.l.bf16 %v252
  %v317 = vunpack.c.l.bf16 %v253
  %v318 = vunpack.c.l.bf16 %v254
  %v319 = vunpack.c.l.bf16 %v255
  %v320 = vunpack.c.l.bf16 %v256
  %v321 = vunpack.c.l.bf16 %v257
  %v322 = vunpack.c.l.bf16 %v258
  %v323 = vunpack.c.l.bf16 %v259
  %v324 = vunpack.c.l.bf16 %v260
  %v325 = vunpack.c.l.bf16 %v261
  %v326 = vunpack.c.l.bf16 %v262
  %v327 = vunpack.c.l.bf16 %v263
  %v328 = vunpack.c.l.bf16 %v264
  %v329 = vunpack.c.l.bf16 %v265
  %v330 = vunpack.c.l.bf16 %v266
  %v331 = vunpack.c.l.bf16 %v267
  %v332 = vunpack.c.l.bf16 %v268
  %v333 = vunpack.c.l.bf16 %v269
  %v334 = vunpack.c.l.bf16 %v270
  %v335 = vunpack.c.l.bf16 %v271
  %v336 = vunpack.c.l.bf16 %v272
  %v337 = vunpack.c.l.bf16 %v273
  %v338 = vunpack.c.l.bf16 %v274
  %v339 = vunpack.c.l.bf16 %v275
  %v340 = vunpack.c.l.bf16 %v276
  %v341 = vunpack.c.l.bf16 %v277
  %v342 = vunpack.c.l.bf16 %v278
  %v343 = vunpack.c.l.bf16 %v279
  %v344 = vunpack.c.l.bf16 %v280
  %v345 = vunpack.c.l.bf16 %v281
  %v346 = vunpack.c.l.bf16 %v282
  %v347 = vunpack.c.l.bf16 %v283
  %v348 = vunpack.c.l.bf16 %v284
  %v349 = vunpack.c.l.bf16 %v285
  %v350 = vunpack.c.l.bf16 %v286
  %v351 = vadd.f32 %v159, %v287
  %v352 = vadd.f32 %v160, %v288
  %v353 = vadd.f32 %v161, %v289
  %v354 = vadd.f32 %v162, %v290
  %v355 = vadd.f32 %v163, %v291
  %v356 = vadd.f32 %v164, %v292
  %v357 = vadd.f32 %v165, %v293
  %v358 = vadd.f32 %v166, %v294
  %v359 = vadd.f32 %v167, %v295
  %v360 = vadd.f32 %v168, %v296
  %v361 = vadd.f32 %v169, %v297
  %v362 = vadd.f32 %v170, %v298
  %v363 = vadd.f32 %v171, %v299
  %v364 = vadd.f32 %v172, %v300
  %v365 = vadd.f32 %v173, %v301
  %v366 = vadd.f32 %v174, %v302
  %v367 = vadd.f32 %v175, %v303
  %v368 = vadd.f32 %v176, %v304
  %v369 = vadd.f32 %v177, %v305
  %v370 = vadd.f32 %v178, %v306
  %v371 = vadd.f32 %v179, %v307
  %v372 = vadd.f32 %v180, %v308
  %v373 = vadd.f32 %v181, %v309
  %v374 = vadd.f32 %v182, %v310
  %v375 = vadd.f32 %v183, %v311
  %v376 = vadd.f32 %v184, %v312
  %v377 = vadd.f32 %v185, %v313
  %v378 = vadd.f32 %v186, %v314
  %v379 = vadd.f32 %v187, %v315
  %v380 = vadd.f32 %v188, %v316
  %v381 = vadd.f32 %v189, %v317
  %v382 = vadd.f32 %v190, %v318
  %v383 = vadd.f32 %v191, %v319
  %v384 = vadd.f32 %v192, %v320
  %v385 = vadd.f32 %v193, %v321
  %v386 = vadd.f32 %v194, %v322
  %v387 = vadd.f32 %v195, %v323
  %v388 = vadd.f32 %v196, %v324
  %v389 = vadd.f32 %v197, %v325
  %v390 = vadd.f32 %v198, %v326
  %v391 = vadd.f32 %v199, %v327
  %v392 = vadd.f32 %v200, %v328
  %v393 = vadd.f32 %v201, %v329
  %v394 = vadd.f32 %v202, %v330
  %v395 = vadd.f32 %v203, %v331
  %v396 = vadd.f32 %v204, %v332
  %v397 = vadd.f32 %v205, %v333
  %v398 = vadd.f32 %v206, %v334
  %v399 = vadd.f32 %v207, %v335
  %v400 = vadd.f32 %v208, %v336
  %v401 = vadd.f32 %v209, %v337
  %v402 = vadd.f32 %v210, %v338
  %v403 = vadd.f32 %v211, %v339
  %v404 = vadd.f32 %v212, %v340
  %v405 = vadd.f32 %v213, %v341
  %v406 = vadd.f32 %v214, %v342
  %v407 = vadd.f32 %v215, %v343
  %v408 = vadd.f32 %v216, %v344
  %v409 = vadd.f32 %v217, %v345
  %v410 = vadd.f32 %v218, %v346
  %v411 = vadd.f32 %v219, %v347
  %v412 = vadd.f32 %v220, %v348
  %v413 = vadd.f32 %v221, %v349
  %v414 = vadd.f32 %v222, %v350
  %v415 = vmax.f32 %v351, 0.0
  %v416 = vmax.f32 %v352, 0.0
  %v417 = vmax.f32 %v353, 0.0
  %v418 = vmax.f32 %v354, 0.0
  %v419 = vmax.f32 %v355, 0.0
  %v420 = vmax.f32 %v356, 0.0
  %v421 = vmax.f32 %v357, 0.0
  %v422 = vmax.f32 %v358, 0.0
  %v423 = vmax.f32 %v359, 0.0
  %v424 = vmax.f32 %v360, 0.0
  %v425 = vmax.f32 %v361, 0.0
  %v426 = vmax.f32 %v362, 0.0
  %v427 = vmax.f32 %v363, 0.0
  %v428 = vmax.f32 %v364, 0.0
  %v429 = vmax.f32 %v365, 0.0
  %v430 = vmax.f32 %v366, 0.0
  %v431 = vmax.f32 %v367, 0.0
  %v432 = vmax.f32 %v368, 0.0
  %v433 = vmax.f32 %v369, 0.0
  %v434 = vmax.f32 %v370, 0.0
  %v435 = vmax.f32 %v371, 0.0
  %v436 = vmax.f32 %v372, 0.0
  %v437 = vmax.f32 %v373, 0.0
  %v438 = vmax.f32 %v374, 0.0
  %v439 = vmax.f32 %v375, 0.0
  %v440 = vmax.f32 %v376, 0.0
  %v441 = vmax.f32 %v377, 0.0
  %v442 = vmax.f32 %v378, 0.0
  %v443 = vmax.f32 %v379, 0.0
  %v444 = vmax.f32 %v380, 0.0
  %v445 = vmax.f32 %v381, 0.0
  %v446 = vmax.f32 %v382, 0.0
  %v447 = vmax.f32 %v383, 0.0
  %v448 = vmax.f32 %v384, 0.0
  %v449 = vmax.f32 %v385, 0.0
  %v450 = vmax.f32 %v386, 0.0
  %v451 = vmax.f32 %v387, 0.0
  %v452 = vmax.f32 %v388, 0.0
  %v453 = vmax.f32 %v389, 0.0
  %v454 = vmax.f32 %v390, 0.0
  %v455 = vmax.f32 %v391, 0.0
  %v456 = vmax.f32 %v392, 0.0
  %v457 = vmax.f32 %v393, 0.0
  %v458 = vmax.f32 %v394, 0.0
  %v459 = vmax.f32 %v395, 0.0
  %v460 = vmax.f32 %v396, 0.0
  %v461 = vmax.f32 %v397, 0.0
  %v462 = vmax.f32 %v398, 0.0
  %v463 = vmax.f32 %v399, 0.0
  %v464 = vmax.f32 %v400, 0.0
  %v465 = vmax.f32 %v401, 0.0
  %v466 = vmax.f32 %v402, 0.0
  %v467 = vmax.f32 %v403, 0.0
  %v468 = vmax.f32 %v404, 0.0
  %v469 = vmax.f32 %v405, 0.0
  %v470 = vmax.f32 %v406, 0.0
  %v471 = vmax.f32 %v407, 0.0
  %v472 = vmax.f32 %v408, 0.0
  %v473 = vmax.f32 %v409, 0.0
  %v474 = vmax.f32 %v410, 0.0
  %v475 = vmax.f32 %v411, 0.0
  %v476 = vmax.f32 %v412, 0.0
  %v477 = vmax.f32 %v413, 0.0
  %v478 = vmax.f32 %v414, 0.0
  %v479 = vpack.c.bf16 %v416, %v415
  %v480 = vpack.c.bf16 %v418, %v417
  %v481 = vpack.c.bf16 %v420, %v419
  %v482 = vpack.c.bf16 %v422, %v421
  %v483 = vpack.c.bf16 %v424, %v423
  %v484 = vpack.c.bf16 %v426, %v425
  %v485 = vpack.c.bf16 %v428, %v427
  %v486 = vpack.c.bf16 %v430, %v429
  %v487 = vpack.c.bf16 %v432, %v431
  %v488 = vpack.c.bf16 %v434, %v433
  %v489 = vpack.c.bf16 %v436, %v435
  %v490 = vpack.c.bf16 %v438, %v437
  %v491 = vpack.c.bf16 %v440, %v439
  %v492 = vpack.c.bf16 %v442, %v441
  %v493 = vpack.c.bf16 %v444, %v443
  %v494 = vpack.c.bf16 %v446, %v445
  %v495 = vpack.c.bf16 %v448, %v447
  %v496 = vpack.c.bf16 %v450, %v449
  %v497 = vpack.c.bf16 %v452, %v451
  %v498 = vpack.c.bf16 %v454, %v453
  %v499 = vpack.c.bf16 %v456, %v455
  %v500 = vpack.c.bf16 %v458, %v457
  %v501 = vpack.c.bf16 %v460, %v459
  %v502 = vpack.c.bf16 %v462, %v461
  %v503 = vpack.c.bf16 %v464, %v463
  %v504 = vpack.c.bf16 %v466, %v465
  %v505 = vpack.c.bf16 %v468, %v467
  %v506 = vpack.c.bf16 %v470, %v469
  %v507 = vpack.c.bf16 %v472, %v471
  %v508 = vpack.c.bf16 %v474, %v473
  %v509 = vpack.c.bf16 %v476, %v475
  %v510 = vpack.c.bf16 %v478, %v477
  %v543 = vunpack.c.l.b16 %v479
  %v544 = vunpack.c.h.b16 %v479
  %v545 = vunpack.c.l.b16 %v480
  %v546 = vunpack.c.h.b16 %v480
  %v547 = vunpack.c.l.b16 %v481
  %v548 = vunpack.c.h.b16 %v481
  %v549 = vunpack.c.l.b16 %v482
  %v550 = vunpack.c.h.b16 %v482
  %v551 = vunpack.c.l.b16 %v483
  %v552 = vunpack.c.h.b16 %v483
  %v553 = vunpack.c.l.b16 %v484
  %v554 = vunpack.c.h.b16 %v484
  %v555 = vunpack.c.l.b16 %v485
  %v556 = vunpack.c.h.b16 %v485
  %v557 = vunpack.c.l.b16 %v486
  %v558 = vunpack.c.h.b16 %v486
  %v559 = vunpack.c.l.b16 %v487
  %v560 = vunpack.c.h.b16 %v487
  %v561 = vunpack.c.l.b16 %v488
  %v562 = vunpack.c.h.b16 %v488
  %v563 = vunpack.c.l.b16 %v489
  %v564 = vunpack.c.h.b16 %v489
  %v565 = vunpack.c.l.b16 %v490
  %v566 = vunpack.c.h.b16 %v490
  %v567 = vunpack.c.l.b16 %v491
  %v568 = vunpack.c.h.b16 %v491
  %v569 = vunpack.c.l.b16 %v492
  %v570 = vunpack.c.h.b16 %v492
  %v571 = vunpack.c.l.b16 %v493
  %v572 = vunpack.c.h.b16 %v493
  %v573 = vunpack.c.l.b16 %v494
  %v574 = vunpack.c.h.b16 %v494
  %v575 = vunpack.c.l.b16 %v495
  %v576 = vunpack.c.h.b16 %v495
  %v577 = vunpack.c.l.b16 %v496
  %v578 = vunpack.c.h.b16 %v496
  %v579 = vunpack.c.l.b16 %v497
  %v580 = vunpack.c.h.b16 %v497
  %v581 = vunpack.c.l.b16 %v498
  %v582 = vunpack.c.h.b16 %v498
  %v583 = vunpack.c.l.b16 %v499
  %v584 = vunpack.c.h.b16 %v499
  %v585 = vunpack.c.l.b16 %v500
  %v586 = vunpack.c.h.b16 %v500
  %v587 = vunpack.c.l.b16 %v501
  %v588 = vunpack.c.h.b16 %v501
  %v589 = vunpack.c.l.b16 %v502
  %v590 = vunpack.c.h.b16 %v502
  %v591 = vunpack.c.l.b16 %v503
  %v592 = vunpack.c.h.b16 %v503
  %v593 = vunpack.c.l.b16 %v504
  %v594 = vunpack.c.h.b16 %v504
  %v595 = vunpack.c.l.b16 %v505
  %v596 = vunpack.c.h.b16 %v505
  %v597 = vunpack.c.l.b16 %v506
  %v598 = vunpack.c.h.b16 %v506
  %v599 = vunpack.c.l.b16 %v507
  %v600 = vunpack.c.h.b16 %v507
  %v601 = vunpack.c.l.b16 %v508
  %v602 = vunpack.c.h.b16 %v508
  %v603 = vunpack.c.l.b16 %v509
  %v604 = vunpack.c.h.b16 %v509
  %v605 = vunpack.c.l.b16 %v510
  %v606 = vunpack.c.h.b16 %v510
  %v607 = vpack.c.b16 %v543, %v543
  %v608 = vpack.c.b16 %v544, %v544
  %v609 = vpack.c.b16 %v545, %v545
  %v610 = vpack.c.b16 %v546, %v546
  %v611 = vpack.c.b16 %v547, %v547
  %v612 = vpack.c.b16 %v548, %v548
  %v613 = vpack.c.b16 %v549, %v549
  %v614 = vpack.c.b16 %v550, %v550
  %v615 = vpack.c.b16 %v551, %v551
  %v616 = vpack.c.b16 %v552, %v552
  %v617 = vpack.c.b16 %v553, %v553
  %v618 = vpack.c.b16 %v554, %v554
  %v619 = vpack.c.b16 %v555, %v555
  %v620 = vpack.c.b16 %v556, %v556
  %v621 = vpack.c.b16 %v557, %v557
  %v622 = vpack.c.b16 %v558, %v558
  %v623 = vpack.c.b16 %v559, %v559
  %v624 = vpack.c.b16 %v560, %v560
  %v625 = vpack.c.b16 %v561, %v561
  %v626 = vpack.c.b16 %v562, %v562
  %v627 = vpack.c.b16 %v563, %v563
  %v628 = vpack.c.b16 %v564, %v564
  %v629 = vpack.c.b16 %v565, %v565
  %v630 = vpack.c.b16 %v566, %v566
  %v631 = vpack.c.b16 %v567, %v567
  %v632 = vpack.c.b16 %v568, %v568
  %v633 = vpack.c.b16 %v569, %v569
  %v634 = vpack.c.b16 %v570, %v570
  %v635 = vpack.c.b16 %v571, %v571
  %v636 = vpack.c.b16 %v572, %v572
  %v637 = vpack.c.b16 %v573, %v573
  %v638 = vpack.c.b16 %v574, %v574
  %v639 = vpack.c.b16 %v575, %v575
  %v640 = vpack.c.b16 %v576, %v576
  %v641 = vpack.c.b16 %v577, %v577
  %v642 = vpack.c.b16 %v578, %v578
  %v643 = vpack.c.b16 %v579, %v579
  %v644 = vpack.c.b16 %v580, %v580
  %v645 = vpack.c.b16 %v581, %v581
  %v646 = vpack.c.b16 %v582, %v582
  %v647 = vpack.c.b16 %v583, %v583
  %v648 = vpack.c.b16 %v584, %v584
  %v649 = vpack.c.b16 %v585, %v585
  %v650 = vpack.c.b16 %v586, %v586
  %v651 = vpack.c.b16 %v587, %v587
  %v652 = vpack.c.b16 %v588, %v588
  %v653 = vpack.c.b16 %v589, %v589
  %v654 = vpack.c.b16 %v590, %v590
  %v655 = vpack.c.b16 %v591, %v591
  %v656 = vpack.c.b16 %v592, %v592
  %v657 = vpack.c.b16 %v593, %v593
  %v658 = vpack.c.b16 %v594, %v594
  %v659 = vpack.c.b16 %v595, %v595
  %v660 = vpack.c.b16 %v596, %v596
  %v661 = vpack.c.b16 %v597, %v597
  %v662 = vpack.c.b16 %v598, %v598
  %v663 = vpack.c.b16 %v599, %v599
  %v664 = vpack.c.b16 %v600, %v600
  %v665 = vpack.c.b16 %v601, %v601
  %v666 = vpack.c.b16 %v602, %v602
  %v667 = vpack.c.b16 %v603, %v603
  %v668 = vpack.c.b16 %v604, %v604
  %v669 = vpack.c.b16 %v605, %v605
  %v670 = vpack.c.b16 %v606, %v606
  %vm735 = vcmask 125952
  %736 = vst.msk [vmem:[%s4] sm:$0xf] %vm735, %v607
  %737 = vst.msk [vmem:[%s4 + $0x4] sm:$0xf] %vm735, %v608
  %738 = vst.msk [vmem:[%s4 + $0x8] sm:$0xf] %vm735, %v609
  %739 = vst.msk [vmem:[%s4 + $0xc] sm:$0xf] %vm735, %v610
  %740 = vst.msk [vmem:[%s4 + $0x10] sm:$0xf] %vm735, %v611
  %741 = vst.msk [vmem:[%s4 + $0x14] sm:$0xf] %vm735, %v612
  %742 = vst.msk [vmem:[%s4 + $0x18] sm:$0xf] %vm735, %v613
  %743 = vst.msk [vmem:[%s4 + $0x1c] sm:$0xf] %vm735, %v614
  %744 = vst.msk [vmem:[%s4 + $0x20] sm:$0xf] %vm735, %v615
  %745 = vst.msk [vmem:[%s4 + $0x24] sm:$0xf] %vm735, %v616
  %746 = vst.msk [vmem:[%s4 + $0x28] sm:$0xf] %vm735, %v617
  %747 = vst.msk [vmem:[%s4 + $0x2c] sm:$0xf] %vm735, %v618
  %748 = vst.msk [vmem:[%s4 + $0x30] sm:$0xf] %vm735, %v619
  %749 = vst.msk [vmem:[%s4 + $0x34] sm:$0xf] %vm735, %v620
  %750 = vst.msk [vmem:[%s4 + $0x38] sm:$0xf] %vm735, %v621
  %751 = vst.msk [vmem:[%s4 + $0x3c] sm:$0xf] %vm735, %v622
  %752 = vst.msk [vmem:[%s4 + $0x40] sm:$0xf] %vm735, %v623
  %753 = vst.msk [vmem:[%s4 + $0x44] sm:$0xf] %vm735, %v624
  %754 = vst.msk [vmem:[%s4 + $0x48] sm:$0xf] %vm735, %v625
  %755 = vst.msk [vmem:[%s4 + $0x4c] sm:$0xf] %vm735, %v626
  %756 = vst.msk [vmem:[%s4 + $0x50] sm:$0xf] %vm735, %v627
  %757 = vst.msk [vmem:[%s4 + $0x54] sm:$0xf] %vm735, %v628
  %758 = vst.msk [vmem:[%s4 + $0x58] sm:$0xf] %vm735, %v629
  %759 = vst.msk [vmem:[%s4 + $0x5c] sm:$0xf] %vm735, %v630
  %760 = vst.msk [vmem:[%s4 + $0x60] sm:$0xf] %vm735, %v631
  %761 = vst.msk [vmem:[%s4 + $0x64] sm:$0xf] %vm735, %v632
  %762 = vst.msk [vmem:[%s4 + $0x68] sm:$0xf] %vm735, %v633
  %763 = vst.msk [vmem:[%s4 + $0x6c] sm:$0xf] %vm735, %v634
  %764 = vst.msk [vmem:[%s4 + $0x70] sm:$0xf] %vm735, %v635
  %765 = vst.msk [vmem:[%s4 + $0x74] sm:$0xf] %vm735, %v636
  %766 = vst.msk [vmem:[%s4 + $0x78] sm:$0xf] %vm735, %v637
  %767 = vst.msk [vmem:[%s4 + $0x7c] sm:$0xf] %vm735, %v638
  %768 = vst.msk [vmem:[%s4 + $0x80] sm:$0xf] %vm735, %v639
  %769 = vst.msk [vmem:[%s4 + $0x84] sm:$0xf] %vm735, %v640
  %770 = vst.msk [vmem:[%s4 + $0x88] sm:$0xf] %vm735, %v641
  %771 = vst.msk [vmem:[%s4 + $0x8c] sm:$0xf] %vm735, %v642
  %772 = vst.msk [vmem:[%s4 + $0x90] sm:$0xf] %vm735, %v643
  %773 = vst.msk [vmem:[%s4 + $0x94] sm:$0xf] %vm735, %v644
  %774 = vst.msk [vmem:[%s4 + $0x98] sm:$0xf] %vm735, %v645
  %775 = vst.msk [vmem:[%s4 + $0x9c] sm:$0xf] %vm735, %v646
  %776 = vst.msk [vmem:[%s4 + $0xa0] sm:$0xf] %vm735, %v647
  %777 = vst.msk [vmem:[%s4 + $0xa4] sm:$0xf] %vm735, %v648
  %778 = vst.msk [vmem:[%s4 + $0xa8] sm:$0xf] %vm735, %v649
  %779 = vst.msk [vmem:[%s4 + $0xac] sm:$0xf] %vm735, %v650
  %780 = vst.msk [vmem:[%s4 + $0xb0] sm:$0xf] %vm735, %v651
  %781 = vst.msk [vmem:[%s4 + $0xb4] sm:$0xf] %vm735, %v652
  %782 = vst.msk [vmem:[%s4 + $0xb8] sm:$0xf] %vm735, %v653
  %783 = vst.msk [vmem:[%s4 + $0xbc] sm:$0xf] %vm735, %v654
  %784 = vst.msk [vmem:[%s4 + $0xc0] sm:$0xf] %vm735, %v655
  %785 = vst.msk [vmem:[%s4 + $0xc4] sm:$0xf] %vm735, %v656
  %786 = vst.msk [vmem:[%s4 + $0xc8] sm:$0xf] %vm735, %v657
  %787 = vst.msk [vmem:[%s4 + $0xcc] sm:$0xf] %vm735, %v658
  %788 = vst.msk [vmem:[%s4 + $0xd0] sm:$0xf] %vm735, %v659
  %789 = vst.msk [vmem:[%s4 + $0xd4] sm:$0xf] %vm735, %v660
  %790 = vst.msk [vmem:[%s4 + $0xd8] sm:$0xf] %vm735, %v661
  %791 = vst.msk [vmem:[%s4 + $0xdc] sm:$0xf] %vm735, %v662
  %792 = vst.msk [vmem:[%s4 + $0xe0] sm:$0xf] %vm735, %v663
  %793 = vst.msk [vmem:[%s4 + $0xe4] sm:$0xf] %vm735, %v664
  %794 = vst.msk [vmem:[%s4 + $0xe8] sm:$0xf] %vm735, %v665
  %795 = vst.msk [vmem:[%s4 + $0xec] sm:$0xf] %vm735, %v666
  %796 = vst.msk [vmem:[%s4 + $0xf0] sm:$0xf] %vm735, %v667
  %797 = vst.msk [vmem:[%s4 + $0xf4] sm:$0xf] %vm735, %v668
  %798 = vst.msk [vmem:[%s4 + $0xf8] sm:$0xf] %vm735, %v669
  %799 = vst.msk [vmem:[%s4 + $0xfc] sm:$0xf] %vm735, %v670
  // Predicated region
  $region18: #{resnet_forward.44} parent=0 // pred_check
    _
  $region19: #{resnet_forward.44} parent=0 // pred_check_branch
    %801 = sbr.rel (0) target = $region21
  $region20: #{resnet_forward.44} parent=0 // pred_region
    _
  $region21: #{resnet_forward.44} parent=0 // pred_fallthru
    _
  // Predicated region
  $region22: #{resnet_forward.44} parent=0 // pred_check
    _
  $region23: #{resnet_forward.44} parent=0 // pred_check_branch
    %803 = sbr.rel (0) target = $region25
  $region24: #{resnet_forward.44} parent=0 // pred_region
    _
  $region25: #{resnet_forward.44} parent=0 // pred_fallthru
    _

// kernel: resnet_forward.41
$region0: #{resnet_forward.41}
  #allocation0 [shape = 'u32[]', space=smem, size = 0x4, offset = 0x4, fixed_abs, tag = 'smem constant byte address 0x4 - core index']
  #allocation1 [shape = 'u32[144,128]{1,0:T(1,128)}', space=vmem, size = 0x12000, scoped, tag = 'internal scratch']
  %s0 = inlined_call_operand.vmem [shape: bf16[512,144], index: 0, kind: input, shape index: {}]
  %s1 = inlined_call_operand.vmem [shape: bf16[144,16], index: 1, kind: input, shape index: {}]
  %s2 = inlined_call_operand.vmem [shape: f32[512,16], index: 2, kind: output, shape index: {0}]
  %s3 = inlined_call_operand.vmem [shape: f32[8,16], index: 3, kind: output, shape index: {1}]
  %4 = xla_tuple %s2, %s3
  %s5 = sld [smem:[#allocation0]]
  $region26: #{resnet_forward.41} parent=0
    _
  %s7 = ssub.s32 1, %s5
  %s8 = scalar_select 0, %s7, %s5
  // Predicated region
  $region2: #{resnet_forward.41} parent=0 // pred_check
    _
  $region3: #{resnet_forward.41} parent=0 // pred_check_branch
    %10 = sbr.rel (0) target = $region5
  $region4: #{resnet_forward.41} parent=0 // pred_region
    _
  $region5: #{resnet_forward.41} parent=0 // pred_fallthru
    _
  // Predicated region
  $region6: #{resnet_forward.41} parent=0 // pred_check
    _
  $region7: #{resnet_forward.41} parent=0 // pred_check_branch
    %12 = sbr.rel (0) target = $region9
  $region8: #{resnet_forward.41} parent=0 // pred_region
    _
  $region9: #{resnet_forward.41} parent=0 // pred_fallthru
    _
  %v14 = vld [vmem:[%s0] sm:$0xff]
  %v15 = vld [vmem:[%s0 + $0x8] sm:$0xff]
  %v16 = vld [vmem:[%s0 + $0x10] sm:$0xff]
  %v17 = vld [vmem:[%s0 + $0x18] sm:$0xff]
  %v18 = vld [vmem:[%s0 + $0x20] sm:$0xff]
  %v19 = vld [vmem:[%s0 + $0x28] sm:$0xff]
  %v20 = vld [vmem:[%s0 + $0x30] sm:$0xff]
  %v21 = vld [vmem:[%s0 + $0x38] sm:$0xff]
  %v22 = vld [vmem:[%s0 + $0x40] sm:$0xff]
  %v23 = vld [vmem:[%s0 + $0x48] sm:$0xff]
  %v24 = vld [vmem:[%s0 + $0x50] sm:$0xff]
  %v25 = vld [vmem:[%s0 + $0x58] sm:$0xff]
  %v26 = vld [vmem:[%s0 + $0x60] sm:$0xff]
  %v27 = vld [vmem:[%s0 + $0x68] sm:$0xff]
  %v28 = vld [vmem:[%s0 + $0x70] sm:$0xff]
  %v29 = vld [vmem:[%s0 + $0x78] sm:$0xff]
  %v30 = vld [vmem:[%s0 + $0x80] sm:$0xff]
  %v31 = vld [vmem:[%s0 + $0x88] sm:$0xff]
  %v32 = vld [vmem:[%s0 + $0x90] sm:$0xff]
  %v33 = vld [vmem:[%s0 + $0x98] sm:$0xff]
  %v34 = vld [vmem:[%s0 + $0xa0] sm:$0xff]
  %v35 = vld [vmem:[%s0 + $0xa8] sm:$0xff]
  %v36 = vld [vmem:[%s0 + $0xb0] sm:$0xff]
  %v37 = vld [vmem:[%s0 + $0xb8] sm:$0xff]
  %v38 = vld [vmem:[%s0 + $0xc0] sm:$0xff]
  %v39 = vld [vmem:[%s0 + $0xc8] sm:$0xff]
  %v40 = vld [vmem:[%s0 + $0xd0] sm:$0xff]
  %v41 = vld [vmem:[%s0 + $0xd8] sm:$0xff]
  %v42 = vld [vmem:[%s0 + $0xe0] sm:$0xff]
  %v43 = vld [vmem:[%s0 + $0xe8] sm:$0xff]
  %v44 = vld [vmem:[%s0 + $0xf0] sm:$0xff]
  %v45 = vld [vmem:[%s0 + $0xf8] sm:$0xff]
  %v46 = vld [vmem:[%s0 + $0x100] sm:$0xff]
  %v47 = vld [vmem:[%s0 + $0x108] sm:$0xff]
  %v48 = vld [vmem:[%s0 + $0x110] sm:$0xff]
  %v49 = vld [vmem:[%s0 + $0x118] sm:$0xff]
  %v50 = vld [vmem:[%s0 + $0x120] sm:$0xff]
  %v51 = vld [vmem:[%s0 + $0x128] sm:$0xff]
  %v52 = vld [vmem:[%s0 + $0x130] sm:$0xff]
  %v53 = vld [vmem:[%s0 + $0x138] sm:$0xff]
  %v54 = vld [vmem:[%s0 + $0x140] sm:$0xff]
  %v55 = vld [vmem:[%s0 + $0x148] sm:$0xff]
  %v56 = vld [vmem:[%s0 + $0x150] sm:$0xff]
  %v57 = vld [vmem:[%s0 + $0x158] sm:$0xff]
  %v58 = vld [vmem:[%s0 + $0x160] sm:$0xff]
  %v59 = vld [vmem:[%s0 + $0x168] sm:$0xff]
  %v60 = vld [vmem:[%s0 + $0x170] sm:$0xff]
  %v61 = vld [vmem:[%s0 + $0x178] sm:$0xff]
  %v62 = vld [vmem:[%s0 + $0x180] sm:$0xff]
  %v63 = vld [vmem:[%s0 + $0x188] sm:$0xff]
  %v64 = vld [vmem:[%s0 + $0x190] sm:$0xff]
  %v65 = vld [vmem:[%s0 + $0x198] sm:$0xff]
  %v66 = vld [vmem:[%s0 + $0x1a0] sm:$0xff]
  %v67 = vld [vmem:[%s0 + $0x1a8] sm:$0xff]
  %v68 = vld [vmem:[%s0 + $0x1b0] sm:$0xff]
  %v69 = vld [vmem:[%s0 + $0x1b8] sm:$0xff]
  %v70 = vld [vmem:[%s0 + $0x1c0] sm:$0xff]
  %v71 = vld [vmem:[%s0 + $0x1c8] sm:$0xff]
  %v72 = vld [vmem:[%s0 + $0x1d0] sm:$0xff]
  %v73 = vld [vmem:[%s0 + $0x1d8] sm:$0xff]
  %v74 = vld [vmem:[%s0 + $0x1e0] sm:$0xff]
  %v75 = vld [vmem:[%s0 + $0x1e8] sm:$0xff]
  %v76 = vld [vmem:[%s0 + $0x1f0] sm:$0xff]
  %v77 = vld [vmem:[%s0 + $0x1f8] sm:$0xff]
  %v78 = vld [vmem:[%s1] sm:$0xf]
  %v79 = vld [vmem:[%s1 + $0x4] sm:$0xf]
  %v80 = vld [vmem:[%s1 + $0x8] sm:$0xf]
  %v81 = vld [vmem:[%s1 + $0xc] sm:$0xf]
  %v82 = vld [vmem:[%s1 + $0x10] sm:$0xf]
  %v83 = vld [vmem:[%s1 + $0x14] sm:$0xf]
  %v84 = vld [vmem:[%s1 + $0x18] sm:$0xf]
  %v85 = vld [vmem:[%s1 + $0x1c] sm:$0xf]
  %v86 = vld [vmem:[%s1 + $0x20] sm:$0xf]
  %v87 = vld [vmem:[%s1 + $0x24] sm:$0xf]
  %v88 = vld [vmem:[%s1 + $0x28] sm:$0xf]
  %v89 = vld [vmem:[%s1 + $0x2c] sm:$0xf]
  %v90 = vld [vmem:[%s1 + $0x30] sm:$0xf]
  %v91 = vld [vmem:[%s1 + $0x34] sm:$0xf]
  %v92 = vld [vmem:[%s1 + $0x38] sm:$0xf]
  %v93 = vld [vmem:[%s1 + $0x3c] sm:$0xf]
  %v94 = vld [vmem:[%s1 + $0x40] sm:$0xf]
  %v95 = vld [vmem:[%s1 + $0x44] sm:$0xf]
  %v160 = vunpack.c.l.b16 %v14
  %v161 = vunpack.c.h.b16 %v14
  %v162 = vunpack.c.l.b16 %v15
  %v163 = vunpack.c.h.b16 %v15
  %v164 = vunpack.c.l.b16 %v16
  %v165 = vunpack.c.h.b16 %v16
  %v166 = vunpack.c.l.b16 %v17
  %v167 = vunpack.c.h.b16 %v17
  %v168 = vunpack.c.l.b16 %v18
  %v169 = vunpack.c.h.b16 %v18
  %v170 = vunpack.c.l.b16 %v19
  %v171 = vunpack.c.h.b16 %v19
  %v172 = vunpack.c.l.b16 %v20
  %v173 = vunpack.c.h.b16 %v20
  %v174 = vunpack.c.l.b16 %v21
  %v175 = vunpack.c.h.b16 %v21
  %v176 = vunpack.c.l.b16 %v22
  %v177 = vunpack.c.h.b16 %v22
  %v178 = vunpack.c.l.b16 %v23
  %v179 = vunpack.c.h.b16 %v23
  %v180 = vunpack.c.l.b16 %v24
  %v181 = vunpack.c.h.b16 %v24
  %v182 = vunpack.c.l.b16 %v25
  %v183 = vunpack.c.h.b16 %v25
  %v184 = vunpack.c.l.b16 %v26
  %v185 = vunpack.c.h.b16 %v26
  %v186 = vunpack.c.l.b16 %v27
  %v187 = vunpack.c.h.b16 %v27
  %v188 = vunpack.c.l.b16 %v28
  %v189 = vunpack.c.h.b16 %v28
  %v190 = vunpack.c.l.b16 %v29
  %v191 = vunpack.c.h.b16 %v29
  %v192 = vunpack.c.l.b16 %v30
  %v193 = vunpack.c.h.b16 %v30
  %v194 = vunpack.c.l.b16 %v31
  %v195 = vunpack.c.h.b16 %v31
  %v196 = vunpack.c.l.b16 %v32
  %v197 = vunpack.c.h.b16 %v32
  %v198 = vunpack.c.l.b16 %v33
  %v199 = vunpack.c.h.b16 %v33
  %v200 = vunpack.c.l.b16 %v34
  %v201 = vunpack.c.h.b16 %v34
  %v202 = vunpack.c.l.b16 %v35
  %v203 = vunpack.c.h.b16 %v35
  %v204 = vunpack.c.l.b16 %v36
  %v205 = vunpack.c.h.b16 %v36
  %v206 = vunpack.c.l.b16 %v37
  %v207 = vunpack.c.h.b16 %v37
  %v208 = vunpack.c.l.b16 %v38
  %v209 = vunpack.c.h.b16 %v38
  %v210 = vunpack.c.l.b16 %v39
  %v211 = vunpack.c.h.b16 %v39
  %v212 = vunpack.c.l.b16 %v40
  %v213 = vunpack.c.h.b16 %v40
  %v214 = vunpack.c.l.b16 %v41
  %v215 = vunpack.c.h.b16 %v41
  %v216 = vunpack.c.l.b16 %v42
  %v217 = vunpack.c.h.b16 %v42
  %v218 = vunpack.c.l.b16 %v43
  %v219 = vunpack.c.h.b16 %v43
  %v220 = vunpack.c.l.b16 %v44
  %v221 = vunpack.c.h.b16 %v44
  %v222 = vunpack.c.l.b16 %v45
  %v223 = vunpack.c.h.b16 %v45
  %v224 = vunpack.c.l.b16 %v46
  %v225 = vunpack.c.h.b16 %v46
  %v226 = vunpack.c.l.b16 %v47
  %v227 = vunpack.c.h.b16 %v47
  %v228 = vunpack.c.l.b16 %v48
  %v229 = vunpack.c.h.b16 %v48
  %v230 = vunpack.c.l.b16 %v49
  %v231 = vunpack.c.h.b16 %v49
  %v232 = vunpack.c.l.b16 %v50
  %v233 = vunpack.c.h.b16 %v50
  %v234 = vunpack.c.l.b16 %v51
  %v235 = vunpack.c.h.b16 %v51
  %v236 = vunpack.c.l.b16 %v52
  %v237 = vunpack.c.h.b16 %v52
  %v238 = vunpack.c.l.b16 %v53
  %v239 = vunpack.c.h.b16 %v53
  %v240 = vunpack.c.l.b16 %v54
  %v241 = vunpack.c.h.b16 %v54
  %v242 = vunpack.c.l.b16 %v55
  %v243 = vunpack.c.h.b16 %v55
  %v244 = vunpack.c.l.b16 %v56
  %v245 = vunpack.c.h.b16 %v56
  %v246 = vunpack.c.l.b16 %v57
  %v247 = vunpack.c.h.b16 %v57
  %v248 = vunpack.c.l.b16 %v58
  %v249 = vunpack.c.h.b16 %v58
  %v250 = vunpack.c.l.b16 %v59
  %v251 = vunpack.c.h.b16 %v59
  %v252 = vunpack.c.l.b16 %v60
  %v253 = vunpack.c.h.b16 %v60
  %v254 = vunpack.c.l.b16 %v61
  %v255 = vunpack.c.h.b16 %v61
  %v256 = vunpack.c.l.b16 %v62
  %v257 = vunpack.c.h.b16 %v62
  %v258 = vunpack.c.l.b16 %v63
  %v259 = vunpack.c.h.b16 %v63
  %v260 = vunpack.c.l.b16 %v64
  %v261 = vunpack.c.h.b16 %v64
  %v262 = vunpack.c.l.b16 %v65
  %v263 = vunpack.c.h.b16 %v65
  %v264 = vunpack.c.l.b16 %v66
  %v265 = vunpack.c.h.b16 %v66
  %v266 = vunpack.c.l.b16 %v67
  %v267 = vunpack.c.h.b16 %v67
  %v268 = vunpack.c.l.b16 %v68
  %v269 = vunpack.c.h.b16 %v68
  %v270 = vunpack.c.l.b16 %v69
  %v271 = vunpack.c.h.b16 %v69
  %v272 = vunpack.c.l.b16 %v70
  %v273 = vunpack.c.h.b16 %v70
  %v274 = vunpack.c.l.b16 %v71
  %v275 = vunpack.c.h.b16 %v71
  %v276 = vunpack.c.l.b16 %v72
  %v277 = vunpack.c.h.b16 %v72
  %v278 = vunpack.c.l.b16 %v73
  %v279 = vunpack.c.h.b16 %v73
  %v280 = vunpack.c.l.b16 %v74
  %v281 = vunpack.c.h.b16 %v74
  %v282 = vunpack.c.l.b16 %v75
  %v283 = vunpack.c.h.b16 %v75
  %v284 = vunpack.c.l.b16 %v76
  %v285 = vunpack.c.h.b16 %v76
  %v286 = vunpack.c.l.b16 %v77
  %v287 = vunpack.c.h.b16 %v77
  %v288 = vpack.c.b16 %v162, %v160
  %v289 = vpack.c.b16 %v163, %v161
  %v290 = vpack.c.b16 %v166, %v164
  %v291 = vpack.c.b16 %v167, %v165
  %v292 = vpack.c.b16 %v170, %v168
  %v293 = vpack.c.b16 %v171, %v169
  %v294 = vpack.c.b16 %v174, %v172
  %v295 = vpack.c.b16 %v175, %v173
  %v296 = vpack.c.b16 %v178, %v176
  %v297 = vpack.c.b16 %v179, %v177
  %v298 = vpack.c.b16 %v182, %v180
  %v299 = vpack.c.b16 %v183, %v181
  %v300 = vpack.c.b16 %v186, %v184
  %v301 = vpack.c.b16 %v187, %v185
  %v302 = vpack.c.b16 %v190, %v188
  %v303 = vpack.c.b16 %v191, %v189
  %v304 = vpack.c.b16 %v194, %v192
  %v305 = vpack.c.b16 %v195, %v193
  %v306 = vpack.c.b16 %v198, %v196
  %v307 = vpack.c.b16 %v199, %v197
  %v308 = vpack.c.b16 %v202, %v200
  %v309 = vpack.c.b16 %v203, %v201
  %v310 = vpack.c.b16 %v206, %v204
  %v311 = vpack.c.b16 %v207, %v205
  %v312 = vpack.c.b16 %v210, %v208
  %v313 = vpack.c.b16 %v211, %v209
  %v314 = vpack.c.b16 %v214, %v212
  %v315 = vpack.c.b16 %v215, %v213
  %v316 = vpack.c.b16 %v218, %v216
  %v317 = vpack.c.b16 %v219, %v217
  %v318 = vpack.c.b16 %v222, %v220
  %v319 = vpack.c.b16 %v223, %v221
  %v320 = vpack.c.b16 %v226, %v224
  %v321 = vpack.c.b16 %v227, %v225
  %v322 = vpack.c.b16 %v230, %v228
  %v323 = vpack.c.b16 %v231, %v229
  %v324 = vpack.c.b16 %v234, %v232
  %v325 = vpack.c.b16 %v235, %v233
  %v326 = vpack.c.b16 %v238, %v236
  %v327 = vpack.c.b16 %v239, %v237
  %v328 = vpack.c.b16 %v242, %v240
  %v329 = vpack.c.b16 %v243, %v241
  %v330 = vpack.c.b16 %v246, %v244
  %v331 = vpack.c.b16 %v247, %v245
  %v332 = vpack.c.b16 %v250, %v248
  %v333 = vpack.c.b16 %v251, %v249
  %v334 = vpack.c.b16 %v254, %v252
  %v335 = vpack.c.b16 %v255, %v253
  %v336 = vpack.c.b16 %v258, %v256
  %v337 = vpack.c.b16 %v259, %v257
  %v338 = vpack.c.b16 %v262, %v260
  %v339 = vpack.c.b16 %v263, %v261
  %v340 = vpack.c.b16 %v266, %v264
  %v341 = vpack.c.b16 %v267, %v265
  %v342 = vpack.c.b16 %v270, %v268
  %v343 = vpack.c.b16 %v271, %v269
  %v344 = vpack.c.b16 %v274, %v272
  %v345 = vpack.c.b16 %v275, %v273
  %v346 = vpack.c.b16 %v278, %v276
  %v347 = vpack.c.b16 %v279, %v277
  %v348 = vpack.c.b16 %v282, %v280
  %v349 = vpack.c.b16 %v283, %v281
  %v350 = vpack.c.b16 %v286, %v284
  %v351 = vpack.c.b16 %v287, %v285
  %v402 = vunpack.c.l.b16 %v78
  %v403 = vunpack.c.l.b16 %v79
  %v404 = vunpack.c.l.b16 %v80
  %v405 = vunpack.c.l.b16 %v81
  %v406 = vunpack.c.l.b16 %v82
  %v407 = vunpack.c.l.b16 %v83
  %v408 = vunpack.c.l.b16 %v84
  %v409 = vunpack.c.l.b16 %v85
  %v410 = vunpack.c.l.b16 %v86
  %v411 = vunpack.c.l.b16 %v87
  %v412 = vunpack.c.l.b16 %v88
  %v413 = vunpack.c.l.b16 %v89
  %v414 = vunpack.c.l.b16 %v90
  %v415 = vunpack.c.l.b16 %v91
  %v416 = vunpack.c.l.b16 %v92
  %v417 = vunpack.c.l.b16 %v93
  %v418 = vunpack.c.l.b16 %v94
  %v419 = vunpack.c.l.b16 %v95
  %v420 = vpack.c.b16 %v403, %v402
  %v421 = vpack.c.b16 %v405, %v404
  %v422 = vpack.c.b16 %v407, %v406
  %v423 = vpack.c.b16 %v409, %v408
  %v424 = vpack.c.b16 %v411, %v410
  %v425 = vpack.c.b16 %v413, %v412
  %v426 = vpack.c.b16 %v415, %v414
  %v427 = vpack.c.b16 %v417, %v416
  %v428 = vpack.c.b16 %v419, %v418
  %vm438 = vcmask 130048
  %v440 = vsel %vm438, %v289, 0
  %v443 = vsel %vm438, %v291, 0
  %v446 = vsel %vm438, %v293, 0
  %v449 = vsel %vm438, %v295, 0
  %v452 = vsel %vm438, %v297, 0
  %v455 = vsel %vm438, %v299, 0
  %v458 = vsel %vm438, %v301, 0
  %v461 = vsel %vm438, %v303, 0
  %v464 = vsel %vm438, %v305, 0
  %v467 = vsel %vm438, %v307, 0
  %v470 = vsel %vm438, %v309, 0
  %v473 = vsel %vm438, %v311, 0
  %v476 = vsel %vm438, %v313, 0
  %v479 = vsel %vm438, %v315, 0
  %v482 = vsel %vm438, %v317, 0
  %v485 = vsel %vm438, %v319, 0
  %v488 = vsel %vm438, %v321, 0
  %v491 = vsel %vm438, %v323, 0
  %v494 = vsel %vm438, %v325, 0
  %v497 = vsel %vm438, %v327, 0
  %v500 = vsel %vm438, %v329, 0
  %v503 = vsel %vm438, %v331, 0
  %v506 = vsel %vm438, %v333, 0
  %v509 = vsel %vm438, %v335, 0
  %v512 = vsel %vm438, %v337, 0
  %v515 = vsel %vm438, %v339, 0
  %v518 = vsel %vm438, %v341, 0
  %v521 = vsel %vm438, %v343, 0
  %v524 = vsel %vm438, %v345, 0
  %v527 = vsel %vm438, %v347, 0
  %v530 = vsel %vm438, %v349, 0
  %v533 = vsel %vm438, %v351, 0
  %535 = vmatprep.subr.bf16.mxu0 0
  %536 = vmatpush1.bf16.msra.mxu0 %v420
  %537 = vmatprep.subr.bf16.mxu0 0
  %538 = vmatpush1.bf16.msra.mxu0 %v421
  %539 = vmatprep.subr.bf16.mxu0 0
  %540 = vmatpush1.bf16.msra.mxu0 %v422
  %541 = vmatprep.subr.bf16.mxu0 0
  %542 = vmatpush1.bf16.msra.mxu0 %v423
  %543 = vmatprep.subr.bf16.mxu0 0
  %544 = vmatpush1.bf16.msra.mxu0 %v424
  %545 = vmatprep.subr.bf16.mxu0 0
  %546 = vmatpush1.bf16.msra.mxu0 %v425
  %547 = vmatprep.subr.bf16.mxu0 0
  %548 = vmatpush1.bf16.msra.mxu0 %v426
  %549 = vmatprep.subr.bf16.mxu0 0
  %550 = vmatpush1.bf16.msra.mxu0 %v427
  %551 = vmatprep.subr.bf16.mxu0 0
  %552 = vmatpush1.bf16.msra.mxu0 %v428
  %553 = vmatprep.subr.bf16.mxu0 0
  %554 = vmatpush1.bf16.msra.mxu0 0
  %555 = vmatprep.subr.bf16.mxu0 0
  %556 = vmatpush1.bf16.msra.mxu0 0
  %557 = vmatprep.subr.bf16.mxu0 0
  %558 = vmatpush1.bf16.msra.mxu0 0
  %559 = vmatprep.subr.bf16.mxu0 0
  %560 = vmatpush1.bf16.msra.mxu0 0
  %561 = vmatprep.subr.bf16.mxu0 0
  %562 = vmatpush1.bf16.msra.mxu0 0
  %563 = vmatprep.subr.bf16.mxu0 0
  %564 = vmatpush1.bf16.msra.mxu0 0
  %565 = vmatprep.subr.bf16.mxu0 0
  %566 = vmatpush1.bf16.msra.mxu0 0
  %567 = vmatprep.mubr.bf16.mxu0 %v440
  %568 = vmatmul.mubr.bf16.gmra.mrb[0].mxu0 %v288
  %v569 = vpop.f32.mrb[0].mxu0
  %v570 = vadd.f32 0.0, %v569
  %v571 = vpop.f32.mrb[0].mxu0
  %v572 = vpop.f32.mrb[0].mxu0
  %v573 = vadd.f32 0.0, %v572
  %v574 = vpop.f32.mrb[0].mxu0
  %575 = vmatprep.mubr.bf16.mxu0 %v443
  %576 = vmatmul.mubr.bf16.gmra.mrb[0].mxu0 %v290
  %v577 = vpop.f32.mrb[0].mxu0
  %v578 = vadd.f32 0.0, %v577
  %v579 = vpop.f32.mrb[0].mxu0
  %v580 = vpop.f32.mrb[0].mxu0
  %v581 = vadd.f32 0.0, %v580
  %v582 = vpop.f32.mrb[0].mxu0
  %583 = vmatprep.mubr.bf16.mxu0 %v446
  %584 = vmatmul.mubr.bf16.gmra.mrb[0].mxu0 %v292
  %v585 = vpop.f32.mrb[0].mxu0
  %v586 = vadd.f32 0.0, %v585
  %v587 = vpop.f32.mrb[0].mxu0
  %v588 = vpop.f32.mrb[0].mxu0
  %v589 = vadd.f32 0.0, %v588
  %v590 = vpop.f32.mrb[0].mxu0
  %591 = vmatprep.mubr.bf16.mxu0 %v449
  %592 = vmatmul.mubr.bf16.gmra.mrb[0].mxu0 %v294
  %v593 = vpop.f32.mrb[0].mxu0
  %v594 = vadd.f32 0.0, %v593
  %v595 = vpop.f32.mrb[0].mxu0
  %v596 = vpop.f32.mrb[0].mxu0
  %v597 = vadd.f32 0.0, %v596
  %v598 = vpop.f32.mrb[0].mxu0
  %599 = vmatprep.mubr.bf16.mxu0 %v452
  %600 = vmatmul.mubr.bf16.gmra.mrb[0].mxu0 %v296
  %v601 = vpop.f32.mrb[0].mxu0
  %v602 = vadd.f32 0.0, %v601
  %v603 = vpop.f32.mrb[0].mxu0
  %v604 = vpop.f32.mrb[0].mxu0
  %v605 = vadd.f32 0.0, %v604
  %v606 = vpop.f32.mrb[0].mxu0
  %607 = vmatprep.mubr.bf16.mxu0 %v455
  %608 = vmatmul.mubr.bf16.gmra.mrb[0].mxu0 %v298
  %v609 = vpop.f32.mrb[0].mxu0
  %v610 = vadd.f32 0.0, %v609
  %v611 = vpop.f32.mrb[0].mxu0
  %v612 = vpop.f32.mrb[0].mxu0
  %v613 = vadd.f32 0.0, %v612
  %v614 = vpop.f32.mrb[0].mxu0
  %615 = vmatprep.mubr.bf16.mxu0 %v458
  %616 = vmatmul.mubr.bf16.gmra.mrb[0].mxu0 %v300
  %v617 = vpop.f32.mrb[0].mxu0
  %v618 = vadd.f32 0.0, %v617
  %v619 = vpop.f32.mrb[0].mxu0
  %v620 = vpop.f32.mrb[0].mxu0
  %v621 = vadd.f32 0.0, %v620
  %v622 = vpop.f32.mrb[0].mxu0
  %623 = vmatprep.mubr.bf16.mxu0 %v461
  %624 = vmatmul.mubr.bf16.gmra.mrb[0].mxu0 %v302
  %v625 = vpop.f32.mrb[0].mxu0
  %v626 = vadd.f32 0.0, %v625
  %v627 = vpop.f32.mrb[0].mxu0
  %v628 = vpop.f32.mrb[0].mxu0
  %v629 = vadd.f32 0.0, %v628
  %v630 = vpop.f32.mrb[0].mxu0
  %631 = vmatprep.mubr.bf16.mxu0 %v464
  %632 = vmatmul.mubr.bf16.gmra.mrb[0].mxu0 %v304
  %v633 = vpop.f32.mrb[0].mxu0
  %v634 = vadd.f32 0.0, %v633
  %v635 = vpop.f32.mrb[0].mxu0
  %v636 = vpop.f32.mrb[0].mxu0
  %v637 = vadd.f32 0.0, %v636
  %v638 = vpop.f32.mrb[0].mxu0
  %639 = vmatprep.mubr.bf16.mxu0 %v467
  %640 = vmatmul.mubr.bf16.gmra.mrb[0].mxu0 %v306
  %v641 = vpop.f32.mrb[0].mxu0
  %v642 = vadd.f32 0.0, %v641
  %v643 = vpop.f32.mrb[0].mxu0
  %v644 = vpop.f32.mrb[0].mxu0
  %v645 = vadd.f32 0.0, %v644
  %v646 = vpop.f32.mrb[0].mxu0
  %647 = vmatprep.mubr.bf16.mxu0 %v470
  %648 = vmatmul.mubr.bf16.gmra.mrb[0].mxu0 %v308
  %v649 = vpop.f32.mrb[0].mxu0
  %v650 = vadd.f32 0.0, %v649
  %v651 = vpop.f32.mrb[0].mxu0
  %v652 = vpop.f32.mrb[0].mxu0
  %v653 = vadd.f32 0.0, %v652
  %v654 = vpop.f32.mrb[0].mxu0
  %655 = vmatprep.mubr.bf16.mxu0 %v473
  %656 = vmatmul.mubr.bf16.gmra.mrb[0].mxu0 %v310
  %v657 = vpop.f32.mrb[0].mxu0
  %v658 = vadd.f32 0.0, %v657
  %v659 = vpop.f32.mrb[0].mxu0
  %v660 = vpop.f32.mrb[0].mxu0
  %v661 = vadd.f32 0.0, %v660
  %v662 = vpop.f32.mrb[0].mxu0
  %663 = vmatprep.mubr.bf16.mxu0 %v476
  %664 = vmatmul.mubr.bf16.gmra.mrb[0].mxu0 %v312
  %v665 = vpop.f32.mrb[0].mxu0
  %v666 = vadd.f32 0.0, %v665
  %v667 = vpop.f32.mrb[0].mxu0
  %v668 = vpop.f32.mrb[0].mxu0
  %v669 = vadd.f32 0.0, %v668
  %v670 = vpop.f32.mrb[0].mxu0
  %671 = vmatprep.mubr.bf16.mxu0 %v479
  %672 = vmatmul.mubr.bf16.gmra.mrb[0].mxu0 %v314
  %v673 = vpop.f32.mrb[0].mxu0
  %v674 = vadd.f32 0.0, %v673
  %v675 = vpop.f32.mrb[0].mxu0
  %v676 = vpop.f32.mrb[0].mxu0
  %v677 = vadd.f32 0.0, %v676
  %v678 = vpop.f32.mrb[0].mxu0
  %679 = vmatprep.mubr.bf16.mxu0 %v482
  %680 = vmatmul.mubr.bf16.gmra.mrb[0].mxu0 %v316
  %v681 = vpop.f32.mrb[0].mxu0
  %v682 = vadd.f32 0.0, %v681
  %v683 = vpop.f32.mrb[0].mxu0
  %v684 = vpop.f32.mrb[0].mxu0
  %v685 = vadd.f32 0.0, %v684
  %v686 = vpop.f32.mrb[0].mxu0
  %687 = vmatprep.mubr.bf16.mxu0 %v485
  %688 = vmatmul.mubr.bf16.gmra.mrb[0].mxu0 %v318
  %v689 = vpop.f32.mrb[0].mxu0
  %v690 = vadd.f32 0.0, %v689
  %v691 = vpop.f32.mrb[0].mxu0
  %v692 = vpop.f32.mrb[0].mxu0
  %v693 = vadd.f32 0.0, %v692
  %v694 = vpop.f32.mrb[0].mxu0
  %695 = vmatprep.mubr.bf16.mxu0 %v488
  %696 = vmatmul.mubr.bf16.gmra.mrb[0].mxu0 %v320
  %v697 = vpop.f32.mrb[0].mxu0
  %v698 = vadd.f32 0.0, %v697
  %v699 = vpop.f32.mrb[0].mxu0
  %v700 = vpop.f32.mrb[0].mxu0
  %v701 = vadd.f32 0.0, %v700
  %v702 = vpop.f32.mrb[0].mxu0
  %703 = vmatprep.mubr.bf16.mxu0 %v491
  %704 = vmatmul.mubr.bf16.gmra.mrb[0].mxu0 %v322
  %v705 = vpop.f32.mrb[0].mxu0
  %v706 = vadd.f32 0.0, %v705
  %v707 = vpop.f32.mrb[0].mxu0
  %v708 = vpop.f32.mrb[0].mxu0
  %v709 = vadd.f32 0.0, %v708
  %v710 = vpop.f32.mrb[0].mxu0
  %711 = vmatprep.mubr.bf16.mxu0 %v494
  %712 = vmatmul.mubr.bf16.gmra.mrb[0].mxu0 %v324
  %v713 = vpop.f32.mrb[0].mxu0
  %v714 = vadd.f32 0.0, %v713
  %v715 = vpop.f32.mrb[0].mxu0
  %v716 = vpop.f32.mrb[0].mxu0
  %v717 = vadd.f32 0.0, %v716
  %v718 = vpop.f32.mrb[0].mxu0
  %719 = vmatprep.mubr.bf16.mxu0 %v497
  %720 = vmatmul.mubr.bf16.gmra.mrb[0].mxu0 %v326
  %v721 = vpop.f32.mrb[0].mxu0
  %v722 = vadd.f32 0.0, %v721
  %v723 = vpop.f32.mrb[0].mxu0
  %v724 = vpop.f32.mrb[0].mxu0
  %v725 = vadd.f32 0.0, %v724
  %v726 = vpop.f32.mrb[0].mxu0
  %727 = vmatprep.mubr.bf16.mxu0 %v500
  %728 = vmatmul.mubr.bf16.gmra.mrb[0].mxu0 %v328
  %v729 = vpop.f32.mrb[0].mxu0
  %v730 = vadd.f32 0.0, %v729
  %v731 = vpop.f32.mrb[0].mxu0
  %v732 = vpop.f32.mrb[0].mxu0
  %v733 = vadd.f32 0.0, %v732
  %v734 = vpop.f32.mrb[0].mxu0
  %735 = vmatprep.mubr.bf16.mxu0 %v503
  %736 = vmatmul.mubr.bf16.gmra.mrb[0].mxu0 %v330
  %v737 = vpop.f32.mrb[0].mxu0
  %v738 = vadd.f32 0.0, %v737
  %v739 = vpop.f32.mrb[0].mxu0
  %v740 = vpop.f32.mrb[0].mxu0
  %v741 = vadd.f32 0.0, %v740
  %v742 = vpop.f32.mrb[0].mxu0
  %743 = vmatprep.mubr.bf16.mxu0 %v506
  %744 = vmatmul.mubr.bf16.gmra.mrb[0].mxu0 %v332
  %v745 = vpop.f32.mrb[0].mxu0
  %v746 = vadd.f32 0.0, %v745
  %v747 = vpop.f32.mrb[0].mxu0
  %v748 = vpop.f32.mrb[0].mxu0
  %v749 = vadd.f32 0.0, %v748
  %v750 = vpop.f32.mrb[0].mxu0
  %751 = vmatprep.mubr.bf16.mxu0 %v509
  %752 = vmatmul.mubr.bf16.gmra.mrb[0].mxu0 %v334
  %v753 = vpop.f32.mrb[0].mxu0
  %v754 = vadd.f32 0.0, %v753
  %v755 = vpop.f32.mrb[0].mxu0
  %v756 = vpop.f32.mrb[0].mxu0
  %v757 = vadd.f32 0.0, %v756
  %v758 = vpop.f32.mrb[0].mxu0
  %759 = vmatprep.mubr.bf16.mxu0 %v512
  %760 = vmatmul.mubr.bf16.gmra.mrb[0].mxu0 %v336
  %v761 = vpop.f32.mrb[0].mxu0
  %v762 = vadd.f32 0.0, %v761
  %v763 = vpop.f32.mrb[0].mxu0
  %v764 = vpop.f32.mrb[0].mxu0
  %v765 = vadd.f32 0.0, %v764
  %v766 = vpop.f32.mrb[0].mxu0
  %767 = vmatprep.mubr.bf16.mxu0 %v515
  %768 = vmatmul.mubr.bf16.gmra.mrb[0].mxu0 %v338
  %v769 = vpop.f32.mrb[0].mxu0
  %v770 = vadd.f32 0.0, %v769
  %v771 = vpop.f32.mrb[0].mxu0
  %v772 = vpop.f32.mrb[0].mxu0
  %v773 = vadd.f32 0.0, %v772
  %v774 = vpop.f32.mrb[0].mxu0
  %775 = vmatprep.mubr.bf16.mxu0 %v518
  %776 = vmatmul.mubr.bf16.gmra.mrb[0].mxu0 %v340
  %v777 = vpop.f32.mrb[0].mxu0
  %v778 = vadd.f32 0.0, %v777
  %v779 = vpop.f32.mrb[0].mxu0
  %v780 = vpop.f32.mrb[0].mxu0
  %v781 = vadd.f32 0.0, %v780
  %v782 = vpop.f32.mrb[0].mxu0
  %783 = vmatprep.mubr.bf16.mxu0 %v521
  %784 = vmatmul.mubr.bf16.gmra.mrb[0].mxu0 %v342
  %v785 = vpop.f32.mrb[0].mxu0
  %v786 = vadd.f32 0.0, %v785
  %v787 = vpop.f32.mrb[0].mxu0
  %v788 = vpop.f32.mrb[0].mxu0
  %v789 = vadd.f32 0.0, %v788
  %v790 = vpop.f32.mrb[0].mxu0
  %791 = vmatprep.mubr.bf16.mxu0 %v524
  %792 = vmatmul.mubr.bf16.gmra.mrb[0].mxu0 %v344
  %v793 = vpop.f32.mrb[0].mxu0
  %v794 = vadd.f32 0.0, %v793
  %v795 = vpop.f32.mrb[0].mxu0
  %v796 = vpop.f32.mrb[0].mxu0
  %v797 = vadd.f32 0.0, %v796
  %v798 = vpop.f32.mrb[0].mxu0
  %799 = vmatprep.mubr.bf16.mxu0 %v527
  %800 = vmatmul.mubr.bf16.gmra.mrb[0].mxu0 %v346
  %v801 = vpop.f32.mrb[0].mxu0
  %v802 = vadd.f32 0.0, %v801
  %v803 = vpop.f32.mrb[0].mxu0
  %v804 = vpop.f32.mrb[0].mxu0
  %v805 = vadd.f32 0.0, %v804
  %v806 = vpop.f32.mrb[0].mxu0
  %807 = vmatprep.mubr.bf16.mxu0 %v530
  %808 = vmatmul.mubr.bf16.gmra.mrb[0].mxu0 %v348
  %v809 = vpop.f32.mrb[0].mxu0
  %v810 = vadd.f32 0.0, %v809
  %v811 = vpop.f32.mrb[0].mxu0
  %v812 = vpop.f32.mrb[0].mxu0
  %v813 = vadd.f32 0.0, %v812
  %v814 = vpop.f32.mrb[0].mxu0
  %815 = vmatprep.mubr.bf16.mxu0 %v533
  %816 = vmatmul.mubr.bf16.gmra.mrb[0].mxu0 %v350
  %v817 = vpop.f32.mrb[0].mxu0
  %v818 = vadd.f32 0.0, %v817
  %v819 = vpop.f32.mrb[0].mxu0
  %v820 = vpop.f32.mrb[0].mxu0
  %v821 = vadd.f32 0.0, %v820
  %v822 = vpop.f32.mrb[0].mxu0
  %823 = vdwg.mxu0
  %824 = vst.msk [vmem:[%s2] sm:$0xff] %vm438, %v570
  %825 = vst.msk [vmem:[%s2 + $0x8] sm:$0xff] %vm438, %v573
  %826 = vst.msk [vmem:[%s2 + $0x10] sm:$0xff] %vm438, %v578
  %827 = vst.msk [vmem:[%s2 + $0x18] sm:$0xff] %vm438, %v581
  %828 = vst.msk [vmem:[%s2 + $0x20] sm:$0xff] %vm438, %v586
  %829 = vst.msk [vmem:[%s2 + $0x28] sm:$0xff] %vm438, %v589
  %830 = vst.msk [vmem:[%s2 + $0x30] sm:$0xff] %vm438, %v594
  %831 = vst.msk [vmem:[%s2 + $0x38] sm:$0xff] %vm438, %v597
  %832 = vst.msk [vmem:[%s2 + $0x40] sm:$0xff] %vm438, %v602
  %833 = vst.msk [vmem:[%s2 + $0x48] sm:$0xff] %vm438, %v605
  %834 = vst.msk [vmem:[%s2 + $0x50] sm:$0xff] %vm438, %v610
  %835 = vst.msk [vmem:[%s2 + $0x58] sm:$0xff] %vm438, %v613
  %836 = vst.msk [vmem:[%s2 + $0x60] sm:$0xff] %vm438, %v618
  %837 = vst.msk [vmem:[%s2 + $0x68] sm:$0xff] %vm438, %v621
  %838 = vst.msk [vmem:[%s2 + $0x70] sm:$0xff] %vm438, %v626
  %839 = vst.msk [vmem:[%s2 + $0x78] sm:$0xff] %vm438, %v629
  %840 = vst.msk [vmem:[%s2 + $0x80] sm:$0xff] %vm438, %v634
  %841 = vst.msk [vmem:[%s2 + $0x88] sm:$0xff] %vm438, %v637
  %842 = vst.msk [vmem:[%s2 + $0x90] sm:$0xff] %vm438, %v642
  %843 = vst.msk [vmem:[%s2 + $0x98] sm:$0xff] %vm438, %v645
  %844 = vst.msk [vmem:[%s2 + $0xa0] sm:$0xff] %vm438, %v650
  %845 = vst.msk [vmem:[%s2 + $0xa8] sm:$0xff] %vm438, %v653
  %846 = vst.msk [vmem:[%s2 + $0xb0] sm:$0xff] %vm438, %v658
  %847 = vst.msk [vmem:[%s2 + $0xb8] sm:$0xff] %vm438, %v661
  %848 = vst.msk [vmem:[%s2 + $0xc0] sm:$0xff] %vm438, %v666
  %849 = vst.msk [vmem:[%s2 + $0xc8] sm:$0xff] %vm438, %v669
  %850 = vst.msk [vmem:[%s2 + $0xd0] sm:$0xff] %vm438, %v674
  %851 = vst.msk [vmem:[%s2 + $0xd8] sm:$0xff] %vm438, %v677
  %852 = vst.msk [vmem:[%s2 + $0xe0] sm:$0xff] %vm438, %v682
  %853 = vst.msk [vmem:[%s2 + $0xe8] sm:$0xff] %vm438, %v685
  %854 = vst.msk [vmem:[%s2 + $0xf0] sm:$0xff] %vm438, %v690
  %855 = vst.msk [vmem:[%s2 + $0xf8] sm:$0xff] %vm438, %v693
  %856 = vst.msk [vmem:[%s2 + $0x100] sm:$0xff] %vm438, %v698
  %857 = vst.msk [vmem:[%s2 + $0x108] sm:$0xff] %vm438, %v701
  %858 = vst.msk [vmem:[%s2 + $0x110] sm:$0xff] %vm438, %v706
  %859 = vst.msk [vmem:[%s2 + $0x118] sm:$0xff] %vm438, %v709
  %860 = vst.msk [vmem:[%s2 + $0x120] sm:$0xff] %vm438, %v714
  %861 = vst.msk [vmem:[%s2 + $0x128] sm:$0xff] %vm438, %v717
  %862 = vst.msk [vmem:[%s2 + $0x130] sm:$0xff] %vm438, %v722
  %863 = vst.msk [vmem:[%s2 + $0x138] sm:$0xff] %vm438, %v725
  %864 = vst.msk [vmem:[%s2 + $0x140] sm:$0xff] %vm438, %v730
  %865 = vst.msk [vmem:[%s2 + $0x148] sm:$0xff] %vm438, %v733
  %866 = vst.msk [vmem:[%s2 + $0x150] sm:$0xff] %vm438, %v738
  %867 = vst.msk [vmem:[%s2 + $0x158] sm:$0xff] %vm438, %v741
  %868 = vst.msk [vmem:[%s2 + $0x160] sm:$0xff] %vm438, %v746
  %869 = vst.msk [vmem:[%s2 + $0x168] sm:$0xff] %vm438, %v749
  %870 = vst.msk [vmem:[%s2 + $0x170] sm:$0xff] %vm438, %v754
  %871 = vst.msk [vmem:[%s2 + $0x178] sm:$0xff] %vm438, %v757
  %872 = vst.msk [vmem:[%s2 + $0x180] sm:$0xff] %vm438, %v762
  %873 = vst.msk [vmem:[%s2 + $0x188] sm:$0xff] %vm438, %v765
  %874 = vst.msk [vmem:[%s2 + $0x190] sm:$0xff] %vm438, %v770
  %875 = vst.msk [vmem:[%s2 + $0x198] sm:$0xff] %vm438, %v773
  %876 = vst.msk [vmem:[%s2 + $0x1a0] sm:$0xff] %vm438, %v778
  %877 = vst.msk [vmem:[%s2 + $0x1a8] sm:$0xff] %vm438, %v781
  %878 = vst.msk [vmem:[%s2 + $0x1b0] sm:$0xff] %vm438, %v786
  %879 = vst.msk [vmem:[%s2 + $0x1b8] sm:$0xff] %vm438, %v789
  %880 = vst.msk [vmem:[%s2 + $0x1c0] sm:$0xff] %vm438, %v794
  %881 = vst.msk [vmem:[%s2 + $0x1c8] sm:$0xff] %vm438, %v797
  %882 = vst.msk [vmem:[%s2 + $0x1d0] sm:$0xff] %vm438, %v802
  %883 = vst.msk [vmem:[%s2 + $0x1d8] sm:$0xff] %vm438, %v805
  %884 = vst.msk [vmem:[%s2 + $0x1e0] sm:$0xff] %vm438, %v810
  %885 = vst.msk [vmem:[%s2 + $0x1e8] sm:$0xff] %vm438, %v813
  %886 = vst.msk [vmem:[%s2 + $0x1f0] sm:$0xff] %vm438, %v818
  %887 = vst.msk [vmem:[%s2 + $0x1f8] sm:$0xff] %vm438, %v821
  %v888 = vsel %vm438, %v570, 0.0
  %v889 = vsel %vm438, %v573, 0.0
  %v890 = vadd.f32 %v888, %v889
  %v891 = vsel %vm438, %v578, 0.0
  %v892 = vadd.f32 %v890, %v891
  %v893 = vsel %vm438, %v581, 0.0
  %v894 = vadd.f32 %v892, %v893
  %v895 = vsel %vm438, %v586, 0.0
  %v896 = vadd.f32 %v894, %v895
  %v897 = vsel %vm438, %v589, 0.0
  %v898 = vadd.f32 %v896, %v897
  %v899 = vsel %vm438, %v594, 0.0
  %v900 = vadd.f32 %v898, %v899
  %v901 = vsel %vm438, %v597, 0.0
  %v902 = vadd.f32 %v900, %v901
  %v903 = vsel %vm438, %v602, 0.0
  %v904 = vadd.f32 %v902, %v903
  %v905 = vsel %vm438, %v605, 0.0
  %v906 = vadd.f32 %v904, %v905
  %v907 = vsel %vm438, %v610, 0.0
  %v908 = vadd.f32 %v906, %v907
  %v909 = vsel %vm438, %v613, 0.0
  %v910 = vadd.f32 %v908, %v909
  %v911 = vsel %vm438, %v618, 0.0
  %v912 = vadd.f32 %v910, %v911
  %v913 = vsel %vm438, %v621, 0.0
  %v914 = vadd.f32 %v912, %v913
  %v915 = vsel %vm438, %v626, 0.0
  %v916 = vadd.f32 %v914, %v915
  %v917 = vsel %vm438, %v629, 0.0
  %v918 = vadd.f32 %v916, %v917
  %v919 = vsel %vm438, %v634, 0.0
  %v920 = vadd.f32 %v918, %v919
  %v921 = vsel %vm438, %v637, 0.0
  %v922 = vadd.f32 %v920, %v921
  %v923 = vsel %vm438, %v642, 0.0
  %v924 = vadd.f32 %v922, %v923
  %v925 = vsel %vm438, %v645, 0.0
  %v926 = vadd.f32 %v924, %v925
  %v927 = vsel %vm438, %v650, 0.0
  %v928 = vadd.f32 %v926, %v927
  %v929 = vsel %vm438, %v653, 0.0
  %v930 = vadd.f32 %v928, %v929
  %v931 = vsel %vm438, %v658, 0.0
  %v932 = vadd.f32 %v930, %v931
  %v933 = vsel %vm438, %v661, 0.0
  %v934 = vadd.f32 %v932, %v933
  %v935 = vsel %vm438, %v666, 0.0
  %v936 = vadd.f32 %v934, %v935
  %v937 = vsel %vm438, %v669, 0.0
  %v938 = vadd.f32 %v936, %v937
  %v939 = vsel %vm438, %v674, 0.0
  %v940 = vadd.f32 %v938, %v939
  %v941 = vsel %vm438, %v677, 0.0
  %v942 = vadd.f32 %v940, %v941
  %v943 = vsel %vm438, %v682, 0.0
  %v944 = vadd.f32 %v942, %v943
  %v945 = vsel %vm438, %v685, 0.0
  %v946 = vadd.f32 %v944, %v945
  %v947 = vsel %vm438, %v690, 0.0
  %v948 = vadd.f32 %v946, %v947
  %v949 = vsel %vm438, %v693, 0.0
  %v950 = vadd.f32 %v948, %v949
  %v951 = vsel %vm438, %v698, 0.0
  %v952 = vadd.f32 %v950, %v951
  %v953 = vsel %vm438, %v701, 0.0
  %v954 = vadd.f32 %v952, %v953
  %v955 = vsel %vm438, %v706, 0.0
  %v956 = vadd.f32 %v954, %v955
  %v957 = vsel %vm438, %v709, 0.0
  %v958 = vadd.f32 %v956, %v957
  %v959 = vsel %vm438, %v714, 0.0
  %v960 = vadd.f32 %v958, %v959
  %v961 = vsel %vm438, %v717, 0.0
  %v962 = vadd.f32 %v960, %v961
  %v963 = vsel %vm438, %v722, 0.0
  %v964 = vadd.f32 %v962, %v963
  %v965 = vsel %vm438, %v725, 0.0
  %v966 = vadd.f32 %v964, %v965
  %v967 = vsel %vm438, %v730, 0.0
  %v968 = vadd.f32 %v966, %v967
  %v969 = vsel %vm438, %v733, 0.0
  %v970 = vadd.f32 %v968, %v969
  %v971 = vsel %vm438, %v738, 0.0
  %v972 = vadd.f32 %v970, %v971
  %v973 = vsel %vm438, %v741, 0.0
  %v974 = vadd.f32 %v972, %v973
  %v975 = vsel %vm438, %v746, 0.0
  %v976 = vadd.f32 %v974, %v975
  %v977 = vsel %vm438, %v749, 0.0
  %v978 = vadd.f32 %v976, %v977
  %v979 = vsel %vm438, %v754, 0.0
  %v980 = vadd.f32 %v978, %v979
  %v981 = vsel %vm438, %v757, 0.0
  %v982 = vadd.f32 %v980, %v981
  %v983 = vsel %vm438, %v762, 0.0
  %v984 = vadd.f32 %v982, %v983
  %v985 = vsel %vm438, %v765, 0.0
  %v986 = vadd.f32 %v984, %v985
  %v987 = vsel %vm438, %v770, 0.0
  %v988 = vadd.f32 %v986, %v987
  %v989 = vsel %vm438, %v773, 0.0
  %v990 = vadd.f32 %v988, %v989
  %v991 = vsel %vm438, %v778, 0.0
  %v992 = vadd.f32 %v990, %v991
  %v993 = vsel %vm438, %v781, 0.0
  %v994 = vadd.f32 %v992, %v993
  %v995 = vsel %vm438, %v786, 0.0
  %v996 = vadd.f32 %v994, %v995
  %v997 = vsel %vm438, %v789, 0.0
  %v998 = vadd.f32 %v996, %v997
  %v999 = vsel %vm438, %v794, 0.0
  %v1000 = vadd.f32 %v998, %v999
  %v1001 = vsel %vm438, %v797, 0.0
  %v1002 = vadd.f32 %v1000, %v1001
  %v1003 = vsel %vm438, %v802, 0.0
  %v1004 = vadd.f32 %v1002, %v1003
  %v1005 = vsel %vm438, %v805, 0.0
  %v1006 = vadd.f32 %v1004, %v1005
  %v1007 = vsel %vm438, %v810, 0.0
  %v1008 = vadd.f32 %v1006, %v1007
  %v1009 = vsel %vm438, %v813, 0.0
  %v1010 = vadd.f32 %v1008, %v1009
  %v1011 = vsel %vm438, %v818, 0.0
  %v1012 = vadd.f32 %v1010, %v1011
  %v1013 = vsel %vm438, %v821, 0.0
  %v1014 = vadd.f32 %v1012, %v1013
  %v1015 = vrot.slane %v1014, 4
  %v1016 = vadd.f32 %v1014, %v1015
  %v1017 = vrot.slane %v1016, 2
  %v1018 = vadd.f32 %v1016, %v1017
  %v1019 = vrot.slane %v1018, 1
  %v1020 = vadd.f32 %v1018, %v1019
  %v1021 = vmul.f32 %v570, %v570
  %v1022 = vmul.f32 %v573, %v573
  %v1023 = vmul.f32 %v578, %v578
  %v1024 = vmul.f32 %v581, %v581
  %v1025 = vmul.f32 %v586, %v586
  %v1026 = vmul.f32 %v589, %v589
  %v1027 = vmul.f32 %v594, %v594
  %v1028 = vmul.f32 %v597, %v597
  %v1029 = vmul.f32 %v602, %v602
  %v1030 = vmul.f32 %v605, %v605
  %v1031 = vmul.f32 %v610, %v610
  %v1032 = vmul.f32 %v613, %v613
  %v1033 = vmul.f32 %v618, %v618
  %v1034 = vmul.f32 %v621, %v621
  %v1035 = vmul.f32 %v626, %v626
  %v1036 = vmul.f32 %v629, %v629
  %v1037 = vmul.f32 %v634, %v634
  %v1038 = vmul.f32 %v637, %v637
  %v1039 = vmul.f32 %v642, %v642
  %v1040 = vmul.f32 %v645, %v645
  %v1041 = vmul.f32 %v650, %v650
  %v1042 = vmul.f32 %v653, %v653
  %v1043 = vmul.f32 %v658, %v658
  %v1044 = vmul.f32 %v661, %v661
  %v1045 = vmul.f32 %v666, %v666
  %v1046 = vmul.f32 %v669, %v669
  %v1047 = vmul.f32 %v674, %v674
  %v1048 = vmul.f32 %v677, %v677
  %v1049 = vmul.f32 %v682, %v682
  %v1050 = vmul.f32 %v685, %v685
  %v1051 = vmul.f32 %v690, %v690
  %v1052 = vmul.f32 %v693, %v693
  %v1053 = vmul.f32 %v698, %v698
  %v1054 = vmul.f32 %v701, %v701
  %v1055 = vmul.f32 %v706, %v706
  %v1056 = vmul.f32 %v709, %v709
  %v1057 = vmul.f32 %v714, %v714
  %v1058 = vmul.f32 %v717, %v717
  %v1059 = vmul.f32 %v722, %v722
  %v1060 = vmul.f32 %v725, %v725
  %v1061 = vmul.f32 %v730, %v730
  %v1062 = vmul.f32 %v733, %v733
  %v1063 = vmul.f32 %v738, %v738
  %v1064 = vmul.f32 %v741, %v741
  %v1065 = vmul.f32 %v746, %v746
  %v1066 = vmul.f32 %v749, %v749
  %v1067 = vmul.f32 %v754, %v754
  %v1068 = vmul.f32 %v757, %v757
  %v1069 = vmul.f32 %v762, %v762
  %v1070 = vmul.f32 %v765, %v765
  %v1071 = vmul.f32 %v770, %v770
  %v1072 = vmul.f32 %v773, %v773
  %v1073 = vmul.f32 %v778, %v778
  %v1074 = vmul.f32 %v781, %v781
  %v1075 = vmul.f32 %v786, %v786
  %v1076 = vmul.f32 %v789, %v789
  %v1077 = vmul.f32 %v794, %v794
  %v1078 = vmul.f32 %v797, %v797
  %v1079 = vmul.f32 %v802, %v802
  %v1080 = vmul.f32 %v805, %v805
  %v1081 = vmul.f32 %v810, %v810
  %v1082 = vmul.f32 %v813, %v813
  %v1083 = vmul.f32 %v818, %v818
  %v1084 = vmul.f32 %v821, %v821
  %v1085 = vsel %vm438, %v1021, 0.0
  %v1086 = vsel %vm438, %v1022, 0.0
  %v1087 = vadd.f32 %v1085, %v1086
  %v1088 = vsel %vm438, %v1023, 0.0
  %v1089 = vadd.f32 %v1087, %v1088
  %v1090 = vsel %vm438, %v1024, 0.0
  %v1091 = vadd.f32 %v1089, %v1090
  %v1092 = vsel %vm438, %v1025, 0.0
  %v1093 = vadd.f32 %v1091, %v1092
  %v1094 = vsel %vm438, %v1026, 0.0
  %v1095 = vadd.f32 %v1093, %v1094
  %v1096 = vsel %vm438, %v1027, 0.0
  %v1097 = vadd.f32 %v1095, %v1096
  %v1098 = vsel %vm438, %v1028, 0.0
  %v1099 = vadd.f32 %v1097, %v1098
  %v1100 = vsel %vm438, %v1029, 0.0
  %v1101 = vadd.f32 %v1099, %v1100
  %v1102 = vsel %vm438, %v1030, 0.0
  %v1103 = vadd.f32 %v1101, %v1102
  %v1104 = vsel %vm438, %v1031, 0.0
  %v1105 = vadd.f32 %v1103, %v1104
  %v1106 = vsel %vm438, %v1032, 0.0
  %v1107 = vadd.f32 %v1105, %v1106
  %v1108 = vsel %vm438, %v1033, 0.0
  %v1109 = vadd.f32 %v1107, %v1108
  %v1110 = vsel %vm438, %v1034, 0.0
  %v1111 = vadd.f32 %v1109, %v1110
  %v1112 = vsel %vm438, %v1035, 0.0
  %v1113 = vadd.f32 %v1111, %v1112
  %v1114 = vsel %vm438, %v1036, 0.0
  %v1115 = vadd.f32 %v1113, %v1114
  %v1116 = vsel %vm438, %v1037, 0.0
  %v1117 = vadd.f32 %v1115, %v1116
  %v1118 = vsel %vm438, %v1038, 0.0
  %v1119 = vadd.f32 %v1117, %v1118
  %v1120 = vsel %vm438, %v1039, 0.0
  %v1121 = vadd.f32 %v1119, %v1120
  %v1122 = vsel %vm438, %v1040, 0.0
  %v1123 = vadd.f32 %v1121, %v1122
  %v1124 = vsel %vm438, %v1041, 0.0
  %v1125 = vadd.f32 %v1123, %v1124
  %v1126 = vsel %vm438, %v1042, 0.0
  %v1127 = vadd.f32 %v1125, %v1126
  %v1128 = vsel %vm438, %v1043, 0.0
  %v1129 = vadd.f32 %v1127, %v1128
  %v1130 = vsel %vm438, %v1044, 0.0
  %v1131 = vadd.f32 %v1129, %v1130
  %v1132 = vsel %vm438, %v1045, 0.0
  %v1133 = vadd.f32 %v1131, %v1132
  %v1134 = vsel %vm438, %v1046, 0.0
  %v1135 = vadd.f32 %v1133, %v1134
  %v1136 = vsel %vm438, %v1047, 0.0
  %v1137 = vadd.f32 %v1135, %v1136
  %v1138 = vsel %vm438, %v1048, 0.0
  %v1139 = vadd.f32 %v1137, %v1138
  %v1140 = vsel %vm438, %v1049, 0.0
  %v1141 = vadd.f32 %v1139, %v1140
  %v1142 = vsel %vm438, %v1050, 0.0
  %v1143 = vadd.f32 %v1141, %v1142
  %v1144 = vsel %vm438, %v1051, 0.0
  %v1145 = vadd.f32 %v1143, %v1144
  %v1146 = vsel %vm438, %v1052, 0.0
  %v1147 = vadd.f32 %v1145, %v1146
  %v1148 = vsel %vm438, %v1053, 0.0
  %v1149 = vadd.f32 %v1147, %v1148
  %v1150 = vsel %vm438, %v1054, 0.0
  %v1151 = vadd.f32 %v1149, %v1150
  %v1152 = vsel %vm438, %v1055, 0.0
  %v1153 = vadd.f32 %v1151, %v1152
  %v1154 = vsel %vm438, %v1056, 0.0
  %v1155 = vadd.f32 %v1153, %v1154
  %v1156 = vsel %vm438, %v1057, 0.0
  %v1157 = vadd.f32 %v1155, %v1156
  %v1158 = vsel %vm438, %v1058, 0.0
  %v1159 = vadd.f32 %v1157, %v1158
  %v1160 = vsel %vm438, %v1059, 0.0
  %v1161 = vadd.f32 %v1159, %v1160
  %v1162 = vsel %vm438, %v1060, 0.0
  %v1163 = vadd.f32 %v1161, %v1162
  %v1164 = vsel %vm438, %v1061, 0.0
  %v1165 = vadd.f32 %v1163, %v1164
  %v1166 = vsel %vm438, %v1062, 0.0
  %v1167 = vadd.f32 %v1165, %v1166
  %v1168 = vsel %vm438, %v1063, 0.0
  %v1169 = vadd.f32 %v1167, %v1168
  %v1170 = vsel %vm438, %v1064, 0.0
  %v1171 = vadd.f32 %v1169, %v1170
  %v1172 = vsel %vm438, %v1065, 0.0
  %v1173 = vadd.f32 %v1171, %v1172
  %v1174 = vsel %vm438, %v1066, 0.0
  %v1175 = vadd.f32 %v1173, %v1174
  %v1176 = vsel %vm438, %v1067, 0.0
  %v1177 = vadd.f32 %v1175, %v1176
  %v1178 = vsel %vm438, %v1068, 0.0
  %v1179 = vadd.f32 %v1177, %v1178
  %v1180 = vsel %vm438, %v1069, 0.0
  %v1181 = vadd.f32 %v1179, %v1180
  %v1182 = vsel %vm438, %v1070, 0.0
  %v1183 = vadd.f32 %v1181, %v1182
  %v1184 = vsel %vm438, %v1071, 0.0
  %v1185 = vadd.f32 %v1183, %v1184
  %v1186 = vsel %vm438, %v1072, 0.0
  %v1187 = vadd.f32 %v1185, %v1186
  %v1188 = vsel %vm438, %v1073, 0.0
  %v1189 = vadd.f32 %v1187, %v1188
  %v1190 = vsel %vm438, %v1074, 0.0
  %v1191 = vadd.f32 %v1189, %v1190
  %v1192 = vsel %vm438, %v1075, 0.0
  %v1193 = vadd.f32 %v1191, %v1192
  %v1194 = vsel %vm438, %v1076, 0.0
  %v1195 = vadd.f32 %v1193, %v1194
  %v1196 = vsel %vm438, %v1077, 0.0
  %v1197 = vadd.f32 %v1195, %v1196
  %v1198 = vsel %vm438, %v1078, 0.0
  %v1199 = vadd.f32 %v1197, %v1198
  %v1200 = vsel %vm438, %v1079, 0.0
  %v1201 = vadd.f32 %v1199, %v1200
  %v1202 = vsel %vm438, %v1080, 0.0
  %v1203 = vadd.f32 %v1201, %v1202
  %v1204 = vsel %vm438, %v1081, 0.0
  %v1205 = vadd.f32 %v1203, %v1204
  %v1206 = vsel %vm438, %v1082, 0.0
  %v1207 = vadd.f32 %v1205, %v1206
  %v1208 = vsel %vm438, %v1083, 0.0
  %v1209 = vadd.f32 %v1207, %v1208
  %v1210 = vsel %vm438, %v1084, 0.0
  %v1211 = vadd.f32 %v1209, %v1210
  %v1212 = vrot.slane %v1211, 4
  %v1213 = vadd.f32 %v1211, %v1212
  %v1214 = vrot.slane %v1213, 2
  %v1215 = vadd.f32 %v1213, %v1214
  %v1216 = vrot.slane %v1215, 1
  %v1217 = vadd.f32 %v1215, %v1216
  %v1218 = vlaneseq
  %v1219 = vshrl.u32 %v1218, 7
  %vm1220 = vcmp.eq.s32.totalorder %v1219, 0
  %v1221 = vsel %vm1220, %v1020, 0.0
  %vm1222 = vcmp.eq.s32.totalorder %v1219, 1
  %v1223 = vsel %vm1222, %v1217, 0.0
  %v1224 = vadd.f32 %v1221, %v1223
  %1225 = vst.msk [vmem:[%s3] sm:$0xff] %vm438, %v1224
  // Predicated region
  $region10: #{resnet_forward.41} parent=0 // pred_check
    _
  $region11: #{resnet_forward.41} parent=0 // pred_check_branch
    %1227 = sbr.rel (0) target = $region13
  $region12: #{resnet_forward.41} parent=0 // pred_region
    _
  $region13: #{resnet_forward.41} parent=0 // pred_fallthru
    _
  // Predicated region
  $region14: #{resnet_forward.41} parent=0 // pred_check
    _
  $region15: #{resnet_forward.41} parent=0 // pred_check_branch
    %1229 = sbr.rel (0) target = $region17
  $region16: #{resnet_forward.41} parent=0 // pred_region
    _
  $region17: #{resnet_forward.41} parent=0 // pred_fallthru
    _
  // Predicated region
  $region18: #{resnet_forward.41} parent=0 // pred_check
    _
  $region19: #{resnet_forward.41} parent=0 // pred_check_branch
    %1231 = sbr.rel (0) target = $region21
  $region20: #{resnet_forward.41} parent=0 // pred_region
    _
  $region21: #{resnet_forward.41} parent=0 // pred_fallthru
    _
  // Predicated region
  $region22: #{resnet_forward.41} parent=0 // pred_check
    _
  $region23: #{resnet_forward.41} parent=0 // pred_check_branch
    %1233 = sbr.rel (0) target = $region25
  $region24: #{resnet_forward.41} parent=0 // pred_region
    _
  $region25: #{resnet_forward.41} parent=0 // pred_fallthru
    _

// kernel: resnet_forward.54
$region0: #{resnet_forward.54}
  #allocation0 [shape = 'u32[]', space=smem, size = 0x4, offset = 0x4, fixed_abs, tag = 'smem constant byte address 0x4 - core index']
  #allocation1 [shape = 'u32[144,128]{1,0:T(1,128)}', space=vmem, size = 0x12000, scoped, tag = 'internal scratch']
  %s0 = inlined_call_operand.vmem [shape: f32[128,32], index: 0, kind: input, shape index: {}]
  %s1 = inlined_call_operand.vmem [shape: f32[1,32], index: 1, kind: input, shape index: {}]
  %s2 = inlined_call_operand.vmem [shape: f32[1,32], index: 2, kind: input, shape index: {}]
  %s3 = inlined_call_operand.vmem [shape: bf16[128,32], index: 3, kind: output, shape index: {}]
  %s4 = sld [smem:[#allocation0]]
  $region22: #{resnet_forward.54} parent=0
    _
  %s6 = ssub.s32 1, %s4
  %s7 = scalar_select 0, %s6, %s4
  // Predicated region
  $region2: #{resnet_forward.54} parent=0 // pred_check
    _
  $region3: #{resnet_forward.54} parent=0 // pred_check_branch
    %9 = sbr.rel (0) target = $region5
  $region4: #{resnet_forward.54} parent=0 // pred_region
    _
  $region5: #{resnet_forward.54} parent=0 // pred_fallthru
    _
  // Predicated region
  $region6: #{resnet_forward.54} parent=0 // pred_check
    _
  $region7: #{resnet_forward.54} parent=0 // pred_check_branch
    %11 = sbr.rel (0) target = $region9
  $region8: #{resnet_forward.54} parent=0 // pred_region
    _
  $region9: #{resnet_forward.54} parent=0 // pred_fallthru
    _
  // Predicated region
  $region10: #{resnet_forward.54} parent=0 // pred_check
    _
  $region11: #{resnet_forward.54} parent=0 // pred_check_branch
    %13 = sbr.rel (0) target = $region13
  $region12: #{resnet_forward.54} parent=0 // pred_region
    _
  $region13: #{resnet_forward.54} parent=0 // pred_fallthru
    _
  %v14 = vld [vmem:[%s0] sm:$0xff]
  %v15 = vld [vmem:[%s0 + $0x8] sm:$0xff]
  %v16 = vld [vmem:[%s0 + $0x10] sm:$0xff]
  %v17 = vld [vmem:[%s0 + $0x18] sm:$0xff]
  %v18 = vld [vmem:[%s0 + $0x20] sm:$0xff]
  %v19 = vld [vmem:[%s0 + $0x28] sm:$0xff]
  %v20 = vld [vmem:[%s0 + $0x30] sm:$0xff]
  %v21 = vld [vmem:[%s0 + $0x38] sm:$0xff]
  %v22 = vld [vmem:[%s0 + $0x40] sm:$0xff]
  %v23 = vld [vmem:[%s0 + $0x48] sm:$0xff]
  %v24 = vld [vmem:[%s0 + $0x50] sm:$0xff]
  %v25 = vld [vmem:[%s0 + $0x58] sm:$0xff]
  %v26 = vld [vmem:[%s0 + $0x60] sm:$0xff]
  %v27 = vld [vmem:[%s0 + $0x68] sm:$0xff]
  %v28 = vld [vmem:[%s0 + $0x70] sm:$0xff]
  %v29 = vld [vmem:[%s0 + $0x78] sm:$0xff]
  %v30 = vld [vmem:[%s1] sm:$0x1]
  %v32 = vlaneseq
  %v33 = vshrl.u32 %v32, 7
  %v34 = vsub.s32 0, %v33
  %v35 = vrot.slane %v30, %v34
  %v37 = vmul.f32 %v14, %v35
  %v38 = vmul.f32 %v15, %v35
  %v39 = vmul.f32 %v16, %v35
  %v40 = vmul.f32 %v17, %v35
  %v41 = vmul.f32 %v18, %v35
  %v42 = vmul.f32 %v19, %v35
  %v43 = vmul.f32 %v20, %v35
  %v44 = vmul.f32 %v21, %v35
  %v45 = vmul.f32 %v22, %v35
  %v46 = vmul.f32 %v23, %v35
  %v47 = vmul.f32 %v24, %v35
  %v48 = vmul.f32 %v25, %v35
  %v49 = vmul.f32 %v26, %v35
  %v50 = vmul.f32 %v27, %v35
  %v51 = vmul.f32 %v28, %v35
  %v52 = vmul.f32 %v29, %v35
  %v53 = vld [vmem:[%s2] sm:$0x1]
  %v55 = vlaneseq
  %v56 = vshrl.u32 %v55, 7
  %v57 = vsub.s32 0, %v56
  %v58 = vrot.slane %v53, %v57
  %v60 = vadd.f32 %v37, %v58
  %v61 = vadd.f32 %v38, %v58
  %v62 = vadd.f32 %v39, %v58
  %v63 = vadd.f32 %v40, %v58
  %v64 = vadd.f32 %v41, %v58
  %v65 = vadd.f32 %v42, %v58
  %v66 = vadd.f32 %v43, %v58
  %v67 = vadd.f32 %v44, %v58
  %v68 = vadd.f32 %v45, %v58
  %v69 = vadd.f32 %v46, %v58
  %v70 = vadd.f32 %v47, %v58
  %v71 = vadd.f32 %v48, %v58
  %v72 = vadd.f32 %v49, %v58
  %v73 = vadd.f32 %v50, %v58
  %v74 = vadd.f32 %v51, %v58
  %v75 = vadd.f32 %v52, %v58
  %v76 = vmax.f32 %v60, 0.0
  %v77 = vmax.f32 %v61, 0.0
  %v78 = vmax.f32 %v62, 0.0
  %v79 = vmax.f32 %v63, 0.0
  %v80 = vmax.f32 %v64, 0.0
  %v81 = vmax.f32 %v65, 0.0
  %v82 = vmax.f32 %v66, 0.0
  %v83 = vmax.f32 %v67, 0.0
  %v84 = vmax.f32 %v68, 0.0
  %v85 = vmax.f32 %v69, 0.0
  %v86 = vmax.f32 %v70, 0.0
  %v87 = vmax.f32 %v71, 0.0
  %v88 = vmax.f32 %v72, 0.0
  %v89 = vmax.f32 %v73, 0.0
  %v90 = vmax.f32 %v74, 0.0
  %v91 = vmax.f32 %v75, 0.0
  %v92 = vpack.c.bf16 %v77, %v76
  %v93 = vpack.c.bf16 %v79, %v78
  %v94 = vpack.c.bf16 %v81, %v80
  %v95 = vpack.c.bf16 %v83, %v82
  %v96 = vpack.c.bf16 %v85, %v84
  %v97 = vpack.c.bf16 %v87, %v86
  %v98 = vpack.c.bf16 %v89, %v88
  %v99 = vpack.c.bf16 %v91, %v90
  %v108 = vunpack.c.l.b16 %v92
  %v109 = vunpack.c.h.b16 %v92
  %v110 = vunpack.c.l.b16 %v93
  %v111 = vunpack.c.h.b16 %v93
  %v112 = vunpack.c.l.b16 %v94
  %v113 = vunpack.c.h.b16 %v94
  %v114 = vunpack.c.l.b16 %v95
  %v115 = vunpack.c.h.b16 %v95
  %v116 = vunpack.c.l.b16 %v96
  %v117 = vunpack.c.h.b16 %v96
  %v118 = vunpack.c.l.b16 %v97
  %v119 = vunpack.c.h.b16 %v97
  %v120 = vunpack.c.l.b16 %v98
  %v121 = vunpack.c.h.b16 %v98
  %v122 = vunpack.c.l.b16 %v99
  %v123 = vunpack.c.h.b16 %v99
  %v124 = vpack.c.b16 %v108, %v108
  %v125 = vpack.c.b16 %v109, %v109
  %v126 = vpack.c.b16 %v110, %v110
  %v127 = vpack.c.b16 %v111, %v111
  %v128 = vpack.c.b16 %v112, %v112
  %v129 = vpack.c.b16 %v113, %v113
  %v130 = vpack.c.b16 %v114, %v114
  %v131 = vpack.c.b16 %v115, %v115
  %v132 = vpack.c.b16 %v116, %v116
  %v133 = vpack.c.b16 %v117, %v117
  %v134 = vpack.c.b16 %v118, %v118
  %v135 = vpack.c.b16 %v119, %v119
  %v136 = vpack.c.b16 %v120, %v120
  %v137 = vpack.c.b16 %v121, %v121
  %v138 = vpack.c.b16 %v122, %v122
  %v139 = vpack.c.b16 %v123, %v123
  %vm156 = vcmask 257024
  %157 = vst.msk [vmem:[%s3] sm:$0xf] %vm156, %v124
  %158 = vst.msk [vmem:[%s3 + $0x4] sm:$0xf] %vm156, %v125
  %159 = vst.msk [vmem:[%s3 + $0x8] sm:$0xf] %vm156, %v126
  %160 = vst.msk [vmem:[%s3 + $0xc] sm:$0xf] %vm156, %v127
  %161 = vst.msk [vmem:[%s3 + $0x10] sm:$0xf] %vm156, %v128
  %162 = vst.msk [vmem:[%s3 + $0x14] sm:$0xf] %vm156, %v129
  %163 = vst.msk [vmem:[%s3 + $0x18] sm:$0xf] %vm156, %v130
  %164 = vst.msk [vmem:[%s3 + $0x1c] sm:$0xf] %vm156, %v131
  %165 = vst.msk [vmem:[%s3 + $0x20] sm:$0xf] %vm156, %v132
  %166 = vst.msk [vmem:[%s3 + $0x24] sm:$0xf] %vm156, %v133
  %167 = vst.msk [vmem:[%s3 + $0x28] sm:$0xf] %vm156, %v134
  %168 = vst.msk [vmem:[%s3 + $0x2c] sm:$0xf] %vm156, %v135
  %169 = vst.msk [vmem:[%s3 + $0x30] sm:$0xf] %vm156, %v136
  %170 = vst.msk [vmem:[%s3 + $0x34] sm:$0xf] %vm156, %v137
  %171 = vst.msk [vmem:[%s3 + $0x38] sm:$0xf] %vm156, %v138
  %172 = vst.msk [vmem:[%s3 + $0x3c] sm:$0xf] %vm156, %v139
  // Predicated region
  $region14: #{resnet_forward.54} parent=0 // pred_check
    _
  $region15: #{resnet_forward.54} parent=0 // pred_check_branch
    %174 = sbr.rel (0) target = $region17
  $region16: #{resnet_forward.54} parent=0 // pred_region
    _
  $region17: #{resnet_forward.54} parent=0 // pred_fallthru
    _
  // Predicated region
  $region18: #{resnet_forward.54} parent=0 // pred_check
    _
  $region19: #{resnet_forward.54} parent=0 // pred_check_branch
    %176 = sbr.rel (0) target = $region21
  $region20: #{resnet_forward.54} parent=0 // pred_region
    _
  $region21: #{resnet_forward.54} parent=0 // pred_fallthru
    _

// kernel: resnet_forward.53
$region0: #{resnet_forward.53}
  #allocation0 [shape = 'u32[]', space=smem, size = 0x4, offset = 0x4, fixed_abs, tag = 'smem constant byte address 0x4 - core index']
  #allocation1 [shape = 'u32[144,128]{1,0:T(1,128)}', space=vmem, size = 0x12000, scoped, tag = 'internal scratch']
  %s0 = inlined_call_operand.vmem [shape: bf16[128,144], index: 0, kind: input, shape index: {}]
  %s1 = inlined_call_operand.vmem [shape: bf16[144,32], index: 1, kind: input, shape index: {}]
  %s2 = inlined_call_operand.vmem [shape: f32[128,32], index: 2, kind: output, shape index: {0}]
  %s3 = inlined_call_operand.vmem [shape: f32[8,32], index: 3, kind: output, shape index: {1}]
  %4 = xla_tuple %s2, %s3
  %s5 = sld [smem:[#allocation0]]
  $region26: #{resnet_forward.53} parent=0
    _
  %s7 = ssub.s32 1, %s5
  %s8 = scalar_select 0, %s7, %s5
  // Predicated region
  $region2: #{resnet_forward.53} parent=0 // pred_check
    _
  $region3: #{resnet_forward.53} parent=0 // pred_check_branch
    %10 = sbr.rel (0) target = $region5
  $region4: #{resnet_forward.53} parent=0 // pred_region
    _
  $region5: #{resnet_forward.53} parent=0 // pred_fallthru
    _
  // Predicated region
  $region6: #{resnet_forward.53} parent=0 // pred_check
    _
  $region7: #{resnet_forward.53} parent=0 // pred_check_branch
    %12 = sbr.rel (0) target = $region9
  $region8: #{resnet_forward.53} parent=0 // pred_region
    _
  $region9: #{resnet_forward.53} parent=0 // pred_fallthru
    _
  %v14 = vld [vmem:[%s0] sm:$0xff]
  %v15 = vld [vmem:[%s0 + $0x8] sm:$0xff]
  %v16 = vld [vmem:[%s0 + $0x10] sm:$0xff]
  %v17 = vld [vmem:[%s0 + $0x18] sm:$0xff]
  %v18 = vld [vmem:[%s0 + $0x20] sm:$0xff]
  %v19 = vld [vmem:[%s0 + $0x28] sm:$0xff]
  %v20 = vld [vmem:[%s0 + $0x30] sm:$0xff]
  %v21 = vld [vmem:[%s0 + $0x38] sm:$0xff]
  %v22 = vld [vmem:[%s0 + $0x40] sm:$0xff]
  %v23 = vld [vmem:[%s0 + $0x48] sm:$0xff]
  %v24 = vld [vmem:[%s0 + $0x50] sm:$0xff]
  %v25 = vld [vmem:[%s0 + $0x58] sm:$0xff]
  %v26 = vld [vmem:[%s0 + $0x60] sm:$0xff]
  %v27 = vld [vmem:[%s0 + $0x68] sm:$0xff]
  %v28 = vld [vmem:[%s0 + $0x70] sm:$0xff]
  %v29 = vld [vmem:[%s0 + $0x78] sm:$0xff]
  %v30 = vld [vmem:[%s1] sm:$0xf]
  %v31 = vld [vmem:[%s1 + $0x4] sm:$0xf]
  %v32 = vld [vmem:[%s1 + $0x8] sm:$0xf]
  %v33 = vld [vmem:[%s1 + $0xc] sm:$0xf]
  %v34 = vld [vmem:[%s1 + $0x10] sm:$0xf]
  %v35 = vld [vmem:[%s1 + $0x14] sm:$0xf]
  %v36 = vld [vmem:[%s1 + $0x18] sm:$0xf]
  %v37 = vld [vmem:[%s1 + $0x1c] sm:$0xf]
  %v38 = vld [vmem:[%s1 + $0x20] sm:$0xf]
  %v39 = vld [vmem:[%s1 + $0x24] sm:$0xf]
  %v40 = vld [vmem:[%s1 + $0x28] sm:$0xf]
  %v41 = vld [vmem:[%s1 + $0x2c] sm:$0xf]
  %v42 = vld [vmem:[%s1 + $0x30] sm:$0xf]
  %v43 = vld [vmem:[%s1 + $0x34] sm:$0xf]
  %v44 = vld [vmem:[%s1 + $0x38] sm:$0xf]
  %v45 = vld [vmem:[%s1 + $0x3c] sm:$0xf]
  %v46 = vld [vmem:[%s1 + $0x40] sm:$0xf]
  %v47 = vld [vmem:[%s1 + $0x44] sm:$0xf]
  %v64 = vunpack.c.l.b16 %v14
  %v65 = vunpack.c.h.b16 %v14
  %v66 = vunpack.c.l.b16 %v15
  %v67 = vunpack.c.h.b16 %v15
  %v68 = vunpack.c.l.b16 %v16
  %v69 = vunpack.c.h.b16 %v16
  %v70 = vunpack.c.l.b16 %v17
  %v71 = vunpack.c.h.b16 %v17
  %v72 = vunpack.c.l.b16 %v18
  %v73 = vunpack.c.h.b16 %v18
  %v74 = vunpack.c.l.b16 %v19
  %v75 = vunpack.c.h.b16 %v19
  %v76 = vunpack.c.l.b16 %v20
  %v77 = vunpack.c.h.b16 %v20
  %v78 = vunpack.c.l.b16 %v21
  %v79 = vunpack.c.h.b16 %v21
  %v80 = vunpack.c.l.b16 %v22
  %v81 = vunpack.c.h.b16 %v22
  %v82 = vunpack.c.l.b16 %v23
  %v83 = vunpack.c.h.b16 %v23
  %v84 = vunpack.c.l.b16 %v24
  %v85 = vunpack.c.h.b16 %v24
  %v86 = vunpack.c.l.b16 %v25
  %v87 = vunpack.c.h.b16 %v25
  %v88 = vunpack.c.l.b16 %v26
  %v89 = vunpack.c.h.b16 %v26
  %v90 = vunpack.c.l.b16 %v27
  %v91 = vunpack.c.h.b16 %v27
  %v92 = vunpack.c.l.b16 %v28
  %v93 = vunpack.c.h.b16 %v28
  %v94 = vunpack.c.l.b16 %v29
  %v95 = vunpack.c.h.b16 %v29
  %v96 = vpack.c.b16 %v66, %v64
  %v97 = vpack.c.b16 %v67, %v65
  %v98 = vpack.c.b16 %v70, %v68
  %v99 = vpack.c.b16 %v71, %v69
  %v100 = vpack.c.b16 %v74, %v72
  %v101 = vpack.c.b16 %v75, %v73
  %v102 = vpack.c.b16 %v78, %v76
  %v103 = vpack.c.b16 %v79, %v77
  %v104 = vpack.c.b16 %v82, %v80
  %v105 = vpack.c.b16 %v83, %v81
  %v106 = vpack.c.b16 %v86, %v84
  %v107 = vpack.c.b16 %v87, %v85
  %v108 = vpack.c.b16 %v90, %v88
  %v109 = vpack.c.b16 %v91, %v89
  %v110 = vpack.c.b16 %v94, %v92
  %v111 = vpack.c.b16 %v95, %v93
  %v138 = vunpack.c.l.b16 %v30
  %v139 = vunpack.c.l.b16 %v31
  %v140 = vunpack.c.l.b16 %v32
  %v141 = vunpack.c.l.b16 %v33
  %v142 = vunpack.c.l.b16 %v34
  %v143 = vunpack.c.l.b16 %v35
  %v144 = vunpack.c.l.b16 %v36
  %v145 = vunpack.c.l.b16 %v37
  %v146 = vunpack.c.l.b16 %v38
  %v147 = vunpack.c.l.b16 %v39
  %v148 = vunpack.c.l.b16 %v40
  %v149 = vunpack.c.l.b16 %v41
  %v150 = vunpack.c.l.b16 %v42
  %v151 = vunpack.c.l.b16 %v43
  %v152 = vunpack.c.l.b16 %v44
  %v153 = vunpack.c.l.b16 %v45
  %v154 = vunpack.c.l.b16 %v46
  %v155 = vunpack.c.l.b16 %v47
  %v156 = vpack.c.b16 %v139, %v138
  %v157 = vpack.c.b16 %v141, %v140
  %v158 = vpack.c.b16 %v143, %v142
  %v159 = vpack.c.b16 %v145, %v144
  %v160 = vpack.c.b16 %v147, %v146
  %v161 = vpack.c.b16 %v149, %v148
  %v162 = vpack.c.b16 %v151, %v150
  %v163 = vpack.c.b16 %v153, %v152
  %v164 = vpack.c.b16 %v155, %v154
  %vm174 = vcmask 130048
  %v176 = vsel %vm174, %v97, 0
  %v179 = vsel %vm174, %v99, 0
  %v182 = vsel %vm174, %v101, 0
  %v185 = vsel %vm174, %v103, 0
  %v188 = vsel %vm174, %v105, 0
  %v191 = vsel %vm174, %v107, 0
  %v194 = vsel %vm174, %v109, 0
  %v197 = vsel %vm174, %v111, 0
  %199 = vmatprep.subr.bf16.mxu0 0
  %200 = vmatpush1.bf16.msra.mxu0 %v156
  %201 = vmatprep.subr.bf16.mxu0 0
  %202 = vmatpush1.bf16.msra.mxu0 %v157
  %203 = vmatprep.subr.bf16.mxu0 0
  %204 = vmatpush1.bf16.msra.mxu0 %v158
  %205 = vmatprep.subr.bf16.mxu0 0
  %206 = vmatpush1.bf16.msra.mxu0 %v159
  %207 = vmatprep.subr.bf16.mxu0 0
  %208 = vmatpush1.bf16.msra.mxu0 %v160
  %209 = vmatprep.subr.bf16.mxu0 0
  %210 = vmatpush1.bf16.msra.mxu0 %v161
  %211 = vmatprep.subr.bf16.mxu0 0
  %212 = vmatpush1.bf16.msra.mxu0 %v162
  %213 = vmatprep.subr.bf16.mxu0 0
  %214 = vmatpush1.bf16.msra.mxu0 %v163
  %215 = vmatprep.subr.bf16.mxu0 0
  %216 = vmatpush1.bf16.msra.mxu0 %v164
  %217 = vmatprep.subr.bf16.mxu0 0
  %218 = vmatpush1.bf16.msra.mxu0 0
  %219 = vmatprep.subr.bf16.mxu0 0
  %220 = vmatpush1.bf16.msra.mxu0 0
  %221 = vmatprep.subr.bf16.mxu0 0
  %222 = vmatpush1.bf16.msra.mxu0 0
  %223 = vmatprep.subr.bf16.mxu0 0
  %224 = vmatpush1.bf16.msra.mxu0 0
  %225 = vmatprep.subr.bf16.mxu0 0
  %226 = vmatpush1.bf16.msra.mxu0 0
  %227 = vmatprep.subr.bf16.mxu0 0
  %228 = vmatpush1.bf16.msra.mxu0 0
  %229 = vmatprep.subr.bf16.mxu0 0
  %230 = vmatpush1.bf16.msra.mxu0 0
  %231 = vmatprep.mubr.bf16.mxu0 %v176
  %232 = vmatmul.mubr.bf16.gmra.mrb[0].mxu0 %v96
  %v233 = vpop.f32.mrb[0].mxu0
  %v234 = vadd.f32 0.0, %v233
  %v235 = vpop.f32.mrb[0].mxu0
  %v236 = vpop.f32.mrb[0].mxu0
  %v237 = vadd.f32 0.0, %v236
  %v238 = vpop.f32.mrb[0].mxu0
  %239 = vmatprep.mubr.bf16.mxu0 %v179
  %240 = vmatmul.mubr.bf16.gmra.mrb[0].mxu0 %v98
  %v241 = vpop.f32.mrb[0].mxu0
  %v242 = vadd.f32 0.0, %v241
  %v243 = vpop.f32.mrb[0].mxu0
  %v244 = vpop.f32.mrb[0].mxu0
  %v245 = vadd.f32 0.0, %v244
  %v246 = vpop.f32.mrb[0].mxu0
  %247 = vmatprep.mubr.bf16.mxu0 %v182
  %248 = vmatmul.mubr.bf16.gmra.mrb[0].mxu0 %v100
  %v249 = vpop.f32.mrb[0].mxu0
  %v250 = vadd.f32 0.0, %v249
  %v251 = vpop.f32.mrb[0].mxu0
  %v252 = vpop.f32.mrb[0].mxu0
  %v253 = vadd.f32 0.0, %v252
  %v254 = vpop.f32.mrb[0].mxu0
  %255 = vmatprep.mubr.bf16.mxu0 %v185
  %256 = vmatmul.mubr.bf16.gmra.mrb[0].mxu0 %v102
  %v257 = vpop.f32.mrb[0].mxu0
  %v258 = vadd.f32 0.0, %v257
  %v259 = vpop.f32.mrb[0].mxu0
  %v260 = vpop.f32.mrb[0].mxu0
  %v261 = vadd.f32 0.0, %v260
  %v262 = vpop.f32.mrb[0].mxu0
  %263 = vmatprep.mubr.bf16.mxu0 %v188
  %264 = vmatmul.mubr.bf16.gmra.mrb[0].mxu0 %v104
  %v265 = vpop.f32.mrb[0].mxu0
  %v266 = vadd.f32 0.0, %v265
  %v267 = vpop.f32.mrb[0].mxu0
  %v268 = vpop.f32.mrb[0].mxu0
  %v269 = vadd.f32 0.0, %v268
  %v270 = vpop.f32.mrb[0].mxu0
  %271 = vmatprep.mubr.bf16.mxu0 %v191
  %272 = vmatmul.mubr.bf16.gmra.mrb[0].mxu0 %v106
  %v273 = vpop.f32.mrb[0].mxu0
  %v274 = vadd.f32 0.0, %v273
  %v275 = vpop.f32.mrb[0].mxu0
  %v276 = vpop.f32.mrb[0].mxu0
  %v277 = vadd.f32 0.0, %v276
  %v278 = vpop.f32.mrb[0].mxu0
  %279 = vmatprep.mubr.bf16.mxu0 %v194
  %280 = vmatmul.mubr.bf16.gmra.mrb[0].mxu0 %v108
  %v281 = vpop.f32.mrb[0].mxu0
  %v282 = vadd.f32 0.0, %v281
  %v283 = vpop.f32.mrb[0].mxu0
  %v284 = vpop.f32.mrb[0].mxu0
  %v285 = vadd.f32 0.0, %v284
  %v286 = vpop.f32.mrb[0].mxu0
  %287 = vmatprep.mubr.bf16.mxu0 %v197
  %288 = vmatmul.mubr.bf16.gmra.mrb[0].mxu0 %v110
  %v289 = vpop.f32.mrb[0].mxu0
  %v290 = vadd.f32 0.0, %v289
  %v291 = vpop.f32.mrb[0].mxu0
  %v292 = vpop.f32.mrb[0].mxu0
  %v293 = vadd.f32 0.0, %v292
  %v294 = vpop.f32.mrb[0].mxu0
  %295 = vdwg.mxu0
  %vm296 = vcmask 261120
  %297 = vst.msk [vmem:[%s2] sm:$0xff] %vm296, %v234
  %298 = vst.msk [vmem:[%s2 + $0x8] sm:$0xff] %vm296, %v237
  %299 = vst.msk [vmem:[%s2 + $0x10] sm:$0xff] %vm296, %v242
  %300 = vst.msk [vmem:[%s2 + $0x18] sm:$0xff] %vm296, %v245
  %301 = vst.msk [vmem:[%s2 + $0x20] sm:$0xff] %vm296, %v250
  %302 = vst.msk [vmem:[%s2 + $0x28] sm:$0xff] %vm296, %v253
  %303 = vst.msk [vmem:[%s2 + $0x30] sm:$0xff] %vm296, %v258
  %304 = vst.msk [vmem:[%s2 + $0x38] sm:$0xff] %vm296, %v261
  %305 = vst.msk [vmem:[%s2 + $0x40] sm:$0xff] %vm296, %v266
  %306 = vst.msk [vmem:[%s2 + $0x48] sm:$0xff] %vm296, %v269
  %307 = vst.msk [vmem:[%s2 + $0x50] sm:$0xff] %vm296, %v274
  %308 = vst.msk [vmem:[%s2 + $0x58] sm:$0xff] %vm296, %v277
  %309 = vst.msk [vmem:[%s2 + $0x60] sm:$0xff] %vm296, %v282
  %310 = vst.msk [vmem:[%s2 + $0x68] sm:$0xff] %vm296, %v285
  %311 = vst.msk [vmem:[%s2 + $0x70] sm:$0xff] %vm296, %v290
  %312 = vst.msk [vmem:[%s2 + $0x78] sm:$0xff] %vm296, %v293
  %v313 = vsel %vm296, %v234, 0.0
  %v314 = vsel %vm296, %v237, 0.0
  %v315 = vadd.f32 %v313, %v314
  %v316 = vsel %vm296, %v242, 0.0
  %v317 = vadd.f32 %v315, %v316
  %v318 = vsel %vm296, %v245, 0.0
  %v319 = vadd.f32 %v317, %v318
  %v320 = vsel %vm296, %v250, 0.0
  %v321 = vadd.f32 %v319, %v320
  %v322 = vsel %vm296, %v253, 0.0
  %v323 = vadd.f32 %v321, %v322
  %v324 = vsel %vm296, %v258, 0.0
  %v325 = vadd.f32 %v323, %v324
  %v326 = vsel %vm296, %v261, 0.0
  %v327 = vadd.f32 %v325, %v326
  %v328 = vsel %vm296, %v266, 0.0
  %v329 = vadd.f32 %v327, %v328
  %v330 = vsel %vm296, %v269, 0.0
  %v331 = vadd.f32 %v329, %v330
  %v332 = vsel %vm296, %v274, 0.0
  %v333 = vadd.f32 %v331, %v332
  %v334 = vsel %vm296, %v277, 0.0
  %v335 = vadd.f32 %v333, %v334
  %v336 = vsel %vm296, %v282, 0.0
  %v337 = vadd.f32 %v335, %v336
  %v338 = vsel %vm296, %v285, 0.0
  %v339 = vadd.f32 %v337, %v338
  %v340 = vsel %vm296, %v290, 0.0
  %v341 = vadd.f32 %v339, %v340
  %v342 = vsel %vm296, %v293, 0.0
  %v343 = vadd.f32 %v341, %v342
  %v344 = vrot.slane %v343, 4
  %v345 = vadd.f32 %v343, %v344
  %v346 = vrot.slane %v345, 2
  %v347 = vadd.f32 %v345, %v346
  %v348 = vrot.slane %v347, 1
  %v349 = vadd.f32 %v347, %v348
  %v350 = vmul.f32 %v234, %v234
  %v351 = vmul.f32 %v237, %v237
  %v352 = vmul.f32 %v242, %v242
  %v353 = vmul.f32 %v245, %v245
  %v354 = vmul.f32 %v250, %v250
  %v355 = vmul.f32 %v253, %v253
  %v356 = vmul.f32 %v258, %v258
  %v357 = vmul.f32 %v261, %v261
  %v358 = vmul.f32 %v266, %v266
  %v359 = vmul.f32 %v269, %v269
  %v360 = vmul.f32 %v274, %v274
  %v361 = vmul.f32 %v277, %v277
  %v362 = vmul.f32 %v282, %v282
  %v363 = vmul.f32 %v285, %v285
  %v364 = vmul.f32 %v290, %v290
  %v365 = vmul.f32 %v293, %v293
  %v366 = vsel %vm296, %v350, 0.0
  %v367 = vsel %vm296, %v351, 0.0
  %v368 = vadd.f32 %v366, %v367
  %v369 = vsel %vm296, %v352, 0.0
  %v370 = vadd.f32 %v368, %v369
  %v371 = vsel %vm296, %v353, 0.0
  %v372 = vadd.f32 %v370, %v371
  %v373 = vsel %vm296, %v354, 0.0
  %v374 = vadd.f32 %v372, %v373
  %v375 = vsel %vm296, %v355, 0.0
  %v376 = vadd.f32 %v374, %v375
  %v377 = vsel %vm296, %v356, 0.0
  %v378 = vadd.f32 %v376, %v377
  %v379 = vsel %vm296, %v357, 0.0
  %v380 = vadd.f32 %v378, %v379
  %v381 = vsel %vm296, %v358, 0.0
  %v382 = vadd.f32 %v380, %v381
  %v383 = vsel %vm296, %v359, 0.0
  %v384 = vadd.f32 %v382, %v383
  %v385 = vsel %vm296, %v360, 0.0
  %v386 = vadd.f32 %v384, %v385
  %v387 = vsel %vm296, %v361, 0.0
  %v388 = vadd.f32 %v386, %v387
  %v389 = vsel %vm296, %v362, 0.0
  %v390 = vadd.f32 %v388, %v389
  %v391 = vsel %vm296, %v363, 0.0
  %v392 = vadd.f32 %v390, %v391
  %v393 = vsel %vm296, %v364, 0.0
  %v394 = vadd.f32 %v392, %v393
  %v395 = vsel %vm296, %v365, 0.0
  %v396 = vadd.f32 %v394, %v395
  %v397 = vrot.slane %v396, 4
  %v398 = vadd.f32 %v396, %v397
  %v399 = vrot.slane %v398, 2
  %v400 = vadd.f32 %v398, %v399
  %v401 = vrot.slane %v400, 1
  %v402 = vadd.f32 %v400, %v401
  %v403 = vlaneseq
  %v404 = vshrl.u32 %v403, 7
  %vm405 = vcmp.eq.s32.totalorder %v404, 0
  %v406 = vsel %vm405, %v349, 0.0
  %vm407 = vcmp.eq.s32.totalorder %v404, 1
  %v408 = vsel %vm407, %v402, 0.0
  %v409 = vadd.f32 %v406, %v408
  %410 = vst.msk [vmem:[%s3] sm:$0xff] %vm296, %v409
  // Predicated region
  $region10: #{resnet_forward.53} parent=0 // pred_check
    _
  $region11: #{resnet_forward.53} parent=0 // pred_check_branch
    %412 = sbr.rel (0) target = $region13
  $region12: #{resnet_forward.53} parent=0 // pred_region
    _
  $region13: #{resnet_forward.53} parent=0 // pred_fallthru
    _
  // Predicated region
  $region14: #{resnet_forward.53} parent=0 // pred_check
    _
  $region15: #{resnet_forward.53} parent=0 // pred_check_branch
    %414 = sbr.rel (0) target = $region17
  $region16: #{resnet_forward.53} parent=0 // pred_region
    _
  $region17: #{resnet_forward.53} parent=0 // pred_fallthru
    _
  // Predicated region
  $region18: #{resnet_forward.53} parent=0 // pred_check
    _
  $region19: #{resnet_forward.53} parent=0 // pred_check_branch
    %416 = sbr.rel (0) target = $region21
  $region20: #{resnet_forward.53} parent=0 // pred_region
    _
  $region21: #{resnet_forward.53} parent=0 // pred_fallthru
    _
  // Predicated region
  $region22: #{resnet_forward.53} parent=0 // pred_check
    _
  $region23: #{resnet_forward.53} parent=0 // pred_check_branch
    %418 = sbr.rel (0) target = $region25
  $region24: #{resnet_forward.53} parent=0 // pred_region
    _
  $region25: #{resnet_forward.53} parent=0 // pred_fallthru
    _

// kernel: resnet_forward.56
$region0: #{resnet_forward.56}
  #allocation0 [shape = 'u32[]', space=smem, size = 0x4, offset = 0x4, fixed_abs, tag = 'smem constant byte address 0x4 - core index']
  #allocation1 [shape = 'u32[144,128]{1,0:T(1,128)}', space=vmem, size = 0x12000, scoped, tag = 'internal scratch']
  %s0 = inlined_call_operand.vmem [shape: f32[128,32], index: 0, kind: input, shape index: {}]
  %s1 = inlined_call_operand.vmem [shape: bf16[128,32], index: 1, kind: input, shape index: {}]
  %s2 = inlined_call_operand.vmem [shape: f32[1,32], index: 2, kind: input, shape index: {}]
  %s3 = inlined_call_operand.vmem [shape: f32[1,32], index: 3, kind: input, shape index: {}]
  %s4 = inlined_call_operand.vmem [shape: bf16[128,32], index: 4, kind: output, shape index: {}]
  %s5 = sld [smem:[#allocation0]]
  $region26: #{resnet_forward.56} parent=0
    _
  %s7 = ssub.s32 1, %s5
  %s8 = scalar_select 0, %s7, %s5
  // Predicated region
  $region2: #{resnet_forward.56} parent=0 // pred_check
    _
  $region3: #{resnet_forward.56} parent=0 // pred_check_branch
    %10 = sbr.rel (0) target = $region5
  $region4: #{resnet_forward.56} parent=0 // pred_region
    _
  $region5: #{resnet_forward.56} parent=0 // pred_fallthru
    _
  // Predicated region
  $region6: #{resnet_forward.56} parent=0 // pred_check
    _
  $region7: #{resnet_forward.56} parent=0 // pred_check_branch
    %12 = sbr.rel (0) target = $region9
  $region8: #{resnet_forward.56} parent=0 // pred_region
    _
  $region9: #{resnet_forward.56} parent=0 // pred_fallthru
    _
  // Predicated region
  $region10: #{resnet_forward.56} parent=0 // pred_check
    _
  $region11: #{resnet_forward.56} parent=0 // pred_check_branch
    %14 = sbr.rel (0) target = $region13
  $region12: #{resnet_forward.56} parent=0 // pred_region
    _
  $region13: #{resnet_forward.56} parent=0 // pred_fallthru
    _
  // Predicated region
  $region14: #{resnet_forward.56} parent=0 // pred_check
    _
  $region15: #{resnet_forward.56} parent=0 // pred_check_branch
    %16 = sbr.rel (0) target = $region17
  $region16: #{resnet_forward.56} parent=0 // pred_region
    _
  $region17: #{resnet_forward.56} parent=0 // pred_fallthru
    _
  %v17 = vld [vmem:[%s0] sm:$0xff]
  %v18 = vld [vmem:[%s0 + $0x8] sm:$0xff]
  %v19 = vld [vmem:[%s0 + $0x10] sm:$0xff]
  %v20 = vld [vmem:[%s0 + $0x18] sm:$0xff]
  %v21 = vld [vmem:[%s0 + $0x20] sm:$0xff]
  %v22 = vld [vmem:[%s0 + $0x28] sm:$0xff]
  %v23 = vld [vmem:[%s0 + $0x30] sm:$0xff]
  %v24 = vld [vmem:[%s0 + $0x38] sm:$0xff]
  %v25 = vld [vmem:[%s0 + $0x40] sm:$0xff]
  %v26 = vld [vmem:[%s0 + $0x48] sm:$0xff]
  %v27 = vld [vmem:[%s0 + $0x50] sm:$0xff]
  %v28 = vld [vmem:[%s0 + $0x58] sm:$0xff]
  %v29 = vld [vmem:[%s0 + $0x60] sm:$0xff]
  %v30 = vld [vmem:[%s0 + $0x68] sm:$0xff]
  %v31 = vld [vmem:[%s0 + $0x70] sm:$0xff]
  %v32 = vld [vmem:[%s0 + $0x78] sm:$0xff]
  %v33 = vld [vmem:[%s2] sm:$0x1]
  %v35 = vlaneseq
  %v36 = vshrl.u32 %v35, 7
  %v37 = vsub.s32 0, %v36
  %v38 = vrot.slane %v33, %v37
  %v40 = vmul.f32 %v17, %v38
  %v41 = vmul.f32 %v18, %v38
  %v42 = vmul.f32 %v19, %v38
  %v43 = vmul.f32 %v20, %v38
  %v44 = vmul.f32 %v21, %v38
  %v45 = vmul.f32 %v22, %v38
  %v46 = vmul.f32 %v23, %v38
  %v47 = vmul.f32 %v24, %v38
  %v48 = vmul.f32 %v25, %v38
  %v49 = vmul.f32 %v26, %v38
  %v50 = vmul.f32 %v27, %v38
  %v51 = vmul.f32 %v28, %v38
  %v52 = vmul.f32 %v29, %v38
  %v53 = vmul.f32 %v30, %v38
  %v54 = vmul.f32 %v31, %v38
  %v55 = vmul.f32 %v32, %v38
  %v56 = vld [vmem:[%s3] sm:$0x1]
  %v58 = vlaneseq
  %v59 = vshrl.u32 %v58, 7
  %v60 = vsub.s32 0, %v59
  %v61 = vrot.slane %v56, %v60
  %v63 = vadd.f32 %v40, %v61
  %v64 = vadd.f32 %v41, %v61
  %v65 = vadd.f32 %v42, %v61
  %v66 = vadd.f32 %v43, %v61
  %v67 = vadd.f32 %v44, %v61
  %v68 = vadd.f32 %v45, %v61
  %v69 = vadd.f32 %v46, %v61
  %v70 = vadd.f32 %v47, %v61
  %v71 = vadd.f32 %v48, %v61
  %v72 = vadd.f32 %v49, %v61
  %v73 = vadd.f32 %v50, %v61
  %v74 = vadd.f32 %v51, %v61
  %v75 = vadd.f32 %v52, %v61
  %v76 = vadd.f32 %v53, %v61
  %v77 = vadd.f32 %v54, %v61
  %v78 = vadd.f32 %v55, %v61
  %v79 = vld [vmem:[%s1] sm:$0xf]
  %v80 = vld [vmem:[%s1 + $0x4] sm:$0xf]
  %v81 = vld [vmem:[%s1 + $0x8] sm:$0xf]
  %v82 = vld [vmem:[%s1 + $0xc] sm:$0xf]
  %v83 = vld [vmem:[%s1 + $0x10] sm:$0xf]
  %v84 = vld [vmem:[%s1 + $0x14] sm:$0xf]
  %v85 = vld [vmem:[%s1 + $0x18] sm:$0xf]
  %v86 = vld [vmem:[%s1 + $0x1c] sm:$0xf]
  %v87 = vld [vmem:[%s1 + $0x20] sm:$0xf]
  %v88 = vld [vmem:[%s1 + $0x24] sm:$0xf]
  %v89 = vld [vmem:[%s1 + $0x28] sm:$0xf]
  %v90 = vld [vmem:[%s1 + $0x2c] sm:$0xf]
  %v91 = vld [vmem:[%s1 + $0x30] sm:$0xf]
  %v92 = vld [vmem:[%s1 + $0x34] sm:$0xf]
  %v93 = vld [vmem:[%s1 + $0x38] sm:$0xf]
  %v94 = vld [vmem:[%s1 + $0x3c] sm:$0xf]
  %v95 = vunpack.c.l.bf16 %v79
  %v96 = vunpack.c.l.bf16 %v80
  %v97 = vunpack.c.l.bf16 %v81
  %v98 = vunpack.c.l.bf16 %v82
  %v99 = vunpack.c.l.bf16 %v83
  %v100 = vunpack.c.l.bf16 %v84
  %v101 = vunpack.c.l.bf16 %v85
  %v102 = vunpack.c.l.bf16 %v86
  %v103 = vunpack.c.l.bf16 %v87
  %v104 = vunpack.c.l.bf16 %v88
  %v105 = vunpack.c.l.bf16 %v89
  %v106 = vunpack.c.l.bf16 %v90
  %v107 = vunpack.c.l.bf16 %v91
  %v108 = vunpack.c.l.bf16 %v92
  %v109 = vunpack.c.l.bf16 %v93
  %v110 = vunpack.c.l.bf16 %v94
  %v111 = vadd.f32 %v63, %v95
  %v112 = vadd.f32 %v64, %v96
  %v113 = vadd.f32 %v65, %v97
  %v114 = vadd.f32 %v66, %v98
  %v115 = vadd.f32 %v67, %v99
  %v116 = vadd.f32 %v68, %v100
  %v117 = vadd.f32 %v69, %v101
  %v118 = vadd.f32 %v70, %v102
  %v119 = vadd.f32 %v71, %v103
  %v120 = vadd.f32 %v72, %v104
  %v121 = vadd.f32 %v73, %v105
  %v122 = vadd.f32 %v74, %v106
  %v123 = vadd.f32 %v75, %v107
  %v124 = vadd.f32 %v76, %v108
  %v125 = vadd.f32 %v77, %v109
  %v126 = vadd.f32 %v78, %v110
  %v127 = vmax.f32 %v111, 0.0
  %v128 = vmax.f32 %v112, 0.0
  %v129 = vmax.f32 %v113, 0.0
  %v130 = vmax.f32 %v114, 0.0
  %v131 = vmax.f32 %v115, 0.0
  %v132 = vmax.f32 %v116, 0.0
  %v133 = vmax.f32 %v117, 0.0
  %v134 = vmax.f32 %v118, 0.0
  %v135 = vmax.f32 %v119, 0.0
  %v136 = vmax.f32 %v120, 0.0
  %v137 = vmax.f32 %v121, 0.0
  %v138 = vmax.f32 %v122, 0.0
  %v139 = vmax.f32 %v123, 0.0
  %v140 = vmax.f32 %v124, 0.0
  %v141 = vmax.f32 %v125, 0.0
  %v142 = vmax.f32 %v126, 0.0
  %v143 = vpack.c.bf16 %v128, %v127
  %v144 = vpack.c.bf16 %v130, %v129
  %v145 = vpack.c.bf16 %v132, %v131
  %v146 = vpack.c.bf16 %v134, %v133
  %v147 = vpack.c.bf16 %v136, %v135
  %v148 = vpack.c.bf16 %v138, %v137
  %v149 = vpack.c.bf16 %v140, %v139
  %v150 = vpack.c.bf16 %v142, %v141
  %v159 = vunpack.c.l.b16 %v143
  %v160 = vunpack.c.h.b16 %v143
  %v161 = vunpack.c.l.b16 %v144
  %v162 = vunpack.c.h.b16 %v144
  %v163 = vunpack.c.l.b16 %v145
  %v164 = vunpack.c.h.b16 %v145
  %v165 = vunpack.c.l.b16 %v146
  %v166 = vunpack.c.h.b16 %v146
  %v167 = vunpack.c.l.b16 %v147
  %v168 = vunpack.c.h.b16 %v147
  %v169 = vunpack.c.l.b16 %v148
  %v170 = vunpack.c.h.b16 %v148
  %v171 = vunpack.c.l.b16 %v149
  %v172 = vunpack.c.h.b16 %v149
  %v173 = vunpack.c.l.b16 %v150
  %v174 = vunpack.c.h.b16 %v150
  %v175 = vpack.c.b16 %v159, %v159
  %v176 = vpack.c.b16 %v160, %v160
  %v177 = vpack.c.b16 %v161, %v161
  %v178 = vpack.c.b16 %v162, %v162
  %v179 = vpack.c.b16 %v163, %v163
  %v180 = vpack.c.b16 %v164, %v164
  %v181 = vpack.c.b16 %v165, %v165
  %v182 = vpack.c.b16 %v166, %v166
  %v183 = vpack.c.b16 %v167, %v167
  %v184 = vpack.c.b16 %v168, %v168
  %v185 = vpack.c.b16 %v169, %v169
  %v186 = vpack.c.b16 %v170, %v170
  %v187 = vpack.c.b16 %v171, %v171
  %v188 = vpack.c.b16 %v172, %v172
  %v189 = vpack.c.b16 %v173, %v173
  %v190 = vpack.c.b16 %v174, %v174
  %vm207 = vcmask 257024
  %208 = vst.msk [vmem:[%s4] sm:$0xf] %vm207, %v175
  %209 = vst.msk [vmem:[%s4 + $0x4] sm:$0xf] %vm207, %v176
  %210 = vst.msk [vmem:[%s4 + $0x8] sm:$0xf] %vm207, %v177
  %211 = vst.msk [vmem:[%s4 + $0xc] sm:$0xf] %vm207, %v178
  %212 = vst.msk [vmem:[%s4 + $0x10] sm:$0xf] %vm207, %v179
  %213 = vst.msk [vmem:[%s4 + $0x14] sm:$0xf] %vm207, %v180
  %214 = vst.msk [vmem:[%s4 + $0x18] sm:$0xf] %vm207, %v181
  %215 = vst.msk [vmem:[%s4 + $0x1c] sm:$0xf] %vm207, %v182
  %216 = vst.msk [vmem:[%s4 + $0x20] sm:$0xf] %vm207, %v183
  %217 = vst.msk [vmem:[%s4 + $0x24] sm:$0xf] %vm207, %v184
  %218 = vst.msk [vmem:[%s4 + $0x28] sm:$0xf] %vm207, %v185
  %219 = vst.msk [vmem:[%s4 + $0x2c] sm:$0xf] %vm207, %v186
  %220 = vst.msk [vmem:[%s4 + $0x30] sm:$0xf] %vm207, %v187
  %221 = vst.msk [vmem:[%s4 + $0x34] sm:$0xf] %vm207, %v188
  %222 = vst.msk [vmem:[%s4 + $0x38] sm:$0xf] %vm207, %v189
  %223 = vst.msk [vmem:[%s4 + $0x3c] sm:$0xf] %vm207, %v190
  // Predicated region
  $region18: #{resnet_forward.56} parent=0 // pred_check
    _
  $region19: #{resnet_forward.56} parent=0 // pred_check_branch
    %225 = sbr.rel (0) target = $region21
  $region20: #{resnet_forward.56} parent=0 // pred_region
    _
  $region21: #{resnet_forward.56} parent=0 // pred_fallthru
    _
  // Predicated region
  $region22: #{resnet_forward.56} parent=0 // pred_check
    _
  $region23: #{resnet_forward.56} parent=0 // pred_check_branch
    %227 = sbr.rel (0) target = $region25
  $region24: #{resnet_forward.56} parent=0 // pred_region
    _
  $region25: #{resnet_forward.56} parent=0 // pred_fallthru
    _

// kernel: resnet_forward.55
$region0: #{resnet_forward.55}
  #allocation0 [shape = 'u32[]', space=smem, size = 0x4, offset = 0x4, fixed_abs, tag = 'smem constant byte address 0x4 - core index']
  #allocation1 [shape = 'u32[144,128]{1,0:T(1,128)}', space=vmem, size = 0x12000, scoped, tag = 'internal scratch']
  %s0 = inlined_call_operand.vmem [shape: bf16[128,288], index: 0, kind: input, shape index: {}]
  %s1 = inlined_call_operand.vmem [shape: bf16[288,32], index: 1, kind: input, shape index: {}]
  %s2 = inlined_call_operand.vmem [shape: f32[128,32], index: 2, kind: output, shape index: {0}]
  %s3 = inlined_call_operand.vmem [shape: f32[8,32], index: 3, kind: output, shape index: {1}]
  %4 = xla_tuple %s2, %s3
  %s5 = sld [smem:[#allocation0]]
  $region26: #{resnet_forward.55} parent=0
    _
  %s7 = ssub.s32 1, %s5
  %s8 = scalar_select 0, %s7, %s5
  // Predicated region
  $region2: #{resnet_forward.55} parent=0 // pred_check
    _
  $region3: #{resnet_forward.55} parent=0 // pred_check_branch
    %10 = sbr.rel (0) target = $region5
  $region4: #{resnet_forward.55} parent=0 // pred_region
    _
  $region5: #{resnet_forward.55} parent=0 // pred_fallthru
    _
  // Predicated region
  $region6: #{resnet_forward.55} parent=0 // pred_check
    _
  $region7: #{resnet_forward.55} parent=0 // pred_check_branch
    %12 = sbr.rel (0) target = $region9
  $region8: #{resnet_forward.55} parent=0 // pred_region
    _
  $region9: #{resnet_forward.55} parent=0 // pred_fallthru
    _
  %v14 = vld [vmem:[%s0] sm:$0xff]
  %v15 = vld [vmem:[%s0 + $0x8] sm:$0xf]
  %v16 = vld [vmem:[%s0 + $0xc] sm:$0xff]
  %v17 = vld [vmem:[%s0 + $0x14] sm:$0xf]
  %v18 = vld [vmem:[%s0 + $0x18] sm:$0xff]
  %v19 = vld [vmem:[%s0 + $0x20] sm:$0xf]
  %v20 = vld [vmem:[%s0 + $0x24] sm:$0xff]
  %v21 = vld [vmem:[%s0 + $0x2c] sm:$0xf]
  %v22 = vld [vmem:[%s0 + $0x30] sm:$0xff]
  %v23 = vld [vmem:[%s0 + $0x38] sm:$0xf]
  %v24 = vld [vmem:[%s0 + $0x3c] sm:$0xff]
  %v25 = vld [vmem:[%s0 + $0x44] sm:$0xf]
  %v26 = vld [vmem:[%s0 + $0x48] sm:$0xff]
  %v27 = vld [vmem:[%s0 + $0x50] sm:$0xf]
  %v28 = vld [vmem:[%s0 + $0x54] sm:$0xff]
  %v29 = vld [vmem:[%s0 + $0x5c] sm:$0xf]
  %v30 = vld [vmem:[%s0 + $0x60] sm:$0xff]
  %v31 = vld [vmem:[%s0 + $0x68] sm:$0xf]
  %v32 = vld [vmem:[%s0 + $0x6c] sm:$0xff]
  %v33 = vld [vmem:[%s0 + $0x74] sm:$0xf]
  %v34 = vld [vmem:[%s0 + $0x78] sm:$0xff]
  %v35 = vld [vmem:[%s0 + $0x80] sm:$0xf]
  %v36 = vld [vmem:[%s0 + $0x84] sm:$0xff]
  %v37 = vld [vmem:[%s0 + $0x8c] sm:$0xf]
  %v38 = vld [vmem:[%s0 + $0x90] sm:$0xff]
  %v39 = vld [vmem:[%s0 + $0x98] sm:$0xf]
  %v40 = vld [vmem:[%s0 + $0x9c] sm:$0xff]
  %v41 = vld [vmem:[%s0 + $0xa4] sm:$0xf]
  %v42 = vld [vmem:[%s0 + $0xa8] sm:$0xff]
  %v43 = vld [vmem:[%s0 + $0xb0] sm:$0xf]
  %v44 = vld [vmem:[%s0 + $0xb4] sm:$0xff]
  %v45 = vld [vmem:[%s0 + $0xbc] sm:$0xf]
  %v46 = vld [vmem:[%s1] sm:$0xf]
  %v47 = vld [vmem:[%s1 + $0x4] sm:$0xf]
  %v48 = vld [vmem:[%s1 + $0x8] sm:$0xf]
  %v49 = vld [vmem:[%s1 + $0xc] sm:$0xf]
  %v50 = vld [vmem:[%s1 + $0x10] sm:$0xf]
  %v51 = vld [vmem:[%s1 + $0x14] sm:$0xf]
  %v52 = vld [vmem:[%s1 + $0x18] sm:$0xf]
  %v53 = vld [vmem:[%s1 + $0x1c] sm:$0xf]
  %v54 = vld [vmem:[%s1 + $0x20] sm:$0xf]
  %v55 = vld [vmem:[%s1 + $0x24] sm:$0xf]
  %v56 = vld [vmem:[%s1 + $0x28] sm:$0xf]
  %v57 = vld [vmem:[%s1 + $0x2c] sm:$0xf]
  %v58 = vld [vmem:[%s1 + $0x30] sm:$0xf]
  %v59 = vld [vmem:[%s1 + $0x34] sm:$0xf]
  %v60 = vld [vmem:[%s1 + $0x38] sm:$0xf]
  %v61 = vld [vmem:[%s1 + $0x3c] sm:$0xf]
  %v62 = vld [vmem:[%s1 + $0x40] sm:$0xf]
  %v63 = vld [vmem:[%s1 + $0x44] sm:$0xf]
  %v64 = vld [vmem:[%s1 + $0x48] sm:$0xf]
  %v65 = vld [vmem:[%s1 + $0x4c] sm:$0xf]
  %v66 = vld [vmem:[%s1 + $0x50] sm:$0xf]
  %v67 = vld [vmem:[%s1 + $0x54] sm:$0xf]
  %v68 = vld [vmem:[%s1 + $0x58] sm:$0xf]
  %v69 = vld [vmem:[%s1 + $0x5c] sm:$0xf]
  %v70 = vld [vmem:[%s1 + $0x60] sm:$0xf]
  %v71 = vld [vmem:[%s1 + $0x64] sm:$0xf]
  %v72 = vld [vmem:[%s1 + $0x68] sm:$0xf]
  %v73 = vld [vmem:[%s1 + $0x6c] sm:$0xf]
  %v74 = vld [vmem:[%s1 + $0x70] sm:$0xf]
  %v75 = vld [vmem:[%s1 + $0x74] sm:$0xf]
  %v76 = vld [vmem:[%s1 + $0x78] sm:$0xf]
  %v77 = vld [vmem:[%s1 + $0x7c] sm:$0xf]
  %v78 = vld [vmem:[%s1 + $0x80] sm:$0xf]
  %v79 = vld [vmem:[%s1 + $0x84] sm:$0xf]
  %v80 = vld [vmem:[%s1 + $0x88] sm:$0xf]
  %v81 = vld [vmem:[%s1 + $0x8c] sm:$0xf]
  %v114 = vunpack.c.l.b16 %v14
  %v115 = vunpack.c.h.b16 %v14
  %v116 = vunpack.c.l.b16 %v15
  %v117 = vunpack.c.l.b16 %v16
  %v118 = vunpack.c.h.b16 %v16
  %v119 = vunpack.c.l.b16 %v17
  %v120 = vunpack.c.l.b16 %v18
  %v121 = vunpack.c.h.b16 %v18
  %v122 = vunpack.c.l.b16 %v19
  %v123 = vunpack.c.l.b16 %v20
  %v124 = vunpack.c.h.b16 %v20
  %v125 = vunpack.c.l.b16 %v21
  %v126 = vunpack.c.l.b16 %v22
  %v127 = vunpack.c.h.b16 %v22
  %v128 = vunpack.c.l.b16 %v23
  %v129 = vunpack.c.l.b16 %v24
  %v130 = vunpack.c.h.b16 %v24
  %v131 = vunpack.c.l.b16 %v25
  %v132 = vunpack.c.l.b16 %v26
  %v133 = vunpack.c.h.b16 %v26
  %v134 = vunpack.c.l.b16 %v27
  %v135 = vunpack.c.l.b16 %v28
  %v136 = vunpack.c.h.b16 %v28
  %v137 = vunpack.c.l.b16 %v29
  %v138 = vunpack.c.l.b16 %v30
  %v139 = vunpack.c.h.b16 %v30
  %v140 = vunpack.c.l.b16 %v31
  %v141 = vunpack.c.l.b16 %v32
  %v142 = vunpack.c.h.b16 %v32
  %v143 = vunpack.c.l.b16 %v33
  %v144 = vunpack.c.l.b16 %v34
  %v145 = vunpack.c.h.b16 %v34
  %v146 = vunpack.c.l.b16 %v35
  %v147 = vunpack.c.l.b16 %v36
  %v148 = vunpack.c.h.b16 %v36
  %v149 = vunpack.c.l.b16 %v37
  %v150 = vunpack.c.l.b16 %v38
  %v151 = vunpack.c.h.b16 %v38
  %v152 = vunpack.c.l.b16 %v39
  %v153 = vunpack.c.l.b16 %v40
  %v154 = vunpack.c.h.b16 %v40
  %v155 = vunpack.c.l.b16 %v41
  %v156 = vunpack.c.l.b16 %v42
  %v157 = vunpack.c.h.b16 %v42
  %v158 = vunpack.c.l.b16 %v43
  %v159 = vunpack.c.l.b16 %v44
  %v160 = vunpack.c.h.b16 %v44
  %v161 = vunpack.c.l.b16 %v45
  %v162 = vpack.c.b16 %v117, %v114
  %v163 = vpack.c.b16 %v118, %v115
  %v164 = vpack.c.b16 %v119, %v116
  %v165 = vpack.c.b16 %v123, %v120
  %v166 = vpack.c.b16 %v124, %v121
  %v167 = vpack.c.b16 %v125, %v122
  %v168 = vpack.c.b16 %v129, %v126
  %v169 = vpack.c.b16 %v130, %v127
  %v170 = vpack.c.b16 %v131, %v128
  %v171 = vpack.c.b16 %v135, %v132
  %v172 = vpack.c.b16 %v136, %v133
  %v173 = vpack.c.b16 %v137, %v134
  %v174 = vpack.c.b16 %v141, %v138
  %v175 = vpack.c.b16 %v142, %v139
  %v176 = vpack.c.b16 %v143, %v140
  %v177 = vpack.c.b16 %v147, %v144
  %v178 = vpack.c.b16 %v148, %v145
  %v179 = vpack.c.b16 %v149, %v146
  %v180 = vpack.c.b16 %v153, %v150
  %v181 = vpack.c.b16 %v154, %v151
  %v182 = vpack.c.b16 %v155, %v152
  %v183 = vpack.c.b16 %v159, %v156
  %v184 = vpack.c.b16 %v160, %v157
  %v185 = vpack.c.b16 %v161, %v158
  %v238 = vunpack.c.l.b16 %v46
  %v239 = vunpack.c.l.b16 %v47
  %v240 = vunpack.c.l.b16 %v48
  %v241 = vunpack.c.l.b16 %v49
  %v242 = vunpack.c.l.b16 %v50
  %v243 = vunpack.c.l.b16 %v51
  %v244 = vunpack.c.l.b16 %v52
  %v245 = vunpack.c.l.b16 %v53
  %v246 = vunpack.c.l.b16 %v54
  %v247 = vunpack.c.l.b16 %v55
  %v248 = vunpack.c.l.b16 %v56
  %v249 = vunpack.c.l.b16 %v57
  %v250 = vunpack.c.l.b16 %v58
  %v251 = vunpack.c.l.b16 %v59
  %v252 = vunpack.c.l.b16 %v60
  %v253 = vunpack.c.l.b16 %v61
  %v254 = vunpack.c.l.b16 %v62
  %v255 = vunpack.c.l.b16 %v63
  %v256 = vunpack.c.l.b16 %v64
  %v257 = vunpack.c.l.b16 %v65
  %v258 = vunpack.c.l.b16 %v66
  %v259 = vunpack.c.l.b16 %v67
  %v260 = vunpack.c.l.b16 %v68
  %v261 = vunpack.c.l.b16 %v69
  %v262 = vunpack.c.l.b16 %v70
  %v263 = vunpack.c.l.b16 %v71
  %v264 = vunpack.c.l.b16 %v72
  %v265 = vunpack.c.l.b16 %v73
  %v266 = vunpack.c.l.b16 %v74
  %v267 = vunpack.c.l.b16 %v75
  %v268 = vunpack.c.l.b16 %v76
  %v269 = vunpack.c.l.b16 %v77
  %v270 = vunpack.c.l.b16 %v78
  %v271 = vunpack.c.l.b16 %v79
  %v272 = vunpack.c.l.b16 %v80
  %v273 = vunpack.c.l.b16 %v81
  %v274 = vpack.c.b16 %v239, %v238
  %v275 = vpack.c.b16 %v241, %v240
  %v276 = vpack.c.b16 %v243, %v242
  %v277 = vpack.c.b16 %v245, %v244
  %v278 = vpack.c.b16 %v247, %v246
  %v279 = vpack.c.b16 %v249, %v248
  %v280 = vpack.c.b16 %v251, %v250
  %v281 = vpack.c.b16 %v253, %v252
  %v282 = vpack.c.b16 %v255, %v254
  %v283 = vpack.c.b16 %v257, %v256
  %v284 = vpack.c.b16 %v259, %v258
  %v285 = vpack.c.b16 %v261, %v260
  %v286 = vpack.c.b16 %v263, %v262
  %v287 = vpack.c.b16 %v265, %v264
  %v288 = vpack.c.b16 %v267, %v266
  %v289 = vpack.c.b16 %v269, %v268
  %v290 = vpack.c.b16 %v271, %v270
  %v291 = vpack.c.b16 %v273, %v272
  %vm310 = vcmask 261120
  %v312 = vsel %vm310, %v164, 0
  %v315 = vsel %vm310, %v167, 0
  %v318 = vsel %vm310, %v170, 0
  %v321 = vsel %vm310, %v173, 0
  %v324 = vsel %vm310, %v176, 0
  %v327 = vsel %vm310, %v179, 0
  %v330 = vsel %vm310, %v182, 0
  %v333 = vsel %vm310, %v185, 0
  %335 = vmatprep.subr.bf16.mxu0 0
  %336 = vmatpush1.bf16.msra.mxu0 %v274
  %337 = vmatprep.subr.bf16.mxu0 0
  %338 = vmatpush1.bf16.msra.mxu0 %v275
  %339 = vmatprep.subr.bf16.mxu0 0
  %340 = vmatpush1.bf16.msra.mxu0 %v276
  %341 = vmatprep.subr.bf16.mxu0 0
  %342 = vmatpush1.bf16.msra.mxu0 %v277
  %343 = vmatprep.subr.bf16.mxu0 0
  %344 = vmatpush1.bf16.msra.mxu0 %v278
  %345 = vmatprep.subr.bf16.mxu0 0
  %346 = vmatpush1.bf16.msra.mxu0 %v279
  %347 = vmatprep.subr.bf16.mxu0 0
  %348 = vmatpush1.bf16.msra.mxu0 %v280
  %349 = vmatprep.subr.bf16.mxu0 0
  %350 = vmatpush1.bf16.msra.mxu0 %v281
  %351 = vmatprep.subr.bf16.mxu0 0
  %352 = vmatpush1.bf16.msra.mxu0 %v282
  %353 = vmatprep.subr.bf16.mxu0 0
  %354 = vmatpush1.bf16.msra.mxu0 %v283
  %355 = vmatprep.subr.bf16.mxu0 0
  %356 = vmatpush1.bf16.msra.mxu0 %v284
  %357 = vmatprep.subr.bf16.mxu0 0
  %358 = vmatpush1.bf16.msra.mxu0 %v285
  %359 = vmatprep.subr.bf16.mxu0 0
  %360 = vmatpush1.bf16.msra.mxu0 %v286
  %361 = vmatprep.subr.bf16.mxu0 0
  %362 = vmatpush1.bf16.msra.mxu0 %v287
  %363 = vmatprep.subr.bf16.mxu0 0
  %364 = vmatpush1.bf16.msra.mxu0 %v288
  %365 = vmatprep.subr.bf16.mxu0 0
  %366 = vmatpush1.bf16.msra.mxu0 %v289
  %367 = vmatprep.mubr.bf16.mxu0 %v163
  %368 = vmatmul.mubr.bf16.gmra.mrb[0].mxu0 %v162
  %v369 = vpop.f32.mrb[0].mxu0
  %v370 = vadd.f32 0.0, %v369
  %v371 = vpop.f32.mrb[0].mxu0
  %v372 = vpop.f32.mrb[0].mxu0
  %v373 = vadd.f32 0.0, %v372
  %v374 = vpop.f32.mrb[0].mxu0
  %375 = vmatprep.mubr.bf16.mxu0 %v166
  %376 = vmatmul.mubr.bf16.gmra.mrb[0].mxu0 %v165
  %v377 = vpop.f32.mrb[0].mxu0
  %v378 = vadd.f32 0.0, %v377
  %v379 = vpop.f32.mrb[0].mxu0
  %v380 = vpop.f32.mrb[0].mxu0
  %v381 = vadd.f32 0.0, %v380
  %v382 = vpop.f32.mrb[0].mxu0
  %383 = vmatprep.mubr.bf16.mxu0 %v169
  %384 = vmatmul.mubr.bf16.gmra.mrb[0].mxu0 %v168
  %v385 = vpop.f32.mrb[0].mxu0
  %v386 = vadd.f32 0.0, %v385
  %v387 = vpop.f32.mrb[0].mxu0
  %v388 = vpop.f32.mrb[0].mxu0
  %v389 = vadd.f32 0.0, %v388
  %v390 = vpop.f32.mrb[0].mxu0
  %391 = vmatprep.mubr.bf16.mxu0 %v172
  %392 = vmatmul.mubr.bf16.gmra.mrb[0].mxu0 %v171
  %v393 = vpop.f32.mrb[0].mxu0
  %v394 = vadd.f32 0.0, %v393
  %v395 = vpop.f32.mrb[0].mxu0
  %v396 = vpop.f32.mrb[0].mxu0
  %v397 = vadd.f32 0.0, %v396
  %v398 = vpop.f32.mrb[0].mxu0
  %399 = vmatprep.mubr.bf16.mxu0 %v175
  %400 = vmatmul.mubr.bf16.gmra.mrb[0].mxu0 %v174
  %v401 = vpop.f32.mrb[0].mxu0
  %v402 = vadd.f32 0.0, %v401
  %v403 = vpop.f32.mrb[0].mxu0
  %v404 = vpop.f32.mrb[0].mxu0
  %v405 = vadd.f32 0.0, %v404
  %v406 = vpop.f32.mrb[0].mxu0
  %407 = vmatprep.mubr.bf16.mxu0 %v178
  %408 = vmatmul.mubr.bf16.gmra.mrb[0].mxu0 %v177
  %v409 = vpop.f32.mrb[0].mxu0
  %v410 = vadd.f32 0.0, %v409
  %v411 = vpop.f32.mrb[0].mxu0
  %v412 = vpop.f32.mrb[0].mxu0
  %v413 = vadd.f32 0.0, %v412
  %v414 = vpop.f32.mrb[0].mxu0
  %415 = vmatprep.mubr.bf16.mxu0 %v181
  %416 = vmatmul.mubr.bf16.gmra.mrb[0].mxu0 %v180
  %v417 = vpop.f32.mrb[0].mxu0
  %v418 = vadd.f32 0.0, %v417
  %v419 = vpop.f32.mrb[0].mxu0
  %v420 = vpop.f32.mrb[0].mxu0
  %v421 = vadd.f32 0.0, %v420
  %v422 = vpop.f32.mrb[0].mxu0
  %423 = vmatprep.mubr.bf16.mxu0 %v184
  %424 = vmatmul.mubr.bf16.gmra.mrb[0].mxu0 %v183
  %v425 = vpop.f32.mrb[0].mxu0
  %v426 = vadd.f32 0.0, %v425
  %v427 = vpop.f32.mrb[0].mxu0
  %v428 = vpop.f32.mrb[0].mxu0
  %v429 = vadd.f32 0.0, %v428
  %v430 = vpop.f32.mrb[0].mxu0
  %431 = vdwg.mxu0
  %432 = vmatprep.subr.bf16.mxu0 0
  %433 = vmatpush1.bf16.msra.mxu0 %v290
  %434 = vmatprep.subr.bf16.mxu0 0
  %435 = vmatpush1.bf16.msra.mxu0 %v291
  %436 = vmatprep.subr.bf16.mxu0 0
  %437 = vmatpush1.bf16.msra.mxu0 0
  %438 = vmatprep.subr.bf16.mxu0 0
  %439 = vmatpush1.bf16.msra.mxu0 0
  %440 = vmatprep.subr.bf16.mxu0 0
  %441 = vmatpush1.bf16.msra.mxu0 0
  %442 = vmatprep.subr.bf16.mxu0 0
  %443 = vmatpush1.bf16.msra.mxu0 0
  %444 = vmatprep.subr.bf16.mxu0 0
  %445 = vmatpush1.bf16.msra.mxu0 0
  %446 = vmatprep.subr.bf16.mxu0 0
  %447 = vmatpush1.bf16.msra.mxu0 0
  %448 = vmatprep.subr.bf16.mxu0 0
  %449 = vmatpush1.bf16.msra.mxu0 0
  %450 = vmatprep.subr.bf16.mxu0 0
  %451 = vmatpush1.bf16.msra.mxu0 0
  %452 = vmatprep.subr.bf16.mxu0 0
  %453 = vmatpush1.bf16.msra.mxu0 0
  %454 = vmatprep.subr.bf16.mxu0 0
  %455 = vmatpush1.bf16.msra.mxu0 0
  %456 = vmatprep.subr.bf16.mxu0 0
  %457 = vmatpush1.bf16.msra.mxu0 0
  %458 = vmatprep.subr.bf16.mxu0 0
  %459 = vmatpush1.bf16.msra.mxu0 0
  %460 = vmatprep.subr.bf16.mxu0 0
  %461 = vmatpush1.bf16.msra.mxu0 0
  %462 = vmatprep.subr.bf16.mxu0 0
  %463 = vmatpush1.bf16.msra.mxu0 0
  %464 = vmatprep.mubr.bf16.mxu0 0
  %465 = vmatmul.mubr.bf16.gmra.mrb[0].mxu0 %v312
  %v466 = vpop.f32.mrb[0].mxu0
  %v467 = vadd.f32 %v370, %v466
  %v468 = vpop.f32.mrb[0].mxu0
  %v469 = vpop.f32.mrb[0].mxu0
  %v470 = vadd.f32 %v373, %v469
  %v471 = vpop.f32.mrb[0].mxu0
  %472 = vmatprep.mubr.bf16.mxu0 0
  %473 = vmatmul.mubr.bf16.gmra.mrb[0].mxu0 %v315
  %v474 = vpop.f32.mrb[0].mxu0
  %v475 = vadd.f32 %v378, %v474
  %v476 = vpop.f32.mrb[0].mxu0
  %v477 = vpop.f32.mrb[0].mxu0
  %v478 = vadd.f32 %v381, %v477
  %v479 = vpop.f32.mrb[0].mxu0
  %480 = vmatprep.mubr.bf16.mxu0 0
  %481 = vmatmul.mubr.bf16.gmra.mrb[0].mxu0 %v318
  %v482 = vpop.f32.mrb[0].mxu0
  %v483 = vadd.f32 %v386, %v482
  %v484 = vpop.f32.mrb[0].mxu0
  %v485 = vpop.f32.mrb[0].mxu0
  %v486 = vadd.f32 %v389, %v485
  %v487 = vpop.f32.mrb[0].mxu0
  %488 = vmatprep.mubr.bf16.mxu0 0
  %489 = vmatmul.mubr.bf16.gmra.mrb[0].mxu0 %v321
  %v490 = vpop.f32.mrb[0].mxu0
  %v491 = vadd.f32 %v394, %v490
  %v492 = vpop.f32.mrb[0].mxu0
  %v493 = vpop.f32.mrb[0].mxu0
  %v494 = vadd.f32 %v397, %v493
  %v495 = vpop.f32.mrb[0].mxu0
  %496 = vmatprep.mubr.bf16.mxu0 0
  %497 = vmatmul.mubr.bf16.gmra.mrb[0].mxu0 %v324
  %v498 = vpop.f32.mrb[0].mxu0
  %v499 = vadd.f32 %v402, %v498
  %v500 = vpop.f32.mrb[0].mxu0
  %v501 = vpop.f32.mrb[0].mxu0
  %v502 = vadd.f32 %v405, %v501
  %v503 = vpop.f32.mrb[0].mxu0
  %504 = vmatprep.mubr.bf16.mxu0 0
  %505 = vmatmul.mubr.bf16.gmra.mrb[0].mxu0 %v327
  %v506 = vpop.f32.mrb[0].mxu0
  %v507 = vadd.f32 %v410, %v506
  %v508 = vpop.f32.mrb[0].mxu0
  %v509 = vpop.f32.mrb[0].mxu0
  %v510 = vadd.f32 %v413, %v509
  %v511 = vpop.f32.mrb[0].mxu0
  %512 = vmatprep.mubr.bf16.mxu0 0
  %513 = vmatmul.mubr.bf16.gmra.mrb[0].mxu0 %v330
  %v514 = vpop.f32.mrb[0].mxu0
  %v515 = vadd.f32 %v418, %v514
  %v516 = vpop.f32.mrb[0].mxu0
  %v517 = vpop.f32.mrb[0].mxu0
  %v518 = vadd.f32 %v421, %v517
  %v519 = vpop.f32.mrb[0].mxu0
  %520 = vmatprep.mubr.bf16.mxu0 0
  %521 = vmatmul.mubr.bf16.gmra.mrb[0].mxu0 %v333
  %v522 = vpop.f32.mrb[0].mxu0
  %v523 = vadd.f32 %v426, %v522
  %v524 = vpop.f32.mrb[0].mxu0
  %v525 = vpop.f32.mrb[0].mxu0
  %v526 = vadd.f32 %v429, %v525
  %v527 = vpop.f32.mrb[0].mxu0
  %528 = vdwg.mxu0
  %529 = vst.msk [vmem:[%s2] sm:$0xff] %vm310, %v467
  %530 = vst.msk [vmem:[%s2 + $0x8] sm:$0xff] %vm310, %v470
  %531 = vst.msk [vmem:[%s2 + $0x10] sm:$0xff] %vm310, %v475
  %532 = vst.msk [vmem:[%s2 + $0x18] sm:$0xff] %vm310, %v478
  %533 = vst.msk [vmem:[%s2 + $0x20] sm:$0xff] %vm310, %v483
  %534 = vst.msk [vmem:[%s2 + $0x28] sm:$0xff] %vm310, %v486
  %535 = vst.msk [vmem:[%s2 + $0x30] sm:$0xff] %vm310, %v491
  %536 = vst.msk [vmem:[%s2 + $0x38] sm:$0xff] %vm310, %v494
  %537 = vst.msk [vmem:[%s2 + $0x40] sm:$0xff] %vm310, %v499
  %538 = vst.msk [vmem:[%s2 + $0x48] sm:$0xff] %vm310, %v502
  %539 = vst.msk [vmem:[%s2 + $0x50] sm:$0xff] %vm310, %v507
  %540 = vst.msk [vmem:[%s2 + $0x58] sm:$0xff] %vm310, %v510
  %541 = vst.msk [vmem:[%s2 + $0x60] sm:$0xff] %vm310, %v515
  %542 = vst.msk [vmem:[%s2 + $0x68] sm:$0xff] %vm310, %v518
  %543 = vst.msk [vmem:[%s2 + $0x70] sm:$0xff] %vm310, %v523
  %544 = vst.msk [vmem:[%s2 + $0x78] sm:$0xff] %vm310, %v526
  %v545 = vsel %vm310, %v467, 0.0
  %v546 = vsel %vm310, %v470, 0.0
  %v547 = vadd.f32 %v545, %v546
  %v548 = vsel %vm310, %v475, 0.0
  %v549 = vadd.f32 %v547, %v548
  %v550 = vsel %vm310, %v478, 0.0
  %v551 = vadd.f32 %v549, %v550
  %v552 = vsel %vm310, %v483, 0.0
  %v553 = vadd.f32 %v551, %v552
  %v554 = vsel %vm310, %v486, 0.0
  %v555 = vadd.f32 %v553, %v554
  %v556 = vsel %vm310, %v491, 0.0
  %v557 = vadd.f32 %v555, %v556
  %v558 = vsel %vm310, %v494, 0.0
  %v559 = vadd.f32 %v557, %v558
  %v560 = vsel %vm310, %v499, 0.0
  %v561 = vadd.f32 %v559, %v560
  %v562 = vsel %vm310, %v502, 0.0
  %v563 = vadd.f32 %v561, %v562
  %v564 = vsel %vm310, %v507, 0.0
  %v565 = vadd.f32 %v563, %v564
  %v566 = vsel %vm310, %v510, 0.0
  %v567 = vadd.f32 %v565, %v566
  %v568 = vsel %vm310, %v515, 0.0
  %v569 = vadd.f32 %v567, %v568
  %v570 = vsel %vm310, %v518, 0.0
  %v571 = vadd.f32 %v569, %v570
  %v572 = vsel %vm310, %v523, 0.0
  %v573 = vadd.f32 %v571, %v572
  %v574 = vsel %vm310, %v526, 0.0
  %v575 = vadd.f32 %v573, %v574
  %v576 = vrot.slane %v575, 4
  %v577 = vadd.f32 %v575, %v576
  %v578 = vrot.slane %v577, 2
  %v579 = vadd.f32 %v577, %v578
  %v580 = vrot.slane %v579, 1
  %v581 = vadd.f32 %v579, %v580
  %v582 = vmul.f32 %v467, %v467
  %v583 = vmul.f32 %v470, %v470
  %v584 = vmul.f32 %v475, %v475
  %v585 = vmul.f32 %v478, %v478
  %v586 = vmul.f32 %v483, %v483
  %v587 = vmul.f32 %v486, %v486
  %v588 = vmul.f32 %v491, %v491
  %v589 = vmul.f32 %v494, %v494
  %v590 = vmul.f32 %v499, %v499
  %v591 = vmul.f32 %v502, %v502
  %v592 = vmul.f32 %v507, %v507
  %v593 = vmul.f32 %v510, %v510
  %v594 = vmul.f32 %v515, %v515
  %v595 = vmul.f32 %v518, %v518
  %v596 = vmul.f32 %v523, %v523
  %v597 = vmul.f32 %v526, %v526
  %v598 = vsel %vm310, %v582, 0.0
  %v599 = vsel %vm310, %v583, 0.0
  %v600 = vadd.f32 %v598, %v599
  %v601 = vsel %vm310, %v584, 0.0
  %v602 = vadd.f32 %v600, %v601
  %v603 = vsel %vm310, %v585, 0.0
  %v604 = vadd.f32 %v602, %v603
  %v605 = vsel %vm310, %v586, 0.0
  %v606 = vadd.f32 %v604, %v605
  %v607 = vsel %vm310, %v587, 0.0
  %v608 = vadd.f32 %v606, %v607
  %v609 = vsel %vm310, %v588, 0.0
  %v610 = vadd.f32 %v608, %v609
  %v611 = vsel %vm310, %v589, 0.0
  %v612 = vadd.f32 %v610, %v611
  %v613 = vsel %vm310, %v590, 0.0
  %v614 = vadd.f32 %v612, %v613
  %v615 = vsel %vm310, %v591, 0.0
  %v616 = vadd.f32 %v614, %v615
  %v617 = vsel %vm310, %v592, 0.0
  %v618 = vadd.f32 %v616, %v617
  %v619 = vsel %vm310, %v593, 0.0
  %v620 = vadd.f32 %v618, %v619
  %v621 = vsel %vm310, %v594, 0.0
  %v622 = vadd.f32 %v620, %v621
  %v623 = vsel %vm310, %v595, 0.0
  %v624 = vadd.f32 %v622, %v623
  %v625 = vsel %vm310, %v596, 0.0
  %v626 = vadd.f32 %v624, %v625
  %v627 = vsel %vm310, %v597, 0.0
  %v628 = vadd.f32 %v626, %v627
  %v629 = vrot.slane %v628, 4
  %v630 = vadd.f32 %v628, %v629
  %v631 = vrot.slane %v630, 2
  %v632 = vadd.f32 %v630, %v631
  %v633 = vrot.slane %v632, 1
  %v634 = vadd.f32 %v632, %v633
  %v635 = vlaneseq
  %v636 = vshrl.u32 %v635, 7
  %vm637 = vcmp.eq.s32.totalorder %v636, 0
  %v638 = vsel %vm637, %v581, 0.0
  %vm639 = vcmp.eq.s32.totalorder %v636, 1
  %v640 = vsel %vm639, %v634, 0.0
  %v641 = vadd.f32 %v638, %v640
  %642 = vst.msk [vmem:[%s3] sm:$0xff] %vm310, %v641
  // Predicated region
  $region10: #{resnet_forward.55} parent=0 // pred_check
    _
  $region11: #{resnet_forward.55} parent=0 // pred_check_branch
    %644 = sbr.rel (0) target = $region13
  $region12: #{resnet_forward.55} parent=0 // pred_region
    _
  $region13: #{resnet_forward.55} parent=0 // pred_fallthru
    _
  // Predicated region
  $region14: #{resnet_forward.55} parent=0 // pred_check
    _
  $region15: #{resnet_forward.55} parent=0 // pred_check_branch
    %646 = sbr.rel (0) target = $region17
  $region16: #{resnet_forward.55} parent=0 // pred_region
    _
  $region17: #{resnet_forward.55} parent=0 // pred_fallthru
    _
  // Predicated region
  $region18: #{resnet_forward.55} parent=0 // pred_check
    _
  $region19: #{resnet_forward.55} parent=0 // pred_check_branch
    %648 = sbr.rel (0) target = $region21
  $region20: #{resnet_forward.55} parent=0 // pred_region
    _
  $region21: #{resnet_forward.55} parent=0 // pred_fallthru
    _
  // Predicated region
  $region22: #{resnet_forward.55} parent=0 // pred_check
    _
  $region23: #{resnet_forward.55} parent=0 // pred_check_branch
    %650 = sbr.rel (0) target = $region25
  $region24: #{resnet_forward.55} parent=0 // pred_region
    _
  $region25: #{resnet_forward.55} parent=0 // pred_fallthru
    _

// kernel: resnet_forward.66
$region0: #{resnet_forward.66}
  #allocation0 [shape = 'u32[]', space=smem, size = 0x4, offset = 0x4, fixed_abs, tag = 'smem constant byte address 0x4 - core index']
  #allocation1 [shape = 'u32[144,128]{1,0:T(1,128)}', space=vmem, size = 0x12000, scoped, tag = 'internal scratch']
  %s0 = inlined_call_operand.vmem [shape: f32[32,64], index: 0, kind: input, shape index: {}]
  %s1 = inlined_call_operand.vmem [shape: f32[1,64], index: 1, kind: input, shape index: {}]
  %s2 = inlined_call_operand.vmem [shape: f32[1,64], index: 2, kind: input, shape index: {}]
  %s3 = inlined_call_operand.vmem [shape: bf16[32,64], index: 3, kind: output, shape index: {}]
  %s4 = sld [smem:[#allocation0]]
  $region22: #{resnet_forward.66} parent=0
    _
  %s6 = ssub.s32 1, %s4
  %s7 = scalar_select 0, %s6, %s4
  // Predicated region
  $region2: #{resnet_forward.66} parent=0 // pred_check
    _
  $region3: #{resnet_forward.66} parent=0 // pred_check_branch
    %9 = sbr.rel (0) target = $region5
  $region4: #{resnet_forward.66} parent=0 // pred_region
    _
  $region5: #{resnet_forward.66} parent=0 // pred_fallthru
    _
  // Predicated region
  $region6: #{resnet_forward.66} parent=0 // pred_check
    _
  $region7: #{resnet_forward.66} parent=0 // pred_check_branch
    %11 = sbr.rel (0) target = $region9
  $region8: #{resnet_forward.66} parent=0 // pred_region
    _
  $region9: #{resnet_forward.66} parent=0 // pred_fallthru
    _
  // Predicated region
  $region10: #{resnet_forward.66} parent=0 // pred_check
    _
  $region11: #{resnet_forward.66} parent=0 // pred_check_branch
    %13 = sbr.rel (0) target = $region13
  $region12: #{resnet_forward.66} parent=0 // pred_region
    _
  $region13: #{resnet_forward.66} parent=0 // pred_fallthru
    _
  %v14 = vld [vmem:[%s0] sm:$0xff]
  %v15 = vld [vmem:[%s0 + $0x8] sm:$0xff]
  %v16 = vld [vmem:[%s0 + $0x10] sm:$0xff]
  %v17 = vld [vmem:[%s0 + $0x18] sm:$0xff]
  %v18 = vld [vmem:[%s1] sm:$0x1]
  %v20 = vlaneseq
  %v21 = vshrl.u32 %v20, 7
  %v22 = vsub.s32 0, %v21
  %v23 = vrot.slane %v18, %v22
  %v25 = vmul.f32 %v14, %v23
  %v26 = vmul.f32 %v15, %v23
  %v27 = vmul.f32 %v16, %v23
  %v28 = vmul.f32 %v17, %v23
  %v29 = vld [vmem:[%s2] sm:$0x1]
  %v31 = vlaneseq
  %v32 = vshrl.u32 %v31, 7
  %v33 = vsub.s32 0, %v32
  %v34 = vrot.slane %v29, %v33
  %v36 = vadd.f32 %v25, %v34
  %v37 = vadd.f32 %v26, %v34
  %v38 = vadd.f32 %v27, %v34
  %v39 = vadd.f32 %v28, %v34
  %v40 = vmax.f32 %v36, 0.0
  %v41 = vmax.f32 %v37, 0.0
  %v42 = vmax.f32 %v38, 0.0
  %v43 = vmax.f32 %v39, 0.0
  %v44 = vpack.c.bf16 %v41, %v40
  %v45 = vpack.c.bf16 %v43, %v42
  %v48 = vunpack.c.l.b16 %v44
  %v49 = vunpack.c.h.b16 %v44
  %v50 = vunpack.c.l.b16 %v45
  %v51 = vunpack.c.h.b16 %v45
  %v52 = vpack.c.b16 %v48, %v48
  %v53 = vpack.c.b16 %v49, %v49
  %v54 = vpack.c.b16 %v50, %v50
  %v55 = vpack.c.b16 %v51, %v51
  %vm60 = vcmask 519168
  %61 = vst.msk [vmem:[%s3] sm:$0xf] %vm60, %v52
  %62 = vst.msk [vmem:[%s3 + $0x4] sm:$0xf] %vm60, %v53
  %63 = vst.msk [vmem:[%s3 + $0x8] sm:$0xf] %vm60, %v54
  %64 = vst.msk [vmem:[%s3 + $0xc] sm:$0xf] %vm60, %v55
  // Predicated region
  $region14: #{resnet_forward.66} parent=0 // pred_check
    _
  $region15: #{resnet_forward.66} parent=0 // pred_check_branch
    %66 = sbr.rel (0) target = $region17
  $region16: #{resnet_forward.66} parent=0 // pred_region
    _
  $region17: #{resnet_forward.66} parent=0 // pred_fallthru
    _
  // Predicated region
  $region18: #{resnet_forward.66} parent=0 // pred_check
    _
  $region19: #{resnet_forward.66} parent=0 // pred_check_branch
    %68 = sbr.rel (0) target = $region21
  $region20: #{resnet_forward.66} parent=0 // pred_region
    _
  $region21: #{resnet_forward.66} parent=0 // pred_fallthru
    _

// kernel: resnet_forward.65
$region0: #{resnet_forward.65}
  #allocation0 [shape = 'u32[]', space=smem, size = 0x4, offset = 0x4, fixed_abs, tag = 'smem constant byte address 0x4 - core index']
  #allocation1 [shape = 'u32[144,128]{1,0:T(1,128)}', space=vmem, size = 0x12000, scoped, tag = 'internal scratch']
  %s0 = inlined_call_operand.vmem [shape: bf16[32,288], index: 0, kind: input, shape index: {}]
  %s1 = inlined_call_operand.vmem [shape: bf16[288,64], index: 1, kind: input, shape index: {}]
  %s2 = inlined_call_operand.vmem [shape: f32[32,64], index: 2, kind: output, shape index: {0}]
  %s3 = inlined_call_operand.vmem [shape: f32[8,64], index: 3, kind: output, shape index: {1}]
  %4 = xla_tuple %s2, %s3
  %s5 = sld [smem:[#allocation0]]
  $region26: #{resnet_forward.65} parent=0
    _
  %s7 = ssub.s32 1, %s5
  %s8 = scalar_select 0, %s7, %s5
  // Predicated region
  $region2: #{resnet_forward.65} parent=0 // pred_check
    _
  $region3: #{resnet_forward.65} parent=0 // pred_check_branch
    %10 = sbr.rel (0) target = $region5
  $region4: #{resnet_forward.65} parent=0 // pred_region
    _
  $region5: #{resnet_forward.65} parent=0 // pred_fallthru
    _
  // Predicated region
  $region6: #{resnet_forward.65} parent=0 // pred_check
    _
  $region7: #{resnet_forward.65} parent=0 // pred_check_branch
    %12 = sbr.rel (0) target = $region9
  $region8: #{resnet_forward.65} parent=0 // pred_region
    _
  $region9: #{resnet_forward.65} parent=0 // pred_fallthru
    _
  %v14 = vld [vmem:[%s0] sm:$0xff]
  %v15 = vld [vmem:[%s0 + $0x8] sm:$0xf]
  %v16 = vld [vmem:[%s0 + $0xc] sm:$0xff]
  %v17 = vld [vmem:[%s0 + $0x14] sm:$0xf]
  %v18 = vld [vmem:[%s0 + $0x18] sm:$0xff]
  %v19 = vld [vmem:[%s0 + $0x20] sm:$0xf]
  %v20 = vld [vmem:[%s0 + $0x24] sm:$0xff]
  %v21 = vld [vmem:[%s0 + $0x2c] sm:$0xf]
  %v22 = vld [vmem:[%s1] sm:$0xf]
  %v23 = vld [vmem:[%s1 + $0x4] sm:$0xf]
  %v24 = vld [vmem:[%s1 + $0x8] sm:$0xf]
  %v25 = vld [vmem:[%s1 + $0xc] sm:$0xf]
  %v26 = vld [vmem:[%s1 + $0x10] sm:$0xf]
  %v27 = vld [vmem:[%s1 + $0x14] sm:$0xf]
  %v28 = vld [vmem:[%s1 + $0x18] sm:$0xf]
  %v29 = vld [vmem:[%s1 + $0x1c] sm:$0xf]
  %v30 = vld [vmem:[%s1 + $0x20] sm:$0xf]
  %v31 = vld [vmem:[%s1 + $0x24] sm:$0xf]
  %v32 = vld [vmem:[%s1 + $0x28] sm:$0xf]
  %v33 = vld [vmem:[%s1 + $0x2c] sm:$0xf]
  %v34 = vld [vmem:[%s1 + $0x30] sm:$0xf]
  %v35 = vld [vmem:[%s1 + $0x34] sm:$0xf]
  %v36 = vld [vmem:[%s1 + $0x38] sm:$0xf]
  %v37 = vld [vmem:[%s1 + $0x3c] sm:$0xf]
  %v38 = vld [vmem:[%s1 + $0x40] sm:$0xf]
  %v39 = vld [vmem:[%s1 + $0x44] sm:$0xf]
  %v40 = vld [vmem:[%s1 + $0x48] sm:$0xf]
  %v41 = vld [vmem:[%s1 + $0x4c] sm:$0xf]
  %v42 = vld [vmem:[%s1 + $0x50] sm:$0xf]
  %v43 = vld [vmem:[%s1 + $0x54] sm:$0xf]
  %v44 = vld [vmem:[%s1 + $0x58] sm:$0xf]
  %v45 = vld [vmem:[%s1 + $0x5c] sm:$0xf]
  %v46 = vld [vmem:[%s1 + $0x60] sm:$0xf]
  %v47 = vld [vmem:[%s1 + $0x64] sm:$0xf]
  %v48 = vld [vmem:[%s1 + $0x68] sm:$0xf]
  %v49 = vld [vmem:[%s1 + $0x6c] sm:$0xf]
  %v50 = vld [vmem:[%s1 + $0x70] sm:$0xf]
  %v51 = vld [vmem:[%s1 + $0x74] sm:$0xf]
  %v52 = vld [vmem:[%s1 + $0x78] sm:$0xf]
  %v53 = vld [vmem:[%s1 + $0x7c] sm:$0xf]
  %v54 = vld [vmem:[%s1 + $0x80] sm:$0xf]
  %v55 = vld [vmem:[%s1 + $0x84] sm:$0xf]
  %v56 = vld [vmem:[%s1 + $0x88] sm:$0xf]
  %v57 = vld [vmem:[%s1 + $0x8c] sm:$0xf]
  %v66 = vunpack.c.l.b16 %v14
  %v67 = vunpack.c.h.b16 %v14
  %v68 = vunpack.c.l.b16 %v15
  %v69 = vunpack.c.l.b16 %v16
  %v70 = vunpack.c.h.b16 %v16
  %v71 = vunpack.c.l.b16 %v17
  %v72 = vunpack.c.l.b16 %v18
  %v73 = vunpack.c.h.b16 %v18
  %v74 = vunpack.c.l.b16 %v19
  %v75 = vunpack.c.l.b16 %v20
  %v76 = vunpack.c.h.b16 %v20
  %v77 = vunpack.c.l.b16 %v21
  %v78 = vpack.c.b16 %v69, %v66
  %v79 = vpack.c.b16 %v70, %v67
  %v80 = vpack.c.b16 %v71, %v68
  %v81 = vpack.c.b16 %v75, %v72
  %v82 = vpack.c.b16 %v76, %v73
  %v83 = vpack.c.b16 %v77, %v74
  %v124 = vunpack.c.l.b16 %v22
  %v125 = vunpack.c.l.b16 %v23
  %v126 = vunpack.c.l.b16 %v24
  %v127 = vunpack.c.l.b16 %v25
  %v128 = vunpack.c.l.b16 %v26
  %v129 = vunpack.c.l.b16 %v27
  %v130 = vunpack.c.l.b16 %v28
  %v131 = vunpack.c.l.b16 %v29
  %v132 = vunpack.c.l.b16 %v30
  %v133 = vunpack.c.l.b16 %v31
  %v134 = vunpack.c.l.b16 %v32
  %v135 = vunpack.c.l.b16 %v33
  %v136 = vunpack.c.l.b16 %v34
  %v137 = vunpack.c.l.b16 %v35
  %v138 = vunpack.c.l.b16 %v36
  %v139 = vunpack.c.l.b16 %v37
  %v140 = vunpack.c.l.b16 %v38
  %v141 = vunpack.c.l.b16 %v39
  %v142 = vunpack.c.l.b16 %v40
  %v143 = vunpack.c.l.b16 %v41
  %v144 = vunpack.c.l.b16 %v42
  %v145 = vunpack.c.l.b16 %v43
  %v146 = vunpack.c.l.b16 %v44
  %v147 = vunpack.c.l.b16 %v45
  %v148 = vunpack.c.l.b16 %v46
  %v149 = vunpack.c.l.b16 %v47
  %v150 = vunpack.c.l.b16 %v48
  %v151 = vunpack.c.l.b16 %v49
  %v152 = vunpack.c.l.b16 %v50
  %v153 = vunpack.c.l.b16 %v51
  %v154 = vunpack.c.l.b16 %v52
  %v155 = vunpack.c.l.b16 %v53
  %v156 = vunpack.c.l.b16 %v54
  %v157 = vunpack.c.l.b16 %v55
  %v158 = vunpack.c.l.b16 %v56
  %v159 = vunpack.c.l.b16 %v57
  %v160 = vpack.c.b16 %v125, %v124
  %v161 = vpack.c.b16 %v127, %v126
  %v162 = vpack.c.b16 %v129, %v128
  %v163 = vpack.c.b16 %v131, %v130
  %v164 = vpack.c.b16 %v133, %v132
  %v165 = vpack.c.b16 %v135, %v134
  %v166 = vpack.c.b16 %v137, %v136
  %v167 = vpack.c.b16 %v139, %v138
  %v168 = vpack.c.b16 %v141, %v140
  %v169 = vpack.c.b16 %v143, %v142
  %v170 = vpack.c.b16 %v145, %v144
  %v171 = vpack.c.b16 %v147, %v146
  %v172 = vpack.c.b16 %v149, %v148
  %v173 = vpack.c.b16 %v151, %v150
  %v174 = vpack.c.b16 %v153, %v152
  %v175 = vpack.c.b16 %v155, %v154
  %v176 = vpack.c.b16 %v157, %v156
  %v177 = vpack.c.b16 %v159, %v158
  %vm196 = vcmask 261120
  %v198 = vsel %vm196, %v80, 0
  %v201 = vsel %vm196, %v83, 0
  %203 = vmatprep.subr.bf16.mxu0 0
  %204 = vmatpush1.bf16.msra.mxu0 %v160
  %205 = vmatprep.subr.bf16.mxu0 0
  %206 = vmatpush1.bf16.msra.mxu0 %v161
  %207 = vmatprep.subr.bf16.mxu0 0
  %208 = vmatpush1.bf16.msra.mxu0 %v162
  %209 = vmatprep.subr.bf16.mxu0 0
  %210 = vmatpush1.bf16.msra.mxu0 %v163
  %211 = vmatprep.subr.bf16.mxu0 0
  %212 = vmatpush1.bf16.msra.mxu0 %v164
  %213 = vmatprep.subr.bf16.mxu0 0
  %214 = vmatpush1.bf16.msra.mxu0 %v165
  %215 = vmatprep.subr.bf16.mxu0 0
  %216 = vmatpush1.bf16.msra.mxu0 %v166
  %217 = vmatprep.subr.bf16.mxu0 0
  %218 = vmatpush1.bf16.msra.mxu0 %v167
  %219 = vmatprep.subr.bf16.mxu0 0
  %220 = vmatpush1.bf16.msra.mxu0 %v168
  %221 = vmatprep.subr.bf16.mxu0 0
  %222 = vmatpush1.bf16.msra.mxu0 %v169
  %223 = vmatprep.subr.bf16.mxu0 0
  %224 = vmatpush1.bf16.msra.mxu0 %v170
  %225 = vmatprep.subr.bf16.mxu0 0
  %226 = vmatpush1.bf16.msra.mxu0 %v171
  %227 = vmatprep.subr.bf16.mxu0 0
  %228 = vmatpush1.bf16.msra.mxu0 %v172
  %229 = vmatprep.subr.bf16.mxu0 0
  %230 = vmatpush1.bf16.msra.mxu0 %v173
  %231 = vmatprep.subr.bf16.mxu0 0
  %232 = vmatpush1.bf16.msra.mxu0 %v174
  %233 = vmatprep.subr.bf16.mxu0 0
  %234 = vmatpush1.bf16.msra.mxu0 %v175
  %235 = vmatprep.mubr.bf16.mxu0 %v79
  %236 = vmatmul.mubr.bf16.gmra.mrb[0].mxu0 %v78
  %v237 = vpop.f32.mrb[0].mxu0
  %v238 = vadd.f32 0.0, %v237
  %v239 = vpop.f32.mrb[0].mxu0
  %v240 = vpop.f32.mrb[0].mxu0
  %v241 = vadd.f32 0.0, %v240
  %v242 = vpop.f32.mrb[0].mxu0
  %243 = vmatprep.mubr.bf16.mxu0 %v82
  %244 = vmatmul.mubr.bf16.gmra.mrb[0].mxu0 %v81
  %v245 = vpop.f32.mrb[0].mxu0
  %v246 = vadd.f32 0.0, %v245
  %v247 = vpop.f32.mrb[0].mxu0
  %v248 = vpop.f32.mrb[0].mxu0
  %v249 = vadd.f32 0.0, %v248
  %v250 = vpop.f32.mrb[0].mxu0
  %251 = vdwg.mxu0
  %252 = vmatprep.subr.bf16.mxu0 0
  %253 = vmatpush1.bf16.msra.mxu0 %v176
  %254 = vmatprep.subr.bf16.mxu0 0
  %255 = vmatpush1.bf16.msra.mxu0 %v177
  %256 = vmatprep.subr.bf16.mxu0 0
  %257 = vmatpush1.bf16.msra.mxu0 0
  %258 = vmatprep.subr.bf16.mxu0 0
  %259 = vmatpush1.bf16.msra.mxu0 0
  %260 = vmatprep.subr.bf16.mxu0 0
  %261 = vmatpush1.bf16.msra.mxu0 0
  %262 = vmatprep.subr.bf16.mxu0 0
  %263 = vmatpush1.bf16.msra.mxu0 0
  %264 = vmatprep.subr.bf16.mxu0 0
  %265 = vmatpush1.bf16.msra.mxu0 0
  %266 = vmatprep.subr.bf16.mxu0 0
  %267 = vmatpush1.bf16.msra.mxu0 0
  %268 = vmatprep.subr.bf16.mxu0 0
  %269 = vmatpush1.bf16.msra.mxu0 0
  %270 = vmatprep.subr.bf16.mxu0 0
  %271 = vmatpush1.bf16.msra.mxu0 0
  %272 = vmatprep.subr.bf16.mxu0 0
  %273 = vmatpush1.bf16.msra.mxu0 0
  %274 = vmatprep.subr.bf16.mxu0 0
  %275 = vmatpush1.bf16.msra.mxu0 0
  %276 = vmatprep.subr.bf16.mxu0 0
  %277 = vmatpush1.bf16.msra.mxu0 0
  %278 = vmatprep.subr.bf16.mxu0 0
  %279 = vmatpush1.bf16.msra.mxu0 0
  %280 = vmatprep.subr.bf16.mxu0 0
  %281 = vmatpush1.bf16.msra.mxu0 0
  %282 = vmatprep.subr.bf16.mxu0 0
  %283 = vmatpush1.bf16.msra.mxu0 0
  %284 = vmatprep.mubr.bf16.mxu0 0
  %285 = vmatmul.mubr.bf16.gmra.mrb[0].mxu0 %v198
  %v286 = vpop.f32.mrb[0].mxu0
  %v287 = vadd.f32 %v238, %v286
  %v288 = vpop.f32.mrb[0].mxu0
  %v289 = vpop.f32.mrb[0].mxu0
  %v290 = vadd.f32 %v241, %v289
  %v291 = vpop.f32.mrb[0].mxu0
  %292 = vmatprep.mubr.bf16.mxu0 0
  %293 = vmatmul.mubr.bf16.gmra.mrb[0].mxu0 %v201
  %v294 = vpop.f32.mrb[0].mxu0
  %v295 = vadd.f32 %v246, %v294
  %v296 = vpop.f32.mrb[0].mxu0
  %v297 = vpop.f32.mrb[0].mxu0
  %v298 = vadd.f32 %v249, %v297
  %v299 = vpop.f32.mrb[0].mxu0
  %300 = vdwg.mxu0
  %vm301 = vcmask 523264
  %302 = vst.msk [vmem:[%s2] sm:$0xff] %vm301, %v287
  %303 = vst.msk [vmem:[%s2 + $0x8] sm:$0xff] %vm301, %v290
  %304 = vst.msk [vmem:[%s2 + $0x10] sm:$0xff] %vm301, %v295
  %305 = vst.msk [vmem:[%s2 + $0x18] sm:$0xff] %vm301, %v298
  %v306 = vsel %vm301, %v287, 0.0
  %v307 = vsel %vm301, %v290, 0.0
  %v308 = vadd.f32 %v306, %v307
  %v309 = vsel %vm301, %v295, 0.0
  %v310 = vadd.f32 %v308, %v309
  %v311 = vsel %vm301, %v298, 0.0
  %v312 = vadd.f32 %v310, %v311
  %v313 = vrot.slane %v312, 4
  %v314 = vadd.f32 %v312, %v313
  %v315 = vrot.slane %v314, 2
  %v316 = vadd.f32 %v314, %v315
  %v317 = vrot.slane %v316, 1
  %v318 = vadd.f32 %v316, %v317
  %v319 = vmul.f32 %v287, %v287
  %v320 = vmul.f32 %v290, %v290
  %v321 = vmul.f32 %v295, %v295
  %v322 = vmul.f32 %v298, %v298
  %v323 = vsel %vm301, %v319, 0.0
  %v324 = vsel %vm301, %v320, 0.0
  %v325 = vadd.f32 %v323, %v324
  %v326 = vsel %vm301, %v321, 0.0
  %v327 = vadd.f32 %v325, %v326
  %v328 = vsel %vm301, %v322, 0.0
  %v329 = vadd.f32 %v327, %v328
  %v330 = vrot.slane %v329, 4
  %v331 = vadd.f32 %v329, %v330
  %v332 = vrot.slane %v331, 2
  %v333 = vadd.f32 %v331, %v332
  %v334 = vrot.slane %v333, 1
  %v335 = vadd.f32 %v333, %v334
  %v336 = vlaneseq
  %v337 = vshrl.u32 %v336, 7
  %vm338 = vcmp.eq.s32.totalorder %v337, 0
  %v339 = vsel %vm338, %v318, 0.0
  %vm340 = vcmp.eq.s32.totalorder %v337, 1
  %v341 = vsel %vm340, %v335, 0.0
  %v342 = vadd.f32 %v339, %v341
  %343 = vst.msk [vmem:[%s3] sm:$0xff] %vm301, %v342
  // Predicated region
  $region10: #{resnet_forward.65} parent=0 // pred_check
    _
  $region11: #{resnet_forward.65} parent=0 // pred_check_branch
    %345 = sbr.rel (0) target = $region13
  $region12: #{resnet_forward.65} parent=0 // pred_region
    _
  $region13: #{resnet_forward.65} parent=0 // pred_fallthru
    _
  // Predicated region
  $region14: #{resnet_forward.65} parent=0 // pred_check
    _
  $region15: #{resnet_forward.65} parent=0 // pred_check_branch
    %347 = sbr.rel (0) target = $region17
  $region16: #{resnet_forward.65} parent=0 // pred_region
    _
  $region17: #{resnet_forward.65} parent=0 // pred_fallthru
    _
  // Predicated region
  $region18: #{resnet_forward.65} parent=0 // pred_check
    _
  $region19: #{resnet_forward.65} parent=0 // pred_check_branch
    %349 = sbr.rel (0) target = $region21
  $region20: #{resnet_forward.65} parent=0 // pred_region
    _
  $region21: #{resnet_forward.65} parent=0 // pred_fallthru
    _
  // Predicated region
  $region22: #{resnet_forward.65} parent=0 // pred_check
    _
  $region23: #{resnet_forward.65} parent=0 // pred_check_branch
    %351 = sbr.rel (0) target = $region25
  $region24: #{resnet_forward.65} parent=0 // pred_region
    _
  $region25: #{resnet_forward.65} parent=0 // pred_fallthru
    _

// kernel: resnet_forward.68
$region0: #{resnet_forward.68}
  #allocation0 [shape = 'u32[]', space=smem, size = 0x4, offset = 0x4, fixed_abs, tag = 'smem constant byte address 0x4 - core index']
  #allocation1 [shape = 'u32[144,128]{1,0:T(1,128)}', space=vmem, size = 0x12000, scoped, tag = 'internal scratch']
  %s0 = inlined_call_operand.vmem [shape: f32[32,64], index: 0, kind: input, shape index: {}]
  %s1 = inlined_call_operand.vmem [shape: bf16[32,64], index: 1, kind: input, shape index: {}]
  %s2 = inlined_call_operand.vmem [shape: f32[1,64], index: 2, kind: input, shape index: {}]
  %s3 = inlined_call_operand.vmem [shape: f32[1,64], index: 3, kind: input, shape index: {}]
  %s4 = inlined_call_operand.vmem [shape: bf16[32,64], index: 4, kind: output, shape index: {}]
  %s5 = sld [smem:[#allocation0]]
  $region26: #{resnet_forward.68} parent=0
    _
  %s7 = ssub.s32 1, %s5
  %s8 = scalar_select 0, %s7, %s5
  // Predicated region
  $region2: #{resnet_forward.68} parent=0 // pred_check
    _
  $region3: #{resnet_forward.68} parent=0 // pred_check_branch
    %10 = sbr.rel (0) target = $region5
  $region4: #{resnet_forward.68} parent=0 // pred_region
    _
  $region5: #{resnet_forward.68} parent=0 // pred_fallthru
    _
  // Predicated region
  $region6: #{resnet_forward.68} parent=0 // pred_check
    _
  $region7: #{resnet_forward.68} parent=0 // pred_check_branch
    %12 = sbr.rel (0) target = $region9
  $region8: #{resnet_forward.68} parent=0 // pred_region
    _
  $region9: #{resnet_forward.68} parent=0 // pred_fallthru
    _
  // Predicated region
  $region10: #{resnet_forward.68} parent=0 // pred_check
    _
  $region11: #{resnet_forward.68} parent=0 // pred_check_branch
    %14 = sbr.rel (0) target = $region13
  $region12: #{resnet_forward.68} parent=0 // pred_region
    _
  $region13: #{resnet_forward.68} parent=0 // pred_fallthru
    _
  // Predicated region
  $region14: #{resnet_forward.68} parent=0 // pred_check
    _
  $region15: #{resnet_forward.68} parent=0 // pred_check_branch
    %16 = sbr.rel (0) target = $region17
  $region16: #{resnet_forward.68} parent=0 // pred_region
    _
  $region17: #{resnet_forward.68} parent=0 // pred_fallthru
    _
  %v17 = vld [vmem:[%s0] sm:$0xff]
  %v18 = vld [vmem:[%s0 + $0x8] sm:$0xff]
  %v19 = vld [vmem:[%s0 + $0x10] sm:$0xff]
  %v20 = vld [vmem:[%s0 + $0x18] sm:$0xff]
  %v21 = vld [vmem:[%s2] sm:$0x1]
  %v23 = vlaneseq
  %v24 = vshrl.u32 %v23, 7
  %v25 = vsub.s32 0, %v24
  %v26 = vrot.slane %v21, %v25
  %v28 = vmul.f32 %v17, %v26
  %v29 = vmul.f32 %v18, %v26
  %v30 = vmul.f32 %v19, %v26
  %v31 = vmul.f32 %v20, %v26
  %v32 = vld [vmem:[%s3] sm:$0x1]
  %v34 = vlaneseq
  %v35 = vshrl.u32 %v34, 7
  %v36 = vsub.s32 0, %v35
  %v37 = vrot.slane %v32, %v36
  %v39 = vadd.f32 %v28, %v37
  %v40 = vadd.f32 %v29, %v37
  %v41 = vadd.f32 %v30, %v37
  %v42 = vadd.f32 %v31, %v37
  %v43 = vld [vmem:[%s1] sm:$0xf]
  %v44 = vld [vmem:[%s1 + $0x4] sm:$0xf]
  %v45 = vld [vmem:[%s1 + $0x8] sm:$0xf]
  %v46 = vld [vmem:[%s1 + $0xc] sm:$0xf]
  %v47 = vunpack.c.l.bf16 %v43
  %v48 = vunpack.c.l.bf16 %v44
  %v49 = vunpack.c.l.bf16 %v45
  %v50 = vunpack.c.l.bf16 %v46
  %v51 = vadd.f32 %v39, %v47
  %v52 = vadd.f32 %v40, %v48
  %v53 = vadd.f32 %v41, %v49
  %v54 = vadd.f32 %v42, %v50
  %v55 = vmax.f32 %v51, 0.0
  %v56 = vmax.f32 %v52, 0.0
  %v57 = vmax.f32 %v53, 0.0
  %v58 = vmax.f32 %v54, 0.0
  %v59 = vpack.c.bf16 %v56, %v55
  %v60 = vpack.c.bf16 %v58, %v57
  %v63 = vunpack.c.l.b16 %v59
  %v64 = vunpack.c.h.b16 %v59
  %v65 = vunpack.c.l.b16 %v60
  %v66 = vunpack.c.h.b16 %v60
  %v67 = vpack.c.b16 %v63, %v63
  %v68 = vpack.c.b16 %v64, %v64
  %v69 = vpack.c.b16 %v65, %v65
  %v70 = vpack.c.b16 %v66, %v66
  %vm75 = vcmask 519168
  %76 = vst.msk [vmem:[%s4] sm:$0xf] %vm75, %v67
  %77 = vst.msk [vmem:[%s4 + $0x4] sm:$0xf] %vm75, %v68
  %78 = vst.msk [vmem:[%s4 + $0x8] sm:$0xf] %vm75, %v69
  %79 = vst.msk [vmem:[%s4 + $0xc] sm:$0xf] %vm75, %v70
  // Predicated region
  $region18: #{resnet_forward.68} parent=0 // pred_check
    _
  $region19: #{resnet_forward.68} parent=0 // pred_check_branch
    %81 = sbr.rel (0) target = $region21
  $region20: #{resnet_forward.68} parent=0 // pred_region
    _
  $region21: #{resnet_forward.68} parent=0 // pred_fallthru
    _
  // Predicated region
  $region22: #{resnet_forward.68} parent=0 // pred_check
    _
  $region23: #{resnet_forward.68} parent=0 // pred_check_branch
    %83 = sbr.rel (0) target = $region25
  $region24: #{resnet_forward.68} parent=0 // pred_region
    _
  $region25: #{resnet_forward.68} parent=0 // pred_fallthru
    _

// kernel: resnet_forward.77
$region0: #{resnet_forward.77}
  #allocation0 [shape = 'u32[]', space=smem, size = 0x4, offset = 0x4, fixed_abs, tag = 'smem constant byte address 0x4 - core index']
  #allocation1 [shape = 'u32[144,128]{1,0:T(1,128)}', space=vmem, size = 0x12000, scoped, tag = 'internal scratch']
  %s0 = inlined_call_operand.vmem [shape: bf16[2,16,64], index: 0, kind: input, shape index: {}]
  %s1 = inlined_call_operand.vmem [shape: f32[64,10], index: 1, kind: input, shape index: {}]
  %s2 = inlined_call_operand.vmem [shape: f32[1,10], index: 2, kind: input, shape index: {}]
  %s3 = inlined_call_operand.hbm [shape: f32[2,10], index: 3, kind: output, shape index: {}]
  %s4 = sld [smem:[#allocation0]]
  $region22: #{resnet_forward.77} parent=0
    _
  %s6 = ssub.s32 1, %s4
  %s7 = scalar_select 0, %s6, %s4
  $region1: #{resnet_forward.77} parent=0
    #allocation2 [shape = 'u8[1024]{0}', space=vmem, size = 0x400, scoped, tag = 'output window, operand 0, single buffered']
    #allocation3 [shape = 's32[1]{0}', space=sflag, size = 0x4, scoped, tag = 'scoped memory for resnet_forward.77']
    %8 = vsyncpa [#allocation3], 0
    // Predicated region
    $region2: #{resnet_forward.77} parent=1 // pred_check
      _
    $region3: #{resnet_forward.77} parent=1 // pred_check_branch
      %10 = sbr.rel (0) target = $region5
    $region4: #{resnet_forward.77} parent=1 // pred_region
      _
    $region5: #{resnet_forward.77} parent=1 // pred_fallthru
      _
    // Predicated region
    $region6: #{resnet_forward.77} parent=1 // pred_check
      _
    $region7: #{resnet_forward.77} parent=1 // pred_check_branch
      %12 = sbr.rel (0) target = $region9
    $region8: #{resnet_forward.77} parent=1 // pred_region
      _
    $region9: #{resnet_forward.77} parent=1 // pred_fallthru
      _
    // Predicated region
    $region10: #{resnet_forward.77} parent=1 // pred_check
      _
    $region11: #{resnet_forward.77} parent=1 // pred_check_branch
      %14 = sbr.rel (0) target = $region13
    $region12: #{resnet_forward.77} parent=1 // pred_region
      _
    $region13: #{resnet_forward.77} parent=1 // pred_fallthru
      _
    %v15 = vld [vmem:[%s0] sm:$0xf]
    %v16 = vld [vmem:[%s0 + $0x4] sm:$0xf]
    %v17 = vld [vmem:[%s0 + $0x8] sm:$0xf]
    %v18 = vld [vmem:[%s0 + $0xc] sm:$0xf]
    %v19 = vunpack.c.l.bf16 %v15
    %v20 = vunpack.c.l.bf16 %v16
    %v21 = vunpack.c.l.bf16 %v17
    %v22 = vunpack.c.l.bf16 %v18
    %vm23 = vcmask 523264
    %v24 = vsel %vm23, %v19, 0.0
    %v25 = vsel %vm23, %v20, 0.0
    %v26 = vadd.f32 %v24, %v25
    %v27 = vrot.slane %v26, 4
    %v28 = vadd.f32 %v26, %v27
    %v29 = vrot.slane %v28, 2
    %v30 = vadd.f32 %v28, %v29
    %v31 = vrot.slane %v30, 1
    %v32 = vadd.f32 %v30, %v31
    %v33 = vsel %vm23, %v21, 0.0
    %v34 = vsel %vm23, %v22, 0.0
    %v35 = vadd.f32 %v33, %v34
    %v36 = vrot.slane %v35, 4
    %v37 = vadd.f32 %v35, %v36
    %v38 = vrot.slane %v37, 2
    %v39 = vadd.f32 %v37, %v38
    %v40 = vrot.slane %v39, 1
    %v41 = vadd.f32 %v39, %v40
    %v42 = vrcp.pop 16.0
    %v43 = vmul.f32 %v32, %v42
    %v44 = vmul.f32 %v41, %v42
    %v45 = vld [vmem:[%s1] sm:$0xff]
    %v46 = vld [vmem:[%s1 + $0x8] sm:$0xff]
    %v47 = vld [vmem:[%s1 + $0x10] sm:$0xff]
    %v48 = vld [vmem:[%s1 + $0x18] sm:$0xff]
    %v49 = vld [vmem:[%s1 + $0x20] sm:$0xff]
    %v50 = vld [vmem:[%s1 + $0x28] sm:$0xff]
    %v51 = vld [vmem:[%s1 + $0x30] sm:$0xff]
    %v52 = vld [vmem:[%s1 + $0x38] sm:$0xff]
    %v53 = vld [vmem:[%s2] sm:$0x1]
    %v55 = vlaneseq
    %v56 = vshrl.u32 %v55, 7
    %v57 = vsub.s32 0, %v56
    %v58 = vrot.slane %v53, %v57
    %vm62 = vcmask 1041409
    %v63 = vsel %vm62, %v44, %v43
    %v64 = vsel %vm23, %v63, 0
    %66 = vmatprep.subr.mxu0 0.0
    %67 = vmatpush1.msra.mxu0 %v45
    %68 = vmatprep.subr.mxu0 0.0
    %69 = vmatpush1.msra.mxu0 %v46
    %70 = vmatprep.subr.mxu0 0.0
    %71 = vmatpush1.msra.mxu0 %v47
    %72 = vmatprep.subr.mxu0 0.0
    %73 = vmatpush1.msra.mxu0 %v48
    %74 = vmatprep.subr.mxu0 0.0
    %75 = vmatpush1.msra.mxu0 %v49
    %76 = vmatprep.subr.mxu0 0.0
    %77 = vmatpush1.msra.mxu0 %v50
    %78 = vmatprep.subr.mxu0 0.0
    %79 = vmatpush1.msra.mxu0 %v51
    %80 = vmatprep.subr.mxu0 0.0
    %81 = vmatpush1.msra.mxu0 %v52
    %82 = vmatprep.subr.mxu0 0.0
    %83 = vmatpush1.msra.mxu0 0.0
    %84 = vmatprep.subr.mxu0 0.0
    %85 = vmatpush1.msra.mxu0 0.0
    %86 = vmatprep.subr.mxu0 0.0
    %87 = vmatpush1.msra.mxu0 0.0
    %88 = vmatprep.subr.mxu0 0.0
    %89 = vmatpush1.msra.mxu0 0.0
    %90 = vmatprep.subr.mxu0 0.0
    %91 = vmatpush1.msra.mxu0 0.0
    %92 = vmatprep.subr.mxu0 0.0
    %93 = vmatpush1.msra.mxu0 0.0
    %94 = vmatprep.subr.mxu0 0.0
    %95 = vmatpush1.msra.mxu0 0.0
    %96 = vmatprep.subr.mxu0 0.0
    %97 = vmatpush1.msra.mxu0 0.0
    %98 = vmatprep.subr.mxu0 0.0
    %99 = vmatpush1.msra.mxu0 0.0
    %100 = vmatprep.subr.mxu0 0.0
    %101 = vmatpush1.msra.mxu0 0.0
    %102 = vmatprep.subr.mxu0 0.0
    %103 = vmatpush1.msra.mxu0 0.0
    %104 = vmatprep.subr.mxu0 0.0
    %105 = vmatpush1.msra.mxu0 0.0
    %106 = vmatprep.subr.mxu0 0.0
    %107 = vmatpush1.msra.mxu0 0.0
    %108 = vmatprep.subr.mxu0 0.0
    %109 = vmatpush1.msra.mxu0 0.0
    %110 = vmatprep.subr.mxu0 0.0
    %111 = vmatpush1.msra.mxu0 0.0
    %112 = vmatprep.subr.mxu0 0.0
    %113 = vmatpush1.msra.mxu0 0.0
    %114 = vmatprep.subr.mxu0 0.0
    %115 = vmatpush1.msra.mxu0 0.0
    %116 = vmatprep.subr.mxu0 0.0
    %117 = vmatpush1.msra.mxu0 0.0
    %118 = vmatprep.subr.mxu0 0.0
    %119 = vmatpush1.msra.mxu0 0.0
    %120 = vmatprep.subr.mxu0 0.0
    %121 = vmatpush1.msra.mxu0 0.0
    %122 = vmatprep.subr.mxu0 0.0
    %123 = vmatpush1.msra.mxu0 0.0
    %124 = vmatprep.subr.mxu0 0.0
    %125 = vmatpush1.msra.mxu0 0.0
    %126 = vmatprep.subr.mxu0 0.0
    %127 = vmatpush1.msra.mxu0 0.0
    %128 = vmatprep.subr.mxu0 0.0
    %129 = vmatpush1.msra.mxu0 0.0
    %130 = vmatprep.mubr.f32.mxu0 0.0
    %131 = vmatmul.mubr.f32.gmra.mrb[0].mxu0 %v64
    %v132 = vpop.f32.mrb[0].mxu0
    %v133 = vadd.f32 %v58, %v132
    %v134 = vpop.f32.mrb[0].mxu0
    %135 = vdwg.mxu0
    %vm136 = vcmask 74752
    %137 = vst.msk [vmem:[#allocation2] sm:$0x3] %vm136, %v133
    // Predicated region
    $region14: #{resnet_forward.77} parent=1 // pred_check
      _
    $region15: #{resnet_forward.77} parent=1 // pred_check_branch
      %139 = sbr.rel (0) target = $region17
    $region16: #{resnet_forward.77} parent=1 // pred_region
      %s141 = ssub.s32 32, 32
      %142 = vsyncadd [#allocation3], %s141
      %s144 = sshll.u32 [#allocation2], 4
      %s145 = int_to_ptr.vmem [resolvable:$true] %s144
      %147 = dma.vmem_to_hbm [thread:$0]  %s145, 32, %s3, [#allocation3]
    $region17: #{resnet_forward.77} parent=1 // pred_fallthru
      _
    // Predicated region
    $region18: #{resnet_forward.77} parent=1 // pred_check
      _
    $region19: #{resnet_forward.77} parent=1 // pred_check_branch
      %149 = sbr.rel (0) target = $region21
    $region20: #{resnet_forward.77} parent=1 // pred_region
      %150 = dma.done [#allocation3], 32
    $region21: #{resnet_forward.77} parent=1 // pred_fallthru
      _
    %151 = vsyncpa [#allocation3], 1

// kernel: resnet_forward.67
$region0: #{resnet_forward.67}
  #allocation0 [shape = 'u32[]', space=smem, size = 0x4, offset = 0x4, fixed_abs, tag = 'smem constant byte address 0x4 - core index']
  #allocation1 [shape = 'u32[144,128]{1,0:T(1,128)}', space=vmem, size = 0x12000, scoped, tag = 'internal scratch']
  %s0 = inlined_call_operand.vmem [shape: bf16[32,576], index: 0, kind: input, shape index: {}]
  %s1 = inlined_call_operand.vmem [shape: bf16[576,64], index: 1, kind: input, shape index: {}]
  %s2 = inlined_call_operand.vmem [shape: f32[32,64], index: 2, kind: output, shape index: {0}]
  %s3 = inlined_call_operand.vmem [shape: f32[8,64], index: 3, kind: output, shape index: {1}]
  %4 = xla_tuple %s2, %s3
  %s5 = sld [smem:[#allocation0]]
  $region26: #{resnet_forward.67} parent=0
    _
  %s7 = ssub.s32 1, %s5
  %s8 = scalar_select 0, %s7, %s5
  // Predicated region
  $region2: #{resnet_forward.67} parent=0 // pred_check
    _
  $region3: #{resnet_forward.67} parent=0 // pred_check_branch
    %10 = sbr.rel (0) target = $region5
  $region4: #{resnet_forward.67} parent=0 // pred_region
    _
  $region5: #{resnet_forward.67} parent=0 // pred_fallthru
    _
  // Predicated region
  $region6: #{resnet_forward.67} parent=0 // pred_check
    _
  $region7: #{resnet_forward.67} parent=0 // pred_check_branch
    %12 = sbr.rel (0) target = $region9
  $region8: #{resnet_forward.67} parent=0 // pred_region
    _
  $region9: #{resnet_forward.67} parent=0 // pred_fallthru
    _
  %v14 = vld [vmem:[%s0] sm:$0xff]
  %v15 = vld [vmem:[%s0 + $0x8] sm:$0xff]
  %v16 = vld [vmem:[%s0 + $0x10] sm:$0xf]
  %v17 = vld [vmem:[%s0 + $0x14] sm:$0xff]
  %v18 = vld [vmem:[%s0 + $0x1c] sm:$0xff]
  %v19 = vld [vmem:[%s0 + $0x24] sm:$0xf]
  %v20 = vld [vmem:[%s0 + $0x28] sm:$0xff]
  %v21 = vld [vmem:[%s0 + $0x30] sm:$0xff]
  %v22 = vld [vmem:[%s0 + $0x38] sm:$0xf]
  %v23 = vld [vmem:[%s0 + $0x3c] sm:$0xff]
  %v24 = vld [vmem:[%s0 + $0x44] sm:$0xff]
  %v25 = vld [vmem:[%s0 + $0x4c] sm:$0xf]
  %v26 = vld [vmem:[%s1] sm:$0xf]
  %v27 = vld [vmem:[%s1 + $0x4] sm:$0xf]
  %v28 = vld [vmem:[%s1 + $0x8] sm:$0xf]
  %v29 = vld [vmem:[%s1 + $0xc] sm:$0xf]
  %v30 = vld [vmem:[%s1 + $0x10] sm:$0xf]
  %v31 = vld [vmem:[%s1 + $0x14] sm:$0xf]
  %v32 = vld [vmem:[%s1 + $0x18] sm:$0xf]
  %v33 = vld [vmem:[%s1 + $0x1c] sm:$0xf]
  %v34 = vld [vmem:[%s1 + $0x20] sm:$0xf]
  %v35 = vld [vmem:[%s1 + $0x24] sm:$0xf]
  %v36 = vld [vmem:[%s1 + $0x28] sm:$0xf]
  %v37 = vld [vmem:[%s1 + $0x2c] sm:$0xf]
  %v38 = vld [vmem:[%s1 + $0x30] sm:$0xf]
  %v39 = vld [vmem:[%s1 + $0x34] sm:$0xf]
  %v40 = vld [vmem:[%s1 + $0x38] sm:$0xf]
  %v41 = vld [vmem:[%s1 + $0x3c] sm:$0xf]
  %v42 = vld [vmem:[%s1 + $0x40] sm:$0xf]
  %v43 = vld [vmem:[%s1 + $0x44] sm:$0xf]
  %v44 = vld [vmem:[%s1 + $0x48] sm:$0xf]
  %v45 = vld [vmem:[%s1 + $0x4c] sm:$0xf]
  %v46 = vld [vmem:[%s1 + $0x50] sm:$0xf]
  %v47 = vld [vmem:[%s1 + $0x54] sm:$0xf]
  %v48 = vld [vmem:[%s1 + $0x58] sm:$0xf]
  %v49 = vld [vmem:[%s1 + $0x5c] sm:$0xf]
  %v50 = vld [vmem:[%s1 + $0x60] sm:$0xf]
  %v51 = vld [vmem:[%s1 + $0x64] sm:$0xf]
  %v52 = vld [vmem:[%s1 + $0x68] sm:$0xf]
  %v53 = vld [vmem:[%s1 + $0x6c] sm:$0xf]
  %v54 = vld [vmem:[%s1 + $0x70] sm:$0xf]
  %v55 = vld [vmem:[%s1 + $0x74] sm:$0xf]
  %v56 = vld [vmem:[%s1 + $0x78] sm:$0xf]
  %v57 = vld [vmem:[%s1 + $0x7c] sm:$0xf]
  %v58 = vld [vmem:[%s1 + $0x80] sm:$0xf]
  %v59 = vld [vmem:[%s1 + $0x84] sm:$0xf]
  %v60 = vld [vmem:[%s1 + $0x88] sm:$0xf]
  %v61 = vld [vmem:[%s1 + $0x8c] sm:$0xf]
  %v62 = vld [vmem:[%s1 + $0x90] sm:$0xf]
  %v63 = vld [vmem:[%s1 + $0x94] sm:$0xf]
  %v64 = vld [vmem:[%s1 + $0x98] sm:$0xf]
  %v65 = vld [vmem:[%s1 + $0x9c] sm:$0xf]
  %v66 = vld [vmem:[%s1 + $0xa0] sm:$0xf]
  %v67 = vld [vmem:[%s1 + $0xa4] sm:$0xf]
  %v68 = vld [vmem:[%s1 + $0xa8] sm:$0xf]
  %v69 = vld [vmem:[%s1 + $0xac] sm:$0xf]
  %v70 = vld [vmem:[%s1 + $0xb0] sm:$0xf]
  %v71 = vld [vmem:[%s1 + $0xb4] sm:$0xf]
  %v72 = vld [vmem:[%s1 + $0xb8] sm:$0xf]
  %v73 = vld [vmem:[%s1 + $0xbc] sm:$0xf]
  %v74 = vld [vmem:[%s1 + $0xc0] sm:$0xf]
  %v75 = vld [vmem:[%s1 + $0xc4] sm:$0xf]
  %v76 = vld [vmem:[%s1 + $0xc8] sm:$0xf]
  %v77 = vld [vmem:[%s1 + $0xcc] sm:$0xf]
  %v78 = vld [vmem:[%s1 + $0xd0] sm:$0xf]
  %v79 = vld [vmem:[%s1 + $0xd4] sm:$0xf]
  %v80 = vld [vmem:[%s1 + $0xd8] sm:$0xf]
  %v81 = vld [vmem:[%s1 + $0xdc] sm:$0xf]
  %v82 = vld [vmem:[%s1 + $0xe0] sm:$0xf]
  %v83 = vld [vmem:[%s1 + $0xe4] sm:$0xf]
  %v84 = vld [vmem:[%s1 + $0xe8] sm:$0xf]
  %v85 = vld [vmem:[%s1 + $0xec] sm:$0xf]
  %v86 = vld [vmem:[%s1 + $0xf0] sm:$0xf]
  %v87 = vld [vmem:[%s1 + $0xf4] sm:$0xf]
  %v88 = vld [vmem:[%s1 + $0xf8] sm:$0xf]
  %v89 = vld [vmem:[%s1 + $0xfc] sm:$0xf]
  %v90 = vld [vmem:[%s1 + $0x100] sm:$0xf]
  %v91 = vld [vmem:[%s1 + $0x104] sm:$0xf]
  %v92 = vld [vmem:[%s1 + $0x108] sm:$0xf]
  %v93 = vld [vmem:[%s1 + $0x10c] sm:$0xf]
  %v94 = vld [vmem:[%s1 + $0x110] sm:$0xf]
  %v95 = vld [vmem:[%s1 + $0x114] sm:$0xf]
  %v96 = vld [vmem:[%s1 + $0x118] sm:$0xf]
  %v97 = vld [vmem:[%s1 + $0x11c] sm:$0xf]
  %v110 = vunpack.c.l.b16 %v14
  %v111 = vunpack.c.h.b16 %v14
  %v112 = vunpack.c.l.b16 %v15
  %v113 = vunpack.c.h.b16 %v15
  %v114 = vunpack.c.l.b16 %v16
  %v115 = vunpack.c.l.b16 %v17
  %v116 = vunpack.c.h.b16 %v17
  %v117 = vunpack.c.l.b16 %v18
  %v118 = vunpack.c.h.b16 %v18
  %v119 = vunpack.c.l.b16 %v19
  %v120 = vunpack.c.l.b16 %v20
  %v121 = vunpack.c.h.b16 %v20
  %v122 = vunpack.c.l.b16 %v21
  %v123 = vunpack.c.h.b16 %v21
  %v124 = vunpack.c.l.b16 %v22
  %v125 = vunpack.c.l.b16 %v23
  %v126 = vunpack.c.h.b16 %v23
  %v127 = vunpack.c.l.b16 %v24
  %v128 = vunpack.c.h.b16 %v24
  %v129 = vunpack.c.l.b16 %v25
  %v130 = vpack.c.b16 %v115, %v110
  %v131 = vpack.c.b16 %v116, %v111
  %v132 = vpack.c.b16 %v117, %v112
  %v133 = vpack.c.b16 %v118, %v113
  %v134 = vpack.c.b16 %v119, %v114
  %v135 = vpack.c.b16 %v125, %v120
  %v136 = vpack.c.b16 %v126, %v121
  %v137 = vpack.c.b16 %v127, %v122
  %v138 = vpack.c.b16 %v128, %v123
  %v139 = vpack.c.b16 %v129, %v124
  %v220 = vunpack.c.l.b16 %v26
  %v221 = vunpack.c.l.b16 %v27
  %v222 = vunpack.c.l.b16 %v28
  %v223 = vunpack.c.l.b16 %v29
  %v224 = vunpack.c.l.b16 %v30
  %v225 = vunpack.c.l.b16 %v31
  %v226 = vunpack.c.l.b16 %v32
  %v227 = vunpack.c.l.b16 %v33
  %v228 = vunpack.c.l.b16 %v34
  %v229 = vunpack.c.l.b16 %v35
  %v230 = vunpack.c.l.b16 %v36
  %v231 = vunpack.c.l.b16 %v37
  %v232 = vunpack.c.l.b16 %v38
  %v233 = vunpack.c.l.b16 %v39
  %v234 = vunpack.c.l.b16 %v40
  %v235 = vunpack.c.l.b16 %v41
  %v236 = vunpack.c.l.b16 %v42
  %v237 = vunpack.c.l.b16 %v43
  %v238 = vunpack.c.l.b16 %v44
  %v239 = vunpack.c.l.b16 %v45
  %v240 = vunpack.c.l.b16 %v46
  %v241 = vunpack.c.l.b16 %v47
  %v242 = vunpack.c.l.b16 %v48
  %v243 = vunpack.c.l.b16 %v49
  %v244 = vunpack.c.l.b16 %v50
  %v245 = vunpack.c.l.b16 %v51
  %v246 = vunpack.c.l.b16 %v52
  %v247 = vunpack.c.l.b16 %v53
  %v248 = vunpack.c.l.b16 %v54
  %v249 = vunpack.c.l.b16 %v55
  %v250 = vunpack.c.l.b16 %v56
  %v251 = vunpack.c.l.b16 %v57
  %v252 = vunpack.c.l.b16 %v58
  %v253 = vunpack.c.l.b16 %v59
  %v254 = vunpack.c.l.b16 %v60
  %v255 = vunpack.c.l.b16 %v61
  %v256 = vunpack.c.l.b16 %v62
  %v257 = vunpack.c.l.b16 %v63
  %v258 = vunpack.c.l.b16 %v64
  %v259 = vunpack.c.l.b16 %v65
  %v260 = vunpack.c.l.b16 %v66
  %v261 = vunpack.c.l.b16 %v67
  %v262 = vunpack.c.l.b16 %v68
  %v263 = vunpack.c.l.b16 %v69
  %v264 = vunpack.c.l.b16 %v70
  %v265 = vunpack.c.l.b16 %v71
  %v266 = vunpack.c.l.b16 %v72
  %v267 = vunpack.c.l.b16 %v73
  %v268 = vunpack.c.l.b16 %v74
  %v269 = vunpack.c.l.b16 %v75
  %v270 = vunpack.c.l.b16 %v76
  %v271 = vunpack.c.l.b16 %v77
  %v272 = vunpack.c.l.b16 %v78
  %v273 = vunpack.c.l.b16 %v79
  %v274 = vunpack.c.l.b16 %v80
  %v275 = vunpack.c.l.b16 %v81
  %v276 = vunpack.c.l.b16 %v82
  %v277 = vunpack.c.l.b16 %v83
  %v278 = vunpack.c.l.b16 %v84
  %v279 = vunpack.c.l.b16 %v85
  %v280 = vunpack.c.l.b16 %v86
  %v281 = vunpack.c.l.b16 %v87
  %v282 = vunpack.c.l.b16 %v88
  %v283 = vunpack.c.l.b16 %v89
  %v284 = vunpack.c.l.b16 %v90
  %v285 = vunpack.c.l.b16 %v91
  %v286 = vunpack.c.l.b16 %v92
  %v287 = vunpack.c.l.b16 %v93
  %v288 = vunpack.c.l.b16 %v94
  %v289 = vunpack.c.l.b16 %v95
  %v290 = vunpack.c.l.b16 %v96
  %v291 = vunpack.c.l.b16 %v97
  %v292 = vpack.c.b16 %v221, %v220
  %v293 = vpack.c.b16 %v223, %v222
  %v294 = vpack.c.b16 %v225, %v224
  %v295 = vpack.c.b16 %v227, %v226
  %v296 = vpack.c.b16 %v229, %v228
  %v297 = vpack.c.b16 %v231, %v230
  %v298 = vpack.c.b16 %v233, %v232
  %v299 = vpack.c.b16 %v235, %v234
  %v300 = vpack.c.b16 %v237, %v236
  %v301 = vpack.c.b16 %v239, %v238
  %v302 = vpack.c.b16 %v241, %v240
  %v303 = vpack.c.b16 %v243, %v242
  %v304 = vpack.c.b16 %v245, %v244
  %v305 = vpack.c.b16 %v247, %v246
  %v306 = vpack.c.b16 %v249, %v248
  %v307 = vpack.c.b16 %v251, %v250
  %v308 = vpack.c.b16 %v253, %v252
  %v309 = vpack.c.b16 %v255, %v254
  %v310 = vpack.c.b16 %v257, %v256
  %v311 = vpack.c.b16 %v259, %v258
  %v312 = vpack.c.b16 %v261, %v260
  %v313 = vpack.c.b16 %v263, %v262
  %v314 = vpack.c.b16 %v265, %v264
  %v315 = vpack.c.b16 %v267, %v266
  %v316 = vpack.c.b16 %v269, %v268
  %v317 = vpack.c.b16 %v271, %v270
  %v318 = vpack.c.b16 %v273, %v272
  %v319 = vpack.c.b16 %v275, %v274
  %v320 = vpack.c.b16 %v277, %v276
  %v321 = vpack.c.b16 %v279, %v278
  %v322 = vpack.c.b16 %v281, %v280
  %v323 = vpack.c.b16 %v283, %v282
  %v324 = vpack.c.b16 %v285, %v284
  %v325 = vpack.c.b16 %v287, %v286
  %v326 = vpack.c.b16 %v289, %v288
  %v327 = vpack.c.b16 %v291, %v290
  %vm364 = vcmask 523264
  %v366 = vsel %vm364, %v134, 0
  %v369 = vsel %vm364, %v139, 0
  %371 = vmatprep.subr.bf16.mxu0 0
  %372 = vmatpush1.bf16.msra.mxu0 %v292
  %373 = vmatprep.subr.bf16.mxu0 0
  %374 = vmatpush1.bf16.msra.mxu0 %v293
  %375 = vmatprep.subr.bf16.mxu0 0
  %376 = vmatpush1.bf16.msra.mxu0 %v294
  %377 = vmatprep.subr.bf16.mxu0 0
  %378 = vmatpush1.bf16.msra.mxu0 %v295
  %379 = vmatprep.subr.bf16.mxu0 0
  %380 = vmatpush1.bf16.msra.mxu0 %v296
  %381 = vmatprep.subr.bf16.mxu0 0
  %382 = vmatpush1.bf16.msra.mxu0 %v297
  %383 = vmatprep.subr.bf16.mxu0 0
  %384 = vmatpush1.bf16.msra.mxu0 %v298
  %385 = vmatprep.subr.bf16.mxu0 0
  %386 = vmatpush1.bf16.msra.mxu0 %v299
  %387 = vmatprep.subr.bf16.mxu0 0
  %388 = vmatpush1.bf16.msra.mxu0 %v300
  %389 = vmatprep.subr.bf16.mxu0 0
  %390 = vmatpush1.bf16.msra.mxu0 %v301
  %391 = vmatprep.subr.bf16.mxu0 0
  %392 = vmatpush1.bf16.msra.mxu0 %v302
  %393 = vmatprep.subr.bf16.mxu0 0
  %394 = vmatpush1.bf16.msra.mxu0 %v303
  %395 = vmatprep.subr.bf16.mxu0 0
  %396 = vmatpush1.bf16.msra.mxu0 %v304
  %397 = vmatprep.subr.bf16.mxu0 0
  %398 = vmatpush1.bf16.msra.mxu0 %v305
  %399 = vmatprep.subr.bf16.mxu0 0
  %400 = vmatpush1.bf16.msra.mxu0 %v306
  %401 = vmatprep.subr.bf16.mxu0 0
  %402 = vmatpush1.bf16.msra.mxu0 %v307
  %403 = vmatprep.mubr.bf16.mxu0 %v131
  %404 = vmatmul.mubr.bf16.gmra.mrb[0].mxu0 %v130
  %v405 = vpop.f32.mrb[0].mxu0
  %v406 = vadd.f32 0.0, %v405
  %v407 = vpop.f32.mrb[0].mxu0
  %v408 = vpop.f32.mrb[0].mxu0
  %v409 = vadd.f32 0.0, %v408
  %v410 = vpop.f32.mrb[0].mxu0
  %411 = vmatprep.mubr.bf16.mxu0 %v136
  %412 = vmatmul.mubr.bf16.gmra.mrb[0].mxu0 %v135
  %v413 = vpop.f32.mrb[0].mxu0
  %v414 = vadd.f32 0.0, %v413
  %v415 = vpop.f32.mrb[0].mxu0
  %v416 = vpop.f32.mrb[0].mxu0
  %v417 = vadd.f32 0.0, %v416
  %v418 = vpop.f32.mrb[0].mxu0
  %419 = vdwg.mxu0
  %420 = vmatprep.subr.bf16.mxu0 0
  %421 = vmatpush1.bf16.msra.mxu0 %v308
  %422 = vmatprep.subr.bf16.mxu0 0
  %423 = vmatpush1.bf16.msra.mxu0 %v309
  %424 = vmatprep.subr.bf16.mxu0 0
  %425 = vmatpush1.bf16.msra.mxu0 %v310
  %426 = vmatprep.subr.bf16.mxu0 0
  %427 = vmatpush1.bf16.msra.mxu0 %v311
  %428 = vmatprep.subr.bf16.mxu0 0
  %429 = vmatpush1.bf16.msra.mxu0 %v312
  %430 = vmatprep.subr.bf16.mxu0 0
  %431 = vmatpush1.bf16.msra.mxu0 %v313
  %432 = vmatprep.subr.bf16.mxu0 0
  %433 = vmatpush1.bf16.msra.mxu0 %v314
  %434 = vmatprep.subr.bf16.mxu0 0
  %435 = vmatpush1.bf16.msra.mxu0 %v315
  %436 = vmatprep.subr.bf16.mxu0 0
  %437 = vmatpush1.bf16.msra.mxu0 %v316
  %438 = vmatprep.subr.bf16.mxu0 0
  %439 = vmatpush1.bf16.msra.mxu0 %v317
  %440 = vmatprep.subr.bf16.mxu0 0
  %441 = vmatpush1.bf16.msra.mxu0 %v318
  %442 = vmatprep.subr.bf16.mxu0 0
  %443 = vmatpush1.bf16.msra.mxu0 %v319
  %444 = vmatprep.subr.bf16.mxu0 0
  %445 = vmatpush1.bf16.msra.mxu0 %v320
  %446 = vmatprep.subr.bf16.mxu0 0
  %447 = vmatpush1.bf16.msra.mxu0 %v321
  %448 = vmatprep.subr.bf16.mxu0 0
  %449 = vmatpush1.bf16.msra.mxu0 %v322
  %450 = vmatprep.subr.bf16.mxu0 0
  %451 = vmatpush1.bf16.msra.mxu0 %v323
  %452 = vmatprep.mubr.bf16.mxu0 %v133
  %453 = vmatmul.mubr.bf16.gmra.mrb[0].mxu0 %v132
  %v454 = vpop.f32.mrb[0].mxu0
  %v455 = vadd.f32 %v406, %v454
  %v456 = vpop.f32.mrb[0].mxu0
  %v457 = vpop.f32.mrb[0].mxu0
  %v458 = vadd.f32 %v409, %v457
  %v459 = vpop.f32.mrb[0].mxu0
  %460 = vmatprep.mubr.bf16.mxu0 %v138
  %461 = vmatmul.mubr.bf16.gmra.mrb[0].mxu0 %v137
  %v462 = vpop.f32.mrb[0].mxu0
  %v463 = vadd.f32 %v414, %v462
  %v464 = vpop.f32.mrb[0].mxu0
  %v465 = vpop.f32.mrb[0].mxu0
  %v466 = vadd.f32 %v417, %v465
  %v467 = vpop.f32.mrb[0].mxu0
  %468 = vdwg.mxu0
  %469 = vmatprep.subr.bf16.mxu0 0
  %470 = vmatpush1.bf16.msra.mxu0 %v324
  %471 = vmatprep.subr.bf16.mxu0 0
  %472 = vmatpush1.bf16.msra.mxu0 %v325
  %473 = vmatprep.subr.bf16.mxu0 0
  %474 = vmatpush1.bf16.msra.mxu0 %v326
  %475 = vmatprep.subr.bf16.mxu0 0
  %476 = vmatpush1.bf16.msra.mxu0 %v327
  %477 = vmatprep.subr.bf16.mxu0 0
  %478 = vmatpush1.bf16.msra.mxu0 0
  %479 = vmatprep.subr.bf16.mxu0 0
  %480 = vmatpush1.bf16.msra.mxu0 0
  %481 = vmatprep.subr.bf16.mxu0 0
  %482 = vmatpush1.bf16.msra.mxu0 0
  %483 = vmatprep.subr.bf16.mxu0 0
  %484 = vmatpush1.bf16.msra.mxu0 0
  %485 = vmatprep.subr.bf16.mxu0 0
  %486 = vmatpush1.bf16.msra.mxu0 0
  %487 = vmatprep.subr.bf16.mxu0 0
  %488 = vmatpush1.bf16.msra.mxu0 0
  %489 = vmatprep.subr.bf16.mxu0 0
  %490 = vmatpush1.bf16.msra.mxu0 0
  %491 = vmatprep.subr.bf16.mxu0 0
  %492 = vmatpush1.bf16.msra.mxu0 0
  %493 = vmatprep.subr.bf16.mxu0 0
  %494 = vmatpush1.bf16.msra.mxu0 0
  %495 = vmatprep.subr.bf16.mxu0 0
  %496 = vmatpush1.bf16.msra.mxu0 0
  %497 = vmatprep.subr.bf16.mxu0 0
  %498 = vmatpush1.bf16.msra.mxu0 0
  %499 = vmatprep.subr.bf16.mxu0 0
  %500 = vmatpush1.bf16.msra.mxu0 0
  %501 = vmatprep.mubr.bf16.mxu0 0
  %502 = vmatmul.mubr.bf16.gmra.mrb[0].mxu0 %v366
  %v503 = vpop.f32.mrb[0].mxu0
  %v504 = vadd.f32 %v455, %v503
  %v505 = vpop.f32.mrb[0].mxu0
  %v506 = vpop.f32.mrb[0].mxu0
  %v507 = vadd.f32 %v458, %v506
  %v508 = vpop.f32.mrb[0].mxu0
  %509 = vmatprep.mubr.bf16.mxu0 0
  %510 = vmatmul.mubr.bf16.gmra.mrb[0].mxu0 %v369
  %v511 = vpop.f32.mrb[0].mxu0
  %v512 = vadd.f32 %v463, %v511
  %v513 = vpop.f32.mrb[0].mxu0
  %v514 = vpop.f32.mrb[0].mxu0
  %v515 = vadd.f32 %v466, %v514
  %v516 = vpop.f32.mrb[0].mxu0
  %517 = vdwg.mxu0
  %518 = vst.msk [vmem:[%s2] sm:$0xff] %vm364, %v504
  %519 = vst.msk [vmem:[%s2 + $0x8] sm:$0xff] %vm364, %v507
  %520 = vst.msk [vmem:[%s2 + $0x10] sm:$0xff] %vm364, %v512
  %521 = vst.msk [vmem:[%s2 + $0x18] sm:$0xff] %vm364, %v515
  %v522 = vsel %vm364, %v504, 0.0
  %v523 = vsel %vm364, %v507, 0.0
  %v524 = vadd.f32 %v522, %v523
  %v525 = vsel %vm364, %v512, 0.0
  %v526 = vadd.f32 %v524, %v525
  %v527 = vsel %vm364, %v515, 0.0
  %v528 = vadd.f32 %v526, %v527
  %v529 = vrot.slane %v528, 4
  %v530 = vadd.f32 %v528, %v529
  %v531 = vrot.slane %v530, 2
  %v532 = vadd.f32 %v530, %v531
  %v533 = vrot.slane %v532, 1
  %v534 = vadd.f32 %v532, %v533
  %v535 = vmul.f32 %v504, %v504
  %v536 = vmul.f32 %v507, %v507
  %v537 = vmul.f32 %v512, %v512
  %v538 = vmul.f32 %v515, %v515
  %v539 = vsel %vm364, %v535, 0.0
  %v540 = vsel %vm364, %v536, 0.0
  %v541 = vadd.f32 %v539, %v540
  %v542 = vsel %vm364, %v537, 0.0
  %v543 = vadd.f32 %v541, %v542
  %v544 = vsel %vm364, %v538, 0.0
  %v545 = vadd.f32 %v543, %v544
  %v546 = vrot.slane %v545, 4
  %v547 = vadd.f32 %v545, %v546
  %v548 = vrot.slane %v547, 2
  %v549 = vadd.f32 %v547, %v548
  %v550 = vrot.slane %v549, 1
  %v551 = vadd.f32 %v549, %v550
  %v552 = vlaneseq
  %v553 = vshrl.u32 %v552, 7
  %vm554 = vcmp.eq.s32.totalorder %v553, 0
  %v555 = vsel %vm554, %v534, 0.0
  %vm556 = vcmp.eq.s32.totalorder %v553, 1
  %v557 = vsel %vm556, %v551, 0.0
  %v558 = vadd.f32 %v555, %v557
  %559 = vst.msk [vmem:[%s3] sm:$0xff] %vm364, %v558
  // Predicated region
  $region10: #{resnet_forward.67} parent=0 // pred_check
    _
  $region11: #{resnet_forward.67} parent=0 // pred_check_branch
    %561 = sbr.rel (0) target = $region13
  $region12: #{resnet_forward.67} parent=0 // pred_region
    _
  $region13: #{resnet_forward.67} parent=0 // pred_fallthru
    _
  // Predicated region
  $region14: #{resnet_forward.67} parent=0 // pred_check
    _
  $region15: #{resnet_forward.67} parent=0 // pred_check_branch
    %563 = sbr.rel (0) target = $region17
  $region16: #{resnet_forward.67} parent=0 // pred_region
    _
  $region17: #{resnet_forward.67} parent=0 // pred_fallthru
    _
  // Predicated region
  $region18: #{resnet_forward.67} parent=0 // pred_check
    _
  $region19: #{resnet_forward.67} parent=0 // pred_check_branch
    %565 = sbr.rel (0) target = $region21
  $region20: #{resnet_forward.67} parent=0 // pred_region
    _
  $region21: #{resnet_forward.67} parent=0 // pred_fallthru
    _
  // Predicated region
  $region22: #{resnet_forward.67} parent=0 // pred_check
    _
  $region23: #{resnet_forward.67} parent=0 // pred_check_branch
    %567 = sbr.rel (0) target = $region25
  $region24: #{resnet_forward.67} parent=0 // pred_region
    _
  $region25: #{resnet_forward.67} parent=0 // pred_fallthru
    _

</llo_original>
